<compile_context>
chip_gen: v5e
topology: v5e:2x2
jax: 0.10.0
libtpu: 0.0.40
codegen_flags: <defaults>
</compile_context>

<pallas_src>
import jax
import jax.numpy as jnp
from jax.experimental import pallas as pl
from jax.experimental.pallas import tpu as pltpu

EPS = 1e-5  # torch.nn.BatchNorm2d default

_COMPILER_PARAMS = pltpu.CompilerParams(
    dimension_semantics=("arbitrary",),
    vmem_limit_bytes=24 * 1024 * 1024,
)


# ----------------------------------------------------------------------------
# Generic single-block pallas_call helper (every operand = one full VMEM block)
# ----------------------------------------------------------------------------
def _single_block_call(kernel, out_shape, *inputs):
    in_specs = [pl.BlockSpec(a.shape, lambda i, nd=a.ndim: (0,) * nd)
                for a in inputs]
    out_specs = pl.BlockSpec(out_shape.shape,
                             lambda i, nd=len(out_shape.shape): (0,) * nd)
    return pl.pallas_call(
        kernel,
        grid=(1,),
        in_specs=in_specs,
        out_specs=out_specs,
        out_shape=out_shape,
        compiler_params=_COMPILER_PARAMS,
    )(*inputs)


# ----------------------------------------------------------------------------
# In-kernel helpers
# ----------------------------------------------------------------------------
def _batchnorm(y, gamma, beta):
    """Training-mode BatchNorm (batch stats, biased variance, two-pass)."""
    m = y.shape[0]
    mean = jnp.sum(y, axis=0, keepdims=True) * (1.0 / m)
    d = y - mean
    var = jnp.sum(d * d, axis=0, keepdims=True) * (1.0 / m)
    inv = jax.lax.rsqrt(var + EPS)
    return d * inv * gamma + beta


def _dot(a, w_ref):
    """GEMM with bf16-stored weight (halved HBM DMA), f32 compute/accumulate."""
    return jnp.dot(a, w_ref[...].astype(jnp.float32),
                   preferred_element_type=jnp.float32)


# ----------------------------------------------------------------------------
# Fused kernels
# ----------------------------------------------------------------------------
def _stem_kernel(p_ref, w_ref, g_ref, b_ref, o_ref):
    """conv1 GEMM + BN(affine=False) + ReLU + fused 2x2/2 max-pool.

    Patch rows were pre-ordered (hpar, wpar, n, ho, wo), so the pool is the
    elementwise max of four contiguous row slabs (no strided access needed)."""
    y = jnp.maximum(_batchnorm(_dot(p_ref[...], w_ref),
                               g_ref[...], b_ref[...]), 0.0)
    m = o_ref.shape[0]
    o_ref[...] = jnp.maximum(jnp.maximum(y[0:m], y[m:2 * m]),
                             jnp.maximum(y[2 * m:3 * m], y[3 * m:4 * m]))


def _conv_bn_relu_kernel(p_ref, w_ref, g_ref, b_ref, o_ref):
    o_ref[...] = jnp.maximum(
        _batchnorm(_dot(p_ref[...], w_ref), g_ref[...], b_ref[...]), 0.0)


def _conv_bn_add_relu_kernel(p_ref, w_ref, g_ref, b_ref, res_ref, o_ref):
    o_ref[...] = jnp.maximum(
        _batchnorm(_dot(p_ref[...], w_ref), g_ref[...], b_ref[...])
        + res_ref[...], 0.0)


def _conv_bn_ds_add_relu_kernel(p_ref, w_ref, g_ref, b_ref,
                                pd_ref, wd_ref, gd_ref, bd_ref, o_ref):
    y = _batchnorm(_dot(p_ref[...], w_ref), g_ref[...], b_ref[...])
    r = _batchnorm(_dot(pd_ref[...], wd_ref), gd_ref[...], bd_ref[...])
    o_ref[...] = jnp.maximum(y + r, 0.0)


def _tail_kernel(p6_ref, pd3_ref,
                 w6_ref, g6_ref, b6_ref,
                 w7_ref, g7_ref, b7_ref,
                 wd3_ref, gd3_ref, bd3_ref,
                 w8_ref, g8_ref, b8_ref,
                 w9_ref, g9_ref, b9_ref,
                 wd4_ref, gd4_ref, bd4_ref,
                 o_ref):
    """Blocks 3 + 4 + final torch.sum in one launch.

    Spatial size is 1x1 after conv6, so conv7/conv8/conv9/ds4 reduce to their
    center taps -> plain GEMMs chained entirely in VMEM."""
    # block 3
    a6 = jnp.maximum(_batchnorm(_dot(p6_ref[...], w6_ref),
                                g6_ref[...], b6_ref[...]), 0.0)
    y7 = _batchnorm(_dot(a6, w7_ref), g7_ref[...], b7_ref[...])
    r3 = _batchnorm(_dot(pd3_ref[...], wd3_ref), gd3_ref[...], bd3_ref[...])
    x3 = jnp.maximum(y7 + r3, 0.0)
    # block 4 (x3 itself is the "im2col" of conv8 and ds4)
    a8 = jnp.maximum(_batchnorm(_dot(x3, w8_ref),
                                g8_ref[...], b8_ref[...]), 0.0)
    y9 = _batchnorm(_dot(a8, w9_ref), g9_ref[...], b9_ref[...])
    r4 = _batchnorm(_dot(x3, wd4_ref), gd4_ref[...], bd4_ref[...])
    out = jnp.maximum(y9 + r4, 0.0)
    o_ref[...] = jnp.sum(out, keepdims=True)      # fused torch.sum -> (1,1)


# ----------------------------------------------------------------------------
# Layer wrappers
# ----------------------------------------------------------------------------
def conv_bn_relu(patches, wmat, gamma, beta):
    return _single_block_call(
        _conv_bn_relu_kernel,
        jax.ShapeDtypeStruct((patches.shape[0], wmat.shape[1]), jnp.float32),
        patches, wmat, gamma, beta)


def conv_bn_add_relu(patches, wmat, gamma, beta, residual):
    return _single_block_call(
        _conv_bn_add_relu_kernel,
        jax.ShapeDtypeStruct((patches.shape[0], wmat.shape[1]), jnp.float32),
        patches, wmat, gamma, beta, residual)


def conv_bn_ds_add_relu(patches, wmat, gamma, beta,
                        patches_ds, wmat_ds, gamma_ds, beta_ds):
    return _single_block_call(
        _conv_bn_ds_add_relu_kernel,
        jax.ShapeDtypeStruct((patches.shape[0], wmat.shape[1]), jnp.float32),
        patches, wmat, gamma, beta, patches_ds, wmat_ds, gamma_ds, beta_ds)


# ----------------------------------------------------------------------------
# im2col glue with exact dead-tap pruning (KB-sized patch tensors; GEMMs run
# in Pallas).  A tap that only ever multiplies zero padding contributes 0 and
# is dropped, together with its weight rows.
# ----------------------------------------------------------------------------
def kept_taps(H, W, kh, kw, stride, pad):
    Ho = (H + 2 * pad - kh) // stride + 1
    Wo = (W + 2 * pad - kw) // stride + 1
    taps = []
    for di in range(kh):
        if not any(pad <= di + stride * i < pad + H for i in range(Ho)):
            continue                               # row always in zero padding
        for dj in range(kw):
            if not any(pad <= dj + stride * j < pad + W for j in range(Wo)):
                continue                           # col always in zero padding
            taps.append((di, dj))
    return taps, Ho, Wo


def im2col(x, kh, kw, stride, pad):
    """Patch matrix (N*Ho*Wo, len(taps)*Cin); tap order matches conv_to_gemm."""
    N, H, W, Cin = x.shape
    taps, Ho, Wo = kept_taps(H, W, kh, kw, stride, pad)
    xp = jnp.pad(x, ((0, 0), (pad, pad), (pad, pad), (0, 0)))
    cols = [xp[:, di:di + stride * Ho:stride, dj:dj + stride * Wo:stride, :]
            for di, dj in taps]
    patches = jnp.stack(cols, axis=3).reshape(N * Ho * Wo, len(taps) * Cin)
    return patches, (N, Ho, Wo)


def conv_to_gemm(w, taps):
    """(cout,cin,kh,kw) torch conv weight -> (len(taps)*cin, cout) GEMM matrix."""
    blocks = [w[:, :, di, dj].T for di, dj in taps]          # each (cin, cout)
    return jnp.concatenate(blocks, axis=0)


def _conv_out(h, w, k, s, p):
    return (h + 2 * p - k) // s + 1, (w + 2 * p - k) // s + 1


def build_plan(H, W):
    """Per-conv (in_H, in_W, kh, kw, stride, pad), statically derived."""
    h1, w1 = _conv_out(H, W, 7, 2, 3)          # conv1
    hp, wp = h1 // 2, w1 // 2                  # maxpool(2,2)
    h2, w2 = _conv_out(hp, wp, 3, 2, 1)        # conv4 output
    h3, w3 = _conv_out(h2, w2, 3, 2, 1)        # conv6 output
    h4, w4 = _conv_out(h3, w3, 3, 2, 1)        # conv8 output
    return {
        "conv1": (H, W, 7, 7, 2, 3),
        "conv2": (hp, wp, 3, 3, 1, 1),
        "conv3": (hp, wp, 3, 3, 1, 1),
        "conv4": (hp, wp, 3, 3, 2, 1),
        "conv5": (h2, w2, 3, 3, 1, 1),
        "ds2":   (hp, wp, 1, 1, 2, 0),
        "conv6": (h2, w2, 3, 3, 2, 1),
        "conv7": (h3, w3, 3, 3, 1, 1),
        "ds3":   (h2, w2, 1, 1, 2, 0),
        "conv8": (h3, w3, 3, 3, 2, 1),
        "conv9": (h4, w4, 3, 3, 1, 1),
        "ds4":   (h3, w3, 1, 1, 2, 0),
    }


# ----------------------------------------------------------------------------
# Parameters
# ----------------------------------------------------------------------------
def init_params(key):
    """Deterministic synthetic weights; BN gammas=1, betas=0 (PyTorch init)."""
    def conv_w(k, cout, cin, kh, kw):
        return 0.05 * jax.random.normal(k, (cout, cin, kh, kw), jnp.float32)

    ks = jax.random.split(key, 12)
    p = {
        "conv1": conv_w(ks[0], 64, 3, 7, 7),
        "conv2": conv_w(ks[1], 64, 64, 3, 3),
        "conv3": conv_w(ks[2], 64, 64, 3, 3),
        "conv4": conv_w(ks[3], 128, 64, 3, 3),
        "conv5": conv_w(ks[4], 128, 128, 3, 3),
        "ds2":   conv_w(ks[5], 128, 64, 1, 1),
        "conv6": conv_w(ks[6], 256, 128, 3, 3),
        "conv7": conv_w(ks[7], 256, 256, 3, 3),
        "ds3":   conv_w(ks[8], 256, 128, 1, 1),
        "conv8": conv_w(ks[9], 512, 256, 3, 3),
        "conv9": conv_w(ks[10], 512, 512, 3, 3),
        "ds4":   conv_w(ks[11], 512, 256, 1, 1),
    }
    for name, c in [("bn1", 64), ("bn2", 64), ("bn3", 64), ("bn4", 128),
                    ("bn5", 128), ("bnds2", 128), ("bn6", 256), ("bn7", 256),
                    ("bnds3", 256), ("bn8", 512), ("bn9", 512), ("bnds4", 512)]:
        p[name + "_g"] = jnp.ones((c,), jnp.float32)   # bn1 affine=False -> 1
        p[name + "_b"] = jnp.zeros((c,), jnp.float32)  # bn1 affine=False -> 0
    return p


def prepare_params(p, input_hw):
    """One-time layout conversion (outside jit): conv weights -> pruned-tap
    bf16 GEMM matrices (halves the HBM weight stream; pruning is exact), BN
    vectors -> (1, C) f32 rows."""
    plan = build_plan(*input_hw)
    q = {}
    for k, v in p.items():
        if v.ndim == 4:
            H, W, kh, kw, s, pad = plan[k]
            taps, _, _ = kept_taps(H, W, kh, kw, s, pad)
            q[k] = conv_to_gemm(v, taps).astype(jnp.bfloat16)
        else:
            q[k] = v.reshape(1, -1)
    return q


# ----------------------------------------------------------------------------
# Model forward (6 pallas_call launches total)
# ----------------------------------------------------------------------------
@jax.jit
def resnet_forward(x_nchw, p):
    x = jnp.transpose(x_nchw, (0, 2, 3, 1)).astype(jnp.float32)  # NCHW -> NHWC

    # ---- stem: conv1 -> bn1 (affine=False) -> relu -> maxpool(2,2), fused --
    patches, (n, h, w) = im2col(x, 7, 7, 2, 3)
    hp, wp = h // 2, w // 2
    K = patches.shape[1]
    # Reorder rows to (hpar, wpar, n, ho, wo) so the in-kernel pool is a max
    # of 4 contiguous row slabs (BN stats are row-order invariant).
    pr = patches.reshape(n, hp, 2, wp, 2, K)
    pr = jnp.transpose(pr, (2, 4, 0, 1, 3, 5)).reshape(n * h * w, K)
    y = _single_block_call(
        _stem_kernel,
        jax.ShapeDtypeStruct((n * hp * wp, 64), jnp.float32),
        pr, p["conv1"], p["bn1_g"], p["bn1_b"])
    x = y.reshape(n, hp, wp, 64)

    # ---- block 1 (64 -> 64, stride 1, identity shortcut) ----
    identity = x.reshape(-1, 64)
    patches, _ = im2col(x, 3, 3, 1, 1)
    y = conv_bn_relu(patches, p["conv2"], p["bn2_g"], p["bn2_b"])
    patches, _ = im2col(y.reshape(n, hp, wp, 64), 3, 3, 1, 1)
    x = conv_bn_add_relu(patches, p["conv3"], p["bn3_g"], p["bn3_b"],
                         identity).reshape(n, hp, wp, 64)

    # ---- block 2 (64 -> 128, stride 2, downsample2) ----
    patches, (n2, h2, w2) = im2col(x, 3, 3, 2, 1)
    y = conv_bn_relu(patches, p["conv4"], p["bn4_g"], p["bn4_b"])
    patches_b, _ = im2col(y.reshape(n2, h2, w2, 128), 3, 3, 1, 1)
    patches_d, _ = im2col(x, 1, 1, 2, 0)                 # 1x1 stride-2 im2col
    x = conv_bn_ds_add_relu(patches_b, p["conv5"], p["bn5_g"], p["bn5_b"],
                            patches_d, p["ds2"], p["bnds2_g"], p["bnds2_b"]
                            ).reshape(n2, h2, w2, 128)

    # ---- blocks 3 + 4 + final torch.sum, fused into ONE kernel ----
    p6, (n3, h3, w3) = im2col(x, 3, 3, 2, 1)             # conv6 patches
    pd3, _ = im2col(x, 1, 1, 2, 0)                       # ds3 patches
    # Spatial collapses to 1x1 after conv6 at this input size, so every
    # remaining conv is a plain GEMM (center tap only) -> single launch.
    assert h3 == 1 and w3 == 1, "fused tail assumes 1x1 spatial after conv6"
    s = _single_block_call(
        _tail_kernel, jax.ShapeDtypeStruct((1, 1), jnp.float32),
        p6, pd3,
        p["conv6"], p["bn6_g"], p["bn6_b"],
        p["conv7"], p["bn7_g"], p["bn7_b"],
        p["ds3"], p["bnds3_g"], p["bnds3_b"],
        p["conv8"], p["bn8_g"], p["bn8_b"],
        p["conv9"], p["bn9_g"], p["bn9_b"],
        p["ds4"], p["bnds4_g"], p["bnds4_b"])
    return s[0, 0]


if __name__ == "__main__":
    key = jax.random.PRNGKey(0)
    k_in, k_p = jax.random.split(key)
    x = jax.random.normal(k_in, (2, 3, 16, 16), jnp.float32)  # NCHW like torch
    params = prepare_params(init_params(k_p), input_hw=(16, 16))
    out = resnet_forward(x, params)
    jax.block_until_ready(out)
    print("KERNEL_OK")
</pallas_src>

<mosaic_0001>
module attributes {stable_mosaic.version = 11 : i64} {
  func.func @_stem_kernel(%arg0: i32, %arg1: memref<128x147xf32, #tpu.memory_space<vmem>>, %arg2: memref<147x64xbf16, #tpu.memory_space<vmem>>, %arg3: memref<1x64xf32, #tpu.memory_space<vmem>>, %arg4: memref<1x64xf32, #tpu.memory_space<vmem>>, %arg5: memref<32x64xf32, #tpu.memory_space<vmem>>) attributes {dimension_semantics = [#tpu.dimension_semantics<arbitrary>], iteration_bounds = array<i64: 1>, scalar_prefetch = 0 : i64, scratch_operands = 0 : i64, tpu.core_type = #tpu.core_type<tc>, window_params = [{pipeline_mode = #tpu.pipeline_mode<synchronous>, transform_indices = @transform_0, window_bounds = array<i64: 128, 147>}, {pipeline_mode = #tpu.pipeline_mode<synchronous>, transform_indices = @transform_1, window_bounds = array<i64: 147, 64>}, {pipeline_mode = #tpu.pipeline_mode<synchronous>, transform_indices = @transform_2, window_bounds = array<i64: 1, 64>}, {pipeline_mode = #tpu.pipeline_mode<synchronous>, transform_indices = @transform_3, window_bounds = array<i64: 1, 64>}, {pipeline_mode = #tpu.pipeline_mode<synchronous>, transform_indices = @transform_4, window_bounds = array<i64: 32, 64>}]} {
    %c0 = arith.constant 0 : index
    %c0_0 = arith.constant 0 : index
    %0 = vector.load %arg1[%c0, %c0_0] : memref<128x147xf32, #tpu.memory_space<vmem>>, vector<128x147xf32>
    %c0_1 = arith.constant 0 : index
    %c0_2 = arith.constant 0 : index
    %1 = vector.load %arg2[%c0_1, %c0_2] : memref<147x64xbf16, #tpu.memory_space<vmem>>, vector<147x64xbf16>
    %2 = arith.extf %1 : vector<147x64xbf16> to vector<147x64xf32>
    %cst = arith.constant dense<0.000000e+00> : vector<128x64xf32>
    %3 = tpu.matmul %0, %2, %cst {dimension_numbers = #tpu.dot_dimension_numbers<[1], [0], [0], [1], [0, 0, 1, 1], [], []>} : vector<128x147xf32>, vector<147x64xf32>, vector<128x64xf32> -> vector<128x64xf32>
    %c0_3 = arith.constant 0 : index
    %c0_4 = arith.constant 0 : index
    %4 = vector.load %arg3[%c0_3, %c0_4] : memref<1x64xf32, #tpu.memory_space<vmem>>, vector<1x64xf32>
    %c0_5 = arith.constant 0 : index
    %c0_6 = arith.constant 0 : index
    %5 = vector.load %arg4[%c0_5, %c0_6] : memref<1x64xf32, #tpu.memory_space<vmem>>, vector<1x64xf32>
    %cst_7 = arith.constant dense<0.000000e+00> : vector<64xf32>
    %6 = vector.multi_reduction <add>, %3, %cst_7 [0] : vector<128x64xf32> to vector<64xf32>
    %7 = vector.shape_cast %6 : vector<64xf32> to vector<1x64xf32>
    %cst_8 = arith.constant 7.812500e-03 : f32
    %8 = vector.broadcast %cst_8 : f32 to vector<1x64xf32>
    %9 = arith.mulf %7, %8 : vector<1x64xf32>
    %10 = vector.broadcast %9 : vector<1x64xf32> to vector<128x64xf32>
    %11 = arith.subf %3, %10 : vector<128x64xf32>
    %12 = arith.mulf %11, %11 : vector<128x64xf32>
    %cst_9 = arith.constant dense<0.000000e+00> : vector<64xf32>
    %13 = vector.multi_reduction <add>, %12, %cst_9 [0] : vector<128x64xf32> to vector<64xf32>
    %14 = vector.shape_cast %13 : vector<64xf32> to vector<1x64xf32>
    %cst_10 = arith.constant 7.812500e-03 : f32
    %15 = vector.broadcast %cst_10 : f32 to vector<1x64xf32>
    %16 = arith.mulf %14, %15 : vector<1x64xf32>
    %cst_11 = arith.constant 9.99999974E-6 : f32
    %17 = vector.broadcast %cst_11 : f32 to vector<1x64xf32>
    %18 = arith.addf %16, %17 : vector<1x64xf32>
    %19 = math.rsqrt %18 : vector<1x64xf32>
    %20 = vector.broadcast %19 : vector<1x64xf32> to vector<128x64xf32>
    %21 = arith.mulf %11, %20 : vector<128x64xf32>
    %22 = vector.broadcast %4 : vector<1x64xf32> to vector<128x64xf32>
    %23 = arith.mulf %21, %22 : vector<128x64xf32>
    %24 = vector.broadcast %5 : vector<1x64xf32> to vector<128x64xf32>
    %25 = arith.addf %23, %24 : vector<128x64xf32>
    %cst_12 = arith.constant 0.000000e+00 : f32
    %26 = vector.broadcast %cst_12 : f32 to vector<128x64xf32>
    %27 = arith.maximumf %25, %26 : vector<128x64xf32>
    %28 = vector.extract_strided_slice %27 {offsets = [0, 0], sizes = [32, 64], strides = [1, 1]} : vector<128x64xf32> to vector<32x64xf32>
    %29 = vector.extract_strided_slice %27 {offsets = [32, 0], sizes = [32, 64], strides = [1, 1]} : vector<128x64xf32> to vector<32x64xf32>
    %30 = arith.maximumf %28, %29 : vector<32x64xf32>
    %31 = vector.extract_strided_slice %27 {offsets = [64, 0], sizes = [32, 64], strides = [1, 1]} : vector<128x64xf32> to vector<32x64xf32>
    %32 = vector.extract_strided_slice %27 {offsets = [96, 0], sizes = [32, 64], strides = [1, 1]} : vector<128x64xf32> to vector<32x64xf32>
    %33 = arith.maximumf %31, %32 : vector<32x64xf32>
    %34 = arith.maximumf %30, %33 : vector<32x64xf32>
    %c0_13 = arith.constant 0 : index
    %c0_14 = arith.constant 0 : index
    %35 = vector.load %arg5[%c0_13, %c0_14] : memref<32x64xf32, #tpu.memory_space<vmem>>, vector<32x64xf32>
    tpu.vector_store %arg5[%c0_13, %c0_14], %34 {strides = array<i32>} : memref<32x64xf32, #tpu.memory_space<vmem>>, vector<32x64xf32>,
    return
  }
  func.func @transform_0(%arg0: i32) -> (i32, i32) {
    %c0_i32 = arith.constant 0 : i32
    %c0_i32_0 = arith.constant 0 : i32
    %c0_i32_1 = arith.constant 0 : i32
    return %c0_i32, %c0_i32_0 : i32, i32
  }
  func.func @transform_1(%arg0: i32) -> (i32, i32) {
    %c0_i32 = arith.constant 0 : i32
    %c0_i32_0 = arith.constant 0 : i32
    %c0_i32_1 = arith.constant 0 : i32
    return %c0_i32, %c0_i32_0 : i32, i32
  }
  func.func @transform_2(%arg0: i32) -> (i32, i32) {
    %c0_i32 = arith.constant 0 : i32
    %c0_i32_0 = arith.constant 0 : i32
    %c0_i32_1 = arith.constant 0 : i32
    return %c0_i32, %c0_i32_0 : i32, i32
  }
  func.func @transform_3(%arg0: i32) -> (i32, i32) {
    %c0_i32 = arith.constant 0 : i32
    %c0_i32_0 = arith.constant 0 : i32
    %c0_i32_1 = arith.constant 0 : i32
    return %c0_i32, %c0_i32_0 : i32, i32
  }
  func.func @transform_4(%arg0: i32) -> (i32, i32) {
    %c0_i32 = arith.constant 0 : i32
    %c0_i32_0 = arith.constant 0 : i32
    %c0_i32_1 = arith.constant 0 : i32
    return %c0_i32, %c0_i32_0 : i32, i32
  }
}

module attributes {stable_mosaic.version = 11 : i64} {
  func.func @_conv_bn_add_relu_kernel(%arg0: i32, %arg1: memref<32x576xf32, #tpu.memory_space<vmem>>, %arg2: memref<576x64xbf16, #tpu.memory_space<vmem>>, %arg3: memref<1x64xf32, #tpu.memory_space<vmem>>, %arg4: memref<1x64xf32, #tpu.memory_space<vmem>>, %arg5: memref<32x64xf32, #tpu.memory_space<vmem>>, %arg6: memref<32x64xf32, #tpu.memory_space<vmem>>) attributes {dimension_semantics = [#tpu.dimension_semantics<arbitrary>], iteration_bounds = array<i64: 1>, scalar_prefetch = 0 : i64, scratch_operands = 0 : i64, tpu.core_type = #tpu.core_type<tc>, window_params = [{pipeline_mode = #tpu.pipeline_mode<synchronous>, transform_indices = @transform_0, window_bounds = array<i64: 32, 576>}, {pipeline_mode = #tpu.pipeline_mode<synchronous>, transform_indices = @transform_1, window_bounds = array<i64: 576, 64>}, {pipeline_mode = #tpu.pipeline_mode<synchronous>, transform_indices = @transform_2, window_bounds = array<i64: 1, 64>}, {pipeline_mode = #tpu.pipeline_mode<synchronous>, transform_indices = @transform_3, window_bounds = array<i64: 1, 64>}, {pipeline_mode = #tpu.pipeline_mode<synchronous>, transform_indices = @transform_4, window_bounds = array<i64: 32, 64>}, {pipeline_mode = #tpu.pipeline_mode<synchronous>, transform_indices = @transform_5, window_bounds = array<i64: 32, 64>}]} {
    %c0 = arith.constant 0 : index
    %c0_0 = arith.constant 0 : index
    %0 = vector.load %arg1[%c0, %c0_0] : memref<32x576xf32, #tpu.memory_space<vmem>>, vector<32x576xf32>
    %c0_1 = arith.constant 0 : index
    %c0_2 = arith.constant 0 : index
    %1 = vector.load %arg2[%c0_1, %c0_2] : memref<576x64xbf16, #tpu.memory_space<vmem>>, vector<576x64xbf16>
    %2 = arith.extf %1 : vector<576x64xbf16> to vector<576x64xf32>
    %cst = arith.constant dense<0.000000e+00> : vector<32x64xf32>
    %3 = tpu.matmul %0, %2, %cst {dimension_numbers = #tpu.dot_dimension_numbers<[1], [0], [0], [1], [0, 0, 1, 1], [], []>} : vector<32x576xf32>, vector<576x64xf32>, vector<32x64xf32> -> vector<32x64xf32>
    %c0_3 = arith.constant 0 : index
    %c0_4 = arith.constant 0 : index
    %4 = vector.load %arg3[%c0_3, %c0_4] : memref<1x64xf32, #tpu.memory_space<vmem>>, vector<1x64xf32>
    %c0_5 = arith.constant 0 : index
    %c0_6 = arith.constant 0 : index
    %5 = vector.load %arg4[%c0_5, %c0_6] : memref<1x64xf32, #tpu.memory_space<vmem>>, vector<1x64xf32>
    %cst_7 = arith.constant dense<0.000000e+00> : vector<64xf32>
    %6 = vector.multi_reduction <add>, %3, %cst_7 [0] : vector<32x64xf32> to vector<64xf32>
    %7 = vector.shape_cast %6 : vector<64xf32> to vector<1x64xf32>
    %cst_8 = arith.constant 3.125000e-02 : f32
    %8 = vector.broadcast %cst_8 : f32 to vector<1x64xf32>
    %9 = arith.mulf %7, %8 : vector<1x64xf32>
    %10 = vector.broadcast %9 : vector<1x64xf32> to vector<32x64xf32>
    %11 = arith.subf %3, %10 : vector<32x64xf32>
    %12 = arith.mulf %11, %11 : vector<32x64xf32>
    %cst_9 = arith.constant dense<0.000000e+00> : vector<64xf32>
    %13 = vector.multi_reduction <add>, %12, %cst_9 [0] : vector<32x64xf32> to vector<64xf32>
    %14 = vector.shape_cast %13 : vector<64xf32> to vector<1x64xf32>
    %cst_10 = arith.constant 3.125000e-02 : f32
    %15 = vector.broadcast %cst_10 : f32 to vector<1x64xf32>
    %16 = arith.mulf %14, %15 : vector<1x64xf32>
    %cst_11 = arith.constant 9.99999974E-6 : f32
    %17 = vector.broadcast %cst_11 : f32 to vector<1x64xf32>
    %18 = arith.addf %16, %17 : vector<1x64xf32>
    %19 = math.rsqrt %18 : vector<1x64xf32>
    %20 = vector.broadcast %19 : vector<1x64xf32> to vector<32x64xf32>
    %21 = arith.mulf %11, %20 : vector<32x64xf32>
    %22 = vector.broadcast %4 : vector<1x64xf32> to vector<32x64xf32>
    %23 = arith.mulf %21, %22 : vector<32x64xf32>
    %24 = vector.broadcast %5 : vector<1x64xf32> to vector<32x64xf32>
    %25 = arith.addf %23, %24 : vector<32x64xf32>
    %c0_12 = arith.constant 0 : index
    %c0_13 = arith.constant 0 : index
    %26 = vector.load %arg5[%c0_12, %c0_13] : memref<32x64xf32, #tpu.memory_space<vmem>>, vector<32x64xf32>
    %27 = arith.addf %25, %26 : vector<32x64xf32>
    %cst_14 = arith.constant 0.000000e+00 : f32
    %28 = vector.broadcast %cst_14 : f32 to vector<32x64xf32>
    %29 = arith.maximumf %27, %28 : vector<32x64xf32>
    %c0_15 = arith.constant 0 : index
    %c0_16 = arith.constant 0 : index
    %30 = vector.load %arg6[%c0_15, %c0_16] : memref<32x64xf32, #tpu.memory_space<vmem>>, vector<32x64xf32>
    tpu.vector_store %arg6[%c0_15, %c0_16], %29 {strides = array<i32>} : memref<32x64xf32, #tpu.memory_space<vmem>>, vector<32x64xf32>,
    return
  }
  func.func @transform_0(%arg0: i32) -> (i32, i32) {
    %c0_i32 = arith.constant 0 : i32
    %c0_i32_0 = arith.constant 0 : i32
    %c0_i32_1 = arith.constant 0 : i32
    return %c0_i32, %c0_i32_0 : i32, i32
  }
  func.func @transform_1(%arg0: i32) -> (i32, i32) {
    %c0_i32 = arith.constant 0 : i32
    %c0_i32_0 = arith.constant 0 : i32
    %c0_i32_1 = arith.constant 0 : i32
    return %c0_i32, %c0_i32_0 : i32, i32
  }
  func.func @transform_2(%arg0: i32) -> (i32, i32) {
    %c0_i32 = arith.constant 0 : i32
    %c0_i32_0 = arith.constant 0 : i32
    %c0_i32_1 = arith.constant 0 : i32
    return %c0_i32, %c0_i32_0 : i32, i32
  }
  func.func @transform_3(%arg0: i32) -> (i32, i32) {
    %c0_i32 = arith.constant 0 : i32
    %c0_i32_0 = arith.constant 0 : i32
    %c0_i32_1 = arith.constant 0 : i32
    return %c0_i32, %c0_i32_0 : i32, i32
  }
  func.func @transform_4(%arg0: i32) -> (i32, i32) {
    %c0_i32 = arith.constant 0 : i32
    %c0_i32_0 = arith.constant 0 : i32
    %c0_i32_1 = arith.constant 0 : i32
    return %c0_i32, %c0_i32_0 : i32, i32
  }
  func.func @transform_5(%arg0: i32) -> (i32, i32) {
    %c0_i32 = arith.constant 0 : i32
    %c0_i32_0 = arith.constant 0 : i32
    %c0_i32_1 = arith.constant 0 : i32
    return %c0_i32, %c0_i32_0 : i32, i32
  }
}

module attributes {stable_mosaic.version = 11 : i64} {
  func.func @_conv_bn_relu_kernel(%arg0: i32, %arg1: memref<32x576xf32, #tpu.memory_space<vmem>>, %arg2: memref<576x64xbf16, #tpu.memory_space<vmem>>, %arg3: memref<1x64xf32, #tpu.memory_space<vmem>>, %arg4: memref<1x64xf32, #tpu.memory_space<vmem>>, %arg5: memref<32x64xf32, #tpu.memory_space<vmem>>) attributes {dimension_semantics = [#tpu.dimension_semantics<arbitrary>], iteration_bounds = array<i64: 1>, scalar_prefetch = 0 : i64, scratch_operands = 0 : i64, tpu.core_type = #tpu.core_type<tc>, window_params = [{pipeline_mode = #tpu.pipeline_mode<synchronous>, transform_indices = @transform_0, window_bounds = array<i64: 32, 576>}, {pipeline_mode = #tpu.pipeline_mode<synchronous>, transform_indices = @transform_1, window_bounds = array<i64: 576, 64>}, {pipeline_mode = #tpu.pipeline_mode<synchronous>, transform_indices = @transform_2, window_bounds = array<i64: 1, 64>}, {pipeline_mode = #tpu.pipeline_mode<synchronous>, transform_indices = @transform_3, window_bounds = array<i64: 1, 64>}, {pipeline_mode = #tpu.pipeline_mode<synchronous>, transform_indices = @transform_4, window_bounds = array<i64: 32, 64>}]} {
    %c0 = arith.constant 0 : index
    %c0_0 = arith.constant 0 : index
    %0 = vector.load %arg1[%c0, %c0_0] : memref<32x576xf32, #tpu.memory_space<vmem>>, vector<32x576xf32>
    %c0_1 = arith.constant 0 : index
    %c0_2 = arith.constant 0 : index
    %1 = vector.load %arg2[%c0_1, %c0_2] : memref<576x64xbf16, #tpu.memory_space<vmem>>, vector<576x64xbf16>
    %2 = arith.extf %1 : vector<576x64xbf16> to vector<576x64xf32>
    %cst = arith.constant dense<0.000000e+00> : vector<32x64xf32>
    %3 = tpu.matmul %0, %2, %cst {dimension_numbers = #tpu.dot_dimension_numbers<[1], [0], [0], [1], [0, 0, 1, 1], [], []>} : vector<32x576xf32>, vector<576x64xf32>, vector<32x64xf32> -> vector<32x64xf32>
    %c0_3 = arith.constant 0 : index
    %c0_4 = arith.constant 0 : index
    %4 = vector.load %arg3[%c0_3, %c0_4] : memref<1x64xf32, #tpu.memory_space<vmem>>, vector<1x64xf32>
    %c0_5 = arith.constant 0 : index
    %c0_6 = arith.constant 0 : index
    %5 = vector.load %arg4[%c0_5, %c0_6] : memref<1x64xf32, #tpu.memory_space<vmem>>, vector<1x64xf32>
    %cst_7 = arith.constant dense<0.000000e+00> : vector<64xf32>
    %6 = vector.multi_reduction <add>, %3, %cst_7 [0] : vector<32x64xf32> to vector<64xf32>
    %7 = vector.shape_cast %6 : vector<64xf32> to vector<1x64xf32>
    %cst_8 = arith.constant 3.125000e-02 : f32
    %8 = vector.broadcast %cst_8 : f32 to vector<1x64xf32>
    %9 = arith.mulf %7, %8 : vector<1x64xf32>
    %10 = vector.broadcast %9 : vector<1x64xf32> to vector<32x64xf32>
    %11 = arith.subf %3, %10 : vector<32x64xf32>
    %12 = arith.mulf %11, %11 : vector<32x64xf32>
    %cst_9 = arith.constant dense<0.000000e+00> : vector<64xf32>
    %13 = vector.multi_reduction <add>, %12, %cst_9 [0] : vector<32x64xf32> to vector<64xf32>
    %14 = vector.shape_cast %13 : vector<64xf32> to vector<1x64xf32>
    %cst_10 = arith.constant 3.125000e-02 : f32
    %15 = vector.broadcast %cst_10 : f32 to vector<1x64xf32>
    %16 = arith.mulf %14, %15 : vector<1x64xf32>
    %cst_11 = arith.constant 9.99999974E-6 : f32
    %17 = vector.broadcast %cst_11 : f32 to vector<1x64xf32>
    %18 = arith.addf %16, %17 : vector<1x64xf32>
    %19 = math.rsqrt %18 : vector<1x64xf32>
    %20 = vector.broadcast %19 : vector<1x64xf32> to vector<32x64xf32>
    %21 = arith.mulf %11, %20 : vector<32x64xf32>
    %22 = vector.broadcast %4 : vector<1x64xf32> to vector<32x64xf32>
    %23 = arith.mulf %21, %22 : vector<32x64xf32>
    %24 = vector.broadcast %5 : vector<1x64xf32> to vector<32x64xf32>
    %25 = arith.addf %23, %24 : vector<32x64xf32>
    %cst_12 = arith.constant 0.000000e+00 : f32
    %26 = vector.broadcast %cst_12 : f32 to vector<32x64xf32>
    %27 = arith.maximumf %25, %26 : vector<32x64xf32>
    %c0_13 = arith.constant 0 : index
    %c0_14 = arith.constant 0 : index
    %28 = vector.load %arg5[%c0_13, %c0_14] : memref<32x64xf32, #tpu.memory_space<vmem>>, vector<32x64xf32>
    tpu.vector_store %arg5[%c0_13, %c0_14], %27 {strides = array<i32>} : memref<32x64xf32, #tpu.memory_space<vmem>>, vector<32x64xf32>,
    return
  }
  func.func @transform_0(%arg0: i32) -> (i32, i32) {
    %c0_i32 = arith.constant 0 : i32
    %c0_i32_0 = arith.constant 0 : i32
    %c0_i32_1 = arith.constant 0 : i32
    return %c0_i32, %c0_i32_0 : i32, i32
  }
  func.func @transform_1(%arg0: i32) -> (i32, i32) {
    %c0_i32 = arith.constant 0 : i32
    %c0_i32_0 = arith.constant 0 : i32
    %c0_i32_1 = arith.constant 0 : i32
    return %c0_i32, %c0_i32_0 : i32, i32
  }
  func.func @transform_2(%arg0: i32) -> (i32, i32) {
    %c0_i32 = arith.constant 0 : i32
    %c0_i32_0 = arith.constant 0 : i32
    %c0_i32_1 = arith.constant 0 : i32
    return %c0_i32, %c0_i32_0 : i32, i32
  }
  func.func @transform_3(%arg0: i32) -> (i32, i32) {
    %c0_i32 = arith.constant 0 : i32
    %c0_i32_0 = arith.constant 0 : i32
    %c0_i32_1 = arith.constant 0 : i32
    return %c0_i32, %c0_i32_0 : i32, i32
  }
  func.func @transform_4(%arg0: i32) -> (i32, i32) {
    %c0_i32 = arith.constant 0 : i32
    %c0_i32_0 = arith.constant 0 : i32
    %c0_i32_1 = arith.constant 0 : i32
    return %c0_i32, %c0_i32_0 : i32, i32
  }
}

module attributes {stable_mosaic.version = 11 : i64} {
  func.func @_conv_bn_relu_kernel(%arg0: i32, %arg1: memref<8x576xf32, #tpu.memory_space<vmem>>, %arg2: memref<576x128xbf16, #tpu.memory_space<vmem>>, %arg3: memref<1x128xf32, #tpu.memory_space<vmem>>, %arg4: memref<1x128xf32, #tpu.memory_space<vmem>>, %arg5: memref<8x128xf32, #tpu.memory_space<vmem>>) attributes {dimension_semantics = [#tpu.dimension_semantics<arbitrary>], iteration_bounds = array<i64: 1>, scalar_prefetch = 0 : i64, scratch_operands = 0 : i64, tpu.core_type = #tpu.core_type<tc>, window_params = [{pipeline_mode = #tpu.pipeline_mode<synchronous>, transform_indices = @transform_0, window_bounds = array<i64: 8, 576>}, {pipeline_mode = #tpu.pipeline_mode<synchronous>, transform_indices = @transform_1, window_bounds = array<i64: 576, 128>}, {pipeline_mode = #tpu.pipeline_mode<synchronous>, transform_indices = @transform_2, window_bounds = array<i64: 1, 128>}, {pipeline_mode = #tpu.pipeline_mode<synchronous>, transform_indices = @transform_3, window_bounds = array<i64: 1, 128>}, {pipeline_mode = #tpu.pipeline_mode<synchronous>, transform_indices = @transform_4, window_bounds = array<i64: 8, 128>}]} {
    %c0 = arith.constant 0 : index
    %c0_0 = arith.constant 0 : index
    %0 = vector.load %arg1[%c0, %c0_0] : memref<8x576xf32, #tpu.memory_space<vmem>>, vector<8x576xf32>
    %c0_1 = arith.constant 0 : index
    %c0_2 = arith.constant 0 : index
    %1 = vector.load %arg2[%c0_1, %c0_2] : memref<576x128xbf16, #tpu.memory_space<vmem>>, vector<576x128xbf16>
    %2 = arith.extf %1 : vector<576x128xbf16> to vector<576x128xf32>
    %cst = arith.constant dense<0.000000e+00> : vector<8x128xf32>
    %3 = tpu.matmul %0, %2, %cst {dimension_numbers = #tpu.dot_dimension_numbers<[1], [0], [0], [1], [0, 0, 1, 1], [], []>} : vector<8x576xf32>, vector<576x128xf32>, vector<8x128xf32> -> vector<8x128xf32>
    %c0_3 = arith.constant 0 : index
    %c0_4 = arith.constant 0 : index
    %4 = vector.load %arg3[%c0_3, %c0_4] : memref<1x128xf32, #tpu.memory_space<vmem>>, vector<1x128xf32>
    %c0_5 = arith.constant 0 : index
    %c0_6 = arith.constant 0 : index
    %5 = vector.load %arg4[%c0_5, %c0_6] : memref<1x128xf32, #tpu.memory_space<vmem>>, vector<1x128xf32>
    %cst_7 = arith.constant dense<0.000000e+00> : vector<128xf32>
    %6 = vector.multi_reduction <add>, %3, %cst_7 [0] : vector<8x128xf32> to vector<128xf32>
    %7 = vector.shape_cast %6 : vector<128xf32> to vector<1x128xf32>
    %cst_8 = arith.constant 1.250000e-01 : f32
    %8 = vector.broadcast %cst_8 : f32 to vector<1x128xf32>
    %9 = arith.mulf %7, %8 : vector<1x128xf32>
    %10 = vector.broadcast %9 : vector<1x128xf32> to vector<8x128xf32>
    %11 = arith.subf %3, %10 : vector<8x128xf32>
    %12 = arith.mulf %11, %11 : vector<8x128xf32>
    %cst_9 = arith.constant dense<0.000000e+00> : vector<128xf32>
    %13 = vector.multi_reduction <add>, %12, %cst_9 [0] : vector<8x128xf32> to vector<128xf32>
    %14 = vector.shape_cast %13 : vector<128xf32> to vector<1x128xf32>
    %cst_10 = arith.constant 1.250000e-01 : f32
    %15 = vector.broadcast %cst_10 : f32 to vector<1x128xf32>
    %16 = arith.mulf %14, %15 : vector<1x128xf32>
    %cst_11 = arith.constant 9.99999974E-6 : f32
    %17 = vector.broadcast %cst_11 : f32 to vector<1x128xf32>
    %18 = arith.addf %16, %17 : vector<1x128xf32>
    %19 = math.rsqrt %18 : vector<1x128xf32>
    %20 = vector.broadcast %19 : vector<1x128xf32> to vector<8x128xf32>
    %21 = arith.mulf %11, %20 : vector<8x128xf32>
    %22 = vector.broadcast %4 : vector<1x128xf32> to vector<8x128xf32>
    %23 = arith.mulf %21, %22 : vector<8x128xf32>
    %24 = vector.broadcast %5 : vector<1x128xf32> to vector<8x128xf32>
    %25 = arith.addf %23, %24 : vector<8x128xf32>
    %cst_12 = arith.constant 0.000000e+00 : f32
    %26 = vector.broadcast %cst_12 : f32 to vector<8x128xf32>
    %27 = arith.maximumf %25, %26 : vector<8x128xf32>
    %c0_13 = arith.constant 0 : index
    %c0_14 = arith.constant 0 : index
    %28 = vector.load %arg5[%c0_13, %c0_14] : memref<8x128xf32, #tpu.memory_space<vmem>>, vector<8x128xf32>
    tpu.vector_store %arg5[%c0_13, %c0_14], %27 {strides = array<i32>} : memref<8x128xf32, #tpu.memory_space<vmem>>, vector<8x128xf32>,
    return
  }
  func.func @transform_0(%arg0: i32) -> (i32, i32) {
    %c0_i32 = arith.constant 0 : i32
    %c0_i32_0 = arith.constant 0 : i32
    %c0_i32_1 = arith.constant 0 : i32
    return %c0_i32, %c0_i32_0 : i32, i32
  }
  func.func @transform_1(%arg0: i32) -> (i32, i32) {
    %c0_i32 = arith.constant 0 : i32
    %c0_i32_0 = arith.constant 0 : i32
    %c0_i32_1 = arith.constant 0 : i32
    return %c0_i32, %c0_i32_0 : i32, i32
  }
  func.func @transform_2(%arg0: i32) -> (i32, i32) {
    %c0_i32 = arith.constant 0 : i32
    %c0_i32_0 = arith.constant 0 : i32
    %c0_i32_1 = arith.constant 0 : i32
    return %c0_i32, %c0_i32_0 : i32, i32
  }
  func.func @transform_3(%arg0: i32) -> (i32, i32) {
    %c0_i32 = arith.constant 0 : i32
    %c0_i32_0 = arith.constant 0 : i32
    %c0_i32_1 = arith.constant 0 : i32
    return %c0_i32, %c0_i32_0 : i32, i32
  }
  func.func @transform_4(%arg0: i32) -> (i32, i32) {
    %c0_i32 = arith.constant 0 : i32
    %c0_i32_0 = arith.constant 0 : i32
    %c0_i32_1 = arith.constant 0 : i32
    return %c0_i32, %c0_i32_0 : i32, i32
  }
}

module attributes {stable_mosaic.version = 11 : i64} {
  func.func @_conv_bn_ds_add_relu_kernel(%arg0: i32, %arg1: memref<8x1152xf32, #tpu.memory_space<vmem>>, %arg2: memref<1152x128xbf16, #tpu.memory_space<vmem>>, %arg3: memref<1x128xf32, #tpu.memory_space<vmem>>, %arg4: memref<1x128xf32, #tpu.memory_space<vmem>>, %arg5: memref<8x64xf32, #tpu.memory_space<vmem>>, %arg6: memref<64x128xbf16, #tpu.memory_space<vmem>>, %arg7: memref<1x128xf32, #tpu.memory_space<vmem>>, %arg8: memref<1x128xf32, #tpu.memory_space<vmem>>, %arg9: memref<8x128xf32, #tpu.memory_space<vmem>>) attributes {dimension_semantics = [#tpu.dimension_semantics<arbitrary>], iteration_bounds = array<i64: 1>, scalar_prefetch = 0 : i64, scratch_operands = 0 : i64, tpu.core_type = #tpu.core_type<tc>, window_params = [{pipeline_mode = #tpu.pipeline_mode<synchronous>, transform_indices = @transform_0, window_bounds = array<i64: 8, 1152>}, {pipeline_mode = #tpu.pipeline_mode<synchronous>, transform_indices = @transform_1, window_bounds = array<i64: 1152, 128>}, {pipeline_mode = #tpu.pipeline_mode<synchronous>, transform_indices = @transform_2, window_bounds = array<i64: 1, 128>}, {pipeline_mode = #tpu.pipeline_mode<synchronous>, transform_indices = @transform_3, window_bounds = array<i64: 1, 128>}, {pipeline_mode = #tpu.pipeline_mode<synchronous>, transform_indices = @transform_4, window_bounds = array<i64: 8, 64>}, {pipeline_mode = #tpu.pipeline_mode<synchronous>, transform_indices = @transform_5, window_bounds = array<i64: 64, 128>}, {pipeline_mode = #tpu.pipeline_mode<synchronous>, transform_indices = @transform_6, window_bounds = array<i64: 1, 128>}, {pipeline_mode = #tpu.pipeline_mode<synchronous>, transform_indices = @transform_7, window_bounds = array<i64: 1, 128>}, {pipeline_mode = #tpu.pipeline_mode<synchronous>, transform_indices = @transform_8, window_bounds = array<i64: 8, 128>}]} {
    %c0 = arith.constant 0 : index
    %c0_0 = arith.constant 0 : index
    %0 = vector.load %arg1[%c0, %c0_0] : memref<8x1152xf32, #tpu.memory_space<vmem>>, vector<8x1152xf32>
    %c0_1 = arith.constant 0 : index
    %c0_2 = arith.constant 0 : index
    %1 = vector.load %arg2[%c0_1, %c0_2] : memref<1152x128xbf16, #tpu.memory_space<vmem>>, vector<1152x128xbf16>
    %2 = arith.extf %1 : vector<1152x128xbf16> to vector<1152x128xf32>
    %cst = arith.constant dense<0.000000e+00> : vector<8x128xf32>
    %3 = tpu.matmul %0, %2, %cst {dimension_numbers = #tpu.dot_dimension_numbers<[1], [0], [0], [1], [0, 0, 1, 1], [], []>} : vector<8x1152xf32>, vector<1152x128xf32>, vector<8x128xf32> -> vector<8x128xf32>
    %c0_3 = arith.constant 0 : index
    %c0_4 = arith.constant 0 : index
    %4 = vector.load %arg3[%c0_3, %c0_4] : memref<1x128xf32, #tpu.memory_space<vmem>>, vector<1x128xf32>
    %c0_5 = arith.constant 0 : index
    %c0_6 = arith.constant 0 : index
    %5 = vector.load %arg4[%c0_5, %c0_6] : memref<1x128xf32, #tpu.memory_space<vmem>>, vector<1x128xf32>
    %cst_7 = arith.constant dense<0.000000e+00> : vector<128xf32>
    %6 = vector.multi_reduction <add>, %3, %cst_7 [0] : vector<8x128xf32> to vector<128xf32>
    %7 = vector.shape_cast %6 : vector<128xf32> to vector<1x128xf32>
    %cst_8 = arith.constant 1.250000e-01 : f32
    %8 = vector.broadcast %cst_8 : f32 to vector<1x128xf32>
    %9 = arith.mulf %7, %8 : vector<1x128xf32>
    %10 = vector.broadcast %9 : vector<1x128xf32> to vector<8x128xf32>
    %11 = arith.subf %3, %10 : vector<8x128xf32>
    %12 = arith.mulf %11, %11 : vector<8x128xf32>
    %cst_9 = arith.constant dense<0.000000e+00> : vector<128xf32>
    %13 = vector.multi_reduction <add>, %12, %cst_9 [0] : vector<8x128xf32> to vector<128xf32>
    %14 = vector.shape_cast %13 : vector<128xf32> to vector<1x128xf32>
    %cst_10 = arith.constant 1.250000e-01 : f32
    %15 = vector.broadcast %cst_10 : f32 to vector<1x128xf32>
    %16 = arith.mulf %14, %15 : vector<1x128xf32>
    %cst_11 = arith.constant 9.99999974E-6 : f32
    %17 = vector.broadcast %cst_11 : f32 to vector<1x128xf32>
    %18 = arith.addf %16, %17 : vector<1x128xf32>
    %19 = math.rsqrt %18 : vector<1x128xf32>
    %20 = vector.broadcast %19 : vector<1x128xf32> to vector<8x128xf32>
    %21 = arith.mulf %11, %20 : vector<8x128xf32>
    %22 = vector.broadcast %4 : vector<1x128xf32> to vector<8x128xf32>
    %23 = arith.mulf %21, %22 : vector<8x128xf32>
    %24 = vector.broadcast %5 : vector<1x128xf32> to vector<8x128xf32>
    %25 = arith.addf %23, %24 : vector<8x128xf32>
    %c0_12 = arith.constant 0 : index
    %c0_13 = arith.constant 0 : index
    %26 = vector.load %arg5[%c0_12, %c0_13] : memref<8x64xf32, #tpu.memory_space<vmem>>, vector<8x64xf32>
    %c0_14 = arith.constant 0 : index
    %c0_15 = arith.constant 0 : index
    %27 = vector.load %arg6[%c0_14, %c0_15] : memref<64x128xbf16, #tpu.memory_space<vmem>>, vector<64x128xbf16>
    %28 = arith.extf %27 : vector<64x128xbf16> to vector<64x128xf32>
    %cst_16 = arith.constant dense<0.000000e+00> : vector<8x128xf32>
    %29 = tpu.matmul %26, %28, %cst_16 {dimension_numbers = #tpu.dot_dimension_numbers<[1], [0], [0], [1], [0, 0, 1, 1], [], []>} : vector<8x64xf32>, vector<64x128xf32>, vector<8x128xf32> -> vector<8x128xf32>
    %c0_17 = arith.constant 0 : index
    %c0_18 = arith.constant 0 : index
    %30 = vector.load %arg7[%c0_17, %c0_18] : memref<1x128xf32, #tpu.memory_space<vmem>>, vector<1x128xf32>
    %c0_19 = arith.constant 0 : index
    %c0_20 = arith.constant 0 : index
    %31 = vector.load %arg8[%c0_19, %c0_20] : memref<1x128xf32, #tpu.memory_space<vmem>>, vector<1x128xf32>
    %cst_21 = arith.constant dense<0.000000e+00> : vector<128xf32>
    %32 = vector.multi_reduction <add>, %29, %cst_21 [0] : vector<8x128xf32> to vector<128xf32>
    %33 = vector.shape_cast %32 : vector<128xf32> to vector<1x128xf32>
    %cst_22 = arith.constant 1.250000e-01 : f32
    %34 = vector.broadcast %cst_22 : f32 to vector<1x128xf32>
    %35 = arith.mulf %33, %34 : vector<1x128xf32>
    %36 = vector.broadcast %35 : vector<1x128xf32> to vector<8x128xf32>
    %37 = arith.subf %29, %36 : vector<8x128xf32>
    %38 = arith.mulf %37, %37 : vector<8x128xf32>
    %cst_23 = arith.constant dense<0.000000e+00> : vector<128xf32>
    %39 = vector.multi_reduction <add>, %38, %cst_23 [0] : vector<8x128xf32> to vector<128xf32>
    %40 = vector.shape_cast %39 : vector<128xf32> to vector<1x128xf32>
    %cst_24 = arith.constant 1.250000e-01 : f32
    %41 = vector.broadcast %cst_24 : f32 to vector<1x128xf32>
    %42 = arith.mulf %40, %41 : vector<1x128xf32>
    %cst_25 = arith.constant 9.99999974E-6 : f32
    %43 = vector.broadcast %cst_25 : f32 to vector<1x128xf32>
    %44 = arith.addf %42, %43 : vector<1x128xf32>
    %45 = math.rsqrt %44 : vector<1x128xf32>
    %46 = vector.broadcast %45 : vector<1x128xf32> to vector<8x128xf32>
    %47 = arith.mulf %37, %46 : vector<8x128xf32>
    %48 = vector.broadcast %30 : vector<1x128xf32> to vector<8x128xf32>
    %49 = arith.mulf %47, %48 : vector<8x128xf32>
    %50 = vector.broadcast %31 : vector<1x128xf32> to vector<8x128xf32>
    %51 = arith.addf %49, %50 : vector<8x128xf32>
    %52 = arith.addf %25, %51 : vector<8x128xf32>
    %cst_26 = arith.constant 0.000000e+00 : f32
    %53 = vector.broadcast %cst_26 : f32 to vector<8x128xf32>
    %54 = arith.maximumf %52, %53 : vector<8x128xf32>
    %c0_27 = arith.constant 0 : index
    %c0_28 = arith.constant 0 : index
    %55 = vector.load %arg9[%c0_27, %c0_28] : memref<8x128xf32, #tpu.memory_space<vmem>>, vector<8x128xf32>
    tpu.vector_store %arg9[%c0_27, %c0_28], %54 {strides = array<i32>} : memref<8x128xf32, #tpu.memory_space<vmem>>, vector<8x128xf32>,
    return
  }
  func.func @transform_0(%arg0: i32) -> (i32, i32) {
    %c0_i32 = arith.constant 0 : i32
    %c0_i32_0 = arith.constant 0 : i32
    %c0_i32_1 = arith.constant 0 : i32
    return %c0_i32, %c0_i32_0 : i32, i32
  }
  func.func @transform_1(%arg0: i32) -> (i32, i32) {
    %c0_i32 = arith.constant 0 : i32
    %c0_i32_0 = arith.constant 0 : i32
    %c0_i32_1 = arith.constant 0 : i32
    return %c0_i32, %c0_i32_0 : i32, i32
  }
  func.func @transform_2(%arg0: i32) -> (i32, i32) {
    %c0_i32 = arith.constant 0 : i32
    %c0_i32_0 = arith.constant 0 : i32
    %c0_i32_1 = arith.constant 0 : i32
    return %c0_i32, %c0_i32_0 : i32, i32
  }
  func.func @transform_3(%arg0: i32) -> (i32, i32) {
    %c0_i32 = arith.constant 0 : i32
    %c0_i32_0 = arith.constant 0 : i32
    %c0_i32_1 = arith.constant 0 : i32
    return %c0_i32, %c0_i32_0 : i32, i32
  }
  func.func @transform_4(%arg0: i32) -> (i32, i32) {
    %c0_i32 = arith.constant 0 : i32
    %c0_i32_0 = arith.constant 0 : i32
    %c0_i32_1 = arith.constant 0 : i32
    return %c0_i32, %c0_i32_0 : i32, i32
  }
  func.func @transform_5(%arg0: i32) -> (i32, i32) {
    %c0_i32 = arith.constant 0 : i32
    %c0_i32_0 = arith.constant 0 : i32
    %c0_i32_1 = arith.constant 0 : i32
    return %c0_i32, %c0_i32_0 : i32, i32
  }
  func.func @transform_6(%arg0: i32) -> (i32, i32) {
    %c0_i32 = arith.constant 0 : i32
    %c0_i32_0 = arith.constant 0 : i32
    %c0_i32_1 = arith.constant 0 : i32
    return %c0_i32, %c0_i32_0 : i32, i32
  }
  func.func @transform_7(%arg0: i32) -> (i32, i32) {
    %c0_i32 = arith.constant 0 : i32
    %c0_i32_0 = arith.constant 0 : i32
    %c0_i32_1 = arith.constant 0 : i32
    return %c0_i32, %c0_i32_0 : i32, i32
  }
  func.func @transform_8(%arg0: i32) -> (i32, i32) {
    %c0_i32 = arith.constant 0 : i32
    %c0_i32_0 = arith.constant 0 : i32
    %c0_i32_1 = arith.constant 0 : i32
    return %c0_i32, %c0_i32_0 : i32, i32
  }
}

module attributes {stable_mosaic.version = 11 : i64} {
  func.func @_tail_kernel(%arg0: i32, %arg1: memref<2x512xf32, #tpu.memory_space<vmem>>, %arg2: memref<2x128xf32, #tpu.memory_space<vmem>>, %arg3: memref<512x256xbf16, #tpu.memory_space<vmem>>, %arg4: memref<1x256xf32, #tpu.memory_space<vmem>>, %arg5: memref<1x256xf32, #tpu.memory_space<vmem>>, %arg6: memref<256x256xbf16, #tpu.memory_space<vmem>>, %arg7: memref<1x256xf32, #tpu.memory_space<vmem>>, %arg8: memref<1x256xf32, #tpu.memory_space<vmem>>, %arg9: memref<128x256xbf16, #tpu.memory_space<vmem>>, %arg10: memref<1x256xf32, #tpu.memory_space<vmem>>, %arg11: memref<1x256xf32, #tpu.memory_space<vmem>>, %arg12: memref<256x512xbf16, #tpu.memory_space<vmem>>, %arg13: memref<1x512xf32, #tpu.memory_space<vmem>>, %arg14: memref<1x512xf32, #tpu.memory_space<vmem>>, %arg15: memref<512x512xbf16, #tpu.memory_space<vmem>>, %arg16: memref<1x512xf32, #tpu.memory_space<vmem>>, %arg17: memref<1x512xf32, #tpu.memory_space<vmem>>, %arg18: memref<256x512xbf16, #tpu.memory_space<vmem>>, %arg19: memref<1x512xf32, #tpu.memory_space<vmem>>, %arg20: memref<1x512xf32, #tpu.memory_space<vmem>>, %arg21: memref<1x1xf32, #tpu.memory_space<vmem>>) attributes {dimension_semantics = [#tpu.dimension_semantics<arbitrary>], iteration_bounds = array<i64: 1>, scalar_prefetch = 0 : i64, scratch_operands = 0 : i64, tpu.core_type = #tpu.core_type<tc>, window_params = [{pipeline_mode = #tpu.pipeline_mode<synchronous>, transform_indices = @transform_0, window_bounds = array<i64: 2, 512>}, {pipeline_mode = #tpu.pipeline_mode<synchronous>, transform_indices = @transform_1, window_bounds = array<i64: 2, 128>}, {pipeline_mode = #tpu.pipeline_mode<synchronous>, transform_indices = @transform_2, window_bounds = array<i64: 512, 256>}, {pipeline_mode = #tpu.pipeline_mode<synchronous>, transform_indices = @transform_3, window_bounds = array<i64: 1, 256>}, {pipeline_mode = #tpu.pipeline_mode<synchronous>, transform_indices = @transform_4, window_bounds = array<i64: 1, 256>}, {pipeline_mode = #tpu.pipeline_mode<synchronous>, transform_indices = @transform_5, window_bounds = array<i64: 256, 256>}, {pipeline_mode = #tpu.pipeline_mode<synchronous>, transform_indices = @transform_6, window_bounds = array<i64: 1, 256>}, {pipeline_mode = #tpu.pipeline_mode<synchronous>, transform_indices = @transform_7, window_bounds = array<i64: 1, 256>}, {pipeline_mode = #tpu.pipeline_mode<synchronous>, transform_indices = @transform_8, window_bounds = array<i64: 128, 256>}, {pipeline_mode = #tpu.pipeline_mode<synchronous>, transform_indices = @transform_9, window_bounds = array<i64: 1, 256>}, {pipeline_mode = #tpu.pipeline_mode<synchronous>, transform_indices = @transform_10, window_bounds = array<i64: 1, 256>}, {pipeline_mode = #tpu.pipeline_mode<synchronous>, transform_indices = @transform_11, window_bounds = array<i64: 256, 512>}, {pipeline_mode = #tpu.pipeline_mode<synchronous>, transform_indices = @transform_12, window_bounds = array<i64: 1, 512>}, {pipeline_mode = #tpu.pipeline_mode<synchronous>, transform_indices = @transform_13, window_bounds = array<i64: 1, 512>}, {pipeline_mode = #tpu.pipeline_mode<synchronous>, transform_indices = @transform_14, window_bounds = array<i64: 512, 512>}, {pipeline_mode = #tpu.pipeline_mode<synchronous>, transform_indices = @transform_15, window_bounds = array<i64: 1, 512>}, {pipeline_mode = #tpu.pipeline_mode<synchronous>, transform_indices = @transform_16, window_bounds = array<i64: 1, 512>}, {pipeline_mode = #tpu.pipeline_mode<synchronous>, transform_indices = @transform_17, window_bounds = array<i64: 256, 512>}, {pipeline_mode = #tpu.pipeline_mode<synchronous>, transform_indices = @transform_18, window_bounds = array<i64: 1, 512>}, {pipeline_mode = #tpu.pipeline_mode<synchronous>, transform_indices = @transform_19, window_bounds = array<i64: 1, 512>}, {pipeline_mode = #tpu.pipeline_mode<synchronous>, transform_indices = @transform_20, window_bounds = array<i64: 1, 1>}]} {
    %c0 = arith.constant 0 : index
    %c0_0 = arith.constant 0 : index
    %0 = vector.load %arg1[%c0, %c0_0] : memref<2x512xf32, #tpu.memory_space<vmem>>, vector<2x512xf32>
    %c0_1 = arith.constant 0 : index
    %c0_2 = arith.constant 0 : index
    %1 = vector.load %arg3[%c0_1, %c0_2] : memref<512x256xbf16, #tpu.memory_space<vmem>>, vector<512x256xbf16>
    %2 = arith.extf %1 : vector<512x256xbf16> to vector<512x256xf32>
    %cst = arith.constant dense<0.000000e+00> : vector<2x256xf32>
    %3 = tpu.matmul %0, %2, %cst {dimension_numbers = #tpu.dot_dimension_numbers<[1], [0], [0], [1], [0, 0, 1, 1], [], []>} : vector<2x512xf32>, vector<512x256xf32>, vector<2x256xf32> -> vector<2x256xf32>
    %c0_3 = arith.constant 0 : index
    %c0_4 = arith.constant 0 : index
    %4 = vector.load %arg4[%c0_3, %c0_4] : memref<1x256xf32, #tpu.memory_space<vmem>>, vector<1x256xf32>
    %c0_5 = arith.constant 0 : index
    %c0_6 = arith.constant 0 : index
    %5 = vector.load %arg5[%c0_5, %c0_6] : memref<1x256xf32, #tpu.memory_space<vmem>>, vector<1x256xf32>
    %cst_7 = arith.constant dense<0.000000e+00> : vector<256xf32>
    %6 = vector.multi_reduction <add>, %3, %cst_7 [0] : vector<2x256xf32> to vector<256xf32>
    %7 = vector.shape_cast %6 : vector<256xf32> to vector<1x256xf32>
    %cst_8 = arith.constant 5.000000e-01 : f32
    %8 = vector.broadcast %cst_8 : f32 to vector<1x256xf32>
    %9 = arith.mulf %7, %8 : vector<1x256xf32>
    %10 = vector.broadcast %9 : vector<1x256xf32> to vector<2x256xf32>
    %11 = arith.subf %3, %10 : vector<2x256xf32>
    %12 = arith.mulf %11, %11 : vector<2x256xf32>
    %cst_9 = arith.constant dense<0.000000e+00> : vector<256xf32>
    %13 = vector.multi_reduction <add>, %12, %cst_9 [0] : vector<2x256xf32> to vector<256xf32>
    %14 = vector.shape_cast %13 : vector<256xf32> to vector<1x256xf32>
    %cst_10 = arith.constant 5.000000e-01 : f32
    %15 = vector.broadcast %cst_10 : f32 to vector<1x256xf32>
    %16 = arith.mulf %14, %15 : vector<1x256xf32>
    %cst_11 = arith.constant 9.99999974E-6 : f32
    %17 = vector.broadcast %cst_11 : f32 to vector<1x256xf32>
    %18 = arith.addf %16, %17 : vector<1x256xf32>
    %19 = math.rsqrt %18 : vector<1x256xf32>
    %20 = vector.broadcast %19 : vector<1x256xf32> to vector<2x256xf32>
    %21 = arith.mulf %11, %20 : vector<2x256xf32>
    %22 = vector.broadcast %4 : vector<1x256xf32> to vector<2x256xf32>
    %23 = arith.mulf %21, %22 : vector<2x256xf32>
    %24 = vector.broadcast %5 : vector<1x256xf32> to vector<2x256xf32>
    %25 = arith.addf %23, %24 : vector<2x256xf32>
    %cst_12 = arith.constant 0.000000e+00 : f32
    %26 = vector.broadcast %cst_12 : f32 to vector<2x256xf32>
    %27 = arith.maximumf %25, %26 : vector<2x256xf32>
    %c0_13 = arith.constant 0 : index
    %c0_14 = arith.constant 0 : index
    %28 = vector.load %arg6[%c0_13, %c0_14] : memref<256x256xbf16, #tpu.memory_space<vmem>>, vector<256x256xbf16>
    %29 = arith.extf %28 : vector<256x256xbf16> to vector<256x256xf32>
    %cst_15 = arith.constant dense<0.000000e+00> : vector<2x256xf32>
    %30 = tpu.matmul %27, %29, %cst_15 {dimension_numbers = #tpu.dot_dimension_numbers<[1], [0], [0], [1], [0, 0, 1, 1], [], []>} : vector<2x256xf32>, vector<256x256xf32>, vector<2x256xf32> -> vector<2x256xf32>
    %c0_16 = arith.constant 0 : index
    %c0_17 = arith.constant 0 : index
    %31 = vector.load %arg7[%c0_16, %c0_17] : memref<1x256xf32, #tpu.memory_space<vmem>>, vector<1x256xf32>
    %c0_18 = arith.constant 0 : index
    %c0_19 = arith.constant 0 : index
    %32 = vector.load %arg8[%c0_18, %c0_19] : memref<1x256xf32, #tpu.memory_space<vmem>>, vector<1x256xf32>
    %cst_20 = arith.constant dense<0.000000e+00> : vector<256xf32>
    %33 = vector.multi_reduction <add>, %30, %cst_20 [0] : vector<2x256xf32> to vector<256xf32>
    %34 = vector.shape_cast %33 : vector<256xf32> to vector<1x256xf32>
    %cst_21 = arith.constant 5.000000e-01 : f32
    %35 = vector.broadcast %cst_21 : f32 to vector<1x256xf32>
    %36 = arith.mulf %34, %35 : vector<1x256xf32>
    %37 = vector.broadcast %36 : vector<1x256xf32> to vector<2x256xf32>
    %38 = arith.subf %30, %37 : vector<2x256xf32>
    %39 = arith.mulf %38, %38 : vector<2x256xf32>
    %cst_22 = arith.constant dense<0.000000e+00> : vector<256xf32>
    %40 = vector.multi_reduction <add>, %39, %cst_22 [0] : vector<2x256xf32> to vector<256xf32>
    %41 = vector.shape_cast %40 : vector<256xf32> to vector<1x256xf32>
    %cst_23 = arith.constant 5.000000e-01 : f32
    %42 = vector.broadcast %cst_23 : f32 to vector<1x256xf32>
    %43 = arith.mulf %41, %42 : vector<1x256xf32>
    %cst_24 = arith.constant 9.99999974E-6 : f32
    %44 = vector.broadcast %cst_24 : f32 to vector<1x256xf32>
    %45 = arith.addf %43, %44 : vector<1x256xf32>
    %46 = math.rsqrt %45 : vector<1x256xf32>
    %47 = vector.broadcast %46 : vector<1x256xf32> to vector<2x256xf32>
    %48 = arith.mulf %38, %47 : vector<2x256xf32>
    %49 = vector.broadcast %31 : vector<1x256xf32> to vector<2x256xf32>
    %50 = arith.mulf %48, %49 : vector<2x256xf32>
    %51 = vector.broadcast %32 : vector<1x256xf32> to vector<2x256xf32>
    %52 = arith.addf %50, %51 : vector<2x256xf32>
    %c0_25 = arith.constant 0 : index
    %c0_26 = arith.constant 0 : index
    %53 = vector.load %arg2[%c0_25, %c0_26] : memref<2x128xf32, #tpu.memory_space<vmem>>, vector<2x128xf32>
    %c0_27 = arith.constant 0 : index
    %c0_28 = arith.constant 0 : index
    %54 = vector.load %arg9[%c0_27, %c0_28] : memref<128x256xbf16, #tpu.memory_space<vmem>>, vector<128x256xbf16>
    %55 = arith.extf %54 : vector<128x256xbf16> to vector<128x256xf32>
    %cst_29 = arith.constant dense<0.000000e+00> : vector<2x256xf32>
    %56 = tpu.matmul %53, %55, %cst_29 {dimension_numbers = #tpu.dot_dimension_numbers<[1], [0], [0], [1], [0, 0, 1, 1], [], []>} : vector<2x128xf32>, vector<128x256xf32>, vector<2x256xf32> -> vector<2x256xf32>
    %c0_30 = arith.constant 0 : index
    %c0_31 = arith.constant 0 : index
    %57 = vector.load %arg10[%c0_30, %c0_31] : memref<1x256xf32, #tpu.memory_space<vmem>>, vector<1x256xf32>
    %c0_32 = arith.constant 0 : index
    %c0_33 = arith.constant 0 : index
    %58 = vector.load %arg11[%c0_32, %c0_33] : memref<1x256xf32, #tpu.memory_space<vmem>>, vector<1x256xf32>
    %cst_34 = arith.constant dense<0.000000e+00> : vector<256xf32>
    %59 = vector.multi_reduction <add>, %56, %cst_34 [0] : vector<2x256xf32> to vector<256xf32>
    %60 = vector.shape_cast %59 : vector<256xf32> to vector<1x256xf32>
    %cst_35 = arith.constant 5.000000e-01 : f32
    %61 = vector.broadcast %cst_35 : f32 to vector<1x256xf32>
    %62 = arith.mulf %60, %61 : vector<1x256xf32>
    %63 = vector.broadcast %62 : vector<1x256xf32> to vector<2x256xf32>
    %64 = arith.subf %56, %63 : vector<2x256xf32>
    %65 = arith.mulf %64, %64 : vector<2x256xf32>
    %cst_36 = arith.constant dense<0.000000e+00> : vector<256xf32>
    %66 = vector.multi_reduction <add>, %65, %cst_36 [0] : vector<2x256xf32> to vector<256xf32>
    %67 = vector.shape_cast %66 : vector<256xf32> to vector<1x256xf32>
    %cst_37 = arith.constant 5.000000e-01 : f32
    %68 = vector.broadcast %cst_37 : f32 to vector<1x256xf32>
    %69 = arith.mulf %67, %68 : vector<1x256xf32>
    %cst_38 = arith.constant 9.99999974E-6 : f32
    %70 = vector.broadcast %cst_38 : f32 to vector<1x256xf32>
    %71 = arith.addf %69, %70 : vector<1x256xf32>
    %72 = math.rsqrt %71 : vector<1x256xf32>
    %73 = vector.broadcast %72 : vector<1x256xf32> to vector<2x256xf32>
    %74 = arith.mulf %64, %73 : vector<2x256xf32>
    %75 = vector.broadcast %57 : vector<1x256xf32> to vector<2x256xf32>
    %76 = arith.mulf %74, %75 : vector<2x256xf32>
    %77 = vector.broadcast %58 : vector<1x256xf32> to vector<2x256xf32>
    %78 = arith.addf %76, %77 : vector<2x256xf32>
    %79 = arith.addf %52, %78 : vector<2x256xf32>
    %cst_39 = arith.constant 0.000000e+00 : f32
    %80 = vector.broadcast %cst_39 : f32 to vector<2x256xf32>
    %81 = arith.maximumf %79, %80 : vector<2x256xf32>
    %c0_40 = arith.constant 0 : index
    %c0_41 = arith.constant 0 : index
    %82 = vector.load %arg12[%c0_40, %c0_41] : memref<256x512xbf16, #tpu.memory_space<vmem>>, vector<256x512xbf16>
    %83 = arith.extf %82 : vector<256x512xbf16> to vector<256x512xf32>
    %cst_42 = arith.constant dense<0.000000e+00> : vector<2x512xf32>
    %84 = tpu.matmul %81, %83, %cst_42 {dimension_numbers = #tpu.dot_dimension_numbers<[1], [0], [0], [1], [0, 0, 1, 1], [], []>} : vector<2x256xf32>, vector<256x512xf32>, vector<2x512xf32> -> vector<2x512xf32>
    %c0_43 = arith.constant 0 : index
    %c0_44 = arith.constant 0 : index
    %85 = vector.load %arg13[%c0_43, %c0_44] : memref<1x512xf32, #tpu.memory_space<vmem>>, vector<1x512xf32>
    %c0_45 = arith.constant 0 : index
    %c0_46 = arith.constant 0 : index
    %86 = vector.load %arg14[%c0_45, %c0_46] : memref<1x512xf32, #tpu.memory_space<vmem>>, vector<1x512xf32>
    %cst_47 = arith.constant dense<0.000000e+00> : vector<512xf32>
    %87 = vector.multi_reduction <add>, %84, %cst_47 [0] : vector<2x512xf32> to vector<512xf32>
    %88 = vector.shape_cast %87 : vector<512xf32> to vector<1x512xf32>
    %cst_48 = arith.constant 5.000000e-01 : f32
    %89 = vector.broadcast %cst_48 : f32 to vector<1x512xf32>
    %90 = arith.mulf %88, %89 : vector<1x512xf32>
    %91 = vector.broadcast %90 : vector<1x512xf32> to vector<2x512xf32>
    %92 = arith.subf %84, %91 : vector<2x512xf32>
    %93 = arith.mulf %92, %92 : vector<2x512xf32>
    %cst_49 = arith.constant dense<0.000000e+00> : vector<512xf32>
    %94 = vector.multi_reduction <add>, %93, %cst_49 [0] : vector<2x512xf32> to vector<512xf32>
    %95 = vector.shape_cast %94 : vector<512xf32> to vector<1x512xf32>
    %cst_50 = arith.constant 5.000000e-01 : f32
    %96 = vector.broadcast %cst_50 : f32 to vector<1x512xf32>
    %97 = arith.mulf %95, %96 : vector<1x512xf32>
    %cst_51 = arith.constant 9.99999974E-6 : f32
    %98 = vector.broadcast %cst_51 : f32 to vector<1x512xf32>
    %99 = arith.addf %97, %98 : vector<1x512xf32>
    %100 = math.rsqrt %99 : vector<1x512xf32>
    %101 = vector.broadcast %100 : vector<1x512xf32> to vector<2x512xf32>
    %102 = arith.mulf %92, %101 : vector<2x512xf32>
    %103 = vector.broadcast %85 : vector<1x512xf32> to vector<2x512xf32>
    %104 = arith.mulf %102, %103 : vector<2x512xf32>
    %105 = vector.broadcast %86 : vector<1x512xf32> to vector<2x512xf32>
    %106 = arith.addf %104, %105 : vector<2x512xf32>
    %cst_52 = arith.constant 0.000000e+00 : f32
    %107 = vector.broadcast %cst_52 : f32 to vector<2x512xf32>
    %108 = arith.maximumf %106, %107 : vector<2x512xf32>
    %c0_53 = arith.constant 0 : index
    %c0_54 = arith.constant 0 : index
    %109 = vector.load %arg15[%c0_53, %c0_54] : memref<512x512xbf16, #tpu.memory_space<vmem>>, vector<512x512xbf16>
    %110 = arith.extf %109 : vector<512x512xbf16> to vector<512x512xf32>
    %cst_55 = arith.constant dense<0.000000e+00> : vector<2x512xf32>
    %111 = tpu.matmul %108, %110, %cst_55 {dimension_numbers = #tpu.dot_dimension_numbers<[1], [0], [0], [1], [0, 0, 1, 1], [], []>} : vector<2x512xf32>, vector<512x512xf32>, vector<2x512xf32> -> vector<2x512xf32>
    %c0_56 = arith.constant 0 : index
    %c0_57 = arith.constant 0 : index
    %112 = vector.load %arg16[%c0_56, %c0_57] : memref<1x512xf32, #tpu.memory_space<vmem>>, vector<1x512xf32>
    %c0_58 = arith.constant 0 : index
    %c0_59 = arith.constant 0 : index
    %113 = vector.load %arg17[%c0_58, %c0_59] : memref<1x512xf32, #tpu.memory_space<vmem>>, vector<1x512xf32>
    %cst_60 = arith.constant dense<0.000000e+00> : vector<512xf32>
    %114 = vector.multi_reduction <add>, %111, %cst_60 [0] : vector<2x512xf32> to vector<512xf32>
    %115 = vector.shape_cast %114 : vector<512xf32> to vector<1x512xf32>
    %cst_61 = arith.constant 5.000000e-01 : f32
    %116 = vector.broadcast %cst_61 : f32 to vector<1x512xf32>
    %117 = arith.mulf %115, %116 : vector<1x512xf32>
    %118 = vector.broadcast %117 : vector<1x512xf32> to vector<2x512xf32>
    %119 = arith.subf %111, %118 : vector<2x512xf32>
    %120 = arith.mulf %119, %119 : vector<2x512xf32>
    %cst_62 = arith.constant dense<0.000000e+00> : vector<512xf32>
    %121 = vector.multi_reduction <add>, %120, %cst_62 [0] : vector<2x512xf32> to vector<512xf32>
    %122 = vector.shape_cast %121 : vector<512xf32> to vector<1x512xf32>
    %cst_63 = arith.constant 5.000000e-01 : f32
    %123 = vector.broadcast %cst_63 : f32 to vector<1x512xf32>
    %124 = arith.mulf %122, %123 : vector<1x512xf32>
    %cst_64 = arith.constant 9.99999974E-6 : f32
    %125 = vector.broadcast %cst_64 : f32 to vector<1x512xf32>
    %126 = arith.addf %124, %125 : vector<1x512xf32>
    %127 = math.rsqrt %126 : vector<1x512xf32>
    %128 = vector.broadcast %127 : vector<1x512xf32> to vector<2x512xf32>
    %129 = arith.mulf %119, %128 : vector<2x512xf32>
    %130 = vector.broadcast %112 : vector<1x512xf32> to vector<2x512xf32>
    %131 = arith.mulf %129, %130 : vector<2x512xf32>
    %132 = vector.broadcast %113 : vector<1x512xf32> to vector<2x512xf32>
    %133 = arith.addf %131, %132 : vector<2x512xf32>
    %c0_65 = arith.constant 0 : index
    %c0_66 = arith.constant 0 : index
    %134 = vector.load %arg18[%c0_65, %c0_66] : memref<256x512xbf16, #tpu.memory_space<vmem>>, vector<256x512xbf16>
    %135 = arith.extf %134 : vector<256x512xbf16> to vector<256x512xf32>
    %cst_67 = arith.constant dense<0.000000e+00> : vector<2x512xf32>
    %136 = tpu.matmul %81, %135, %cst_67 {dimension_numbers = #tpu.dot_dimension_numbers<[1], [0], [0], [1], [0, 0, 1, 1], [], []>} : vector<2x256xf32>, vector<256x512xf32>, vector<2x512xf32> -> vector<2x512xf32>
    %c0_68 = arith.constant 0 : index
    %c0_69 = arith.constant 0 : index
    %137 = vector.load %arg19[%c0_68, %c0_69] : memref<1x512xf32, #tpu.memory_space<vmem>>, vector<1x512xf32>
    %c0_70 = arith.constant 0 : index
    %c0_71 = arith.constant 0 : index
    %138 = vector.load %arg20[%c0_70, %c0_71] : memref<1x512xf32, #tpu.memory_space<vmem>>, vector<1x512xf32>
    %cst_72 = arith.constant dense<0.000000e+00> : vector<512xf32>
    %139 = vector.multi_reduction <add>, %136, %cst_72 [0] : vector<2x512xf32> to vector<512xf32>
    %140 = vector.shape_cast %139 : vector<512xf32> to vector<1x512xf32>
    %cst_73 = arith.constant 5.000000e-01 : f32
    %141 = vector.broadcast %cst_73 : f32 to vector<1x512xf32>
    %142 = arith.mulf %140, %141 : vector<1x512xf32>
    %143 = vector.broadcast %142 : vector<1x512xf32> to vector<2x512xf32>
    %144 = arith.subf %136, %143 : vector<2x512xf32>
    %145 = arith.mulf %144, %144 : vector<2x512xf32>
    %cst_74 = arith.constant dense<0.000000e+00> : vector<512xf32>
    %146 = vector.multi_reduction <add>, %145, %cst_74 [0] : vector<2x512xf32> to vector<512xf32>
    %147 = vector.shape_cast %146 : vector<512xf32> to vector<1x512xf32>
    %cst_75 = arith.constant 5.000000e-01 : f32
    %148 = vector.broadcast %cst_75 : f32 to vector<1x512xf32>
    %149 = arith.mulf %147, %148 : vector<1x512xf32>
    %cst_76 = arith.constant 9.99999974E-6 : f32
    %150 = vector.broadcast %cst_76 : f32 to vector<1x512xf32>
    %151 = arith.addf %149, %150 : vector<1x512xf32>
    %152 = math.rsqrt %151 : vector<1x512xf32>
    %153 = vector.broadcast %152 : vector<1x512xf32> to vector<2x512xf32>
    %154 = arith.mulf %144, %153 : vector<2x512xf32>
    %155 = vector.broadcast %137 : vector<1x512xf32> to vector<2x512xf32>
    %156 = arith.mulf %154, %155 : vector<2x512xf32>
    %157 = vector.broadcast %138 : vector<1x512xf32> to vector<2x512xf32>
    %158 = arith.addf %156, %157 : vector<2x512xf32>
    %159 = arith.addf %133, %158 : vector<2x512xf32>
    %cst_77 = arith.constant 0.000000e+00 : f32
    %160 = vector.broadcast %cst_77 : f32 to vector<2x512xf32>
    %161 = arith.maximumf %159, %160 : vector<2x512xf32>
    %162 = vector.shape_cast %161 : vector<2x512xf32> to vector<1x2x512xf32>
    %cst_78 = arith.constant dense<0.000000e+00> : vector<1xf32>
    %163 = vector.multi_reduction <add>, %162, %cst_78 [1, 2] : vector<1x2x512xf32> to vector<1xf32>
    %164 = vector.shape_cast %163 : vector<1xf32> to vector<1x1x1xf32>
    %165 = vector.extract %164[0, 0, 0] : f32 from vector<1x1x1xf32>
    %166 = vector.broadcast %165 : f32 to vector<1x1xf32>
    %c0_79 = arith.constant 0 : index
    %c0_80 = arith.constant 0 : index
    %167 = vector.load %arg21[%c0_79, %c0_80] : memref<1x1xf32, #tpu.memory_space<vmem>>, vector<1x1xf32>
    tpu.vector_store %arg21[%c0_79, %c0_80], %166 {strides = array<i32>} : memref<1x1xf32, #tpu.memory_space<vmem>>, vector<1x1xf32>,
    return
  }
  func.func @transform_0(%arg0: i32) -> (i32, i32) {
    %c0_i32 = arith.constant 0 : i32
    %c0_i32_0 = arith.constant 0 : i32
    %c0_i32_1 = arith.constant 0 : i32
    return %c0_i32, %c0_i32_0 : i32, i32
  }
  func.func @transform_1(%arg0: i32) -> (i32, i32) {
    %c0_i32 = arith.constant 0 : i32
    %c0_i32_0 = arith.constant 0 : i32
    %c0_i32_1 = arith.constant 0 : i32
    return %c0_i32, %c0_i32_0 : i32, i32
  }
  func.func @transform_2(%arg0: i32) -> (i32, i32) {
    %c0_i32 = arith.constant 0 : i32
    %c0_i32_0 = arith.constant 0 : i32
    %c0_i32_1 = arith.constant 0 : i32
    return %c0_i32, %c0_i32_0 : i32, i32
  }
  func.func @transform_3(%arg0: i32) -> (i32, i32) {
    %c0_i32 = arith.constant 0 : i32
    %c0_i32_0 = arith.constant 0 : i32
    %c0_i32_1 = arith.constant 0 : i32
    return %c0_i32, %c0_i32_0 : i32, i32
  }
  func.func @transform_4(%arg0: i32) -> (i32, i32) {
    %c0_i32 = arith.constant 0 : i32
    %c0_i32_0 = arith.constant 0 : i32
    %c0_i32_1 = arith.constant 0 : i32
    return %c0_i32, %c0_i32_0 : i32, i32
  }
  func.func @transform_5(%arg0: i32) -> (i32, i32) {
    %c0_i32 = arith.constant 0 : i32
    %c0_i32_0 = arith.constant 0 : i32
    %c0_i32_1 = arith.constant 0 : i32
    return %c0_i32, %c0_i32_0 : i32, i32
  }
  func.func @transform_6(%arg0: i32) -> (i32, i32) {
    %c0_i32 = arith.constant 0 : i32
    %c0_i32_0 = arith.constant 0 : i32
    %c0_i32_1 = arith.constant 0 : i32
    return %c0_i32, %c0_i32_0 : i32, i32
  }
  func.func @transform_7(%arg0: i32) -> (i32, i32) {
    %c0_i32 = arith.constant 0 : i32
    %c0_i32_0 = arith.constant 0 : i32
    %c0_i32_1 = arith.constant 0 : i32
    return %c0_i32, %c0_i32_0 : i32, i32
  }
  func.func @transform_8(%arg0: i32) -> (i32, i32) {
    %c0_i32 = arith.constant 0 : i32
    %c0_i32_0 = arith.constant 0 : i32
    %c0_i32_1 = arith.constant 0 : i32
    return %c0_i32, %c0_i32_0 : i32, i32
  }
  func.func @transform_9(%arg0: i32) -> (i32, i32) {
    %c0_i32 = arith.constant 0 : i32
    %c0_i32_0 = arith.constant 0 : i32
    %c0_i32_1 = arith.constant 0 : i32
    return %c0_i32, %c0_i32_0 : i32, i32
  }
  func.func @transform_10(%arg0: i32) -> (i32, i32) {
    %c0_i32 = arith.constant 0 : i32
    %c0_i32_0 = arith.constant 0 : i32
    %c0_i32_1 = arith.constant 0 : i32
    return %c0_i32, %c0_i32_0 : i32, i32
  }
  func.func @transform_11(%arg0: i32) -> (i32, i32) {
    %c0_i32 = arith.constant 0 : i32
    %c0_i32_0 = arith.constant 0 : i32
    %c0_i32_1 = arith.constant 0 : i32
    return %c0_i32, %c0_i32_0 : i32, i32
  }
  func.func @transform_12(%arg0: i32) -> (i32, i32) {
    %c0_i32 = arith.constant 0 : i32
    %c0_i32_0 = arith.constant 0 : i32
    %c0_i32_1 = arith.constant 0 : i32
    return %c0_i32, %c0_i32_0 : i32, i32
  }
  func.func @transform_13(%arg0: i32) -> (i32, i32) {
    %c0_i32 = arith.constant 0 : i32
    %c0_i32_0 = arith.constant 0 : i32
    %c0_i32_1 = arith.constant 0 : i32
    return %c0_i32, %c0_i32_0 : i32, i32
  }
  func.func @transform_14(%arg0: i32) -> (i32, i32) {
    %c0_i32 = arith.constant 0 : i32
    %c0_i32_0 = arith.constant 0 : i32
    %c0_i32_1 = arith.constant 0 : i32
    return %c0_i32, %c0_i32_0 : i32, i32
  }
  func.func @transform_15(%arg0: i32) -> (i32, i32) {
    %c0_i32 = arith.constant 0 : i32
    %c0_i32_0 = arith.constant 0 : i32
    %c0_i32_1 = arith.constant 0 : i32
    return %c0_i32, %c0_i32_0 : i32, i32
  }
  func.func @transform_16(%arg0: i32) -> (i32, i32) {
    %c0_i32 = arith.constant 0 : i32
    %c0_i32_0 = arith.constant 0 : i32
    %c0_i32_1 = arith.constant 0 : i32
    return %c0_i32, %c0_i32_0 : i32, i32
  }
  func.func @transform_17(%arg0: i32) -> (i32, i32) {
    %c0_i32 = arith.constant 0 : i32
    %c0_i32_0 = arith.constant 0 : i32
    %c0_i32_1 = arith.constant 0 : i32
    return %c0_i32, %c0_i32_0 : i32, i32
  }
  func.func @transform_18(%arg0: i32) -> (i32, i32) {
    %c0_i32 = arith.constant 0 : i32
    %c0_i32_0 = arith.constant 0 : i32
    %c0_i32_1 = arith.constant 0 : i32
    return %c0_i32, %c0_i32_0 : i32, i32
  }
  func.func @transform_19(%arg0: i32) -> (i32, i32) {
    %c0_i32 = arith.constant 0 : i32
    %c0_i32_0 = arith.constant 0 : i32
    %c0_i32_1 = arith.constant 0 : i32
    return %c0_i32, %c0_i32_0 : i32, i32
  }
  func.func @transform_20(%arg0: i32) -> (i32, i32) {
    %c0_i32 = arith.constant 0 : i32
    %c0_i32_0 = arith.constant 0 : i32
    %c0_i32_1 = arith.constant 0 : i32
    return %c0_i32, %c0_i32_0 : i32, i32
  }
}

</mosaic_0001>

<llo_original>
// kernel: resnet_forward.6
$region0: #{resnet_forward.6}
  #allocation0 [shape = 'u32[]', space=smem, size = 0x4, offset = 0x4, fixed_abs, tag = 'smem constant byte address 0x4 - core index']
  #allocation1 [shape = 'u32[72,128]{1,0:T(1,128)}', space=vmem, size = 0x9000, scoped, tag = 'internal scratch']
  %s0 = inlined_call_operand.vmem [shape: f32[128,147], index: 0, kind: input, shape index: {}]
  %s1 = inlined_call_operand.vmem [shape: bf16[147,64], index: 1, kind: input, shape index: {}]
  %s2 = inlined_call_operand.vmem [shape: f32[1,64], index: 2, kind: input, shape index: {}]
  %s3 = inlined_call_operand.vmem [shape: f32[1,64], index: 3, kind: input, shape index: {}]
  %s4 = inlined_call_operand.vmem [shape: f32[32,64], index: 4, kind: output, shape index: {}]
  %s5 = sld [smem:[#allocation0]]
  $region26: #{resnet_forward.6} parent=0
    _
  %s7 = ssub.s32 1, %s5
  %s8 = scalar_select 0, %s7, %s5
  // Predicated region
  $region2: #{resnet_forward.6} parent=0 // pred_check
    _
  $region3: #{resnet_forward.6} parent=0 // pred_check_branch
    %10 = sbr.rel (0) target = $region5
  $region4: #{resnet_forward.6} parent=0 // pred_region
    _
  $region5: #{resnet_forward.6} parent=0 // pred_fallthru
    _
  // Predicated region
  $region6: #{resnet_forward.6} parent=0 // pred_check
    _
  $region7: #{resnet_forward.6} parent=0 // pred_check_branch
    %12 = sbr.rel (0) target = $region9
  $region8: #{resnet_forward.6} parent=0 // pred_region
    _
  $region9: #{resnet_forward.6} parent=0 // pred_fallthru
    _
  // Predicated region
  $region10: #{resnet_forward.6} parent=0 // pred_check
    _
  $region11: #{resnet_forward.6} parent=0 // pred_check_branch
    %14 = sbr.rel (0) target = $region13
  $region12: #{resnet_forward.6} parent=0 // pred_region
    _
  $region13: #{resnet_forward.6} parent=0 // pred_fallthru
    _
  // Predicated region
  $region14: #{resnet_forward.6} parent=0 // pred_check
    _
  $region15: #{resnet_forward.6} parent=0 // pred_check_branch
    %16 = sbr.rel (0) target = $region17
  $region16: #{resnet_forward.6} parent=0 // pred_region
    _
  $region17: #{resnet_forward.6} parent=0 // pred_fallthru
    _
  %v17 = vld [vmem:[%s0] sm:$0xff]
  %v18 = vld [vmem:[%s0 + $0x8] sm:$0xff]
  %v19 = vld [vmem:[%s0 + $0x10] sm:$0xff]
  %v20 = vld [vmem:[%s0 + $0x18] sm:$0xff]
  %v21 = vld [vmem:[%s0 + $0x20] sm:$0xff]
  %v22 = vld [vmem:[%s0 + $0x28] sm:$0xff]
  %v23 = vld [vmem:[%s0 + $0x30] sm:$0xff]
  %v24 = vld [vmem:[%s0 + $0x38] sm:$0xff]
  %v25 = vld [vmem:[%s0 + $0x40] sm:$0xff]
  %v26 = vld [vmem:[%s0 + $0x48] sm:$0xff]
  %v27 = vld [vmem:[%s0 + $0x50] sm:$0xff]
  %v28 = vld [vmem:[%s0 + $0x58] sm:$0xff]
  %v29 = vld [vmem:[%s0 + $0x60] sm:$0xff]
  %v30 = vld [vmem:[%s0 + $0x68] sm:$0xff]
  %v31 = vld [vmem:[%s0 + $0x70] sm:$0xff]
  %v32 = vld [vmem:[%s0 + $0x78] sm:$0xff]
  %v33 = vld [vmem:[%s0 + $0x80] sm:$0xff]
  %v34 = vld [vmem:[%s0 + $0x88] sm:$0xff]
  %v35 = vld [vmem:[%s0 + $0x90] sm:$0xff]
  %v36 = vld [vmem:[%s0 + $0x98] sm:$0xff]
  %v37 = vld [vmem:[%s0 + $0xa0] sm:$0xff]
  %v38 = vld [vmem:[%s0 + $0xa8] sm:$0xff]
  %v39 = vld [vmem:[%s0 + $0xb0] sm:$0xff]
  %v40 = vld [vmem:[%s0 + $0xb8] sm:$0xff]
  %v41 = vld [vmem:[%s0 + $0xc0] sm:$0xff]
  %v42 = vld [vmem:[%s0 + $0xc8] sm:$0xff]
  %v43 = vld [vmem:[%s0 + $0xd0] sm:$0xff]
  %v44 = vld [vmem:[%s0 + $0xd8] sm:$0xff]
  %v45 = vld [vmem:[%s0 + $0xe0] sm:$0xff]
  %v46 = vld [vmem:[%s0 + $0xe8] sm:$0xff]
  %v47 = vld [vmem:[%s0 + $0xf0] sm:$0xff]
  %v48 = vld [vmem:[%s0 + $0xf8] sm:$0xff]
  %v49 = vld [vmem:[%s1] sm:$0xf]
  %v50 = vld [vmem:[%s1 + $0x4] sm:$0xf]
  %v51 = vld [vmem:[%s1 + $0x8] sm:$0xf]
  %v52 = vld [vmem:[%s1 + $0xc] sm:$0xf]
  %v53 = vld [vmem:[%s1 + $0x10] sm:$0xf]
  %v54 = vld [vmem:[%s1 + $0x14] sm:$0xf]
  %v55 = vld [vmem:[%s1 + $0x18] sm:$0xf]
  %v56 = vld [vmem:[%s1 + $0x1c] sm:$0xf]
  %v57 = vld [vmem:[%s1 + $0x20] sm:$0xf]
  %v58 = vld [vmem:[%s1 + $0x24] sm:$0xf]
  %v59 = vld [vmem:[%s1 + $0x28] sm:$0xf]
  %v60 = vld [vmem:[%s1 + $0x2c] sm:$0xf]
  %v61 = vld [vmem:[%s1 + $0x30] sm:$0xf]
  %v62 = vld [vmem:[%s1 + $0x34] sm:$0xf]
  %v63 = vld [vmem:[%s1 + $0x38] sm:$0xf]
  %v64 = vld [vmem:[%s1 + $0x3c] sm:$0xf]
  %v65 = vld [vmem:[%s1 + $0x40] sm:$0xf]
  %v66 = vld [vmem:[%s1 + $0x44] sm:$0xf]
  %v67 = vld [vmem:[%s1 + $0x48] sm:$0x3]
  %v68 = vunpack.c.l.bf16 %v49
  %v69 = vunpack.c.l.bf16 %v50
  %v70 = vunpack.c.l.bf16 %v51
  %v71 = vunpack.c.l.bf16 %v52
  %v72 = vunpack.c.l.bf16 %v53
  %v73 = vunpack.c.l.bf16 %v54
  %v74 = vunpack.c.l.bf16 %v55
  %v75 = vunpack.c.l.bf16 %v56
  %v76 = vunpack.c.l.bf16 %v57
  %v77 = vunpack.c.l.bf16 %v58
  %v78 = vunpack.c.l.bf16 %v59
  %v79 = vunpack.c.l.bf16 %v60
  %v80 = vunpack.c.l.bf16 %v61
  %v81 = vunpack.c.l.bf16 %v62
  %v82 = vunpack.c.l.bf16 %v63
  %v83 = vunpack.c.l.bf16 %v64
  %v84 = vunpack.c.l.bf16 %v65
  %v85 = vunpack.c.l.bf16 %v66
  %v86 = vunpack.c.l.bf16 %v67
  %vm87 = vcmask 154624
  %v89 = vsel %vm87, %v18, 0
  %v92 = vsel %vm87, %v20, 0
  %v95 = vsel %vm87, %v22, 0
  %v98 = vsel %vm87, %v24, 0
  %v101 = vsel %vm87, %v26, 0
  %v104 = vsel %vm87, %v28, 0
  %v107 = vsel %vm87, %v30, 0
  %v110 = vsel %vm87, %v32, 0
  %v113 = vsel %vm87, %v34, 0
  %v116 = vsel %vm87, %v36, 0
  %v119 = vsel %vm87, %v38, 0
  %v122 = vsel %vm87, %v40, 0
  %v125 = vsel %vm87, %v42, 0
  %v128 = vsel %vm87, %v44, 0
  %v131 = vsel %vm87, %v46, 0
  %v134 = vsel %vm87, %v48, 0
  %vm136 = vcmask 1042432
  %v138 = vsel %vm136, %v86, 0
  %140 = vmatpush.msra.mxu0 %v83
  %141 = vmatpush.msra.mxu0 %v82
  %142 = vmatpush.msra.mxu0 %v81
  %143 = vmatpush.msra.mxu0 %v80
  %144 = vmatpush.msra.mxu0 %v79
  %145 = vmatpush.msra.mxu0 %v78
  %146 = vmatpush.msra.mxu0 %v77
  %147 = vmatpush.msra.mxu0 %v76
  %148 = vmatpush.msra.mxu0 %v75
  %149 = vmatpush.msra.mxu0 %v74
  %150 = vmatpush.msra.mxu0 %v73
  %151 = vmatpush.msra.mxu0 %v72
  %152 = vmatpush.msra.mxu0 %v71
  %153 = vmatpush.msra.mxu0 %v70
  %154 = vmatpush.msra.mxu0 %v69
  %155 = vmatpush.msra.mxu0 %v68
  %156 = vmatmul.f32.gmra.mxu0 %v17
  %v157 = vpop.f32.mrf.mxu0
  %v158 = vadd.f32 0.0, %v157
  %159 = vmatmul.f32.gmra.mxu0 %v19
  %v160 = vpop.f32.mrf.mxu0
  %v161 = vadd.f32 0.0, %v160
  %162 = vmatmul.f32.gmra.mxu0 %v21
  %v163 = vpop.f32.mrf.mxu0
  %v164 = vadd.f32 0.0, %v163
  %165 = vmatmul.f32.gmra.mxu0 %v23
  %v166 = vpop.f32.mrf.mxu0
  %v167 = vadd.f32 0.0, %v166
  %168 = vmatmul.f32.gmra.mxu0 %v25
  %v169 = vpop.f32.mrf.mxu0
  %v170 = vadd.f32 0.0, %v169
  %171 = vmatmul.f32.gmra.mxu0 %v27
  %v172 = vpop.f32.mrf.mxu0
  %v173 = vadd.f32 0.0, %v172
  %174 = vmatmul.f32.gmra.mxu0 %v29
  %v175 = vpop.f32.mrf.mxu0
  %v176 = vadd.f32 0.0, %v175
  %177 = vmatmul.f32.gmra.mxu0 %v31
  %v178 = vpop.f32.mrf.mxu0
  %v179 = vadd.f32 0.0, %v178
  %180 = vmatmul.f32.gmra.mxu0 %v33
  %v181 = vpop.f32.mrf.mxu0
  %v182 = vadd.f32 0.0, %v181
  %183 = vmatmul.f32.gmra.mxu0 %v35
  %v184 = vpop.f32.mrf.mxu0
  %v185 = vadd.f32 0.0, %v184
  %186 = vmatmul.f32.gmra.mxu0 %v37
  %v187 = vpop.f32.mrf.mxu0
  %v188 = vadd.f32 0.0, %v187
  %189 = vmatmul.f32.gmra.mxu0 %v39
  %v190 = vpop.f32.mrf.mxu0
  %v191 = vadd.f32 0.0, %v190
  %192 = vmatmul.f32.gmra.mxu0 %v41
  %v193 = vpop.f32.mrf.mxu0
  %v194 = vadd.f32 0.0, %v193
  %195 = vmatmul.f32.gmra.mxu0 %v43
  %v196 = vpop.f32.mrf.mxu0
  %v197 = vadd.f32 0.0, %v196
  %198 = vmatmul.f32.gmra.mxu0 %v45
  %v199 = vpop.f32.mrf.mxu0
  %v200 = vadd.f32 0.0, %v199
  %201 = vmatmul.f32.gmra.mxu0 %v47
  %v202 = vpop.f32.mrf.mxu0
  %v203 = vadd.f32 0.0, %v202
  %204 = vdwg.mxu0
  %205 = vmatpush.msra.mxu0 0.0
  %206 = vmatpush.msra.mxu0 0.0
  %207 = vmatpush.msra.mxu0 0.0
  %208 = vmatpush.msra.mxu0 0.0
  %209 = vmatpush.msra.mxu0 0.0
  %210 = vmatpush.msra.mxu0 0.0
  %211 = vmatpush.msra.mxu0 0.0
  %212 = vmatpush.msra.mxu0 0.0
  %213 = vmatpush.msra.mxu0 0.0
  %214 = vmatpush.msra.mxu0 0.0
  %215 = vmatpush.msra.mxu0 0.0
  %216 = vmatpush.msra.mxu0 0.0
  %217 = vmatpush.msra.mxu0 0.0
  %218 = vmatpush.msra.mxu0 %v138
  %219 = vmatpush.msra.mxu0 %v85
  %220 = vmatpush.msra.mxu0 %v84
  %221 = vmatmul.f32.gmra.mxu0 %v89
  %v222 = vpop.f32.mrf.mxu0
  %v223 = vadd.f32 %v158, %v222
  %224 = vmatmul.f32.gmra.mxu0 %v92
  %v225 = vpop.f32.mrf.mxu0
  %v226 = vadd.f32 %v161, %v225
  %227 = vmatmul.f32.gmra.mxu0 %v95
  %v228 = vpop.f32.mrf.mxu0
  %v229 = vadd.f32 %v164, %v228
  %230 = vmatmul.f32.gmra.mxu0 %v98
  %v231 = vpop.f32.mrf.mxu0
  %v232 = vadd.f32 %v167, %v231
  %233 = vmatmul.f32.gmra.mxu0 %v101
  %v234 = vpop.f32.mrf.mxu0
  %v235 = vadd.f32 %v170, %v234
  %236 = vmatmul.f32.gmra.mxu0 %v104
  %v237 = vpop.f32.mrf.mxu0
  %v238 = vadd.f32 %v173, %v237
  %239 = vmatmul.f32.gmra.mxu0 %v107
  %v240 = vpop.f32.mrf.mxu0
  %v241 = vadd.f32 %v176, %v240
  %242 = vmatmul.f32.gmra.mxu0 %v110
  %v243 = vpop.f32.mrf.mxu0
  %v244 = vadd.f32 %v179, %v243
  %245 = vmatmul.f32.gmra.mxu0 %v113
  %v246 = vpop.f32.mrf.mxu0
  %v247 = vadd.f32 %v182, %v246
  %248 = vmatmul.f32.gmra.mxu0 %v116
  %v249 = vpop.f32.mrf.mxu0
  %v250 = vadd.f32 %v185, %v249
  %251 = vmatmul.f32.gmra.mxu0 %v119
  %v252 = vpop.f32.mrf.mxu0
  %v253 = vadd.f32 %v188, %v252
  %254 = vmatmul.f32.gmra.mxu0 %v122
  %v255 = vpop.f32.mrf.mxu0
  %v256 = vadd.f32 %v191, %v255
  %257 = vmatmul.f32.gmra.mxu0 %v125
  %v258 = vpop.f32.mrf.mxu0
  %v259 = vadd.f32 %v194, %v258
  %260 = vmatmul.f32.gmra.mxu0 %v128
  %v261 = vpop.f32.mrf.mxu0
  %v262 = vadd.f32 %v197, %v261
  %263 = vmatmul.f32.gmra.mxu0 %v131
  %v264 = vpop.f32.mrf.mxu0
  %v265 = vadd.f32 %v200, %v264
  %266 = vmatmul.f32.gmra.mxu0 %v134
  %v267 = vpop.f32.mrf.mxu0
  %v268 = vadd.f32 %v203, %v267
  %269 = vdwg.mxu0
  %v270 = vld [vmem:[%s2] sm:$0x1]
  %v271 = vld [vmem:[%s3] sm:$0x1]
  %vm272 = vcmask 523264
  %v273 = vsel %vm272, %v223, 0.0
  %v274 = vsel %vm272, %v226, 0.0
  %v275 = vadd.f32 %v273, %v274
  %v276 = vsel %vm272, %v229, 0.0
  %v277 = vadd.f32 %v275, %v276
  %v278 = vsel %vm272, %v232, 0.0
  %v279 = vadd.f32 %v277, %v278
  %v280 = vsel %vm272, %v235, 0.0
  %v281 = vadd.f32 %v279, %v280
  %v282 = vsel %vm272, %v238, 0.0
  %v283 = vadd.f32 %v281, %v282
  %v284 = vsel %vm272, %v241, 0.0
  %v285 = vadd.f32 %v283, %v284
  %v286 = vsel %vm272, %v244, 0.0
  %v287 = vadd.f32 %v285, %v286
  %v288 = vsel %vm272, %v247, 0.0
  %v289 = vadd.f32 %v287, %v288
  %v290 = vsel %vm272, %v250, 0.0
  %v291 = vadd.f32 %v289, %v290
  %v292 = vsel %vm272, %v253, 0.0
  %v293 = vadd.f32 %v291, %v292
  %v294 = vsel %vm272, %v256, 0.0
  %v295 = vadd.f32 %v293, %v294
  %v296 = vsel %vm272, %v259, 0.0
  %v297 = vadd.f32 %v295, %v296
  %v298 = vsel %vm272, %v262, 0.0
  %v299 = vadd.f32 %v297, %v298
  %v300 = vsel %vm272, %v265, 0.0
  %v301 = vadd.f32 %v299, %v300
  %v302 = vsel %vm272, %v268, 0.0
  %v303 = vadd.f32 %v301, %v302
  %v304 = vrot.slane %v303, 4
  %v305 = vadd.f32 %v303, %v304
  %v306 = vrot.slane %v305, 2
  %v307 = vadd.f32 %v305, %v306
  %v308 = vrot.slane %v307, 1
  %v309 = vadd.f32 %v307, %v308
  %v310 = vmul.f32 %v309, 0.0078125
  %v311 = vsub.f32 %v223, %v310
  %v312 = vsub.f32 %v226, %v310
  %v313 = vsub.f32 %v229, %v310
  %v314 = vsub.f32 %v232, %v310
  %v315 = vsub.f32 %v235, %v310
  %v316 = vsub.f32 %v238, %v310
  %v317 = vsub.f32 %v241, %v310
  %v318 = vsub.f32 %v244, %v310
  %v319 = vsub.f32 %v247, %v310
  %v320 = vsub.f32 %v250, %v310
  %v321 = vsub.f32 %v253, %v310
  %v322 = vsub.f32 %v256, %v310
  %v323 = vsub.f32 %v259, %v310
  %v324 = vsub.f32 %v262, %v310
  %v325 = vsub.f32 %v265, %v310
  %v326 = vsub.f32 %v268, %v310
  %v327 = vmul.f32 %v311, %v311
  %v328 = vmul.f32 %v312, %v312
  %v329 = vmul.f32 %v313, %v313
  %v330 = vmul.f32 %v314, %v314
  %v331 = vmul.f32 %v315, %v315
  %v332 = vmul.f32 %v316, %v316
  %v333 = vmul.f32 %v317, %v317
  %v334 = vmul.f32 %v318, %v318
  %v335 = vmul.f32 %v319, %v319
  %v336 = vmul.f32 %v320, %v320
  %v337 = vmul.f32 %v321, %v321
  %v338 = vmul.f32 %v322, %v322
  %v339 = vmul.f32 %v323, %v323
  %v340 = vmul.f32 %v324, %v324
  %v341 = vmul.f32 %v325, %v325
  %v342 = vmul.f32 %v326, %v326
  %v343 = vsel %vm272, %v327, 0.0
  %v344 = vsel %vm272, %v328, 0.0
  %v345 = vadd.f32 %v343, %v344
  %v346 = vsel %vm272, %v329, 0.0
  %v347 = vadd.f32 %v345, %v346
  %v348 = vsel %vm272, %v330, 0.0
  %v349 = vadd.f32 %v347, %v348
  %v350 = vsel %vm272, %v331, 0.0
  %v351 = vadd.f32 %v349, %v350
  %v352 = vsel %vm272, %v332, 0.0
  %v353 = vadd.f32 %v351, %v352
  %v354 = vsel %vm272, %v333, 0.0
  %v355 = vadd.f32 %v353, %v354
  %v356 = vsel %vm272, %v334, 0.0
  %v357 = vadd.f32 %v355, %v356
  %v358 = vsel %vm272, %v335, 0.0
  %v359 = vadd.f32 %v357, %v358
  %v360 = vsel %vm272, %v336, 0.0
  %v361 = vadd.f32 %v359, %v360
  %v362 = vsel %vm272, %v337, 0.0
  %v363 = vadd.f32 %v361, %v362
  %v364 = vsel %vm272, %v338, 0.0
  %v365 = vadd.f32 %v363, %v364
  %v366 = vsel %vm272, %v339, 0.0
  %v367 = vadd.f32 %v365, %v366
  %v368 = vsel %vm272, %v340, 0.0
  %v369 = vadd.f32 %v367, %v368
  %v370 = vsel %vm272, %v341, 0.0
  %v371 = vadd.f32 %v369, %v370
  %v372 = vsel %vm272, %v342, 0.0
  %v373 = vadd.f32 %v371, %v372
  %v374 = vrot.slane %v373, 4
  %v375 = vadd.f32 %v373, %v374
  %v376 = vrot.slane %v375, 2
  %v377 = vadd.f32 %v375, %v376
  %v378 = vrot.slane %v377, 1
  %v379 = vadd.f32 %v377, %v378
  %v380 = vmul.f32 %v379, 0.0078125
  %v381 = vadd.f32 %v380, 1e-05
  %v382 = vrsqrt.pop %v381
  %v383 = vmul.f32 %v382, %v381
  %v384 = vmul.f32 %v383, %v382
  %v385 = vmul.f32 0.5, %v384
  %v386 = vsub.f32 1.5, %v385
  %v387 = vmul.f32 %v382, %v386
  %vm388 = vweird.f32 %v381
  %vm389 = vweird.f32 %v382
  %vm390 = vmor %vm388, %vm389
  %v391 = vsel %vm390, %v382, %v387
  %v392 = vmul.f32 %v311, %v391
  %v393 = vmul.f32 %v312, %v391
  %v394 = vmul.f32 %v313, %v391
  %v395 = vmul.f32 %v314, %v391
  %v396 = vmul.f32 %v315, %v391
  %v397 = vmul.f32 %v316, %v391
  %v398 = vmul.f32 %v317, %v391
  %v399 = vmul.f32 %v318, %v391
  %v400 = vmul.f32 %v319, %v391
  %v401 = vmul.f32 %v320, %v391
  %v402 = vmul.f32 %v321, %v391
  %v403 = vmul.f32 %v322, %v391
  %v404 = vmul.f32 %v323, %v391
  %v405 = vmul.f32 %v324, %v391
  %v406 = vmul.f32 %v325, %v391
  %v407 = vmul.f32 %v326, %v391
  %v409 = vperm.slane %v270, 0
  %v411 = vmul.f32 %v392, %v409
  %v412 = vmul.f32 %v393, %v409
  %v413 = vmul.f32 %v394, %v409
  %v414 = vmul.f32 %v395, %v409
  %v415 = vmul.f32 %v396, %v409
  %v416 = vmul.f32 %v397, %v409
  %v417 = vmul.f32 %v398, %v409
  %v418 = vmul.f32 %v399, %v409
  %v419 = vmul.f32 %v400, %v409
  %v420 = vmul.f32 %v401, %v409
  %v421 = vmul.f32 %v402, %v409
  %v422 = vmul.f32 %v403, %v409
  %v423 = vmul.f32 %v404, %v409
  %v424 = vmul.f32 %v405, %v409
  %v425 = vmul.f32 %v406, %v409
  %v426 = vmul.f32 %v407, %v409
  %v428 = vperm.slane %v271, 0
  %v430 = vadd.f32 %v411, %v428
  %v431 = vadd.f32 %v412, %v428
  %v432 = vadd.f32 %v413, %v428
  %v433 = vadd.f32 %v414, %v428
  %v434 = vadd.f32 %v415, %v428
  %v435 = vadd.f32 %v416, %v428
  %v436 = vadd.f32 %v417, %v428
  %v437 = vadd.f32 %v418, %v428
  %v438 = vadd.f32 %v419, %v428
  %v439 = vadd.f32 %v420, %v428
  %v440 = vadd.f32 %v421, %v428
  %v441 = vadd.f32 %v422, %v428
  %v442 = vadd.f32 %v423, %v428
  %v443 = vadd.f32 %v424, %v428
  %v444 = vadd.f32 %v425, %v428
  %v445 = vadd.f32 %v426, %v428
  %v446 = vmax.f32 %v430, 0.0
  %v447 = vmax.f32 %v431, 0.0
  %v448 = vmax.f32 %v432, 0.0
  %v449 = vmax.f32 %v433, 0.0
  %v450 = vmax.f32 %v434, 0.0
  %v451 = vmax.f32 %v435, 0.0
  %v452 = vmax.f32 %v436, 0.0
  %v453 = vmax.f32 %v437, 0.0
  %v454 = vmax.f32 %v438, 0.0
  %v455 = vmax.f32 %v439, 0.0
  %v456 = vmax.f32 %v440, 0.0
  %v457 = vmax.f32 %v441, 0.0
  %v458 = vmax.f32 %v442, 0.0
  %v459 = vmax.f32 %v443, 0.0
  %v460 = vmax.f32 %v444, 0.0
  %v461 = vmax.f32 %v445, 0.0
  %v462 = vmax.f32 %v446, %v450
  %v463 = vmax.f32 %v447, %v451
  %v464 = vmax.f32 %v448, %v452
  %v465 = vmax.f32 %v449, %v453
  %v466 = vmax.f32 %v454, %v458
  %v467 = vmax.f32 %v455, %v459
  %v468 = vmax.f32 %v456, %v460
  %v469 = vmax.f32 %v457, %v461
  %v470 = vmax.f32 %v462, %v466
  %v471 = vmax.f32 %v463, %v467
  %v472 = vmax.f32 %v464, %v468
  %v473 = vmax.f32 %v465, %v469
  %474 = vst.msk [vmem:[%s4] sm:$0xff] %vm272, %v470
  %475 = vst.msk [vmem:[%s4 + $0x8] sm:$0xff] %vm272, %v471
  %476 = vst.msk [vmem:[%s4 + $0x10] sm:$0xff] %vm272, %v472
  %477 = vst.msk [vmem:[%s4 + $0x18] sm:$0xff] %vm272, %v473
  // Predicated region
  $region18: #{resnet_forward.6} parent=0 // pred_check
    _
  $region19: #{resnet_forward.6} parent=0 // pred_check_branch
    %479 = sbr.rel (0) target = $region21
  $region20: #{resnet_forward.6} parent=0 // pred_region
    _
  $region21: #{resnet_forward.6} parent=0 // pred_fallthru
    _
  // Predicated region
  $region22: #{resnet_forward.6} parent=0 // pred_check
    _
  $region23: #{resnet_forward.6} parent=0 // pred_check_branch
    %481 = sbr.rel (0) target = $region25
  $region24: #{resnet_forward.6} parent=0 // pred_region
    _
  $region25: #{resnet_forward.6} parent=0 // pred_fallthru
    _

// kernel: resnet_forward.8
$region0: #{resnet_forward.8}
  #allocation0 [shape = 'u32[]', space=smem, size = 0x4, offset = 0x4, fixed_abs, tag = 'smem constant byte address 0x4 - core index']
  #allocation1 [shape = 'u32[72,128]{1,0:T(1,128)}', space=vmem, size = 0x9000, scoped, tag = 'internal scratch']
  %s0 = inlined_call_operand.vmem [shape: f32[32,576], index: 0, kind: input, shape index: {}]
  %s1 = inlined_call_operand.vmem [shape: bf16[576,64], index: 1, kind: input, shape index: {}]
  %s2 = inlined_call_operand.vmem [shape: f32[1,64], index: 2, kind: input, shape index: {}]
  %s3 = inlined_call_operand.vmem [shape: f32[1,64], index: 3, kind: input, shape index: {}]
  %s4 = inlined_call_operand.vmem [shape: f32[32,64], index: 4, kind: input, shape index: {}]
  %s5 = inlined_call_operand.vmem [shape: f32[32,64], index: 5, kind: output, shape index: {}]
  %s6 = sld [smem:[#allocation0]]
  $region30: #{resnet_forward.8} parent=0
    _
  %s8 = ssub.s32 1, %s6
  %s9 = scalar_select 0, %s8, %s6
  // Predicated region
  $region2: #{resnet_forward.8} parent=0 // pred_check
    _
  $region3: #{resnet_forward.8} parent=0 // pred_check_branch
    %11 = sbr.rel (0) target = $region5
  $region4: #{resnet_forward.8} parent=0 // pred_region
    _
  $region5: #{resnet_forward.8} parent=0 // pred_fallthru
    _
  // Predicated region
  $region6: #{resnet_forward.8} parent=0 // pred_check
    _
  $region7: #{resnet_forward.8} parent=0 // pred_check_branch
    %13 = sbr.rel (0) target = $region9
  $region8: #{resnet_forward.8} parent=0 // pred_region
    _
  $region9: #{resnet_forward.8} parent=0 // pred_fallthru
    _
  // Predicated region
  $region10: #{resnet_forward.8} parent=0 // pred_check
    _
  $region11: #{resnet_forward.8} parent=0 // pred_check_branch
    %15 = sbr.rel (0) target = $region13
  $region12: #{resnet_forward.8} parent=0 // pred_region
    _
  $region13: #{resnet_forward.8} parent=0 // pred_fallthru
    _
  // Predicated region
  $region14: #{resnet_forward.8} parent=0 // pred_check
    _
  $region15: #{resnet_forward.8} parent=0 // pred_check_branch
    %17 = sbr.rel (0) target = $region17
  $region16: #{resnet_forward.8} parent=0 // pred_region
    _
  $region17: #{resnet_forward.8} parent=0 // pred_fallthru
    _
  // Predicated region
  $region18: #{resnet_forward.8} parent=0 // pred_check
    _
  $region19: #{resnet_forward.8} parent=0 // pred_check_branch
    %19 = sbr.rel (0) target = $region21
  $region20: #{resnet_forward.8} parent=0 // pred_region
    _
  $region21: #{resnet_forward.8} parent=0 // pred_fallthru
    _
  %v20 = vld [vmem:[%s0] sm:$0xff]
  %v21 = vld [vmem:[%s0 + $0x8] sm:$0xff]
  %v22 = vld [vmem:[%s0 + $0x10] sm:$0xff]
  %v23 = vld [vmem:[%s0 + $0x18] sm:$0xff]
  %v24 = vld [vmem:[%s0 + $0x20] sm:$0xff]
  %v25 = vld [vmem:[%s0 + $0x28] sm:$0xff]
  %v26 = vld [vmem:[%s0 + $0x30] sm:$0xff]
  %v27 = vld [vmem:[%s0 + $0x38] sm:$0xff]
  %v28 = vld [vmem:[%s0 + $0x40] sm:$0xff]
  %v29 = vld [vmem:[%s0 + $0x48] sm:$0xff]
  %v30 = vld [vmem:[%s0 + $0x50] sm:$0xff]
  %v31 = vld [vmem:[%s0 + $0x58] sm:$0xff]
  %v32 = vld [vmem:[%s0 + $0x60] sm:$0xff]
  %v33 = vld [vmem:[%s0 + $0x68] sm:$0xff]
  %v34 = vld [vmem:[%s0 + $0x70] sm:$0xff]
  %v35 = vld [vmem:[%s0 + $0x78] sm:$0xff]
  %v36 = vld [vmem:[%s0 + $0x80] sm:$0xff]
  %v37 = vld [vmem:[%s0 + $0x88] sm:$0xff]
  %v38 = vld [vmem:[%s0 + $0x90] sm:$0xff]
  %v39 = vld [vmem:[%s0 + $0x98] sm:$0xff]
  %v40 = vld [vmem:[%s1] sm:$0xf]
  %v41 = vld [vmem:[%s1 + $0x4] sm:$0xf]
  %v42 = vld [vmem:[%s1 + $0x8] sm:$0xf]
  %v43 = vld [vmem:[%s1 + $0xc] sm:$0xf]
  %v44 = vld [vmem:[%s1 + $0x10] sm:$0xf]
  %v45 = vld [vmem:[%s1 + $0x14] sm:$0xf]
  %v46 = vld [vmem:[%s1 + $0x18] sm:$0xf]
  %v47 = vld [vmem:[%s1 + $0x1c] sm:$0xf]
  %v48 = vld [vmem:[%s1 + $0x20] sm:$0xf]
  %v49 = vld [vmem:[%s1 + $0x24] sm:$0xf]
  %v50 = vld [vmem:[%s1 + $0x28] sm:$0xf]
  %v51 = vld [vmem:[%s1 + $0x2c] sm:$0xf]
  %v52 = vld [vmem:[%s1 + $0x30] sm:$0xf]
  %v53 = vld [vmem:[%s1 + $0x34] sm:$0xf]
  %v54 = vld [vmem:[%s1 + $0x38] sm:$0xf]
  %v55 = vld [vmem:[%s1 + $0x3c] sm:$0xf]
  %v56 = vld [vmem:[%s1 + $0x40] sm:$0xf]
  %v57 = vld [vmem:[%s1 + $0x44] sm:$0xf]
  %v58 = vld [vmem:[%s1 + $0x48] sm:$0xf]
  %v59 = vld [vmem:[%s1 + $0x4c] sm:$0xf]
  %v60 = vld [vmem:[%s1 + $0x50] sm:$0xf]
  %v61 = vld [vmem:[%s1 + $0x54] sm:$0xf]
  %v62 = vld [vmem:[%s1 + $0x58] sm:$0xf]
  %v63 = vld [vmem:[%s1 + $0x5c] sm:$0xf]
  %v64 = vld [vmem:[%s1 + $0x60] sm:$0xf]
  %v65 = vld [vmem:[%s1 + $0x64] sm:$0xf]
  %v66 = vld [vmem:[%s1 + $0x68] sm:$0xf]
  %v67 = vld [vmem:[%s1 + $0x6c] sm:$0xf]
  %v68 = vld [vmem:[%s1 + $0x70] sm:$0xf]
  %v69 = vld [vmem:[%s1 + $0x74] sm:$0xf]
  %v70 = vld [vmem:[%s1 + $0x78] sm:$0xf]
  %v71 = vld [vmem:[%s1 + $0x7c] sm:$0xf]
  %v72 = vld [vmem:[%s1 + $0x80] sm:$0xf]
  %v73 = vld [vmem:[%s1 + $0x84] sm:$0xf]
  %v74 = vld [vmem:[%s1 + $0x88] sm:$0xf]
  %v75 = vld [vmem:[%s1 + $0x8c] sm:$0xf]
  %v76 = vld [vmem:[%s1 + $0x90] sm:$0xf]
  %v77 = vld [vmem:[%s1 + $0x94] sm:$0xf]
  %v78 = vld [vmem:[%s1 + $0x98] sm:$0xf]
  %v79 = vld [vmem:[%s1 + $0x9c] sm:$0xf]
  %v80 = vld [vmem:[%s1 + $0xa0] sm:$0xf]
  %v81 = vld [vmem:[%s1 + $0xa4] sm:$0xf]
  %v82 = vld [vmem:[%s1 + $0xa8] sm:$0xf]
  %v83 = vld [vmem:[%s1 + $0xac] sm:$0xf]
  %v84 = vld [vmem:[%s1 + $0xb0] sm:$0xf]
  %v85 = vld [vmem:[%s1 + $0xb4] sm:$0xf]
  %v86 = vld [vmem:[%s1 + $0xb8] sm:$0xf]
  %v87 = vld [vmem:[%s1 + $0xbc] sm:$0xf]
  %v88 = vld [vmem:[%s1 + $0xc0] sm:$0xf]
  %v89 = vld [vmem:[%s1 + $0xc4] sm:$0xf]
  %v90 = vld [vmem:[%s1 + $0xc8] sm:$0xf]
  %v91 = vld [vmem:[%s1 + $0xcc] sm:$0xf]
  %v92 = vld [vmem:[%s1 + $0xd0] sm:$0xf]
  %v93 = vld [vmem:[%s1 + $0xd4] sm:$0xf]
  %v94 = vld [vmem:[%s1 + $0xd8] sm:$0xf]
  %v95 = vld [vmem:[%s1 + $0xdc] sm:$0xf]
  %v96 = vld [vmem:[%s1 + $0xe0] sm:$0xf]
  %v97 = vld [vmem:[%s1 + $0xe4] sm:$0xf]
  %v98 = vld [vmem:[%s1 + $0xe8] sm:$0xf]
  %v99 = vld [vmem:[%s1 + $0xec] sm:$0xf]
  %v100 = vld [vmem:[%s1 + $0xf0] sm:$0xf]
  %v101 = vld [vmem:[%s1 + $0xf4] sm:$0xf]
  %v102 = vld [vmem:[%s1 + $0xf8] sm:$0xf]
  %v103 = vld [vmem:[%s1 + $0xfc] sm:$0xf]
  %v104 = vld [vmem:[%s1 + $0x100] sm:$0xf]
  %v105 = vld [vmem:[%s1 + $0x104] sm:$0xf]
  %v106 = vld [vmem:[%s1 + $0x108] sm:$0xf]
  %v107 = vld [vmem:[%s1 + $0x10c] sm:$0xf]
  %v108 = vld [vmem:[%s1 + $0x110] sm:$0xf]
  %v109 = vld [vmem:[%s1 + $0x114] sm:$0xf]
  %v110 = vld [vmem:[%s1 + $0x118] sm:$0xf]
  %v111 = vld [vmem:[%s1 + $0x11c] sm:$0xf]
  %v112 = vunpack.c.l.bf16 %v40
  %v113 = vunpack.c.l.bf16 %v41
  %v114 = vunpack.c.l.bf16 %v42
  %v115 = vunpack.c.l.bf16 %v43
  %v116 = vunpack.c.l.bf16 %v44
  %v117 = vunpack.c.l.bf16 %v45
  %v118 = vunpack.c.l.bf16 %v46
  %v119 = vunpack.c.l.bf16 %v47
  %v120 = vunpack.c.l.bf16 %v48
  %v121 = vunpack.c.l.bf16 %v49
  %v122 = vunpack.c.l.bf16 %v50
  %v123 = vunpack.c.l.bf16 %v51
  %v124 = vunpack.c.l.bf16 %v52
  %v125 = vunpack.c.l.bf16 %v53
  %v126 = vunpack.c.l.bf16 %v54
  %v127 = vunpack.c.l.bf16 %v55
  %v128 = vunpack.c.l.bf16 %v56
  %v129 = vunpack.c.l.bf16 %v57
  %v130 = vunpack.c.l.bf16 %v58
  %v131 = vunpack.c.l.bf16 %v59
  %v132 = vunpack.c.l.bf16 %v60
  %v133 = vunpack.c.l.bf16 %v61
  %v134 = vunpack.c.l.bf16 %v62
  %v135 = vunpack.c.l.bf16 %v63
  %v136 = vunpack.c.l.bf16 %v64
  %v137 = vunpack.c.l.bf16 %v65
  %v138 = vunpack.c.l.bf16 %v66
  %v139 = vunpack.c.l.bf16 %v67
  %v140 = vunpack.c.l.bf16 %v68
  %v141 = vunpack.c.l.bf16 %v69
  %v142 = vunpack.c.l.bf16 %v70
  %v143 = vunpack.c.l.bf16 %v71
  %v144 = vunpack.c.l.bf16 %v72
  %v145 = vunpack.c.l.bf16 %v73
  %v146 = vunpack.c.l.bf16 %v74
  %v147 = vunpack.c.l.bf16 %v75
  %v148 = vunpack.c.l.bf16 %v76
  %v149 = vunpack.c.l.bf16 %v77
  %v150 = vunpack.c.l.bf16 %v78
  %v151 = vunpack.c.l.bf16 %v79
  %v152 = vunpack.c.l.bf16 %v80
  %v153 = vunpack.c.l.bf16 %v81
  %v154 = vunpack.c.l.bf16 %v82
  %v155 = vunpack.c.l.bf16 %v83
  %v156 = vunpack.c.l.bf16 %v84
  %v157 = vunpack.c.l.bf16 %v85
  %v158 = vunpack.c.l.bf16 %v86
  %v159 = vunpack.c.l.bf16 %v87
  %v160 = vunpack.c.l.bf16 %v88
  %v161 = vunpack.c.l.bf16 %v89
  %v162 = vunpack.c.l.bf16 %v90
  %v163 = vunpack.c.l.bf16 %v91
  %v164 = vunpack.c.l.bf16 %v92
  %v165 = vunpack.c.l.bf16 %v93
  %v166 = vunpack.c.l.bf16 %v94
  %v167 = vunpack.c.l.bf16 %v95
  %v168 = vunpack.c.l.bf16 %v96
  %v169 = vunpack.c.l.bf16 %v97
  %v170 = vunpack.c.l.bf16 %v98
  %v171 = vunpack.c.l.bf16 %v99
  %v172 = vunpack.c.l.bf16 %v100
  %v173 = vunpack.c.l.bf16 %v101
  %v174 = vunpack.c.l.bf16 %v102
  %v175 = vunpack.c.l.bf16 %v103
  %v176 = vunpack.c.l.bf16 %v104
  %v177 = vunpack.c.l.bf16 %v105
  %v178 = vunpack.c.l.bf16 %v106
  %v179 = vunpack.c.l.bf16 %v107
  %v180 = vunpack.c.l.bf16 %v108
  %v181 = vunpack.c.l.bf16 %v109
  %v182 = vunpack.c.l.bf16 %v110
  %v183 = vunpack.c.l.bf16 %v111
  %vm184 = vcmask 523264
  %v186 = vsel %vm184, %v24, 0
  %v189 = vsel %vm184, %v29, 0
  %v192 = vsel %vm184, %v34, 0
  %v195 = vsel %vm184, %v39, 0
  %197 = vmatpush.msra.mxu0 %v127
  %198 = vmatpush.msra.mxu0 %v126
  %199 = vmatpush.msra.mxu0 %v125
  %200 = vmatpush.msra.mxu0 %v124
  %201 = vmatpush.msra.mxu0 %v123
  %202 = vmatpush.msra.mxu0 %v122
  %203 = vmatpush.msra.mxu0 %v121
  %204 = vmatpush.msra.mxu0 %v120
  %205 = vmatpush.msra.mxu0 %v119
  %206 = vmatpush.msra.mxu0 %v118
  %207 = vmatpush.msra.mxu0 %v117
  %208 = vmatpush.msra.mxu0 %v116
  %209 = vmatpush.msra.mxu0 %v115
  %210 = vmatpush.msra.mxu0 %v114
  %211 = vmatpush.msra.mxu0 %v113
  %212 = vmatpush.msra.mxu0 %v112
  %213 = vmatmul.f32.gmra.mxu0 %v20
  %v214 = vpop.f32.mrf.mxu0
  %v215 = vadd.f32 0.0, %v214
  %216 = vmatmul.f32.gmra.mxu0 %v25
  %v217 = vpop.f32.mrf.mxu0
  %v218 = vadd.f32 0.0, %v217
  %219 = vmatmul.f32.gmra.mxu0 %v30
  %v220 = vpop.f32.mrf.mxu0
  %v221 = vadd.f32 0.0, %v220
  %222 = vmatmul.f32.gmra.mxu0 %v35
  %v223 = vpop.f32.mrf.mxu0
  %v224 = vadd.f32 0.0, %v223
  %225 = vdwg.mxu0
  %226 = vmatpush.msra.mxu0 %v143
  %227 = vmatpush.msra.mxu0 %v142
  %228 = vmatpush.msra.mxu0 %v141
  %229 = vmatpush.msra.mxu0 %v140
  %230 = vmatpush.msra.mxu0 %v139
  %231 = vmatpush.msra.mxu0 %v138
  %232 = vmatpush.msra.mxu0 %v137
  %233 = vmatpush.msra.mxu0 %v136
  %234 = vmatpush.msra.mxu0 %v135
  %235 = vmatpush.msra.mxu0 %v134
  %236 = vmatpush.msra.mxu0 %v133
  %237 = vmatpush.msra.mxu0 %v132
  %238 = vmatpush.msra.mxu0 %v131
  %239 = vmatpush.msra.mxu0 %v130
  %240 = vmatpush.msra.mxu0 %v129
  %241 = vmatpush.msra.mxu0 %v128
  %242 = vmatmul.f32.gmra.mxu0 %v21
  %v243 = vpop.f32.mrf.mxu0
  %v244 = vadd.f32 %v215, %v243
  %245 = vmatmul.f32.gmra.mxu0 %v26
  %v246 = vpop.f32.mrf.mxu0
  %v247 = vadd.f32 %v218, %v246
  %248 = vmatmul.f32.gmra.mxu0 %v31
  %v249 = vpop.f32.mrf.mxu0
  %v250 = vadd.f32 %v221, %v249
  %251 = vmatmul.f32.gmra.mxu0 %v36
  %v252 = vpop.f32.mrf.mxu0
  %v253 = vadd.f32 %v224, %v252
  %254 = vdwg.mxu0
  %255 = vmatpush.msra.mxu0 %v159
  %256 = vmatpush.msra.mxu0 %v158
  %257 = vmatpush.msra.mxu0 %v157
  %258 = vmatpush.msra.mxu0 %v156
  %259 = vmatpush.msra.mxu0 %v155
  %260 = vmatpush.msra.mxu0 %v154
  %261 = vmatpush.msra.mxu0 %v153
  %262 = vmatpush.msra.mxu0 %v152
  %263 = vmatpush.msra.mxu0 %v151
  %264 = vmatpush.msra.mxu0 %v150
  %265 = vmatpush.msra.mxu0 %v149
  %266 = vmatpush.msra.mxu0 %v148
  %267 = vmatpush.msra.mxu0 %v147
  %268 = vmatpush.msra.mxu0 %v146
  %269 = vmatpush.msra.mxu0 %v145
  %270 = vmatpush.msra.mxu0 %v144
  %271 = vmatmul.f32.gmra.mxu0 %v22
  %v272 = vpop.f32.mrf.mxu0
  %v273 = vadd.f32 %v244, %v272
  %274 = vmatmul.f32.gmra.mxu0 %v27
  %v275 = vpop.f32.mrf.mxu0
  %v276 = vadd.f32 %v247, %v275
  %277 = vmatmul.f32.gmra.mxu0 %v32
  %v278 = vpop.f32.mrf.mxu0
  %v279 = vadd.f32 %v250, %v278
  %280 = vmatmul.f32.gmra.mxu0 %v37
  %v281 = vpop.f32.mrf.mxu0
  %v282 = vadd.f32 %v253, %v281
  %283 = vdwg.mxu0
  %284 = vmatpush.msra.mxu0 %v175
  %285 = vmatpush.msra.mxu0 %v174
  %286 = vmatpush.msra.mxu0 %v173
  %287 = vmatpush.msra.mxu0 %v172
  %288 = vmatpush.msra.mxu0 %v171
  %289 = vmatpush.msra.mxu0 %v170
  %290 = vmatpush.msra.mxu0 %v169
  %291 = vmatpush.msra.mxu0 %v168
  %292 = vmatpush.msra.mxu0 %v167
  %293 = vmatpush.msra.mxu0 %v166
  %294 = vmatpush.msra.mxu0 %v165
  %295 = vmatpush.msra.mxu0 %v164
  %296 = vmatpush.msra.mxu0 %v163
  %297 = vmatpush.msra.mxu0 %v162
  %298 = vmatpush.msra.mxu0 %v161
  %299 = vmatpush.msra.mxu0 %v160
  %300 = vmatmul.f32.gmra.mxu0 %v23
  %v301 = vpop.f32.mrf.mxu0
  %v302 = vadd.f32 %v273, %v301
  %303 = vmatmul.f32.gmra.mxu0 %v28
  %v304 = vpop.f32.mrf.mxu0
  %v305 = vadd.f32 %v276, %v304
  %306 = vmatmul.f32.gmra.mxu0 %v33
  %v307 = vpop.f32.mrf.mxu0
  %v308 = vadd.f32 %v279, %v307
  %309 = vmatmul.f32.gmra.mxu0 %v38
  %v310 = vpop.f32.mrf.mxu0
  %v311 = vadd.f32 %v282, %v310
  %312 = vdwg.mxu0
  %313 = vmatpush.msra.mxu0 0.0
  %314 = vmatpush.msra.mxu0 0.0
  %315 = vmatpush.msra.mxu0 0.0
  %316 = vmatpush.msra.mxu0 0.0
  %317 = vmatpush.msra.mxu0 0.0
  %318 = vmatpush.msra.mxu0 0.0
  %319 = vmatpush.msra.mxu0 0.0
  %320 = vmatpush.msra.mxu0 0.0
  %321 = vmatpush.msra.mxu0 %v183
  %322 = vmatpush.msra.mxu0 %v182
  %323 = vmatpush.msra.mxu0 %v181
  %324 = vmatpush.msra.mxu0 %v180
  %325 = vmatpush.msra.mxu0 %v179
  %326 = vmatpush.msra.mxu0 %v178
  %327 = vmatpush.msra.mxu0 %v177
  %328 = vmatpush.msra.mxu0 %v176
  %329 = vmatmul.f32.gmra.mxu0 %v186
  %v330 = vpop.f32.mrf.mxu0
  %v331 = vadd.f32 %v302, %v330
  %332 = vmatmul.f32.gmra.mxu0 %v189
  %v333 = vpop.f32.mrf.mxu0
  %v334 = vadd.f32 %v305, %v333
  %335 = vmatmul.f32.gmra.mxu0 %v192
  %v336 = vpop.f32.mrf.mxu0
  %v337 = vadd.f32 %v308, %v336
  %338 = vmatmul.f32.gmra.mxu0 %v195
  %v339 = vpop.f32.mrf.mxu0
  %v340 = vadd.f32 %v311, %v339
  %341 = vdwg.mxu0
  %v342 = vld [vmem:[%s2] sm:$0x1]
  %v343 = vld [vmem:[%s3] sm:$0x1]
  %v344 = vsel %vm184, %v331, 0.0
  %v345 = vsel %vm184, %v334, 0.0
  %v346 = vadd.f32 %v344, %v345
  %v347 = vsel %vm184, %v337, 0.0
  %v348 = vadd.f32 %v346, %v347
  %v349 = vsel %vm184, %v340, 0.0
  %v350 = vadd.f32 %v348, %v349
  %v351 = vrot.slane %v350, 4
  %v352 = vadd.f32 %v350, %v351
  %v353 = vrot.slane %v352, 2
  %v354 = vadd.f32 %v352, %v353
  %v355 = vrot.slane %v354, 1
  %v356 = vadd.f32 %v354, %v355
  %v357 = vmul.f32 %v356, 0.03125
  %v358 = vsub.f32 %v331, %v357
  %v359 = vsub.f32 %v334, %v357
  %v360 = vsub.f32 %v337, %v357
  %v361 = vsub.f32 %v340, %v357
  %v362 = vmul.f32 %v358, %v358
  %v363 = vmul.f32 %v359, %v359
  %v364 = vmul.f32 %v360, %v360
  %v365 = vmul.f32 %v361, %v361
  %v366 = vsel %vm184, %v362, 0.0
  %v367 = vsel %vm184, %v363, 0.0
  %v368 = vadd.f32 %v366, %v367
  %v369 = vsel %vm184, %v364, 0.0
  %v370 = vadd.f32 %v368, %v369
  %v371 = vsel %vm184, %v365, 0.0
  %v372 = vadd.f32 %v370, %v371
  %v373 = vrot.slane %v372, 4
  %v374 = vadd.f32 %v372, %v373
  %v375 = vrot.slane %v374, 2
  %v376 = vadd.f32 %v374, %v375
  %v377 = vrot.slane %v376, 1
  %v378 = vadd.f32 %v376, %v377
  %v379 = vmul.f32 %v378, 0.03125
  %v380 = vadd.f32 %v379, 1e-05
  %v381 = vrsqrt.pop %v380
  %v382 = vmul.f32 %v381, %v380
  %v383 = vmul.f32 %v382, %v381
  %v384 = vmul.f32 0.5, %v383
  %v385 = vsub.f32 1.5, %v384
  %v386 = vmul.f32 %v381, %v385
  %vm387 = vweird.f32 %v380
  %vm388 = vweird.f32 %v381
  %vm389 = vmor %vm387, %vm388
  %v390 = vsel %vm389, %v381, %v386
  %v391 = vmul.f32 %v358, %v390
  %v392 = vmul.f32 %v359, %v390
  %v393 = vmul.f32 %v360, %v390
  %v394 = vmul.f32 %v361, %v390
  %v396 = vperm.slane %v342, 0
  %v398 = vmul.f32 %v391, %v396
  %v399 = vmul.f32 %v392, %v396
  %v400 = vmul.f32 %v393, %v396
  %v401 = vmul.f32 %v394, %v396
  %v403 = vperm.slane %v343, 0
  %v405 = vadd.f32 %v398, %v403
  %v406 = vadd.f32 %v399, %v403
  %v407 = vadd.f32 %v400, %v403
  %v408 = vadd.f32 %v401, %v403
  %v409 = vld [vmem:[%s4] sm:$0xff]
  %v410 = vld [vmem:[%s4 + $0x8] sm:$0xff]
  %v411 = vld [vmem:[%s4 + $0x10] sm:$0xff]
  %v412 = vld [vmem:[%s4 + $0x18] sm:$0xff]
  %v413 = vadd.f32 %v405, %v409
  %v414 = vadd.f32 %v406, %v410
  %v415 = vadd.f32 %v407, %v411
  %v416 = vadd.f32 %v408, %v412
  %v417 = vmax.f32 %v413, 0.0
  %v418 = vmax.f32 %v414, 0.0
  %v419 = vmax.f32 %v415, 0.0
  %v420 = vmax.f32 %v416, 0.0
  %421 = vst.msk [vmem:[%s5] sm:$0xff] %vm184, %v417
  %422 = vst.msk [vmem:[%s5 + $0x8] sm:$0xff] %vm184, %v418
  %423 = vst.msk [vmem:[%s5 + $0x10] sm:$0xff] %vm184, %v419
  %424 = vst.msk [vmem:[%s5 + $0x18] sm:$0xff] %vm184, %v420
  // Predicated region
  $region22: #{resnet_forward.8} parent=0 // pred_check
    _
  $region23: #{resnet_forward.8} parent=0 // pred_check_branch
    %426 = sbr.rel (0) target = $region25
  $region24: #{resnet_forward.8} parent=0 // pred_region
    _
  $region25: #{resnet_forward.8} parent=0 // pred_fallthru
    _
  // Predicated region
  $region26: #{resnet_forward.8} parent=0 // pred_check
    _
  $region27: #{resnet_forward.8} parent=0 // pred_check_branch
    %428 = sbr.rel (0) target = $region29
  $region28: #{resnet_forward.8} parent=0 // pred_region
    _
  $region29: #{resnet_forward.8} parent=0 // pred_fallthru
    _

// kernel: resnet_forward.7
$region0: #{resnet_forward.7}
  #allocation0 [shape = 'u32[]', space=smem, size = 0x4, offset = 0x4, fixed_abs, tag = 'smem constant byte address 0x4 - core index']
  #allocation1 [shape = 'u32[72,128]{1,0:T(1,128)}', space=vmem, size = 0x9000, scoped, tag = 'internal scratch']
  %s0 = inlined_call_operand.vmem [shape: f32[32,576], index: 0, kind: input, shape index: {}]
  %s1 = inlined_call_operand.vmem [shape: bf16[576,64], index: 1, kind: input, shape index: {}]
  %s2 = inlined_call_operand.vmem [shape: f32[1,64], index: 2, kind: input, shape index: {}]
  %s3 = inlined_call_operand.vmem [shape: f32[1,64], index: 3, kind: input, shape index: {}]
  %s4 = inlined_call_operand.vmem [shape: f32[32,64], index: 4, kind: output, shape index: {}]
  %s5 = sld [smem:[#allocation0]]
  $region26: #{resnet_forward.7} parent=0
    _
  %s7 = ssub.s32 1, %s5
  %s8 = scalar_select 0, %s7, %s5
  // Predicated region
  $region2: #{resnet_forward.7} parent=0 // pred_check
    _
  $region3: #{resnet_forward.7} parent=0 // pred_check_branch
    %10 = sbr.rel (0) target = $region5
  $region4: #{resnet_forward.7} parent=0 // pred_region
    _
  $region5: #{resnet_forward.7} parent=0 // pred_fallthru
    _
  // Predicated region
  $region6: #{resnet_forward.7} parent=0 // pred_check
    _
  $region7: #{resnet_forward.7} parent=0 // pred_check_branch
    %12 = sbr.rel (0) target = $region9
  $region8: #{resnet_forward.7} parent=0 // pred_region
    _
  $region9: #{resnet_forward.7} parent=0 // pred_fallthru
    _
  // Predicated region
  $region10: #{resnet_forward.7} parent=0 // pred_check
    _
  $region11: #{resnet_forward.7} parent=0 // pred_check_branch
    %14 = sbr.rel (0) target = $region13
  $region12: #{resnet_forward.7} parent=0 // pred_region
    _
  $region13: #{resnet_forward.7} parent=0 // pred_fallthru
    _
  // Predicated region
  $region14: #{resnet_forward.7} parent=0 // pred_check
    _
  $region15: #{resnet_forward.7} parent=0 // pred_check_branch
    %16 = sbr.rel (0) target = $region17
  $region16: #{resnet_forward.7} parent=0 // pred_region
    _
  $region17: #{resnet_forward.7} parent=0 // pred_fallthru
    _
  %v17 = vld [vmem:[%s0] sm:$0xff]
  %v18 = vld [vmem:[%s0 + $0x8] sm:$0xff]
  %v19 = vld [vmem:[%s0 + $0x10] sm:$0xff]
  %v20 = vld [vmem:[%s0 + $0x18] sm:$0xff]
  %v21 = vld [vmem:[%s0 + $0x20] sm:$0xff]
  %v22 = vld [vmem:[%s0 + $0x28] sm:$0xff]
  %v23 = vld [vmem:[%s0 + $0x30] sm:$0xff]
  %v24 = vld [vmem:[%s0 + $0x38] sm:$0xff]
  %v25 = vld [vmem:[%s0 + $0x40] sm:$0xff]
  %v26 = vld [vmem:[%s0 + $0x48] sm:$0xff]
  %v27 = vld [vmem:[%s0 + $0x50] sm:$0xff]
  %v28 = vld [vmem:[%s0 + $0x58] sm:$0xff]
  %v29 = vld [vmem:[%s0 + $0x60] sm:$0xff]
  %v30 = vld [vmem:[%s0 + $0x68] sm:$0xff]
  %v31 = vld [vmem:[%s0 + $0x70] sm:$0xff]
  %v32 = vld [vmem:[%s0 + $0x78] sm:$0xff]
  %v33 = vld [vmem:[%s0 + $0x80] sm:$0xff]
  %v34 = vld [vmem:[%s0 + $0x88] sm:$0xff]
  %v35 = vld [vmem:[%s0 + $0x90] sm:$0xff]
  %v36 = vld [vmem:[%s0 + $0x98] sm:$0xff]
  %v37 = vld [vmem:[%s1] sm:$0xf]
  %v38 = vld [vmem:[%s1 + $0x4] sm:$0xf]
  %v39 = vld [vmem:[%s1 + $0x8] sm:$0xf]
  %v40 = vld [vmem:[%s1 + $0xc] sm:$0xf]
  %v41 = vld [vmem:[%s1 + $0x10] sm:$0xf]
  %v42 = vld [vmem:[%s1 + $0x14] sm:$0xf]
  %v43 = vld [vmem:[%s1 + $0x18] sm:$0xf]
  %v44 = vld [vmem:[%s1 + $0x1c] sm:$0xf]
  %v45 = vld [vmem:[%s1 + $0x20] sm:$0xf]
  %v46 = vld [vmem:[%s1 + $0x24] sm:$0xf]
  %v47 = vld [vmem:[%s1 + $0x28] sm:$0xf]
  %v48 = vld [vmem:[%s1 + $0x2c] sm:$0xf]
  %v49 = vld [vmem:[%s1 + $0x30] sm:$0xf]
  %v50 = vld [vmem:[%s1 + $0x34] sm:$0xf]
  %v51 = vld [vmem:[%s1 + $0x38] sm:$0xf]
  %v52 = vld [vmem:[%s1 + $0x3c] sm:$0xf]
  %v53 = vld [vmem:[%s1 + $0x40] sm:$0xf]
  %v54 = vld [vmem:[%s1 + $0x44] sm:$0xf]
  %v55 = vld [vmem:[%s1 + $0x48] sm:$0xf]
  %v56 = vld [vmem:[%s1 + $0x4c] sm:$0xf]
  %v57 = vld [vmem:[%s1 + $0x50] sm:$0xf]
  %v58 = vld [vmem:[%s1 + $0x54] sm:$0xf]
  %v59 = vld [vmem:[%s1 + $0x58] sm:$0xf]
  %v60 = vld [vmem:[%s1 + $0x5c] sm:$0xf]
  %v61 = vld [vmem:[%s1 + $0x60] sm:$0xf]
  %v62 = vld [vmem:[%s1 + $0x64] sm:$0xf]
  %v63 = vld [vmem:[%s1 + $0x68] sm:$0xf]
  %v64 = vld [vmem:[%s1 + $0x6c] sm:$0xf]
  %v65 = vld [vmem:[%s1 + $0x70] sm:$0xf]
  %v66 = vld [vmem:[%s1 + $0x74] sm:$0xf]
  %v67 = vld [vmem:[%s1 + $0x78] sm:$0xf]
  %v68 = vld [vmem:[%s1 + $0x7c] sm:$0xf]
  %v69 = vld [vmem:[%s1 + $0x80] sm:$0xf]
  %v70 = vld [vmem:[%s1 + $0x84] sm:$0xf]
  %v71 = vld [vmem:[%s1 + $0x88] sm:$0xf]
  %v72 = vld [vmem:[%s1 + $0x8c] sm:$0xf]
  %v73 = vld [vmem:[%s1 + $0x90] sm:$0xf]
  %v74 = vld [vmem:[%s1 + $0x94] sm:$0xf]
  %v75 = vld [vmem:[%s1 + $0x98] sm:$0xf]
  %v76 = vld [vmem:[%s1 + $0x9c] sm:$0xf]
  %v77 = vld [vmem:[%s1 + $0xa0] sm:$0xf]
  %v78 = vld [vmem:[%s1 + $0xa4] sm:$0xf]
  %v79 = vld [vmem:[%s1 + $0xa8] sm:$0xf]
  %v80 = vld [vmem:[%s1 + $0xac] sm:$0xf]
  %v81 = vld [vmem:[%s1 + $0xb0] sm:$0xf]
  %v82 = vld [vmem:[%s1 + $0xb4] sm:$0xf]
  %v83 = vld [vmem:[%s1 + $0xb8] sm:$0xf]
  %v84 = vld [vmem:[%s1 + $0xbc] sm:$0xf]
  %v85 = vld [vmem:[%s1 + $0xc0] sm:$0xf]
  %v86 = vld [vmem:[%s1 + $0xc4] sm:$0xf]
  %v87 = vld [vmem:[%s1 + $0xc8] sm:$0xf]
  %v88 = vld [vmem:[%s1 + $0xcc] sm:$0xf]
  %v89 = vld [vmem:[%s1 + $0xd0] sm:$0xf]
  %v90 = vld [vmem:[%s1 + $0xd4] sm:$0xf]
  %v91 = vld [vmem:[%s1 + $0xd8] sm:$0xf]
  %v92 = vld [vmem:[%s1 + $0xdc] sm:$0xf]
  %v93 = vld [vmem:[%s1 + $0xe0] sm:$0xf]
  %v94 = vld [vmem:[%s1 + $0xe4] sm:$0xf]
  %v95 = vld [vmem:[%s1 + $0xe8] sm:$0xf]
  %v96 = vld [vmem:[%s1 + $0xec] sm:$0xf]
  %v97 = vld [vmem:[%s1 + $0xf0] sm:$0xf]
  %v98 = vld [vmem:[%s1 + $0xf4] sm:$0xf]
  %v99 = vld [vmem:[%s1 + $0xf8] sm:$0xf]
  %v100 = vld [vmem:[%s1 + $0xfc] sm:$0xf]
  %v101 = vld [vmem:[%s1 + $0x100] sm:$0xf]
  %v102 = vld [vmem:[%s1 + $0x104] sm:$0xf]
  %v103 = vld [vmem:[%s1 + $0x108] sm:$0xf]
  %v104 = vld [vmem:[%s1 + $0x10c] sm:$0xf]
  %v105 = vld [vmem:[%s1 + $0x110] sm:$0xf]
  %v106 = vld [vmem:[%s1 + $0x114] sm:$0xf]
  %v107 = vld [vmem:[%s1 + $0x118] sm:$0xf]
  %v108 = vld [vmem:[%s1 + $0x11c] sm:$0xf]
  %v109 = vunpack.c.l.bf16 %v37
  %v110 = vunpack.c.l.bf16 %v38
  %v111 = vunpack.c.l.bf16 %v39
  %v112 = vunpack.c.l.bf16 %v40
  %v113 = vunpack.c.l.bf16 %v41
  %v114 = vunpack.c.l.bf16 %v42
  %v115 = vunpack.c.l.bf16 %v43
  %v116 = vunpack.c.l.bf16 %v44
  %v117 = vunpack.c.l.bf16 %v45
  %v118 = vunpack.c.l.bf16 %v46
  %v119 = vunpack.c.l.bf16 %v47
  %v120 = vunpack.c.l.bf16 %v48
  %v121 = vunpack.c.l.bf16 %v49
  %v122 = vunpack.c.l.bf16 %v50
  %v123 = vunpack.c.l.bf16 %v51
  %v124 = vunpack.c.l.bf16 %v52
  %v125 = vunpack.c.l.bf16 %v53
  %v126 = vunpack.c.l.bf16 %v54
  %v127 = vunpack.c.l.bf16 %v55
  %v128 = vunpack.c.l.bf16 %v56
  %v129 = vunpack.c.l.bf16 %v57
  %v130 = vunpack.c.l.bf16 %v58
  %v131 = vunpack.c.l.bf16 %v59
  %v132 = vunpack.c.l.bf16 %v60
  %v133 = vunpack.c.l.bf16 %v61
  %v134 = vunpack.c.l.bf16 %v62
  %v135 = vunpack.c.l.bf16 %v63
  %v136 = vunpack.c.l.bf16 %v64
  %v137 = vunpack.c.l.bf16 %v65
  %v138 = vunpack.c.l.bf16 %v66
  %v139 = vunpack.c.l.bf16 %v67
  %v140 = vunpack.c.l.bf16 %v68
  %v141 = vunpack.c.l.bf16 %v69
  %v142 = vunpack.c.l.bf16 %v70
  %v143 = vunpack.c.l.bf16 %v71
  %v144 = vunpack.c.l.bf16 %v72
  %v145 = vunpack.c.l.bf16 %v73
  %v146 = vunpack.c.l.bf16 %v74
  %v147 = vunpack.c.l.bf16 %v75
  %v148 = vunpack.c.l.bf16 %v76
  %v149 = vunpack.c.l.bf16 %v77
  %v150 = vunpack.c.l.bf16 %v78
  %v151 = vunpack.c.l.bf16 %v79
  %v152 = vunpack.c.l.bf16 %v80
  %v153 = vunpack.c.l.bf16 %v81
  %v154 = vunpack.c.l.bf16 %v82
  %v155 = vunpack.c.l.bf16 %v83
  %v156 = vunpack.c.l.bf16 %v84
  %v157 = vunpack.c.l.bf16 %v85
  %v158 = vunpack.c.l.bf16 %v86
  %v159 = vunpack.c.l.bf16 %v87
  %v160 = vunpack.c.l.bf16 %v88
  %v161 = vunpack.c.l.bf16 %v89
  %v162 = vunpack.c.l.bf16 %v90
  %v163 = vunpack.c.l.bf16 %v91
  %v164 = vunpack.c.l.bf16 %v92
  %v165 = vunpack.c.l.bf16 %v93
  %v166 = vunpack.c.l.bf16 %v94
  %v167 = vunpack.c.l.bf16 %v95
  %v168 = vunpack.c.l.bf16 %v96
  %v169 = vunpack.c.l.bf16 %v97
  %v170 = vunpack.c.l.bf16 %v98
  %v171 = vunpack.c.l.bf16 %v99
  %v172 = vunpack.c.l.bf16 %v100
  %v173 = vunpack.c.l.bf16 %v101
  %v174 = vunpack.c.l.bf16 %v102
  %v175 = vunpack.c.l.bf16 %v103
  %v176 = vunpack.c.l.bf16 %v104
  %v177 = vunpack.c.l.bf16 %v105
  %v178 = vunpack.c.l.bf16 %v106
  %v179 = vunpack.c.l.bf16 %v107
  %v180 = vunpack.c.l.bf16 %v108
  %vm181 = vcmask 523264
  %v183 = vsel %vm181, %v21, 0
  %v186 = vsel %vm181, %v26, 0
  %v189 = vsel %vm181, %v31, 0
  %v192 = vsel %vm181, %v36, 0
  %194 = vmatpush.msra.mxu0 %v124
  %195 = vmatpush.msra.mxu0 %v123
  %196 = vmatpush.msra.mxu0 %v122
  %197 = vmatpush.msra.mxu0 %v121
  %198 = vmatpush.msra.mxu0 %v120
  %199 = vmatpush.msra.mxu0 %v119
  %200 = vmatpush.msra.mxu0 %v118
  %201 = vmatpush.msra.mxu0 %v117
  %202 = vmatpush.msra.mxu0 %v116
  %203 = vmatpush.msra.mxu0 %v115
  %204 = vmatpush.msra.mxu0 %v114
  %205 = vmatpush.msra.mxu0 %v113
  %206 = vmatpush.msra.mxu0 %v112
  %207 = vmatpush.msra.mxu0 %v111
  %208 = vmatpush.msra.mxu0 %v110
  %209 = vmatpush.msra.mxu0 %v109
  %210 = vmatmul.f32.gmra.mxu0 %v17
  %v211 = vpop.f32.mrf.mxu0
  %v212 = vadd.f32 0.0, %v211
  %213 = vmatmul.f32.gmra.mxu0 %v22
  %v214 = vpop.f32.mrf.mxu0
  %v215 = vadd.f32 0.0, %v214
  %216 = vmatmul.f32.gmra.mxu0 %v27
  %v217 = vpop.f32.mrf.mxu0
  %v218 = vadd.f32 0.0, %v217
  %219 = vmatmul.f32.gmra.mxu0 %v32
  %v220 = vpop.f32.mrf.mxu0
  %v221 = vadd.f32 0.0, %v220
  %222 = vdwg.mxu0
  %223 = vmatpush.msra.mxu0 %v140
  %224 = vmatpush.msra.mxu0 %v139
  %225 = vmatpush.msra.mxu0 %v138
  %226 = vmatpush.msra.mxu0 %v137
  %227 = vmatpush.msra.mxu0 %v136
  %228 = vmatpush.msra.mxu0 %v135
  %229 = vmatpush.msra.mxu0 %v134
  %230 = vmatpush.msra.mxu0 %v133
  %231 = vmatpush.msra.mxu0 %v132
  %232 = vmatpush.msra.mxu0 %v131
  %233 = vmatpush.msra.mxu0 %v130
  %234 = vmatpush.msra.mxu0 %v129
  %235 = vmatpush.msra.mxu0 %v128
  %236 = vmatpush.msra.mxu0 %v127
  %237 = vmatpush.msra.mxu0 %v126
  %238 = vmatpush.msra.mxu0 %v125
  %239 = vmatmul.f32.gmra.mxu0 %v18
  %v240 = vpop.f32.mrf.mxu0
  %v241 = vadd.f32 %v212, %v240
  %242 = vmatmul.f32.gmra.mxu0 %v23
  %v243 = vpop.f32.mrf.mxu0
  %v244 = vadd.f32 %v215, %v243
  %245 = vmatmul.f32.gmra.mxu0 %v28
  %v246 = vpop.f32.mrf.mxu0
  %v247 = vadd.f32 %v218, %v246
  %248 = vmatmul.f32.gmra.mxu0 %v33
  %v249 = vpop.f32.mrf.mxu0
  %v250 = vadd.f32 %v221, %v249
  %251 = vdwg.mxu0
  %252 = vmatpush.msra.mxu0 %v156
  %253 = vmatpush.msra.mxu0 %v155
  %254 = vmatpush.msra.mxu0 %v154
  %255 = vmatpush.msra.mxu0 %v153
  %256 = vmatpush.msra.mxu0 %v152
  %257 = vmatpush.msra.mxu0 %v151
  %258 = vmatpush.msra.mxu0 %v150
  %259 = vmatpush.msra.mxu0 %v149
  %260 = vmatpush.msra.mxu0 %v148
  %261 = vmatpush.msra.mxu0 %v147
  %262 = vmatpush.msra.mxu0 %v146
  %263 = vmatpush.msra.mxu0 %v145
  %264 = vmatpush.msra.mxu0 %v144
  %265 = vmatpush.msra.mxu0 %v143
  %266 = vmatpush.msra.mxu0 %v142
  %267 = vmatpush.msra.mxu0 %v141
  %268 = vmatmul.f32.gmra.mxu0 %v19
  %v269 = vpop.f32.mrf.mxu0
  %v270 = vadd.f32 %v241, %v269
  %271 = vmatmul.f32.gmra.mxu0 %v24
  %v272 = vpop.f32.mrf.mxu0
  %v273 = vadd.f32 %v244, %v272
  %274 = vmatmul.f32.gmra.mxu0 %v29
  %v275 = vpop.f32.mrf.mxu0
  %v276 = vadd.f32 %v247, %v275
  %277 = vmatmul.f32.gmra.mxu0 %v34
  %v278 = vpop.f32.mrf.mxu0
  %v279 = vadd.f32 %v250, %v278
  %280 = vdwg.mxu0
  %281 = vmatpush.msra.mxu0 %v172
  %282 = vmatpush.msra.mxu0 %v171
  %283 = vmatpush.msra.mxu0 %v170
  %284 = vmatpush.msra.mxu0 %v169
  %285 = vmatpush.msra.mxu0 %v168
  %286 = vmatpush.msra.mxu0 %v167
  %287 = vmatpush.msra.mxu0 %v166
  %288 = vmatpush.msra.mxu0 %v165
  %289 = vmatpush.msra.mxu0 %v164
  %290 = vmatpush.msra.mxu0 %v163
  %291 = vmatpush.msra.mxu0 %v162
  %292 = vmatpush.msra.mxu0 %v161
  %293 = vmatpush.msra.mxu0 %v160
  %294 = vmatpush.msra.mxu0 %v159
  %295 = vmatpush.msra.mxu0 %v158
  %296 = vmatpush.msra.mxu0 %v157
  %297 = vmatmul.f32.gmra.mxu0 %v20
  %v298 = vpop.f32.mrf.mxu0
  %v299 = vadd.f32 %v270, %v298
  %300 = vmatmul.f32.gmra.mxu0 %v25
  %v301 = vpop.f32.mrf.mxu0
  %v302 = vadd.f32 %v273, %v301
  %303 = vmatmul.f32.gmra.mxu0 %v30
  %v304 = vpop.f32.mrf.mxu0
  %v305 = vadd.f32 %v276, %v304
  %306 = vmatmul.f32.gmra.mxu0 %v35
  %v307 = vpop.f32.mrf.mxu0
  %v308 = vadd.f32 %v279, %v307
  %309 = vdwg.mxu0
  %310 = vmatpush.msra.mxu0 0.0
  %311 = vmatpush.msra.mxu0 0.0
  %312 = vmatpush.msra.mxu0 0.0
  %313 = vmatpush.msra.mxu0 0.0
  %314 = vmatpush.msra.mxu0 0.0
  %315 = vmatpush.msra.mxu0 0.0
  %316 = vmatpush.msra.mxu0 0.0
  %317 = vmatpush.msra.mxu0 0.0
  %318 = vmatpush.msra.mxu0 %v180
  %319 = vmatpush.msra.mxu0 %v179
  %320 = vmatpush.msra.mxu0 %v178
  %321 = vmatpush.msra.mxu0 %v177
  %322 = vmatpush.msra.mxu0 %v176
  %323 = vmatpush.msra.mxu0 %v175
  %324 = vmatpush.msra.mxu0 %v174
  %325 = vmatpush.msra.mxu0 %v173
  %326 = vmatmul.f32.gmra.mxu0 %v183
  %v327 = vpop.f32.mrf.mxu0
  %v328 = vadd.f32 %v299, %v327
  %329 = vmatmul.f32.gmra.mxu0 %v186
  %v330 = vpop.f32.mrf.mxu0
  %v331 = vadd.f32 %v302, %v330
  %332 = vmatmul.f32.gmra.mxu0 %v189
  %v333 = vpop.f32.mrf.mxu0
  %v334 = vadd.f32 %v305, %v333
  %335 = vmatmul.f32.gmra.mxu0 %v192
  %v336 = vpop.f32.mrf.mxu0
  %v337 = vadd.f32 %v308, %v336
  %338 = vdwg.mxu0
  %v339 = vld [vmem:[%s2] sm:$0x1]
  %v340 = vld [vmem:[%s3] sm:$0x1]
  %v341 = vsel %vm181, %v328, 0.0
  %v342 = vsel %vm181, %v331, 0.0
  %v343 = vadd.f32 %v341, %v342
  %v344 = vsel %vm181, %v334, 0.0
  %v345 = vadd.f32 %v343, %v344
  %v346 = vsel %vm181, %v337, 0.0
  %v347 = vadd.f32 %v345, %v346
  %v348 = vrot.slane %v347, 4
  %v349 = vadd.f32 %v347, %v348
  %v350 = vrot.slane %v349, 2
  %v351 = vadd.f32 %v349, %v350
  %v352 = vrot.slane %v351, 1
  %v353 = vadd.f32 %v351, %v352
  %v354 = vmul.f32 %v353, 0.03125
  %v355 = vsub.f32 %v328, %v354
  %v356 = vsub.f32 %v331, %v354
  %v357 = vsub.f32 %v334, %v354
  %v358 = vsub.f32 %v337, %v354
  %v359 = vmul.f32 %v355, %v355
  %v360 = vmul.f32 %v356, %v356
  %v361 = vmul.f32 %v357, %v357
  %v362 = vmul.f32 %v358, %v358
  %v363 = vsel %vm181, %v359, 0.0
  %v364 = vsel %vm181, %v360, 0.0
  %v365 = vadd.f32 %v363, %v364
  %v366 = vsel %vm181, %v361, 0.0
  %v367 = vadd.f32 %v365, %v366
  %v368 = vsel %vm181, %v362, 0.0
  %v369 = vadd.f32 %v367, %v368
  %v370 = vrot.slane %v369, 4
  %v371 = vadd.f32 %v369, %v370
  %v372 = vrot.slane %v371, 2
  %v373 = vadd.f32 %v371, %v372
  %v374 = vrot.slane %v373, 1
  %v375 = vadd.f32 %v373, %v374
  %v376 = vmul.f32 %v375, 0.03125
  %v377 = vadd.f32 %v376, 1e-05
  %v378 = vrsqrt.pop %v377
  %v379 = vmul.f32 %v378, %v377
  %v380 = vmul.f32 %v379, %v378
  %v381 = vmul.f32 0.5, %v380
  %v382 = vsub.f32 1.5, %v381
  %v383 = vmul.f32 %v378, %v382
  %vm384 = vweird.f32 %v377
  %vm385 = vweird.f32 %v378
  %vm386 = vmor %vm384, %vm385
  %v387 = vsel %vm386, %v378, %v383
  %v388 = vmul.f32 %v355, %v387
  %v389 = vmul.f32 %v356, %v387
  %v390 = vmul.f32 %v357, %v387
  %v391 = vmul.f32 %v358, %v387
  %v393 = vperm.slane %v339, 0
  %v395 = vmul.f32 %v388, %v393
  %v396 = vmul.f32 %v389, %v393
  %v397 = vmul.f32 %v390, %v393
  %v398 = vmul.f32 %v391, %v393
  %v400 = vperm.slane %v340, 0
  %v402 = vadd.f32 %v395, %v400
  %v403 = vadd.f32 %v396, %v400
  %v404 = vadd.f32 %v397, %v400
  %v405 = vadd.f32 %v398, %v400
  %v406 = vmax.f32 %v402, 0.0
  %v407 = vmax.f32 %v403, 0.0
  %v408 = vmax.f32 %v404, 0.0
  %v409 = vmax.f32 %v405, 0.0
  %410 = vst.msk [vmem:[%s4] sm:$0xff] %vm181, %v406
  %411 = vst.msk [vmem:[%s4 + $0x8] sm:$0xff] %vm181, %v407
  %412 = vst.msk [vmem:[%s4 + $0x10] sm:$0xff] %vm181, %v408
  %413 = vst.msk [vmem:[%s4 + $0x18] sm:$0xff] %vm181, %v409
  // Predicated region
  $region18: #{resnet_forward.7} parent=0 // pred_check
    _
  $region19: #{resnet_forward.7} parent=0 // pred_check_branch
    %415 = sbr.rel (0) target = $region21
  $region20: #{resnet_forward.7} parent=0 // pred_region
    _
  $region21: #{resnet_forward.7} parent=0 // pred_fallthru
    _
  // Predicated region
  $region22: #{resnet_forward.7} parent=0 // pred_check
    _
  $region23: #{resnet_forward.7} parent=0 // pred_check_branch
    %417 = sbr.rel (0) target = $region25
  $region24: #{resnet_forward.7} parent=0 // pred_region
    _
  $region25: #{resnet_forward.7} parent=0 // pred_fallthru
    _

// kernel: resnet_forward.9
$region0: #{resnet_forward.9}
  #allocation0 [shape = 'u32[]', space=smem, size = 0x4, offset = 0x4, fixed_abs, tag = 'smem constant byte address 0x4 - core index']
  #allocation1 [shape = 'u32[72,128]{1,0:T(1,128)}', space=vmem, size = 0x9000, scoped, tag = 'internal scratch']
  %s0 = inlined_call_operand.vmem [shape: f32[8,576], index: 0, kind: input, shape index: {}]
  %s1 = inlined_call_operand.vmem [shape: bf16[576,128], index: 1, kind: input, shape index: {}]
  %s2 = inlined_call_operand.vmem [shape: f32[1,128], index: 2, kind: input, shape index: {}]
  %s3 = inlined_call_operand.vmem [shape: f32[1,128], index: 3, kind: input, shape index: {}]
  %s4 = inlined_call_operand.vmem [shape: f32[8,128], index: 4, kind: output, shape index: {}]
  %s5 = sld [smem:[#allocation0]]
  $region26: #{resnet_forward.9} parent=0
    _
  %s7 = ssub.s32 1, %s5
  %s8 = scalar_select 0, %s7, %s5
  // Predicated region
  $region2: #{resnet_forward.9} parent=0 // pred_check
    _
  $region3: #{resnet_forward.9} parent=0 // pred_check_branch
    %10 = sbr.rel (0) target = $region5
  $region4: #{resnet_forward.9} parent=0 // pred_region
    _
  $region5: #{resnet_forward.9} parent=0 // pred_fallthru
    _
  // Predicated region
  $region6: #{resnet_forward.9} parent=0 // pred_check
    _
  $region7: #{resnet_forward.9} parent=0 // pred_check_branch
    %12 = sbr.rel (0) target = $region9
  $region8: #{resnet_forward.9} parent=0 // pred_region
    _
  $region9: #{resnet_forward.9} parent=0 // pred_fallthru
    _
  // Predicated region
  $region10: #{resnet_forward.9} parent=0 // pred_check
    _
  $region11: #{resnet_forward.9} parent=0 // pred_check_branch
    %14 = sbr.rel (0) target = $region13
  $region12: #{resnet_forward.9} parent=0 // pred_region
    _
  $region13: #{resnet_forward.9} parent=0 // pred_fallthru
    _
  // Predicated region
  $region14: #{resnet_forward.9} parent=0 // pred_check
    _
  $region15: #{resnet_forward.9} parent=0 // pred_check_branch
    %16 = sbr.rel (0) target = $region17
  $region16: #{resnet_forward.9} parent=0 // pred_region
    _
  $region17: #{resnet_forward.9} parent=0 // pred_fallthru
    _
  %v17 = vld [vmem:[%s0] sm:$0xff]
  %v18 = vld [vmem:[%s0 + $0x8] sm:$0xff]
  %v19 = vld [vmem:[%s0 + $0x10] sm:$0xff]
  %v20 = vld [vmem:[%s0 + $0x18] sm:$0xff]
  %v21 = vld [vmem:[%s0 + $0x20] sm:$0xff]
  %v22 = vld [vmem:[%s1] sm:$0xf]
  %v23 = vld [vmem:[%s1 + $0x4] sm:$0xf]
  %v24 = vld [vmem:[%s1 + $0x8] sm:$0xf]
  %v25 = vld [vmem:[%s1 + $0xc] sm:$0xf]
  %v26 = vld [vmem:[%s1 + $0x10] sm:$0xf]
  %v27 = vld [vmem:[%s1 + $0x14] sm:$0xf]
  %v28 = vld [vmem:[%s1 + $0x18] sm:$0xf]
  %v29 = vld [vmem:[%s1 + $0x1c] sm:$0xf]
  %v30 = vld [vmem:[%s1 + $0x20] sm:$0xf]
  %v31 = vld [vmem:[%s1 + $0x24] sm:$0xf]
  %v32 = vld [vmem:[%s1 + $0x28] sm:$0xf]
  %v33 = vld [vmem:[%s1 + $0x2c] sm:$0xf]
  %v34 = vld [vmem:[%s1 + $0x30] sm:$0xf]
  %v35 = vld [vmem:[%s1 + $0x34] sm:$0xf]
  %v36 = vld [vmem:[%s1 + $0x38] sm:$0xf]
  %v37 = vld [vmem:[%s1 + $0x3c] sm:$0xf]
  %v38 = vld [vmem:[%s1 + $0x40] sm:$0xf]
  %v39 = vld [vmem:[%s1 + $0x44] sm:$0xf]
  %v40 = vld [vmem:[%s1 + $0x48] sm:$0xf]
  %v41 = vld [vmem:[%s1 + $0x4c] sm:$0xf]
  %v42 = vld [vmem:[%s1 + $0x50] sm:$0xf]
  %v43 = vld [vmem:[%s1 + $0x54] sm:$0xf]
  %v44 = vld [vmem:[%s1 + $0x58] sm:$0xf]
  %v45 = vld [vmem:[%s1 + $0x5c] sm:$0xf]
  %v46 = vld [vmem:[%s1 + $0x60] sm:$0xf]
  %v47 = vld [vmem:[%s1 + $0x64] sm:$0xf]
  %v48 = vld [vmem:[%s1 + $0x68] sm:$0xf]
  %v49 = vld [vmem:[%s1 + $0x6c] sm:$0xf]
  %v50 = vld [vmem:[%s1 + $0x70] sm:$0xf]
  %v51 = vld [vmem:[%s1 + $0x74] sm:$0xf]
  %v52 = vld [vmem:[%s1 + $0x78] sm:$0xf]
  %v53 = vld [vmem:[%s1 + $0x7c] sm:$0xf]
  %v54 = vld [vmem:[%s1 + $0x80] sm:$0xf]
  %v55 = vld [vmem:[%s1 + $0x84] sm:$0xf]
  %v56 = vld [vmem:[%s1 + $0x88] sm:$0xf]
  %v57 = vld [vmem:[%s1 + $0x8c] sm:$0xf]
  %v58 = vld [vmem:[%s1 + $0x90] sm:$0xf]
  %v59 = vld [vmem:[%s1 + $0x94] sm:$0xf]
  %v60 = vld [vmem:[%s1 + $0x98] sm:$0xf]
  %v61 = vld [vmem:[%s1 + $0x9c] sm:$0xf]
  %v62 = vld [vmem:[%s1 + $0xa0] sm:$0xf]
  %v63 = vld [vmem:[%s1 + $0xa4] sm:$0xf]
  %v64 = vld [vmem:[%s1 + $0xa8] sm:$0xf]
  %v65 = vld [vmem:[%s1 + $0xac] sm:$0xf]
  %v66 = vld [vmem:[%s1 + $0xb0] sm:$0xf]
  %v67 = vld [vmem:[%s1 + $0xb4] sm:$0xf]
  %v68 = vld [vmem:[%s1 + $0xb8] sm:$0xf]
  %v69 = vld [vmem:[%s1 + $0xbc] sm:$0xf]
  %v70 = vld [vmem:[%s1 + $0xc0] sm:$0xf]
  %v71 = vld [vmem:[%s1 + $0xc4] sm:$0xf]
  %v72 = vld [vmem:[%s1 + $0xc8] sm:$0xf]
  %v73 = vld [vmem:[%s1 + $0xcc] sm:$0xf]
  %v74 = vld [vmem:[%s1 + $0xd0] sm:$0xf]
  %v75 = vld [vmem:[%s1 + $0xd4] sm:$0xf]
  %v76 = vld [vmem:[%s1 + $0xd8] sm:$0xf]
  %v77 = vld [vmem:[%s1 + $0xdc] sm:$0xf]
  %v78 = vld [vmem:[%s1 + $0xe0] sm:$0xf]
  %v79 = vld [vmem:[%s1 + $0xe4] sm:$0xf]
  %v80 = vld [vmem:[%s1 + $0xe8] sm:$0xf]
  %v81 = vld [vmem:[%s1 + $0xec] sm:$0xf]
  %v82 = vld [vmem:[%s1 + $0xf0] sm:$0xf]
  %v83 = vld [vmem:[%s1 + $0xf4] sm:$0xf]
  %v84 = vld [vmem:[%s1 + $0xf8] sm:$0xf]
  %v85 = vld [vmem:[%s1 + $0xfc] sm:$0xf]
  %v86 = vld [vmem:[%s1 + $0x100] sm:$0xf]
  %v87 = vld [vmem:[%s1 + $0x104] sm:$0xf]
  %v88 = vld [vmem:[%s1 + $0x108] sm:$0xf]
  %v89 = vld [vmem:[%s1 + $0x10c] sm:$0xf]
  %v90 = vld [vmem:[%s1 + $0x110] sm:$0xf]
  %v91 = vld [vmem:[%s1 + $0x114] sm:$0xf]
  %v92 = vld [vmem:[%s1 + $0x118] sm:$0xf]
  %v93 = vld [vmem:[%s1 + $0x11c] sm:$0xf]
  %v94 = vunpack.c.l.bf16 %v22
  %v95 = vunpack.c.l.bf16 %v23
  %v96 = vunpack.c.l.bf16 %v24
  %v97 = vunpack.c.l.bf16 %v25
  %v98 = vunpack.c.l.bf16 %v26
  %v99 = vunpack.c.l.bf16 %v27
  %v100 = vunpack.c.l.bf16 %v28
  %v101 = vunpack.c.l.bf16 %v29
  %v102 = vunpack.c.l.bf16 %v30
  %v103 = vunpack.c.l.bf16 %v31
  %v104 = vunpack.c.l.bf16 %v32
  %v105 = vunpack.c.l.bf16 %v33
  %v106 = vunpack.c.l.bf16 %v34
  %v107 = vunpack.c.l.bf16 %v35
  %v108 = vunpack.c.l.bf16 %v36
  %v109 = vunpack.c.l.bf16 %v37
  %v110 = vunpack.c.l.bf16 %v38
  %v111 = vunpack.c.l.bf16 %v39
  %v112 = vunpack.c.l.bf16 %v40
  %v113 = vunpack.c.l.bf16 %v41
  %v114 = vunpack.c.l.bf16 %v42
  %v115 = vunpack.c.l.bf16 %v43
  %v116 = vunpack.c.l.bf16 %v44
  %v117 = vunpack.c.l.bf16 %v45
  %v118 = vunpack.c.l.bf16 %v46
  %v119 = vunpack.c.l.bf16 %v47
  %v120 = vunpack.c.l.bf16 %v48
  %v121 = vunpack.c.l.bf16 %v49
  %v122 = vunpack.c.l.bf16 %v50
  %v123 = vunpack.c.l.bf16 %v51
  %v124 = vunpack.c.l.bf16 %v52
  %v125 = vunpack.c.l.bf16 %v53
  %v126 = vunpack.c.l.bf16 %v54
  %v127 = vunpack.c.l.bf16 %v55
  %v128 = vunpack.c.l.bf16 %v56
  %v129 = vunpack.c.l.bf16 %v57
  %v130 = vunpack.c.l.bf16 %v58
  %v131 = vunpack.c.l.bf16 %v59
  %v132 = vunpack.c.l.bf16 %v60
  %v133 = vunpack.c.l.bf16 %v61
  %v134 = vunpack.c.l.bf16 %v62
  %v135 = vunpack.c.l.bf16 %v63
  %v136 = vunpack.c.l.bf16 %v64
  %v137 = vunpack.c.l.bf16 %v65
  %v138 = vunpack.c.l.bf16 %v66
  %v139 = vunpack.c.l.bf16 %v67
  %v140 = vunpack.c.l.bf16 %v68
  %v141 = vunpack.c.l.bf16 %v69
  %v142 = vunpack.c.l.bf16 %v70
  %v143 = vunpack.c.l.bf16 %v71
  %v144 = vunpack.c.l.bf16 %v72
  %v145 = vunpack.c.l.bf16 %v73
  %v146 = vunpack.c.l.bf16 %v74
  %v147 = vunpack.c.l.bf16 %v75
  %v148 = vunpack.c.l.bf16 %v76
  %v149 = vunpack.c.l.bf16 %v77
  %v150 = vunpack.c.l.bf16 %v78
  %v151 = vunpack.c.l.bf16 %v79
  %v152 = vunpack.c.l.bf16 %v80
  %v153 = vunpack.c.l.bf16 %v81
  %v154 = vunpack.c.l.bf16 %v82
  %v155 = vunpack.c.l.bf16 %v83
  %v156 = vunpack.c.l.bf16 %v84
  %v157 = vunpack.c.l.bf16 %v85
  %v158 = vunpack.c.l.bf16 %v86
  %v159 = vunpack.c.l.bf16 %v87
  %v160 = vunpack.c.l.bf16 %v88
  %v161 = vunpack.c.l.bf16 %v89
  %v162 = vunpack.c.l.bf16 %v90
  %v163 = vunpack.c.l.bf16 %v91
  %v164 = vunpack.c.l.bf16 %v92
  %v165 = vunpack.c.l.bf16 %v93
  %vm166 = vcmask 523264
  %v168 = vsel %vm166, %v21, 0
  %170 = vmatpush.msra.mxu0 %v109
  %171 = vmatpush.msra.mxu0 %v108
  %172 = vmatpush.msra.mxu0 %v107
  %173 = vmatpush.msra.mxu0 %v106
  %174 = vmatpush.msra.mxu0 %v105
  %175 = vmatpush.msra.mxu0 %v104
  %176 = vmatpush.msra.mxu0 %v103
  %177 = vmatpush.msra.mxu0 %v102
  %178 = vmatpush.msra.mxu0 %v101
  %179 = vmatpush.msra.mxu0 %v100
  %180 = vmatpush.msra.mxu0 %v99
  %181 = vmatpush.msra.mxu0 %v98
  %182 = vmatpush.msra.mxu0 %v97
  %183 = vmatpush.msra.mxu0 %v96
  %184 = vmatpush.msra.mxu0 %v95
  %185 = vmatpush.msra.mxu0 %v94
  %186 = vmatmul.f32.gmra.mxu0 %v17
  %v187 = vpop.f32.mrf.mxu0
  %v188 = vadd.f32 0.0, %v187
  %189 = vdwg.mxu0
  %190 = vmatpush.msra.mxu0 %v125
  %191 = vmatpush.msra.mxu0 %v124
  %192 = vmatpush.msra.mxu0 %v123
  %193 = vmatpush.msra.mxu0 %v122
  %194 = vmatpush.msra.mxu0 %v121
  %195 = vmatpush.msra.mxu0 %v120
  %196 = vmatpush.msra.mxu0 %v119
  %197 = vmatpush.msra.mxu0 %v118
  %198 = vmatpush.msra.mxu0 %v117
  %199 = vmatpush.msra.mxu0 %v116
  %200 = vmatpush.msra.mxu0 %v115
  %201 = vmatpush.msra.mxu0 %v114
  %202 = vmatpush.msra.mxu0 %v113
  %203 = vmatpush.msra.mxu0 %v112
  %204 = vmatpush.msra.mxu0 %v111
  %205 = vmatpush.msra.mxu0 %v110
  %206 = vmatmul.f32.gmra.mxu0 %v18
  %v207 = vpop.f32.mrf.mxu0
  %v208 = vadd.f32 %v188, %v207
  %209 = vdwg.mxu0
  %210 = vmatpush.msra.mxu0 %v141
  %211 = vmatpush.msra.mxu0 %v140
  %212 = vmatpush.msra.mxu0 %v139
  %213 = vmatpush.msra.mxu0 %v138
  %214 = vmatpush.msra.mxu0 %v137
  %215 = vmatpush.msra.mxu0 %v136
  %216 = vmatpush.msra.mxu0 %v135
  %217 = vmatpush.msra.mxu0 %v134
  %218 = vmatpush.msra.mxu0 %v133
  %219 = vmatpush.msra.mxu0 %v132
  %220 = vmatpush.msra.mxu0 %v131
  %221 = vmatpush.msra.mxu0 %v130
  %222 = vmatpush.msra.mxu0 %v129
  %223 = vmatpush.msra.mxu0 %v128
  %224 = vmatpush.msra.mxu0 %v127
  %225 = vmatpush.msra.mxu0 %v126
  %226 = vmatmul.f32.gmra.mxu0 %v19
  %v227 = vpop.f32.mrf.mxu0
  %v228 = vadd.f32 %v208, %v227
  %229 = vdwg.mxu0
  %230 = vmatpush.msra.mxu0 %v157
  %231 = vmatpush.msra.mxu0 %v156
  %232 = vmatpush.msra.mxu0 %v155
  %233 = vmatpush.msra.mxu0 %v154
  %234 = vmatpush.msra.mxu0 %v153
  %235 = vmatpush.msra.mxu0 %v152
  %236 = vmatpush.msra.mxu0 %v151
  %237 = vmatpush.msra.mxu0 %v150
  %238 = vmatpush.msra.mxu0 %v149
  %239 = vmatpush.msra.mxu0 %v148
  %240 = vmatpush.msra.mxu0 %v147
  %241 = vmatpush.msra.mxu0 %v146
  %242 = vmatpush.msra.mxu0 %v145
  %243 = vmatpush.msra.mxu0 %v144
  %244 = vmatpush.msra.mxu0 %v143
  %245 = vmatpush.msra.mxu0 %v142
  %246 = vmatmul.f32.gmra.mxu0 %v20
  %v247 = vpop.f32.mrf.mxu0
  %v248 = vadd.f32 %v228, %v247
  %249 = vdwg.mxu0
  %250 = vmatpush.msra.mxu0 0.0
  %251 = vmatpush.msra.mxu0 0.0
  %252 = vmatpush.msra.mxu0 0.0
  %253 = vmatpush.msra.mxu0 0.0
  %254 = vmatpush.msra.mxu0 0.0
  %255 = vmatpush.msra.mxu0 0.0
  %256 = vmatpush.msra.mxu0 0.0
  %257 = vmatpush.msra.mxu0 0.0
  %258 = vmatpush.msra.mxu0 %v165
  %259 = vmatpush.msra.mxu0 %v164
  %260 = vmatpush.msra.mxu0 %v163
  %261 = vmatpush.msra.mxu0 %v162
  %262 = vmatpush.msra.mxu0 %v161
  %263 = vmatpush.msra.mxu0 %v160
  %264 = vmatpush.msra.mxu0 %v159
  %265 = vmatpush.msra.mxu0 %v158
  %266 = vmatmul.f32.gmra.mxu0 %v168
  %v267 = vpop.f32.mrf.mxu0
  %v268 = vadd.f32 %v248, %v267
  %269 = vdwg.mxu0
  %v270 = vld [vmem:[%s2] sm:$0x1]
  %v271 = vld [vmem:[%s3] sm:$0x1]
  %v272 = vrot.slane %v268, 4
  %v273 = vadd.f32 %v268, %v272
  %v274 = vrot.slane %v273, 2
  %v275 = vadd.f32 %v273, %v274
  %v276 = vrot.slane %v275, 1
  %v277 = vadd.f32 %v275, %v276
  %v278 = vmul.f32 %v277, 0.125
  %v279 = vsub.f32 %v268, %v278
  %v280 = vmul.f32 %v279, %v279
  %v281 = vrot.slane %v280, 4
  %v282 = vadd.f32 %v280, %v281
  %v283 = vrot.slane %v282, 2
  %v284 = vadd.f32 %v282, %v283
  %v285 = vrot.slane %v284, 1
  %v286 = vadd.f32 %v284, %v285
  %v287 = vmul.f32 %v286, 0.125
  %v288 = vadd.f32 %v287, 1e-05
  %v289 = vrsqrt.pop %v288
  %v290 = vmul.f32 %v289, %v288
  %v291 = vmul.f32 %v290, %v289
  %v292 = vmul.f32 0.5, %v291
  %v293 = vsub.f32 1.5, %v292
  %v294 = vmul.f32 %v289, %v293
  %vm295 = vweird.f32 %v288
  %vm296 = vweird.f32 %v289
  %vm297 = vmor %vm295, %vm296
  %v298 = vsel %vm297, %v289, %v294
  %v299 = vmul.f32 %v279, %v298
  %v301 = vperm.slane %v270, 0
  %v303 = vmul.f32 %v299, %v301
  %v305 = vperm.slane %v271, 0
  %v307 = vadd.f32 %v303, %v305
  %v308 = vmax.f32 %v307, 0.0
  %309 = vst [vmem:[%s4] sm:$0xff] %v308
  // Predicated region
  $region18: #{resnet_forward.9} parent=0 // pred_check
    _
  $region19: #{resnet_forward.9} parent=0 // pred_check_branch
    %311 = sbr.rel (0) target = $region21
  $region20: #{resnet_forward.9} parent=0 // pred_region
    _
  $region21: #{resnet_forward.9} parent=0 // pred_fallthru
    _
  // Predicated region
  $region22: #{resnet_forward.9} parent=0 // pred_check
    _
  $region23: #{resnet_forward.9} parent=0 // pred_check_branch
    %313 = sbr.rel (0) target = $region25
  $region24: #{resnet_forward.9} parent=0 // pred_region
    _
  $region25: #{resnet_forward.9} parent=0 // pred_fallthru
    _

// kernel: resnet_forward.10
$region0: #{resnet_forward.10}
  #allocation0 [shape = 'u32[]', space=smem, size = 0x4, offset = 0x4, fixed_abs, tag = 'smem constant byte address 0x4 - core index']
  #allocation1 [shape = 'u32[72,128]{1,0:T(1,128)}', space=vmem, size = 0x9000, scoped, tag = 'internal scratch']
  %s0 = inlined_call_operand.vmem [shape: f32[8,1152], index: 0, kind: input, shape index: {}]
  %s1 = inlined_call_operand.vmem [shape: bf16[1152,128], index: 1, kind: input, shape index: {}]
  %s2 = inlined_call_operand.vmem [shape: f32[1,128], index: 2, kind: input, shape index: {}]
  %s3 = inlined_call_operand.vmem [shape: f32[1,128], index: 3, kind: input, shape index: {}]
  %s4 = inlined_call_operand.vmem [shape: f32[8,64], index: 4, kind: input, shape index: {}]
  %s5 = inlined_call_operand.vmem [shape: bf16[64,128], index: 5, kind: input, shape index: {}]
  %s6 = inlined_call_operand.vmem [shape: f32[1,128], index: 6, kind: input, shape index: {}]
  %s7 = inlined_call_operand.vmem [shape: f32[1,128], index: 7, kind: input, shape index: {}]
  %s8 = inlined_call_operand.vmem [shape: f32[8,128], index: 8, kind: output, shape index: {}]
  %s9 = sld [smem:[#allocation0]]
  $region42: #{resnet_forward.10} parent=0
    _
  %s11 = ssub.s32 1, %s9
  %s12 = scalar_select 0, %s11, %s9
  // Predicated region
  $region2: #{resnet_forward.10} parent=0 // pred_check
    _
  $region3: #{resnet_forward.10} parent=0 // pred_check_branch
    %14 = sbr.rel (0) target = $region5
  $region4: #{resnet_forward.10} parent=0 // pred_region
    _
  $region5: #{resnet_forward.10} parent=0 // pred_fallthru
    _
  // Predicated region
  $region6: #{resnet_forward.10} parent=0 // pred_check
    _
  $region7: #{resnet_forward.10} parent=0 // pred_check_branch
    %16 = sbr.rel (0) target = $region9
  $region8: #{resnet_forward.10} parent=0 // pred_region
    _
  $region9: #{resnet_forward.10} parent=0 // pred_fallthru
    _
  // Predicated region
  $region10: #{resnet_forward.10} parent=0 // pred_check
    _
  $region11: #{resnet_forward.10} parent=0 // pred_check_branch
    %18 = sbr.rel (0) target = $region13
  $region12: #{resnet_forward.10} parent=0 // pred_region
    _
  $region13: #{resnet_forward.10} parent=0 // pred_fallthru
    _
  // Predicated region
  $region14: #{resnet_forward.10} parent=0 // pred_check
    _
  $region15: #{resnet_forward.10} parent=0 // pred_check_branch
    %20 = sbr.rel (0) target = $region17
  $region16: #{resnet_forward.10} parent=0 // pred_region
    _
  $region17: #{resnet_forward.10} parent=0 // pred_fallthru
    _
  // Predicated region
  $region18: #{resnet_forward.10} parent=0 // pred_check
    _
  $region19: #{resnet_forward.10} parent=0 // pred_check_branch
    %22 = sbr.rel (0) target = $region21
  $region20: #{resnet_forward.10} parent=0 // pred_region
    _
  $region21: #{resnet_forward.10} parent=0 // pred_fallthru
    _
  // Predicated region
  $region22: #{resnet_forward.10} parent=0 // pred_check
    _
  $region23: #{resnet_forward.10} parent=0 // pred_check_branch
    %24 = sbr.rel (0) target = $region25
  $region24: #{resnet_forward.10} parent=0 // pred_region
    _
  $region25: #{resnet_forward.10} parent=0 // pred_fallthru
    _
  // Predicated region
  $region26: #{resnet_forward.10} parent=0 // pred_check
    _
  $region27: #{resnet_forward.10} parent=0 // pred_check_branch
    %26 = sbr.rel (0) target = $region29
  $region28: #{resnet_forward.10} parent=0 // pred_region
    _
  $region29: #{resnet_forward.10} parent=0 // pred_fallthru
    _
  // Predicated region
  $region30: #{resnet_forward.10} parent=0 // pred_check
    _
  $region31: #{resnet_forward.10} parent=0 // pred_check_branch
    %28 = sbr.rel (0) target = $region33
  $region32: #{resnet_forward.10} parent=0 // pred_region
    _
  $region33: #{resnet_forward.10} parent=0 // pred_fallthru
    _
  %v29 = vld [vmem:[%s0] sm:$0xff]
  %v30 = vld [vmem:[%s0 + $0x8] sm:$0xff]
  %v31 = vld [vmem:[%s0 + $0x10] sm:$0xff]
  %v32 = vld [vmem:[%s0 + $0x18] sm:$0xff]
  %v33 = vld [vmem:[%s0 + $0x20] sm:$0xff]
  %v34 = vld [vmem:[%s0 + $0x28] sm:$0xff]
  %v35 = vld [vmem:[%s0 + $0x30] sm:$0xff]
  %v36 = vld [vmem:[%s0 + $0x38] sm:$0xff]
  %v37 = vld [vmem:[%s0 + $0x40] sm:$0xff]
  %v38 = vld [vmem:[%s1] sm:$0xf]
  %v39 = vld [vmem:[%s1 + $0x4] sm:$0xf]
  %v40 = vld [vmem:[%s1 + $0x8] sm:$0xf]
  %v41 = vld [vmem:[%s1 + $0xc] sm:$0xf]
  %v42 = vld [vmem:[%s1 + $0x10] sm:$0xf]
  %v43 = vld [vmem:[%s1 + $0x14] sm:$0xf]
  %v44 = vld [vmem:[%s1 + $0x18] sm:$0xf]
  %v45 = vld [vmem:[%s1 + $0x1c] sm:$0xf]
  %v46 = vld [vmem:[%s1 + $0x20] sm:$0xf]
  %v47 = vld [vmem:[%s1 + $0x24] sm:$0xf]
  %v48 = vld [vmem:[%s1 + $0x28] sm:$0xf]
  %v49 = vld [vmem:[%s1 + $0x2c] sm:$0xf]
  %v50 = vld [vmem:[%s1 + $0x30] sm:$0xf]
  %v51 = vld [vmem:[%s1 + $0x34] sm:$0xf]
  %v52 = vld [vmem:[%s1 + $0x38] sm:$0xf]
  %v53 = vld [vmem:[%s1 + $0x3c] sm:$0xf]
  %v54 = vld [vmem:[%s1 + $0x40] sm:$0xf]
  %v55 = vld [vmem:[%s1 + $0x44] sm:$0xf]
  %v56 = vld [vmem:[%s1 + $0x48] sm:$0xf]
  %v57 = vld [vmem:[%s1 + $0x4c] sm:$0xf]
  %v58 = vld [vmem:[%s1 + $0x50] sm:$0xf]
  %v59 = vld [vmem:[%s1 + $0x54] sm:$0xf]
  %v60 = vld [vmem:[%s1 + $0x58] sm:$0xf]
  %v61 = vld [vmem:[%s1 + $0x5c] sm:$0xf]
  %v62 = vld [vmem:[%s1 + $0x60] sm:$0xf]
  %v63 = vld [vmem:[%s1 + $0x64] sm:$0xf]
  %v64 = vld [vmem:[%s1 + $0x68] sm:$0xf]
  %v65 = vld [vmem:[%s1 + $0x6c] sm:$0xf]
  %v66 = vld [vmem:[%s1 + $0x70] sm:$0xf]
  %v67 = vld [vmem:[%s1 + $0x74] sm:$0xf]
  %v68 = vld [vmem:[%s1 + $0x78] sm:$0xf]
  %v69 = vld [vmem:[%s1 + $0x7c] sm:$0xf]
  %v70 = vld [vmem:[%s1 + $0x80] sm:$0xf]
  %v71 = vld [vmem:[%s1 + $0x84] sm:$0xf]
  %v72 = vld [vmem:[%s1 + $0x88] sm:$0xf]
  %v73 = vld [vmem:[%s1 + $0x8c] sm:$0xf]
  %v74 = vld [vmem:[%s1 + $0x90] sm:$0xf]
  %v75 = vld [vmem:[%s1 + $0x94] sm:$0xf]
  %v76 = vld [vmem:[%s1 + $0x98] sm:$0xf]
  %v77 = vld [vmem:[%s1 + $0x9c] sm:$0xf]
  %v78 = vld [vmem:[%s1 + $0xa0] sm:$0xf]
  %v79 = vld [vmem:[%s1 + $0xa4] sm:$0xf]
  %v80 = vld [vmem:[%s1 + $0xa8] sm:$0xf]
  %v81 = vld [vmem:[%s1 + $0xac] sm:$0xf]
  %v82 = vld [vmem:[%s1 + $0xb0] sm:$0xf]
  %v83 = vld [vmem:[%s1 + $0xb4] sm:$0xf]
  %v84 = vld [vmem:[%s1 + $0xb8] sm:$0xf]
  %v85 = vld [vmem:[%s1 + $0xbc] sm:$0xf]
  %v86 = vld [vmem:[%s1 + $0xc0] sm:$0xf]
  %v87 = vld [vmem:[%s1 + $0xc4] sm:$0xf]
  %v88 = vld [vmem:[%s1 + $0xc8] sm:$0xf]
  %v89 = vld [vmem:[%s1 + $0xcc] sm:$0xf]
  %v90 = vld [vmem:[%s1 + $0xd0] sm:$0xf]
  %v91 = vld [vmem:[%s1 + $0xd4] sm:$0xf]
  %v92 = vld [vmem:[%s1 + $0xd8] sm:$0xf]
  %v93 = vld [vmem:[%s1 + $0xdc] sm:$0xf]
  %v94 = vld [vmem:[%s1 + $0xe0] sm:$0xf]
  %v95 = vld [vmem:[%s1 + $0xe4] sm:$0xf]
  %v96 = vld [vmem:[%s1 + $0xe8] sm:$0xf]
  %v97 = vld [vmem:[%s1 + $0xec] sm:$0xf]
  %v98 = vld [vmem:[%s1 + $0xf0] sm:$0xf]
  %v99 = vld [vmem:[%s1 + $0xf4] sm:$0xf]
  %v100 = vld [vmem:[%s1 + $0xf8] sm:$0xf]
  %v101 = vld [vmem:[%s1 + $0xfc] sm:$0xf]
  %v102 = vld [vmem:[%s1 + $0x100] sm:$0xf]
  %v103 = vld [vmem:[%s1 + $0x104] sm:$0xf]
  %v104 = vld [vmem:[%s1 + $0x108] sm:$0xf]
  %v105 = vld [vmem:[%s1 + $0x10c] sm:$0xf]
  %v106 = vld [vmem:[%s1 + $0x110] sm:$0xf]
  %v107 = vld [vmem:[%s1 + $0x114] sm:$0xf]
  %v108 = vld [vmem:[%s1 + $0x118] sm:$0xf]
  %v109 = vld [vmem:[%s1 + $0x11c] sm:$0xf]
  %v110 = vld [vmem:[%s1 + $0x120] sm:$0xf]
  %v111 = vld [vmem:[%s1 + $0x124] sm:$0xf]
  %v112 = vld [vmem:[%s1 + $0x128] sm:$0xf]
  %v113 = vld [vmem:[%s1 + $0x12c] sm:$0xf]
  %v114 = vld [vmem:[%s1 + $0x130] sm:$0xf]
  %v115 = vld [vmem:[%s1 + $0x134] sm:$0xf]
  %v116 = vld [vmem:[%s1 + $0x138] sm:$0xf]
  %v117 = vld [vmem:[%s1 + $0x13c] sm:$0xf]
  %v118 = vld [vmem:[%s1 + $0x140] sm:$0xf]
  %v119 = vld [vmem:[%s1 + $0x144] sm:$0xf]
  %v120 = vld [vmem:[%s1 + $0x148] sm:$0xf]
  %v121 = vld [vmem:[%s1 + $0x14c] sm:$0xf]
  %v122 = vld [vmem:[%s1 + $0x150] sm:$0xf]
  %v123 = vld [vmem:[%s1 + $0x154] sm:$0xf]
  %v124 = vld [vmem:[%s1 + $0x158] sm:$0xf]
  %v125 = vld [vmem:[%s1 + $0x15c] sm:$0xf]
  %v126 = vld [vmem:[%s1 + $0x160] sm:$0xf]
  %v127 = vld [vmem:[%s1 + $0x164] sm:$0xf]
  %v128 = vld [vmem:[%s1 + $0x168] sm:$0xf]
  %v129 = vld [vmem:[%s1 + $0x16c] sm:$0xf]
  %v130 = vld [vmem:[%s1 + $0x170] sm:$0xf]
  %v131 = vld [vmem:[%s1 + $0x174] sm:$0xf]
  %v132 = vld [vmem:[%s1 + $0x178] sm:$0xf]
  %v133 = vld [vmem:[%s1 + $0x17c] sm:$0xf]
  %v134 = vld [vmem:[%s1 + $0x180] sm:$0xf]
  %v135 = vld [vmem:[%s1 + $0x184] sm:$0xf]
  %v136 = vld [vmem:[%s1 + $0x188] sm:$0xf]
  %v137 = vld [vmem:[%s1 + $0x18c] sm:$0xf]
  %v138 = vld [vmem:[%s1 + $0x190] sm:$0xf]
  %v139 = vld [vmem:[%s1 + $0x194] sm:$0xf]
  %v140 = vld [vmem:[%s1 + $0x198] sm:$0xf]
  %v141 = vld [vmem:[%s1 + $0x19c] sm:$0xf]
  %v142 = vld [vmem:[%s1 + $0x1a0] sm:$0xf]
  %v143 = vld [vmem:[%s1 + $0x1a4] sm:$0xf]
  %v144 = vld [vmem:[%s1 + $0x1a8] sm:$0xf]
  %v145 = vld [vmem:[%s1 + $0x1ac] sm:$0xf]
  %v146 = vld [vmem:[%s1 + $0x1b0] sm:$0xf]
  %v147 = vld [vmem:[%s1 + $0x1b4] sm:$0xf]
  %v148 = vld [vmem:[%s1 + $0x1b8] sm:$0xf]
  %v149 = vld [vmem:[%s1 + $0x1bc] sm:$0xf]
  %v150 = vld [vmem:[%s1 + $0x1c0] sm:$0xf]
  %v151 = vld [vmem:[%s1 + $0x1c4] sm:$0xf]
  %v152 = vld [vmem:[%s1 + $0x1c8] sm:$0xf]
  %v153 = vld [vmem:[%s1 + $0x1cc] sm:$0xf]
  %v154 = vld [vmem:[%s1 + $0x1d0] sm:$0xf]
  %v155 = vld [vmem:[%s1 + $0x1d4] sm:$0xf]
  %v156 = vld [vmem:[%s1 + $0x1d8] sm:$0xf]
  %v157 = vld [vmem:[%s1 + $0x1dc] sm:$0xf]
  %v158 = vld [vmem:[%s1 + $0x1e0] sm:$0xf]
  %v159 = vld [vmem:[%s1 + $0x1e4] sm:$0xf]
  %v160 = vld [vmem:[%s1 + $0x1e8] sm:$0xf]
  %v161 = vld [vmem:[%s1 + $0x1ec] sm:$0xf]
  %v162 = vld [vmem:[%s1 + $0x1f0] sm:$0xf]
  %v163 = vld [vmem:[%s1 + $0x1f4] sm:$0xf]
  %v164 = vld [vmem:[%s1 + $0x1f8] sm:$0xf]
  %v165 = vld [vmem:[%s1 + $0x1fc] sm:$0xf]
  %v166 = vld [vmem:[%s1 + $0x200] sm:$0xf]
  %v167 = vld [vmem:[%s1 + $0x204] sm:$0xf]
  %v168 = vld [vmem:[%s1 + $0x208] sm:$0xf]
  %v169 = vld [vmem:[%s1 + $0x20c] sm:$0xf]
  %v170 = vld [vmem:[%s1 + $0x210] sm:$0xf]
  %v171 = vld [vmem:[%s1 + $0x214] sm:$0xf]
  %v172 = vld [vmem:[%s1 + $0x218] sm:$0xf]
  %v173 = vld [vmem:[%s1 + $0x21c] sm:$0xf]
  %v174 = vld [vmem:[%s1 + $0x220] sm:$0xf]
  %v175 = vld [vmem:[%s1 + $0x224] sm:$0xf]
  %v176 = vld [vmem:[%s1 + $0x228] sm:$0xf]
  %v177 = vld [vmem:[%s1 + $0x22c] sm:$0xf]
  %v178 = vld [vmem:[%s1 + $0x230] sm:$0xf]
  %v179 = vld [vmem:[%s1 + $0x234] sm:$0xf]
  %v180 = vld [vmem:[%s1 + $0x238] sm:$0xf]
  %v181 = vld [vmem:[%s1 + $0x23c] sm:$0xf]
  %v182 = vunpack.c.l.bf16 %v38
  %v183 = vunpack.c.l.bf16 %v39
  %v184 = vunpack.c.l.bf16 %v40
  %v185 = vunpack.c.l.bf16 %v41
  %v186 = vunpack.c.l.bf16 %v42
  %v187 = vunpack.c.l.bf16 %v43
  %v188 = vunpack.c.l.bf16 %v44
  %v189 = vunpack.c.l.bf16 %v45
  %v190 = vunpack.c.l.bf16 %v46
  %v191 = vunpack.c.l.bf16 %v47
  %v192 = vunpack.c.l.bf16 %v48
  %v193 = vunpack.c.l.bf16 %v49
  %v194 = vunpack.c.l.bf16 %v50
  %v195 = vunpack.c.l.bf16 %v51
  %v196 = vunpack.c.l.bf16 %v52
  %v197 = vunpack.c.l.bf16 %v53
  %v198 = vunpack.c.l.bf16 %v54
  %v199 = vunpack.c.l.bf16 %v55
  %v200 = vunpack.c.l.bf16 %v56
  %v201 = vunpack.c.l.bf16 %v57
  %v202 = vunpack.c.l.bf16 %v58
  %v203 = vunpack.c.l.bf16 %v59
  %v204 = vunpack.c.l.bf16 %v60
  %v205 = vunpack.c.l.bf16 %v61
  %v206 = vunpack.c.l.bf16 %v62
  %v207 = vunpack.c.l.bf16 %v63
  %v208 = vunpack.c.l.bf16 %v64
  %v209 = vunpack.c.l.bf16 %v65
  %v210 = vunpack.c.l.bf16 %v66
  %v211 = vunpack.c.l.bf16 %v67
  %v212 = vunpack.c.l.bf16 %v68
  %v213 = vunpack.c.l.bf16 %v69
  %v214 = vunpack.c.l.bf16 %v70
  %v215 = vunpack.c.l.bf16 %v71
  %v216 = vunpack.c.l.bf16 %v72
  %v217 = vunpack.c.l.bf16 %v73
  %v218 = vunpack.c.l.bf16 %v74
  %v219 = vunpack.c.l.bf16 %v75
  %v220 = vunpack.c.l.bf16 %v76
  %v221 = vunpack.c.l.bf16 %v77
  %v222 = vunpack.c.l.bf16 %v78
  %v223 = vunpack.c.l.bf16 %v79
  %v224 = vunpack.c.l.bf16 %v80
  %v225 = vunpack.c.l.bf16 %v81
  %v226 = vunpack.c.l.bf16 %v82
  %v227 = vunpack.c.l.bf16 %v83
  %v228 = vunpack.c.l.bf16 %v84
  %v229 = vunpack.c.l.bf16 %v85
  %v230 = vunpack.c.l.bf16 %v86
  %v231 = vunpack.c.l.bf16 %v87
  %v232 = vunpack.c.l.bf16 %v88
  %v233 = vunpack.c.l.bf16 %v89
  %v234 = vunpack.c.l.bf16 %v90
  %v235 = vunpack.c.l.bf16 %v91
  %v236 = vunpack.c.l.bf16 %v92
  %v237 = vunpack.c.l.bf16 %v93
  %v238 = vunpack.c.l.bf16 %v94
  %v239 = vunpack.c.l.bf16 %v95
  %v240 = vunpack.c.l.bf16 %v96
  %v241 = vunpack.c.l.bf16 %v97
  %v242 = vunpack.c.l.bf16 %v98
  %v243 = vunpack.c.l.bf16 %v99
  %v244 = vunpack.c.l.bf16 %v100
  %v245 = vunpack.c.l.bf16 %v101
  %v246 = vunpack.c.l.bf16 %v102
  %v247 = vunpack.c.l.bf16 %v103
  %v248 = vunpack.c.l.bf16 %v104
  %v249 = vunpack.c.l.bf16 %v105
  %v250 = vunpack.c.l.bf16 %v106
  %v251 = vunpack.c.l.bf16 %v107
  %v252 = vunpack.c.l.bf16 %v108
  %v253 = vunpack.c.l.bf16 %v109
  %v254 = vunpack.c.l.bf16 %v110
  %v255 = vunpack.c.l.bf16 %v111
  %v256 = vunpack.c.l.bf16 %v112
  %v257 = vunpack.c.l.bf16 %v113
  %v258 = vunpack.c.l.bf16 %v114
  %v259 = vunpack.c.l.bf16 %v115
  %v260 = vunpack.c.l.bf16 %v116
  %v261 = vunpack.c.l.bf16 %v117
  %v262 = vunpack.c.l.bf16 %v118
  %v263 = vunpack.c.l.bf16 %v119
  %v264 = vunpack.c.l.bf16 %v120
  %v265 = vunpack.c.l.bf16 %v121
  %v266 = vunpack.c.l.bf16 %v122
  %v267 = vunpack.c.l.bf16 %v123
  %v268 = vunpack.c.l.bf16 %v124
  %v269 = vunpack.c.l.bf16 %v125
  %v270 = vunpack.c.l.bf16 %v126
  %v271 = vunpack.c.l.bf16 %v127
  %v272 = vunpack.c.l.bf16 %v128
  %v273 = vunpack.c.l.bf16 %v129
  %v274 = vunpack.c.l.bf16 %v130
  %v275 = vunpack.c.l.bf16 %v131
  %v276 = vunpack.c.l.bf16 %v132
  %v277 = vunpack.c.l.bf16 %v133
  %v278 = vunpack.c.l.bf16 %v134
  %v279 = vunpack.c.l.bf16 %v135
  %v280 = vunpack.c.l.bf16 %v136
  %v281 = vunpack.c.l.bf16 %v137
  %v282 = vunpack.c.l.bf16 %v138
  %v283 = vunpack.c.l.bf16 %v139
  %v284 = vunpack.c.l.bf16 %v140
  %v285 = vunpack.c.l.bf16 %v141
  %v286 = vunpack.c.l.bf16 %v142
  %v287 = vunpack.c.l.bf16 %v143
  %v288 = vunpack.c.l.bf16 %v144
  %v289 = vunpack.c.l.bf16 %v145
  %v290 = vunpack.c.l.bf16 %v146
  %v291 = vunpack.c.l.bf16 %v147
  %v292 = vunpack.c.l.bf16 %v148
  %v293 = vunpack.c.l.bf16 %v149
  %v294 = vunpack.c.l.bf16 %v150
  %v295 = vunpack.c.l.bf16 %v151
  %v296 = vunpack.c.l.bf16 %v152
  %v297 = vunpack.c.l.bf16 %v153
  %v298 = vunpack.c.l.bf16 %v154
  %v299 = vunpack.c.l.bf16 %v155
  %v300 = vunpack.c.l.bf16 %v156
  %v301 = vunpack.c.l.bf16 %v157
  %v302 = vunpack.c.l.bf16 %v158
  %v303 = vunpack.c.l.bf16 %v159
  %v304 = vunpack.c.l.bf16 %v160
  %v305 = vunpack.c.l.bf16 %v161
  %v306 = vunpack.c.l.bf16 %v162
  %v307 = vunpack.c.l.bf16 %v163
  %v308 = vunpack.c.l.bf16 %v164
  %v309 = vunpack.c.l.bf16 %v165
  %v310 = vunpack.c.l.bf16 %v166
  %v311 = vunpack.c.l.bf16 %v167
  %v312 = vunpack.c.l.bf16 %v168
  %v313 = vunpack.c.l.bf16 %v169
  %v314 = vunpack.c.l.bf16 %v170
  %v315 = vunpack.c.l.bf16 %v171
  %v316 = vunpack.c.l.bf16 %v172
  %v317 = vunpack.c.l.bf16 %v173
  %v318 = vunpack.c.l.bf16 %v174
  %v319 = vunpack.c.l.bf16 %v175
  %v320 = vunpack.c.l.bf16 %v176
  %v321 = vunpack.c.l.bf16 %v177
  %v322 = vunpack.c.l.bf16 %v178
  %v323 = vunpack.c.l.bf16 %v179
  %v324 = vunpack.c.l.bf16 %v180
  %v325 = vunpack.c.l.bf16 %v181
  %326 = vmatpush.msra.mxu0 %v197
  %327 = vmatpush.msra.mxu0 %v196
  %328 = vmatpush.msra.mxu0 %v195
  %329 = vmatpush.msra.mxu0 %v194
  %330 = vmatpush.msra.mxu0 %v193
  %331 = vmatpush.msra.mxu0 %v192
  %332 = vmatpush.msra.mxu0 %v191
  %333 = vmatpush.msra.mxu0 %v190
  %334 = vmatpush.msra.mxu0 %v189
  %335 = vmatpush.msra.mxu0 %v188
  %336 = vmatpush.msra.mxu0 %v187
  %337 = vmatpush.msra.mxu0 %v186
  %338 = vmatpush.msra.mxu0 %v185
  %339 = vmatpush.msra.mxu0 %v184
  %340 = vmatpush.msra.mxu0 %v183
  %341 = vmatpush.msra.mxu0 %v182
  %342 = vmatmul.f32.gmra.mxu0 %v29
  %v343 = vpop.f32.mrf.mxu0
  %v344 = vadd.f32 0.0, %v343
  %345 = vdwg.mxu0
  %346 = vmatpush.msra.mxu0 %v213
  %347 = vmatpush.msra.mxu0 %v212
  %348 = vmatpush.msra.mxu0 %v211
  %349 = vmatpush.msra.mxu0 %v210
  %350 = vmatpush.msra.mxu0 %v209
  %351 = vmatpush.msra.mxu0 %v208
  %352 = vmatpush.msra.mxu0 %v207
  %353 = vmatpush.msra.mxu0 %v206
  %354 = vmatpush.msra.mxu0 %v205
  %355 = vmatpush.msra.mxu0 %v204
  %356 = vmatpush.msra.mxu0 %v203
  %357 = vmatpush.msra.mxu0 %v202
  %358 = vmatpush.msra.mxu0 %v201
  %359 = vmatpush.msra.mxu0 %v200
  %360 = vmatpush.msra.mxu0 %v199
  %361 = vmatpush.msra.mxu0 %v198
  %362 = vmatmul.f32.gmra.mxu0 %v30
  %v363 = vpop.f32.mrf.mxu0
  %v364 = vadd.f32 %v344, %v363
  %365 = vdwg.mxu0
  %366 = vmatpush.msra.mxu0 %v229
  %367 = vmatpush.msra.mxu0 %v228
  %368 = vmatpush.msra.mxu0 %v227
  %369 = vmatpush.msra.mxu0 %v226
  %370 = vmatpush.msra.mxu0 %v225
  %371 = vmatpush.msra.mxu0 %v224
  %372 = vmatpush.msra.mxu0 %v223
  %373 = vmatpush.msra.mxu0 %v222
  %374 = vmatpush.msra.mxu0 %v221
  %375 = vmatpush.msra.mxu0 %v220
  %376 = vmatpush.msra.mxu0 %v219
  %377 = vmatpush.msra.mxu0 %v218
  %378 = vmatpush.msra.mxu0 %v217
  %379 = vmatpush.msra.mxu0 %v216
  %380 = vmatpush.msra.mxu0 %v215
  %381 = vmatpush.msra.mxu0 %v214
  %382 = vmatmul.f32.gmra.mxu0 %v31
  %v383 = vpop.f32.mrf.mxu0
  %v384 = vadd.f32 %v364, %v383
  %385 = vdwg.mxu0
  %386 = vmatpush.msra.mxu0 %v245
  %387 = vmatpush.msra.mxu0 %v244
  %388 = vmatpush.msra.mxu0 %v243
  %389 = vmatpush.msra.mxu0 %v242
  %390 = vmatpush.msra.mxu0 %v241
  %391 = vmatpush.msra.mxu0 %v240
  %392 = vmatpush.msra.mxu0 %v239
  %393 = vmatpush.msra.mxu0 %v238
  %394 = vmatpush.msra.mxu0 %v237
  %395 = vmatpush.msra.mxu0 %v236
  %396 = vmatpush.msra.mxu0 %v235
  %397 = vmatpush.msra.mxu0 %v234
  %398 = vmatpush.msra.mxu0 %v233
  %399 = vmatpush.msra.mxu0 %v232
  %400 = vmatpush.msra.mxu0 %v231
  %401 = vmatpush.msra.mxu0 %v230
  %402 = vmatmul.f32.gmra.mxu0 %v32
  %v403 = vpop.f32.mrf.mxu0
  %v404 = vadd.f32 %v384, %v403
  %405 = vdwg.mxu0
  %406 = vmatpush.msra.mxu0 %v261
  %407 = vmatpush.msra.mxu0 %v260
  %408 = vmatpush.msra.mxu0 %v259
  %409 = vmatpush.msra.mxu0 %v258
  %410 = vmatpush.msra.mxu0 %v257
  %411 = vmatpush.msra.mxu0 %v256
  %412 = vmatpush.msra.mxu0 %v255
  %413 = vmatpush.msra.mxu0 %v254
  %414 = vmatpush.msra.mxu0 %v253
  %415 = vmatpush.msra.mxu0 %v252
  %416 = vmatpush.msra.mxu0 %v251
  %417 = vmatpush.msra.mxu0 %v250
  %418 = vmatpush.msra.mxu0 %v249
  %419 = vmatpush.msra.mxu0 %v248
  %420 = vmatpush.msra.mxu0 %v247
  %421 = vmatpush.msra.mxu0 %v246
  %422 = vmatmul.f32.gmra.mxu0 %v33
  %v423 = vpop.f32.mrf.mxu0
  %v424 = vadd.f32 %v404, %v423
  %425 = vdwg.mxu0
  %426 = vmatpush.msra.mxu0 %v277
  %427 = vmatpush.msra.mxu0 %v276
  %428 = vmatpush.msra.mxu0 %v275
  %429 = vmatpush.msra.mxu0 %v274
  %430 = vmatpush.msra.mxu0 %v273
  %431 = vmatpush.msra.mxu0 %v272
  %432 = vmatpush.msra.mxu0 %v271
  %433 = vmatpush.msra.mxu0 %v270
  %434 = vmatpush.msra.mxu0 %v269
  %435 = vmatpush.msra.mxu0 %v268
  %436 = vmatpush.msra.mxu0 %v267
  %437 = vmatpush.msra.mxu0 %v266
  %438 = vmatpush.msra.mxu0 %v265
  %439 = vmatpush.msra.mxu0 %v264
  %440 = vmatpush.msra.mxu0 %v263
  %441 = vmatpush.msra.mxu0 %v262
  %442 = vmatmul.f32.gmra.mxu0 %v34
  %v443 = vpop.f32.mrf.mxu0
  %v444 = vadd.f32 %v424, %v443
  %445 = vdwg.mxu0
  %446 = vmatpush.msra.mxu0 %v293
  %447 = vmatpush.msra.mxu0 %v292
  %448 = vmatpush.msra.mxu0 %v291
  %449 = vmatpush.msra.mxu0 %v290
  %450 = vmatpush.msra.mxu0 %v289
  %451 = vmatpush.msra.mxu0 %v288
  %452 = vmatpush.msra.mxu0 %v287
  %453 = vmatpush.msra.mxu0 %v286
  %454 = vmatpush.msra.mxu0 %v285
  %455 = vmatpush.msra.mxu0 %v284
  %456 = vmatpush.msra.mxu0 %v283
  %457 = vmatpush.msra.mxu0 %v282
  %458 = vmatpush.msra.mxu0 %v281
  %459 = vmatpush.msra.mxu0 %v280
  %460 = vmatpush.msra.mxu0 %v279
  %461 = vmatpush.msra.mxu0 %v278
  %462 = vmatmul.f32.gmra.mxu0 %v35
  %v463 = vpop.f32.mrf.mxu0
  %v464 = vadd.f32 %v444, %v463
  %465 = vdwg.mxu0
  %466 = vmatpush.msra.mxu0 %v309
  %467 = vmatpush.msra.mxu0 %v308
  %468 = vmatpush.msra.mxu0 %v307
  %469 = vmatpush.msra.mxu0 %v306
  %470 = vmatpush.msra.mxu0 %v305
  %471 = vmatpush.msra.mxu0 %v304
  %472 = vmatpush.msra.mxu0 %v303
  %473 = vmatpush.msra.mxu0 %v302
  %474 = vmatpush.msra.mxu0 %v301
  %475 = vmatpush.msra.mxu0 %v300
  %476 = vmatpush.msra.mxu0 %v299
  %477 = vmatpush.msra.mxu0 %v298
  %478 = vmatpush.msra.mxu0 %v297
  %479 = vmatpush.msra.mxu0 %v296
  %480 = vmatpush.msra.mxu0 %v295
  %481 = vmatpush.msra.mxu0 %v294
  %482 = vmatmul.f32.gmra.mxu0 %v36
  %v483 = vpop.f32.mrf.mxu0
  %v484 = vadd.f32 %v464, %v483
  %485 = vdwg.mxu0
  %486 = vmatpush.msra.mxu0 %v325
  %487 = vmatpush.msra.mxu0 %v324
  %488 = vmatpush.msra.mxu0 %v323
  %489 = vmatpush.msra.mxu0 %v322
  %490 = vmatpush.msra.mxu0 %v321
  %491 = vmatpush.msra.mxu0 %v320
  %492 = vmatpush.msra.mxu0 %v319
  %493 = vmatpush.msra.mxu0 %v318
  %494 = vmatpush.msra.mxu0 %v317
  %495 = vmatpush.msra.mxu0 %v316
  %496 = vmatpush.msra.mxu0 %v315
  %497 = vmatpush.msra.mxu0 %v314
  %498 = vmatpush.msra.mxu0 %v313
  %499 = vmatpush.msra.mxu0 %v312
  %500 = vmatpush.msra.mxu0 %v311
  %501 = vmatpush.msra.mxu0 %v310
  %502 = vmatmul.f32.gmra.mxu0 %v37
  %v503 = vpop.f32.mrf.mxu0
  %v504 = vadd.f32 %v484, %v503
  %505 = vdwg.mxu0
  %v506 = vld [vmem:[%s2] sm:$0x1]
  %v507 = vld [vmem:[%s3] sm:$0x1]
  %v508 = vrot.slane %v504, 4
  %v509 = vadd.f32 %v504, %v508
  %v510 = vrot.slane %v509, 2
  %v511 = vadd.f32 %v509, %v510
  %v512 = vrot.slane %v511, 1
  %v513 = vadd.f32 %v511, %v512
  %v514 = vmul.f32 %v513, 0.125
  %v515 = vsub.f32 %v504, %v514
  %v516 = vmul.f32 %v515, %v515
  %v517 = vrot.slane %v516, 4
  %v518 = vadd.f32 %v516, %v517
  %v519 = vrot.slane %v518, 2
  %v520 = vadd.f32 %v518, %v519
  %v521 = vrot.slane %v520, 1
  %v522 = vadd.f32 %v520, %v521
  %v523 = vmul.f32 %v522, 0.125
  %v524 = vadd.f32 %v523, 1e-05
  %v525 = vrsqrt.pop %v524
  %v526 = vmul.f32 %v525, %v524
  %v527 = vmul.f32 %v526, %v525
  %v528 = vmul.f32 0.5, %v527
  %v529 = vsub.f32 1.5, %v528
  %v530 = vmul.f32 %v525, %v529
  %vm531 = vweird.f32 %v524
  %vm532 = vweird.f32 %v525
  %vm533 = vmor %vm531, %vm532
  %v534 = vsel %vm533, %v525, %v530
  %v535 = vmul.f32 %v515, %v534
  %v537 = vperm.slane %v506, 0
  %v539 = vmul.f32 %v535, %v537
  %v541 = vperm.slane %v507, 0
  %v543 = vadd.f32 %v539, %v541
  %v544 = vld [vmem:[%s4] sm:$0xff]
  %v545 = vld [vmem:[%s5] sm:$0xf]
  %v546 = vld [vmem:[%s5 + $0x4] sm:$0xf]
  %v547 = vld [vmem:[%s5 + $0x8] sm:$0xf]
  %v548 = vld [vmem:[%s5 + $0xc] sm:$0xf]
  %v549 = vld [vmem:[%s5 + $0x10] sm:$0xf]
  %v550 = vld [vmem:[%s5 + $0x14] sm:$0xf]
  %v551 = vld [vmem:[%s5 + $0x18] sm:$0xf]
  %v552 = vld [vmem:[%s5 + $0x1c] sm:$0xf]
  %v553 = vunpack.c.l.bf16 %v545
  %v554 = vunpack.c.l.bf16 %v546
  %v555 = vunpack.c.l.bf16 %v547
  %v556 = vunpack.c.l.bf16 %v548
  %v557 = vunpack.c.l.bf16 %v549
  %v558 = vunpack.c.l.bf16 %v550
  %v559 = vunpack.c.l.bf16 %v551
  %v560 = vunpack.c.l.bf16 %v552
  %vm561 = vcmask 523264
  %v563 = vsel %vm561, %v544, 0
  %565 = vmatpush.msra.mxu0 0.0
  %566 = vmatpush.msra.mxu0 0.0
  %567 = vmatpush.msra.mxu0 0.0
  %568 = vmatpush.msra.mxu0 0.0
  %569 = vmatpush.msra.mxu0 0.0
  %570 = vmatpush.msra.mxu0 0.0
  %571 = vmatpush.msra.mxu0 0.0
  %572 = vmatpush.msra.mxu0 0.0
  %573 = vmatpush.msra.mxu0 %v560
  %574 = vmatpush.msra.mxu0 %v559
  %575 = vmatpush.msra.mxu0 %v558
  %576 = vmatpush.msra.mxu0 %v557
  %577 = vmatpush.msra.mxu0 %v556
  %578 = vmatpush.msra.mxu0 %v555
  %579 = vmatpush.msra.mxu0 %v554
  %580 = vmatpush.msra.mxu0 %v553
  %581 = vmatmul.f32.gmra.mxu0 %v563
  %v582 = vpop.f32.mrf.mxu0
  %v583 = vadd.f32 0.0, %v582
  %584 = vdwg.mxu0
  %v585 = vld [vmem:[%s6] sm:$0x1]
  %v586 = vld [vmem:[%s7] sm:$0x1]
  %v587 = vrot.slane %v583, 4
  %v588 = vadd.f32 %v583, %v587
  %v589 = vrot.slane %v588, 2
  %v590 = vadd.f32 %v588, %v589
  %v591 = vrot.slane %v590, 1
  %v592 = vadd.f32 %v590, %v591
  %v593 = vmul.f32 %v592, 0.125
  %v594 = vsub.f32 %v583, %v593
  %v595 = vmul.f32 %v594, %v594
  %v596 = vrot.slane %v595, 4
  %v597 = vadd.f32 %v595, %v596
  %v598 = vrot.slane %v597, 2
  %v599 = vadd.f32 %v597, %v598
  %v600 = vrot.slane %v599, 1
  %v601 = vadd.f32 %v599, %v600
  %v602 = vmul.f32 %v601, 0.125
  %v603 = vadd.f32 %v602, 1e-05
  %v604 = vrsqrt.pop %v603
  %v605 = vmul.f32 %v604, %v603
  %v606 = vmul.f32 %v605, %v604
  %v607 = vmul.f32 0.5, %v606
  %v608 = vsub.f32 1.5, %v607
  %v609 = vmul.f32 %v604, %v608
  %vm610 = vweird.f32 %v603
  %vm611 = vweird.f32 %v604
  %vm612 = vmor %vm610, %vm611
  %v613 = vsel %vm612, %v604, %v609
  %v614 = vmul.f32 %v594, %v613
  %v616 = vperm.slane %v585, 0
  %v618 = vmul.f32 %v614, %v616
  %v620 = vperm.slane %v586, 0
  %v622 = vadd.f32 %v618, %v620
  %v623 = vadd.f32 %v543, %v622
  %v624 = vmax.f32 %v623, 0.0
  %625 = vst [vmem:[%s8] sm:$0xff] %v624
  // Predicated region
  $region34: #{resnet_forward.10} parent=0 // pred_check
    _
  $region35: #{resnet_forward.10} parent=0 // pred_check_branch
    %627 = sbr.rel (0) target = $region37
  $region36: #{resnet_forward.10} parent=0 // pred_region
    _
  $region37: #{resnet_forward.10} parent=0 // pred_fallthru
    _
  // Predicated region
  $region38: #{resnet_forward.10} parent=0 // pred_check
    _
  $region39: #{resnet_forward.10} parent=0 // pred_check_branch
    %629 = sbr.rel (0) target = $region41
  $region40: #{resnet_forward.10} parent=0 // pred_region
    _
  $region41: #{resnet_forward.10} parent=0 // pred_fallthru
    _

// kernel: resnet_forward.11
$region0: #{resnet_forward.11}
  #allocation0 [shape = 'u32[]', space=smem, size = 0x4, offset = 0x4, fixed_abs, tag = 'smem constant byte address 0x4 - core index']
  #allocation1 [shape = 'u32[72,128]{1,0:T(1,128)}', space=vmem, size = 0x9000, scoped, tag = 'internal scratch']
  %s0 = inlined_call_operand.vmem [shape: f32[2,512], index: 0, kind: input, shape index: {}]
  %s1 = inlined_call_operand.vmem [shape: f32[2,128], index: 1, kind: input, shape index: {}]
  %s2 = inlined_call_operand.vmem [shape: bf16[512,256], index: 2, kind: input, shape index: {}]
  %s3 = inlined_call_operand.vmem [shape: f32[1,256], index: 3, kind: input, shape index: {}]
  %s4 = inlined_call_operand.vmem [shape: f32[1,256], index: 4, kind: input, shape index: {}]
  %s5 = inlined_call_operand.vmem [shape: bf16[256,256], index: 5, kind: input, shape index: {}]
  %s6 = inlined_call_operand.vmem [shape: f32[1,256], index: 6, kind: input, shape index: {}]
  %s7 = inlined_call_operand.vmem [shape: f32[1,256], index: 7, kind: input, shape index: {}]
  %s8 = inlined_call_operand.vmem [shape: bf16[128,256], index: 8, kind: input, shape index: {}]
  %s9 = inlined_call_operand.vmem [shape: f32[1,256], index: 9, kind: input, shape index: {}]
  %s10 = inlined_call_operand.vmem [shape: f32[1,256], index: 10, kind: input, shape index: {}]
  %s11 = inlined_call_operand.vmem [shape: bf16[256,512], index: 11, kind: input, shape index: {}]
  %s12 = inlined_call_operand.vmem [shape: f32[1,512], index: 12, kind: input, shape index: {}]
  %s13 = inlined_call_operand.vmem [shape: f32[1,512], index: 13, kind: input, shape index: {}]
  %s14 = inlined_call_operand.vmem [shape: bf16[512,512], index: 14, kind: input, shape index: {}]
  %s15 = inlined_call_operand.vmem [shape: f32[1,512], index: 15, kind: input, shape index: {}]
  %s16 = inlined_call_operand.vmem [shape: f32[1,512], index: 16, kind: input, shape index: {}]
  %s17 = inlined_call_operand.vmem [shape: bf16[256,512], index: 17, kind: input, shape index: {}]
  %s18 = inlined_call_operand.vmem [shape: f32[1,512], index: 18, kind: input, shape index: {}]
  %s19 = inlined_call_operand.vmem [shape: f32[1,512], index: 19, kind: input, shape index: {}]
  %s20 = inlined_call_operand.hbm [shape: f32[1,1], index: 20, kind: output, shape index: {}]
  %s21 = sld [smem:[#allocation0]]
  $region90: #{resnet_forward.11} parent=0
    _
  %s23 = ssub.s32 1, %s21
  %s24 = scalar_select 0, %s23, %s21
  $region1: #{resnet_forward.11} parent=0
    #allocation2 [shape = 'u8[512]{0}', space=vmem, size = 0x400, scoped, tag = 'output window, operand 0, single buffered']
    #allocation3 [shape = 's32[1]{0}', space=sflag, size = 0x4, scoped, tag = 'scoped memory for resnet_forward.11']
    %25 = vsyncpa [#allocation3], 0
    // Predicated region
    $region2: #{resnet_forward.11} parent=1 // pred_check
      _
    $region3: #{resnet_forward.11} parent=1 // pred_check_branch
      %27 = sbr.rel (0) target = $region5
    $region4: #{resnet_forward.11} parent=1 // pred_region
      _
    $region5: #{resnet_forward.11} parent=1 // pred_fallthru
      _
    // Predicated region
    $region6: #{resnet_forward.11} parent=1 // pred_check
      _
    $region7: #{resnet_forward.11} parent=1 // pred_check_branch
      %29 = sbr.rel (0) target = $region9
    $region8: #{resnet_forward.11} parent=1 // pred_region
      _
    $region9: #{resnet_forward.11} parent=1 // pred_fallthru
      _
    // Predicated region
    $region10: #{resnet_forward.11} parent=1 // pred_check
      _
    $region11: #{resnet_forward.11} parent=1 // pred_check_branch
      %31 = sbr.rel (0) target = $region13
    $region12: #{resnet_forward.11} parent=1 // pred_region
      _
    $region13: #{resnet_forward.11} parent=1 // pred_fallthru
      _
    // Predicated region
    $region14: #{resnet_forward.11} parent=1 // pred_check
      _
    $region15: #{resnet_forward.11} parent=1 // pred_check_branch
      %33 = sbr.rel (0) target = $region17
    $region16: #{resnet_forward.11} parent=1 // pred_region
      _
    $region17: #{resnet_forward.11} parent=1 // pred_fallthru
      _
    // Predicated region
    $region18: #{resnet_forward.11} parent=1 // pred_check
      _
    $region19: #{resnet_forward.11} parent=1 // pred_check_branch
      %35 = sbr.rel (0) target = $region21
    $region20: #{resnet_forward.11} parent=1 // pred_region
      _
    $region21: #{resnet_forward.11} parent=1 // pred_fallthru
      _
    // Predicated region
    $region22: #{resnet_forward.11} parent=1 // pred_check
      _
    $region23: #{resnet_forward.11} parent=1 // pred_check_branch
      %37 = sbr.rel (0) target = $region25
    $region24: #{resnet_forward.11} parent=1 // pred_region
      _
    $region25: #{resnet_forward.11} parent=1 // pred_fallthru
      _
    // Predicated region
    $region26: #{resnet_forward.11} parent=1 // pred_check
      _
    $region27: #{resnet_forward.11} parent=1 // pred_check_branch
      %39 = sbr.rel (0) target = $region29
    $region28: #{resnet_forward.11} parent=1 // pred_region
      _
    $region29: #{resnet_forward.11} parent=1 // pred_fallthru
      _
    // Predicated region
    $region30: #{resnet_forward.11} parent=1 // pred_check
      _
    $region31: #{resnet_forward.11} parent=1 // pred_check_branch
      %41 = sbr.rel (0) target = $region33
    $region32: #{resnet_forward.11} parent=1 // pred_region
      _
    $region33: #{resnet_forward.11} parent=1 // pred_fallthru
      _
    // Predicated region
    $region34: #{resnet_forward.11} parent=1 // pred_check
      _
    $region35: #{resnet_forward.11} parent=1 // pred_check_branch
      %43 = sbr.rel (0) target = $region37
    $region36: #{resnet_forward.11} parent=1 // pred_region
      _
    $region37: #{resnet_forward.11} parent=1 // pred_fallthru
      _
    // Predicated region
    $region38: #{resnet_forward.11} parent=1 // pred_check
      _
    $region39: #{resnet_forward.11} parent=1 // pred_check_branch
      %45 = sbr.rel (0) target = $region41
    $region40: #{resnet_forward.11} parent=1 // pred_region
      _
    $region41: #{resnet_forward.11} parent=1 // pred_fallthru
      _
    // Predicated region
    $region42: #{resnet_forward.11} parent=1 // pred_check
      _
    $region43: #{resnet_forward.11} parent=1 // pred_check_branch
      %47 = sbr.rel (0) target = $region45
    $region44: #{resnet_forward.11} parent=1 // pred_region
      _
    $region45: #{resnet_forward.11} parent=1 // pred_fallthru
      _
    // Predicated region
    $region46: #{resnet_forward.11} parent=1 // pred_check
      _
    $region47: #{resnet_forward.11} parent=1 // pred_check_branch
      %49 = sbr.rel (0) target = $region49
    $region48: #{resnet_forward.11} parent=1 // pred_region
      _
    $region49: #{resnet_forward.11} parent=1 // pred_fallthru
      _
    // Predicated region
    $region50: #{resnet_forward.11} parent=1 // pred_check
      _
    $region51: #{resnet_forward.11} parent=1 // pred_check_branch
      %51 = sbr.rel (0) target = $region53
    $region52: #{resnet_forward.11} parent=1 // pred_region
      _
    $region53: #{resnet_forward.11} parent=1 // pred_fallthru
      _
    // Predicated region
    $region54: #{resnet_forward.11} parent=1 // pred_check
      _
    $region55: #{resnet_forward.11} parent=1 // pred_check_branch
      %53 = sbr.rel (0) target = $region57
    $region56: #{resnet_forward.11} parent=1 // pred_region
      _
    $region57: #{resnet_forward.11} parent=1 // pred_fallthru
      _
    // Predicated region
    $region58: #{resnet_forward.11} parent=1 // pred_check
      _
    $region59: #{resnet_forward.11} parent=1 // pred_check_branch
      %55 = sbr.rel (0) target = $region61
    $region60: #{resnet_forward.11} parent=1 // pred_region
      _
    $region61: #{resnet_forward.11} parent=1 // pred_fallthru
      _
    // Predicated region
    $region62: #{resnet_forward.11} parent=1 // pred_check
      _
    $region63: #{resnet_forward.11} parent=1 // pred_check_branch
      %57 = sbr.rel (0) target = $region65
    $region64: #{resnet_forward.11} parent=1 // pred_region
      _
    $region65: #{resnet_forward.11} parent=1 // pred_fallthru
      _
    // Predicated region
    $region66: #{resnet_forward.11} parent=1 // pred_check
      _
    $region67: #{resnet_forward.11} parent=1 // pred_check_branch
      %59 = sbr.rel (0) target = $region69
    $region68: #{resnet_forward.11} parent=1 // pred_region
      _
    $region69: #{resnet_forward.11} parent=1 // pred_fallthru
      _
    // Predicated region
    $region70: #{resnet_forward.11} parent=1 // pred_check
      _
    $region71: #{resnet_forward.11} parent=1 // pred_check_branch
      %61 = sbr.rel (0) target = $region73
    $region72: #{resnet_forward.11} parent=1 // pred_region
      _
    $region73: #{resnet_forward.11} parent=1 // pred_fallthru
      _
    // Predicated region
    $region74: #{resnet_forward.11} parent=1 // pred_check
      _
    $region75: #{resnet_forward.11} parent=1 // pred_check_branch
      %63 = sbr.rel (0) target = $region77
    $region76: #{resnet_forward.11} parent=1 // pred_region
      _
    $region77: #{resnet_forward.11} parent=1 // pred_fallthru
      _
    // Predicated region
    $region78: #{resnet_forward.11} parent=1 // pred_check
      _
    $region79: #{resnet_forward.11} parent=1 // pred_check_branch
      %65 = sbr.rel (0) target = $region81
    $region80: #{resnet_forward.11} parent=1 // pred_region
      _
    $region81: #{resnet_forward.11} parent=1 // pred_fallthru
      _
    %v66 = vld [vmem:[%s0] sm:$0xff]
    %v67 = vld [vmem:[%s2] sm:$0xff]
    %v68 = vld [vmem:[%s2 + $0x8] sm:$0xff]
    %v69 = vld [vmem:[%s2 + $0x10] sm:$0xff]
    %v70 = vld [vmem:[%s2 + $0x18] sm:$0xff]
    %v71 = vld [vmem:[%s2 + $0x20] sm:$0xff]
    %v72 = vld [vmem:[%s2 + $0x28] sm:$0xff]
    %v73 = vld [vmem:[%s2 + $0x30] sm:$0xff]
    %v74 = vld [vmem:[%s2 + $0x38] sm:$0xff]
    %v75 = vld [vmem:[%s2 + $0x40] sm:$0xff]
    %v76 = vld [vmem:[%s2 + $0x48] sm:$0xff]
    %v77 = vld [vmem:[%s2 + $0x50] sm:$0xff]
    %v78 = vld [vmem:[%s2 + $0x58] sm:$0xff]
    %v79 = vld [vmem:[%s2 + $0x60] sm:$0xff]
    %v80 = vld [vmem:[%s2 + $0x68] sm:$0xff]
    %v81 = vld [vmem:[%s2 + $0x70] sm:$0xff]
    %v82 = vld [vmem:[%s2 + $0x78] sm:$0xff]
    %v83 = vld [vmem:[%s2 + $0x80] sm:$0xff]
    %v84 = vld [vmem:[%s2 + $0x88] sm:$0xff]
    %v85 = vld [vmem:[%s2 + $0x90] sm:$0xff]
    %v86 = vld [vmem:[%s2 + $0x98] sm:$0xff]
    %v87 = vld [vmem:[%s2 + $0xa0] sm:$0xff]
    %v88 = vld [vmem:[%s2 + $0xa8] sm:$0xff]
    %v89 = vld [vmem:[%s2 + $0xb0] sm:$0xff]
    %v90 = vld [vmem:[%s2 + $0xb8] sm:$0xff]
    %v91 = vld [vmem:[%s2 + $0xc0] sm:$0xff]
    %v92 = vld [vmem:[%s2 + $0xc8] sm:$0xff]
    %v93 = vld [vmem:[%s2 + $0xd0] sm:$0xff]
    %v94 = vld [vmem:[%s2 + $0xd8] sm:$0xff]
    %v95 = vld [vmem:[%s2 + $0xe0] sm:$0xff]
    %v96 = vld [vmem:[%s2 + $0xe8] sm:$0xff]
    %v97 = vld [vmem:[%s2 + $0xf0] sm:$0xff]
    %v98 = vld [vmem:[%s2 + $0xf8] sm:$0xff]
    %v99 = vld [vmem:[%s2 + $0x100] sm:$0xff]
    %v100 = vld [vmem:[%s2 + $0x108] sm:$0xff]
    %v101 = vld [vmem:[%s2 + $0x110] sm:$0xff]
    %v102 = vld [vmem:[%s2 + $0x118] sm:$0xff]
    %v103 = vld [vmem:[%s2 + $0x120] sm:$0xff]
    %v104 = vld [vmem:[%s2 + $0x128] sm:$0xff]
    %v105 = vld [vmem:[%s2 + $0x130] sm:$0xff]
    %v106 = vld [vmem:[%s2 + $0x138] sm:$0xff]
    %v107 = vld [vmem:[%s2 + $0x140] sm:$0xff]
    %v108 = vld [vmem:[%s2 + $0x148] sm:$0xff]
    %v109 = vld [vmem:[%s2 + $0x150] sm:$0xff]
    %v110 = vld [vmem:[%s2 + $0x158] sm:$0xff]
    %v111 = vld [vmem:[%s2 + $0x160] sm:$0xff]
    %v112 = vld [vmem:[%s2 + $0x168] sm:$0xff]
    %v113 = vld [vmem:[%s2 + $0x170] sm:$0xff]
    %v114 = vld [vmem:[%s2 + $0x178] sm:$0xff]
    %v115 = vld [vmem:[%s2 + $0x180] sm:$0xff]
    %v116 = vld [vmem:[%s2 + $0x188] sm:$0xff]
    %v117 = vld [vmem:[%s2 + $0x190] sm:$0xff]
    %v118 = vld [vmem:[%s2 + $0x198] sm:$0xff]
    %v119 = vld [vmem:[%s2 + $0x1a0] sm:$0xff]
    %v120 = vld [vmem:[%s2 + $0x1a8] sm:$0xff]
    %v121 = vld [vmem:[%s2 + $0x1b0] sm:$0xff]
    %v122 = vld [vmem:[%s2 + $0x1b8] sm:$0xff]
    %v123 = vld [vmem:[%s2 + $0x1c0] sm:$0xff]
    %v124 = vld [vmem:[%s2 + $0x1c8] sm:$0xff]
    %v125 = vld [vmem:[%s2 + $0x1d0] sm:$0xff]
    %v126 = vld [vmem:[%s2 + $0x1d8] sm:$0xff]
    %v127 = vld [vmem:[%s2 + $0x1e0] sm:$0xff]
    %v128 = vld [vmem:[%s2 + $0x1e8] sm:$0xff]
    %v129 = vld [vmem:[%s2 + $0x1f0] sm:$0xff]
    %v130 = vld [vmem:[%s2 + $0x1f8] sm:$0xff]
    %v131 = vunpack.c.l.bf16 %v67
    %v132 = vunpack.c.h.bf16 %v67
    %v133 = vunpack.c.l.bf16 %v68
    %v134 = vunpack.c.h.bf16 %v68
    %v135 = vunpack.c.l.bf16 %v69
    %v136 = vunpack.c.h.bf16 %v69
    %v137 = vunpack.c.l.bf16 %v70
    %v138 = vunpack.c.h.bf16 %v70
    %v139 = vunpack.c.l.bf16 %v71
    %v140 = vunpack.c.h.bf16 %v71
    %v141 = vunpack.c.l.bf16 %v72
    %v142 = vunpack.c.h.bf16 %v72
    %v143 = vunpack.c.l.bf16 %v73
    %v144 = vunpack.c.h.bf16 %v73
    %v145 = vunpack.c.l.bf16 %v74
    %v146 = vunpack.c.h.bf16 %v74
    %v147 = vunpack.c.l.bf16 %v75
    %v148 = vunpack.c.h.bf16 %v75
    %v149 = vunpack.c.l.bf16 %v76
    %v150 = vunpack.c.h.bf16 %v76
    %v151 = vunpack.c.l.bf16 %v77
    %v152 = vunpack.c.h.bf16 %v77
    %v153 = vunpack.c.l.bf16 %v78
    %v154 = vunpack.c.h.bf16 %v78
    %v155 = vunpack.c.l.bf16 %v79
    %v156 = vunpack.c.h.bf16 %v79
    %v157 = vunpack.c.l.bf16 %v80
    %v158 = vunpack.c.h.bf16 %v80
    %v159 = vunpack.c.l.bf16 %v81
    %v160 = vunpack.c.h.bf16 %v81
    %v161 = vunpack.c.l.bf16 %v82
    %v162 = vunpack.c.h.bf16 %v82
    %v163 = vunpack.c.l.bf16 %v83
    %v164 = vunpack.c.h.bf16 %v83
    %v165 = vunpack.c.l.bf16 %v84
    %v166 = vunpack.c.h.bf16 %v84
    %v167 = vunpack.c.l.bf16 %v85
    %v168 = vunpack.c.h.bf16 %v85
    %v169 = vunpack.c.l.bf16 %v86
    %v170 = vunpack.c.h.bf16 %v86
    %v171 = vunpack.c.l.bf16 %v87
    %v172 = vunpack.c.h.bf16 %v87
    %v173 = vunpack.c.l.bf16 %v88
    %v174 = vunpack.c.h.bf16 %v88
    %v175 = vunpack.c.l.bf16 %v89
    %v176 = vunpack.c.h.bf16 %v89
    %v177 = vunpack.c.l.bf16 %v90
    %v178 = vunpack.c.h.bf16 %v90
    %v179 = vunpack.c.l.bf16 %v91
    %v180 = vunpack.c.h.bf16 %v91
    %v181 = vunpack.c.l.bf16 %v92
    %v182 = vunpack.c.h.bf16 %v92
    %v183 = vunpack.c.l.bf16 %v93
    %v184 = vunpack.c.h.bf16 %v93
    %v185 = vunpack.c.l.bf16 %v94
    %v186 = vunpack.c.h.bf16 %v94
    %v187 = vunpack.c.l.bf16 %v95
    %v188 = vunpack.c.h.bf16 %v95
    %v189 = vunpack.c.l.bf16 %v96
    %v190 = vunpack.c.h.bf16 %v96
    %v191 = vunpack.c.l.bf16 %v97
    %v192 = vunpack.c.h.bf16 %v97
    %v193 = vunpack.c.l.bf16 %v98
    %v194 = vunpack.c.h.bf16 %v98
    %v195 = vunpack.c.l.bf16 %v99
    %v196 = vunpack.c.h.bf16 %v99
    %v197 = vunpack.c.l.bf16 %v100
    %v198 = vunpack.c.h.bf16 %v100
    %v199 = vunpack.c.l.bf16 %v101
    %v200 = vunpack.c.h.bf16 %v101
    %v201 = vunpack.c.l.bf16 %v102
    %v202 = vunpack.c.h.bf16 %v102
    %v203 = vunpack.c.l.bf16 %v103
    %v204 = vunpack.c.h.bf16 %v103
    %v205 = vunpack.c.l.bf16 %v104
    %v206 = vunpack.c.h.bf16 %v104
    %v207 = vunpack.c.l.bf16 %v105
    %v208 = vunpack.c.h.bf16 %v105
    %v209 = vunpack.c.l.bf16 %v106
    %v210 = vunpack.c.h.bf16 %v106
    %v211 = vunpack.c.l.bf16 %v107
    %v212 = vunpack.c.h.bf16 %v107
    %v213 = vunpack.c.l.bf16 %v108
    %v214 = vunpack.c.h.bf16 %v108
    %v215 = vunpack.c.l.bf16 %v109
    %v216 = vunpack.c.h.bf16 %v109
    %v217 = vunpack.c.l.bf16 %v110
    %v218 = vunpack.c.h.bf16 %v110
    %v219 = vunpack.c.l.bf16 %v111
    %v220 = vunpack.c.h.bf16 %v111
    %v221 = vunpack.c.l.bf16 %v112
    %v222 = vunpack.c.h.bf16 %v112
    %v223 = vunpack.c.l.bf16 %v113
    %v224 = vunpack.c.h.bf16 %v113
    %v225 = vunpack.c.l.bf16 %v114
    %v226 = vunpack.c.h.bf16 %v114
    %v227 = vunpack.c.l.bf16 %v115
    %v228 = vunpack.c.h.bf16 %v115
    %v229 = vunpack.c.l.bf16 %v116
    %v230 = vunpack.c.h.bf16 %v116
    %v231 = vunpack.c.l.bf16 %v117
    %v232 = vunpack.c.h.bf16 %v117
    %v233 = vunpack.c.l.bf16 %v118
    %v234 = vunpack.c.h.bf16 %v118
    %v235 = vunpack.c.l.bf16 %v119
    %v236 = vunpack.c.h.bf16 %v119
    %v237 = vunpack.c.l.bf16 %v120
    %v238 = vunpack.c.h.bf16 %v120
    %v239 = vunpack.c.l.bf16 %v121
    %v240 = vunpack.c.h.bf16 %v121
    %v241 = vunpack.c.l.bf16 %v122
    %v242 = vunpack.c.h.bf16 %v122
    %v243 = vunpack.c.l.bf16 %v123
    %v244 = vunpack.c.h.bf16 %v123
    %v245 = vunpack.c.l.bf16 %v124
    %v246 = vunpack.c.h.bf16 %v124
    %v247 = vunpack.c.l.bf16 %v125
    %v248 = vunpack.c.h.bf16 %v125
    %v249 = vunpack.c.l.bf16 %v126
    %v250 = vunpack.c.h.bf16 %v126
    %v251 = vunpack.c.l.bf16 %v127
    %v252 = vunpack.c.h.bf16 %v127
    %v253 = vunpack.c.l.bf16 %v128
    %v254 = vunpack.c.h.bf16 %v128
    %v255 = vunpack.c.l.bf16 %v129
    %v256 = vunpack.c.h.bf16 %v129
    %v257 = vunpack.c.l.bf16 %v130
    %v258 = vunpack.c.h.bf16 %v130
    %260 = vst [vmem:[#allocation1] ss:$4 sm:$0xff] %v66
    %v261 = vld.sshfl [vmem:[#allocation1] sm:$0xff pattern:$0x73625140]
    %v262 = vld.sshfl [vmem:[#allocation1 + $0x8] sm:$0xff pattern:$0x73625140]
    %v263 = vld.sshfl [vmem:[#allocation1 + $0x10] sm:$0xff pattern:$0x73625140]
    %v264 = vld.sshfl [vmem:[#allocation1 + $0x18] sm:$0xff pattern:$0x73625140]
    %269 = vmatpush.msra.mxu0 %v161
    %270 = vmatpush.msra.mxu0 %v159
    %271 = vmatpush.msra.mxu0 %v157
    %272 = vmatpush.msra.mxu0 %v155
    %273 = vmatpush.msra.mxu0 %v153
    %274 = vmatpush.msra.mxu0 %v151
    %275 = vmatpush.msra.mxu0 %v149
    %276 = vmatpush.msra.mxu0 %v147
    %277 = vmatpush.msra.mxu0 %v145
    %278 = vmatpush.msra.mxu0 %v143
    %279 = vmatpush.msra.mxu0 %v141
    %280 = vmatpush.msra.mxu0 %v139
    %281 = vmatpush.msra.mxu0 %v137
    %282 = vmatpush.msra.mxu0 %v135
    %283 = vmatpush.msra.mxu0 %v133
    %284 = vmatpush.msra.mxu0 %v131
    %285 = vmatmul.f32.gmra.mxu0 %v261
    %v286 = vpop.f32.mrf.mxu0
    %v287 = vadd.f32 0.0, %v286
    %288 = vdwg.mxu0
    %289 = vmatpush.msra.mxu0 %v193
    %290 = vmatpush.msra.mxu0 %v191
    %291 = vmatpush.msra.mxu0 %v189
    %292 = vmatpush.msra.mxu0 %v187
    %293 = vmatpush.msra.mxu0 %v185
    %294 = vmatpush.msra.mxu0 %v183
    %295 = vmatpush.msra.mxu0 %v181
    %296 = vmatpush.msra.mxu0 %v179
    %297 = vmatpush.msra.mxu0 %v177
    %298 = vmatpush.msra.mxu0 %v175
    %299 = vmatpush.msra.mxu0 %v173
    %300 = vmatpush.msra.mxu0 %v171
    %301 = vmatpush.msra.mxu0 %v169
    %302 = vmatpush.msra.mxu0 %v167
    %303 = vmatpush.msra.mxu0 %v165
    %304 = vmatpush.msra.mxu0 %v163
    %305 = vmatmul.f32.gmra.mxu0 %v262
    %v306 = vpop.f32.mrf.mxu0
    %v307 = vadd.f32 %v287, %v306
    %308 = vdwg.mxu0
    %309 = vmatpush.msra.mxu0 %v225
    %310 = vmatpush.msra.mxu0 %v223
    %311 = vmatpush.msra.mxu0 %v221
    %312 = vmatpush.msra.mxu0 %v219
    %313 = vmatpush.msra.mxu0 %v217
    %314 = vmatpush.msra.mxu0 %v215
    %315 = vmatpush.msra.mxu0 %v213
    %316 = vmatpush.msra.mxu0 %v211
    %317 = vmatpush.msra.mxu0 %v209
    %318 = vmatpush.msra.mxu0 %v207
    %319 = vmatpush.msra.mxu0 %v205
    %320 = vmatpush.msra.mxu0 %v203
    %321 = vmatpush.msra.mxu0 %v201
    %322 = vmatpush.msra.mxu0 %v199
    %323 = vmatpush.msra.mxu0 %v197
    %324 = vmatpush.msra.mxu0 %v195
    %325 = vmatmul.f32.gmra.mxu0 %v263
    %v326 = vpop.f32.mrf.mxu0
    %v327 = vadd.f32 %v307, %v326
    %328 = vdwg.mxu0
    %329 = vmatpush.msra.mxu0 %v257
    %330 = vmatpush.msra.mxu0 %v255
    %331 = vmatpush.msra.mxu0 %v253
    %332 = vmatpush.msra.mxu0 %v251
    %333 = vmatpush.msra.mxu0 %v249
    %334 = vmatpush.msra.mxu0 %v247
    %335 = vmatpush.msra.mxu0 %v245
    %336 = vmatpush.msra.mxu0 %v243
    %337 = vmatpush.msra.mxu0 %v241
    %338 = vmatpush.msra.mxu0 %v239
    %339 = vmatpush.msra.mxu0 %v237
    %340 = vmatpush.msra.mxu0 %v235
    %341 = vmatpush.msra.mxu0 %v233
    %342 = vmatpush.msra.mxu0 %v231
    %343 = vmatpush.msra.mxu0 %v229
    %344 = vmatpush.msra.mxu0 %v227
    %345 = vmatmul.f32.gmra.mxu0 %v264
    %v346 = vpop.f32.mrf.mxu0
    %v347 = vadd.f32 %v327, %v346
    %348 = vdwg.mxu0
    %349 = vmatpush.msra.mxu0 %v162
    %350 = vmatpush.msra.mxu0 %v160
    %351 = vmatpush.msra.mxu0 %v158
    %352 = vmatpush.msra.mxu0 %v156
    %353 = vmatpush.msra.mxu0 %v154
    %354 = vmatpush.msra.mxu0 %v152
    %355 = vmatpush.msra.mxu0 %v150
    %356 = vmatpush.msra.mxu0 %v148
    %357 = vmatpush.msra.mxu0 %v146
    %358 = vmatpush.msra.mxu0 %v144
    %359 = vmatpush.msra.mxu0 %v142
    %360 = vmatpush.msra.mxu0 %v140
    %361 = vmatpush.msra.mxu0 %v138
    %362 = vmatpush.msra.mxu0 %v136
    %363 = vmatpush.msra.mxu0 %v134
    %364 = vmatpush.msra.mxu0 %v132
    %365 = vmatmul.f32.gmra.mxu0 %v261
    %v366 = vpop.f32.mrf.mxu0
    %v367 = vadd.f32 0.0, %v366
    %368 = vdwg.mxu0
    %369 = vmatpush.msra.mxu0 %v194
    %370 = vmatpush.msra.mxu0 %v192
    %371 = vmatpush.msra.mxu0 %v190
    %372 = vmatpush.msra.mxu0 %v188
    %373 = vmatpush.msra.mxu0 %v186
    %374 = vmatpush.msra.mxu0 %v184
    %375 = vmatpush.msra.mxu0 %v182
    %376 = vmatpush.msra.mxu0 %v180
    %377 = vmatpush.msra.mxu0 %v178
    %378 = vmatpush.msra.mxu0 %v176
    %379 = vmatpush.msra.mxu0 %v174
    %380 = vmatpush.msra.mxu0 %v172
    %381 = vmatpush.msra.mxu0 %v170
    %382 = vmatpush.msra.mxu0 %v168
    %383 = vmatpush.msra.mxu0 %v166
    %384 = vmatpush.msra.mxu0 %v164
    %385 = vmatmul.f32.gmra.mxu0 %v262
    %v386 = vpop.f32.mrf.mxu0
    %v387 = vadd.f32 %v367, %v386
    %388 = vdwg.mxu0
    %389 = vmatpush.msra.mxu0 %v226
    %390 = vmatpush.msra.mxu0 %v224
    %391 = vmatpush.msra.mxu0 %v222
    %392 = vmatpush.msra.mxu0 %v220
    %393 = vmatpush.msra.mxu0 %v218
    %394 = vmatpush.msra.mxu0 %v216
    %395 = vmatpush.msra.mxu0 %v214
    %396 = vmatpush.msra.mxu0 %v212
    %397 = vmatpush.msra.mxu0 %v210
    %398 = vmatpush.msra.mxu0 %v208
    %399 = vmatpush.msra.mxu0 %v206
    %400 = vmatpush.msra.mxu0 %v204
    %401 = vmatpush.msra.mxu0 %v202
    %402 = vmatpush.msra.mxu0 %v200
    %403 = vmatpush.msra.mxu0 %v198
    %404 = vmatpush.msra.mxu0 %v196
    %405 = vmatmul.f32.gmra.mxu0 %v263
    %v406 = vpop.f32.mrf.mxu0
    %v407 = vadd.f32 %v387, %v406
    %408 = vdwg.mxu0
    %409 = vmatpush.msra.mxu0 %v258
    %410 = vmatpush.msra.mxu0 %v256
    %411 = vmatpush.msra.mxu0 %v254
    %412 = vmatpush.msra.mxu0 %v252
    %413 = vmatpush.msra.mxu0 %v250
    %414 = vmatpush.msra.mxu0 %v248
    %415 = vmatpush.msra.mxu0 %v246
    %416 = vmatpush.msra.mxu0 %v244
    %417 = vmatpush.msra.mxu0 %v242
    %418 = vmatpush.msra.mxu0 %v240
    %419 = vmatpush.msra.mxu0 %v238
    %420 = vmatpush.msra.mxu0 %v236
    %421 = vmatpush.msra.mxu0 %v234
    %422 = vmatpush.msra.mxu0 %v232
    %423 = vmatpush.msra.mxu0 %v230
    %424 = vmatpush.msra.mxu0 %v228
    %425 = vmatmul.f32.gmra.mxu0 %v264
    %v426 = vpop.f32.mrf.mxu0
    %v427 = vadd.f32 %v407, %v426
    %428 = vdwg.mxu0
    %v429 = vld [vmem:[%s3] sm:$0x3]
    %v430 = vld [vmem:[%s4] sm:$0x3]
    %vm431 = vcmask 1041408
    %v432 = vsel %vm431, %v347, 0.0
    %v433 = vrot.slane %v432, 4
    %v434 = vadd.f32 %v432, %v433
    %v435 = vrot.slane %v434, 2
    %v436 = vadd.f32 %v434, %v435
    %v437 = vrot.slane %v436, 1
    %v438 = vadd.f32 %v436, %v437
    %v439 = vsel %vm431, %v427, 0.0
    %v440 = vrot.slane %v439, 4
    %v441 = vadd.f32 %v439, %v440
    %v442 = vrot.slane %v441, 2
    %v443 = vadd.f32 %v441, %v442
    %v444 = vrot.slane %v443, 1
    %v445 = vadd.f32 %v443, %v444
    %v446 = vmul.f32 %v438, 0.5
    %v447 = vmul.f32 %v445, 0.5
    %v448 = vsub.f32 %v347, %v446
    %v449 = vsub.f32 %v427, %v447
    %v450 = vmul.f32 %v448, %v448
    %v451 = vmul.f32 %v449, %v449
    %v452 = vsel %vm431, %v450, 0.0
    %v453 = vrot.slane %v452, 4
    %v454 = vadd.f32 %v452, %v453
    %v455 = vrot.slane %v454, 2
    %v456 = vadd.f32 %v454, %v455
    %v457 = vrot.slane %v456, 1
    %v458 = vadd.f32 %v456, %v457
    %v459 = vsel %vm431, %v451, 0.0
    %v460 = vrot.slane %v459, 4
    %v461 = vadd.f32 %v459, %v460
    %v462 = vrot.slane %v461, 2
    %v463 = vadd.f32 %v461, %v462
    %v464 = vrot.slane %v463, 1
    %v465 = vadd.f32 %v463, %v464
    %v466 = vmul.f32 %v458, 0.5
    %v467 = vmul.f32 %v465, 0.5
    %v468 = vadd.f32 %v466, 1e-05
    %v469 = vadd.f32 %v467, 1e-05
    %v470 = vrsqrt.pop %v468
    %v471 = vmul.f32 %v470, %v468
    %v472 = vmul.f32 %v471, %v470
    %v473 = vmul.f32 0.5, %v472
    %v474 = vsub.f32 1.5, %v473
    %v475 = vmul.f32 %v470, %v474
    %vm476 = vweird.f32 %v468
    %vm477 = vweird.f32 %v470
    %vm478 = vmor %vm476, %vm477
    %v479 = vsel %vm478, %v470, %v475
    %v480 = vrsqrt.pop %v469
    %v481 = vmul.f32 %v480, %v469
    %v482 = vmul.f32 %v481, %v480
    %v483 = vmul.f32 0.5, %v482
    %v484 = vsub.f32 1.5, %v483
    %v485 = vmul.f32 %v480, %v484
    %vm486 = vweird.f32 %v469
    %vm487 = vweird.f32 %v480
    %vm488 = vmor %vm486, %vm487
    %v489 = vsel %vm488, %v480, %v485
    %v490 = vmul.f32 %v448, %v479
    %v491 = vmul.f32 %v449, %v489
    %v493 = vperm.slane %v429, 0
    %v494 = vperm.slane %v429, 1
    %v497 = vmul.f32 %v490, %v493
    %v498 = vmul.f32 %v491, %v494
    %v500 = vperm.slane %v430, 0
    %v501 = vperm.slane %v430, 1
    %v504 = vadd.f32 %v497, %v500
    %v505 = vadd.f32 %v498, %v501
    %v506 = vmax.f32 %v504, 0.0
    %v507 = vmax.f32 %v505, 0.0
    %v508 = vld [vmem:[%s5] sm:$0xff]
    %v509 = vld [vmem:[%s5 + $0x8] sm:$0xff]
    %v510 = vld [vmem:[%s5 + $0x10] sm:$0xff]
    %v511 = vld [vmem:[%s5 + $0x18] sm:$0xff]
    %v512 = vld [vmem:[%s5 + $0x20] sm:$0xff]
    %v513 = vld [vmem:[%s5 + $0x28] sm:$0xff]
    %v514 = vld [vmem:[%s5 + $0x30] sm:$0xff]
    %v515 = vld [vmem:[%s5 + $0x38] sm:$0xff]
    %v516 = vld [vmem:[%s5 + $0x40] sm:$0xff]
    %v517 = vld [vmem:[%s5 + $0x48] sm:$0xff]
    %v518 = vld [vmem:[%s5 + $0x50] sm:$0xff]
    %v519 = vld [vmem:[%s5 + $0x58] sm:$0xff]
    %v520 = vld [vmem:[%s5 + $0x60] sm:$0xff]
    %v521 = vld [vmem:[%s5 + $0x68] sm:$0xff]
    %v522 = vld [vmem:[%s5 + $0x70] sm:$0xff]
    %v523 = vld [vmem:[%s5 + $0x78] sm:$0xff]
    %v524 = vld [vmem:[%s5 + $0x80] sm:$0xff]
    %v525 = vld [vmem:[%s5 + $0x88] sm:$0xff]
    %v526 = vld [vmem:[%s5 + $0x90] sm:$0xff]
    %v527 = vld [vmem:[%s5 + $0x98] sm:$0xff]
    %v528 = vld [vmem:[%s5 + $0xa0] sm:$0xff]
    %v529 = vld [vmem:[%s5 + $0xa8] sm:$0xff]
    %v530 = vld [vmem:[%s5 + $0xb0] sm:$0xff]
    %v531 = vld [vmem:[%s5 + $0xb8] sm:$0xff]
    %v532 = vld [vmem:[%s5 + $0xc0] sm:$0xff]
    %v533 = vld [vmem:[%s5 + $0xc8] sm:$0xff]
    %v534 = vld [vmem:[%s5 + $0xd0] sm:$0xff]
    %v535 = vld [vmem:[%s5 + $0xd8] sm:$0xff]
    %v536 = vld [vmem:[%s5 + $0xe0] sm:$0xff]
    %v537 = vld [vmem:[%s5 + $0xe8] sm:$0xff]
    %v538 = vld [vmem:[%s5 + $0xf0] sm:$0xff]
    %v539 = vld [vmem:[%s5 + $0xf8] sm:$0xff]
    %v540 = vunpack.c.l.bf16 %v508
    %v541 = vunpack.c.h.bf16 %v508
    %v542 = vunpack.c.l.bf16 %v509
    %v543 = vunpack.c.h.bf16 %v509
    %v544 = vunpack.c.l.bf16 %v510
    %v545 = vunpack.c.h.bf16 %v510
    %v546 = vunpack.c.l.bf16 %v511
    %v547 = vunpack.c.h.bf16 %v511
    %v548 = vunpack.c.l.bf16 %v512
    %v549 = vunpack.c.h.bf16 %v512
    %v550 = vunpack.c.l.bf16 %v513
    %v551 = vunpack.c.h.bf16 %v513
    %v552 = vunpack.c.l.bf16 %v514
    %v553 = vunpack.c.h.bf16 %v514
    %v554 = vunpack.c.l.bf16 %v515
    %v555 = vunpack.c.h.bf16 %v515
    %v556 = vunpack.c.l.bf16 %v516
    %v557 = vunpack.c.h.bf16 %v516
    %v558 = vunpack.c.l.bf16 %v517
    %v559 = vunpack.c.h.bf16 %v517
    %v560 = vunpack.c.l.bf16 %v518
    %v561 = vunpack.c.h.bf16 %v518
    %v562 = vunpack.c.l.bf16 %v519
    %v563 = vunpack.c.h.bf16 %v519
    %v564 = vunpack.c.l.bf16 %v520
    %v565 = vunpack.c.h.bf16 %v520
    %v566 = vunpack.c.l.bf16 %v521
    %v567 = vunpack.c.h.bf16 %v521
    %v568 = vunpack.c.l.bf16 %v522
    %v569 = vunpack.c.h.bf16 %v522
    %v570 = vunpack.c.l.bf16 %v523
    %v571 = vunpack.c.h.bf16 %v523
    %v572 = vunpack.c.l.bf16 %v524
    %v573 = vunpack.c.h.bf16 %v524
    %v574 = vunpack.c.l.bf16 %v525
    %v575 = vunpack.c.h.bf16 %v525
    %v576 = vunpack.c.l.bf16 %v526
    %v577 = vunpack.c.h.bf16 %v526
    %v578 = vunpack.c.l.bf16 %v527
    %v579 = vunpack.c.h.bf16 %v527
    %v580 = vunpack.c.l.bf16 %v528
    %v581 = vunpack.c.h.bf16 %v528
    %v582 = vunpack.c.l.bf16 %v529
    %v583 = vunpack.c.h.bf16 %v529
    %v584 = vunpack.c.l.bf16 %v530
    %v585 = vunpack.c.h.bf16 %v530
    %v586 = vunpack.c.l.bf16 %v531
    %v587 = vunpack.c.h.bf16 %v531
    %v588 = vunpack.c.l.bf16 %v532
    %v589 = vunpack.c.h.bf16 %v532
    %v590 = vunpack.c.l.bf16 %v533
    %v591 = vunpack.c.h.bf16 %v533
    %v592 = vunpack.c.l.bf16 %v534
    %v593 = vunpack.c.h.bf16 %v534
    %v594 = vunpack.c.l.bf16 %v535
    %v595 = vunpack.c.h.bf16 %v535
    %v596 = vunpack.c.l.bf16 %v536
    %v597 = vunpack.c.h.bf16 %v536
    %v598 = vunpack.c.l.bf16 %v537
    %v599 = vunpack.c.h.bf16 %v537
    %v600 = vunpack.c.l.bf16 %v538
    %v601 = vunpack.c.h.bf16 %v538
    %v602 = vunpack.c.l.bf16 %v539
    %v603 = vunpack.c.h.bf16 %v539
    %604 = vmatpush.msra.mxu0 %v570
    %605 = vmatpush.msra.mxu0 %v568
    %606 = vmatpush.msra.mxu0 %v566
    %607 = vmatpush.msra.mxu0 %v564
    %608 = vmatpush.msra.mxu0 %v562
    %609 = vmatpush.msra.mxu0 %v560
    %610 = vmatpush.msra.mxu0 %v558
    %611 = vmatpush.msra.mxu0 %v556
    %612 = vmatpush.msra.mxu0 %v554
    %613 = vmatpush.msra.mxu0 %v552
    %614 = vmatpush.msra.mxu0 %v550
    %615 = vmatpush.msra.mxu0 %v548
    %616 = vmatpush.msra.mxu0 %v546
    %617 = vmatpush.msra.mxu0 %v544
    %618 = vmatpush.msra.mxu0 %v542
    %619 = vmatpush.msra.mxu0 %v540
    %620 = vmatmul.f32.gmra.mxu0 %v506
    %v621 = vpop.f32.mrf.mxu0
    %v622 = vadd.f32 0.0, %v621
    %623 = vdwg.mxu0
    %624 = vmatpush.msra.mxu0 %v602
    %625 = vmatpush.msra.mxu0 %v600
    %626 = vmatpush.msra.mxu0 %v598
    %627 = vmatpush.msra.mxu0 %v596
    %628 = vmatpush.msra.mxu0 %v594
    %629 = vmatpush.msra.mxu0 %v592
    %630 = vmatpush.msra.mxu0 %v590
    %631 = vmatpush.msra.mxu0 %v588
    %632 = vmatpush.msra.mxu0 %v586
    %633 = vmatpush.msra.mxu0 %v584
    %634 = vmatpush.msra.mxu0 %v582
    %635 = vmatpush.msra.mxu0 %v580
    %636 = vmatpush.msra.mxu0 %v578
    %637 = vmatpush.msra.mxu0 %v576
    %638 = vmatpush.msra.mxu0 %v574
    %639 = vmatpush.msra.mxu0 %v572
    %640 = vmatmul.f32.gmra.mxu0 %v507
    %v641 = vpop.f32.mrf.mxu0
    %v642 = vadd.f32 %v622, %v641
    %643 = vdwg.mxu0
    %644 = vmatpush.msra.mxu0 %v571
    %645 = vmatpush.msra.mxu0 %v569
    %646 = vmatpush.msra.mxu0 %v567
    %647 = vmatpush.msra.mxu0 %v565
    %648 = vmatpush.msra.mxu0 %v563
    %649 = vmatpush.msra.mxu0 %v561
    %650 = vmatpush.msra.mxu0 %v559
    %651 = vmatpush.msra.mxu0 %v557
    %652 = vmatpush.msra.mxu0 %v555
    %653 = vmatpush.msra.mxu0 %v553
    %654 = vmatpush.msra.mxu0 %v551
    %655 = vmatpush.msra.mxu0 %v549
    %656 = vmatpush.msra.mxu0 %v547
    %657 = vmatpush.msra.mxu0 %v545
    %658 = vmatpush.msra.mxu0 %v543
    %659 = vmatpush.msra.mxu0 %v541
    %660 = vmatmul.f32.gmra.mxu0 %v506
    %v661 = vpop.f32.mrf.mxu0
    %v662 = vadd.f32 0.0, %v661
    %663 = vdwg.mxu0
    %664 = vmatpush.msra.mxu0 %v603
    %665 = vmatpush.msra.mxu0 %v601
    %666 = vmatpush.msra.mxu0 %v599
    %667 = vmatpush.msra.mxu0 %v597
    %668 = vmatpush.msra.mxu0 %v595
    %669 = vmatpush.msra.mxu0 %v593
    %670 = vmatpush.msra.mxu0 %v591
    %671 = vmatpush.msra.mxu0 %v589
    %672 = vmatpush.msra.mxu0 %v587
    %673 = vmatpush.msra.mxu0 %v585
    %674 = vmatpush.msra.mxu0 %v583
    %675 = vmatpush.msra.mxu0 %v581
    %676 = vmatpush.msra.mxu0 %v579
    %677 = vmatpush.msra.mxu0 %v577
    %678 = vmatpush.msra.mxu0 %v575
    %679 = vmatpush.msra.mxu0 %v573
    %680 = vmatmul.f32.gmra.mxu0 %v507
    %v681 = vpop.f32.mrf.mxu0
    %v682 = vadd.f32 %v662, %v681
    %683 = vdwg.mxu0
    %v684 = vld [vmem:[%s6] sm:$0x3]
    %v685 = vld [vmem:[%s7] sm:$0x3]
    %v686 = vsel %vm431, %v642, 0.0
    %v687 = vrot.slane %v686, 4
    %v688 = vadd.f32 %v686, %v687
    %v689 = vrot.slane %v688, 2
    %v690 = vadd.f32 %v688, %v689
    %v691 = vrot.slane %v690, 1
    %v692 = vadd.f32 %v690, %v691
    %v693 = vsel %vm431, %v682, 0.0
    %v694 = vrot.slane %v693, 4
    %v695 = vadd.f32 %v693, %v694
    %v696 = vrot.slane %v695, 2
    %v697 = vadd.f32 %v695, %v696
    %v698 = vrot.slane %v697, 1
    %v699 = vadd.f32 %v697, %v698
    %v700 = vmul.f32 %v692, 0.5
    %v701 = vmul.f32 %v699, 0.5
    %v702 = vsub.f32 %v642, %v700
    %v703 = vsub.f32 %v682, %v701
    %v704 = vmul.f32 %v702, %v702
    %v705 = vmul.f32 %v703, %v703
    %v706 = vsel %vm431, %v704, 0.0
    %v707 = vrot.slane %v706, 4
    %v708 = vadd.f32 %v706, %v707
    %v709 = vrot.slane %v708, 2
    %v710 = vadd.f32 %v708, %v709
    %v711 = vrot.slane %v710, 1
    %v712 = vadd.f32 %v710, %v711
    %v713 = vsel %vm431, %v705, 0.0
    %v714 = vrot.slane %v713, 4
    %v715 = vadd.f32 %v713, %v714
    %v716 = vrot.slane %v715, 2
    %v717 = vadd.f32 %v715, %v716
    %v718 = vrot.slane %v717, 1
    %v719 = vadd.f32 %v717, %v718
    %v720 = vmul.f32 %v712, 0.5
    %v721 = vmul.f32 %v719, 0.5
    %v722 = vadd.f32 %v720, 1e-05
    %v723 = vadd.f32 %v721, 1e-05
    %v724 = vrsqrt.pop %v722
    %v725 = vmul.f32 %v724, %v722
    %v726 = vmul.f32 %v725, %v724
    %v727 = vmul.f32 0.5, %v726
    %v728 = vsub.f32 1.5, %v727
    %v729 = vmul.f32 %v724, %v728
    %vm730 = vweird.f32 %v722
    %vm731 = vweird.f32 %v724
    %vm732 = vmor %vm730, %vm731
    %v733 = vsel %vm732, %v724, %v729
    %v734 = vrsqrt.pop %v723
    %v735 = vmul.f32 %v734, %v723
    %v736 = vmul.f32 %v735, %v734
    %v737 = vmul.f32 0.5, %v736
    %v738 = vsub.f32 1.5, %v737
    %v739 = vmul.f32 %v734, %v738
    %vm740 = vweird.f32 %v723
    %vm741 = vweird.f32 %v734
    %vm742 = vmor %vm740, %vm741
    %v743 = vsel %vm742, %v734, %v739
    %v744 = vmul.f32 %v702, %v733
    %v745 = vmul.f32 %v703, %v743
    %v747 = vperm.slane %v684, 0
    %v748 = vperm.slane %v684, 1
    %v751 = vmul.f32 %v744, %v747
    %v752 = vmul.f32 %v745, %v748
    %v754 = vperm.slane %v685, 0
    %v755 = vperm.slane %v685, 1
    %v758 = vadd.f32 %v751, %v754
    %v759 = vadd.f32 %v752, %v755
    %v760 = vld [vmem:[%s1] sm:$0x3]
    %v761 = vld [vmem:[%s8] sm:$0xff]
    %v762 = vld [vmem:[%s8 + $0x8] sm:$0xff]
    %v763 = vld [vmem:[%s8 + $0x10] sm:$0xff]
    %v764 = vld [vmem:[%s8 + $0x18] sm:$0xff]
    %v765 = vld [vmem:[%s8 + $0x20] sm:$0xff]
    %v766 = vld [vmem:[%s8 + $0x28] sm:$0xff]
    %v767 = vld [vmem:[%s8 + $0x30] sm:$0xff]
    %v768 = vld [vmem:[%s8 + $0x38] sm:$0xff]
    %v769 = vld [vmem:[%s8 + $0x40] sm:$0xff]
    %v770 = vld [vmem:[%s8 + $0x48] sm:$0xff]
    %v771 = vld [vmem:[%s8 + $0x50] sm:$0xff]
    %v772 = vld [vmem:[%s8 + $0x58] sm:$0xff]
    %v773 = vld [vmem:[%s8 + $0x60] sm:$0xff]
    %v774 = vld [vmem:[%s8 + $0x68] sm:$0xff]
    %v775 = vld [vmem:[%s8 + $0x70] sm:$0xff]
    %v776 = vld [vmem:[%s8 + $0x78] sm:$0xff]
    %v777 = vunpack.c.l.bf16 %v761
    %v778 = vunpack.c.h.bf16 %v761
    %v779 = vunpack.c.l.bf16 %v762
    %v780 = vunpack.c.h.bf16 %v762
    %v781 = vunpack.c.l.bf16 %v763
    %v782 = vunpack.c.h.bf16 %v763
    %v783 = vunpack.c.l.bf16 %v764
    %v784 = vunpack.c.h.bf16 %v764
    %v785 = vunpack.c.l.bf16 %v765
    %v786 = vunpack.c.h.bf16 %v765
    %v787 = vunpack.c.l.bf16 %v766
    %v788 = vunpack.c.h.bf16 %v766
    %v789 = vunpack.c.l.bf16 %v767
    %v790 = vunpack.c.h.bf16 %v767
    %v791 = vunpack.c.l.bf16 %v768
    %v792 = vunpack.c.h.bf16 %v768
    %v793 = vunpack.c.l.bf16 %v769
    %v794 = vunpack.c.h.bf16 %v769
    %v795 = vunpack.c.l.bf16 %v770
    %v796 = vunpack.c.h.bf16 %v770
    %v797 = vunpack.c.l.bf16 %v771
    %v798 = vunpack.c.h.bf16 %v771
    %v799 = vunpack.c.l.bf16 %v772
    %v800 = vunpack.c.h.bf16 %v772
    %v801 = vunpack.c.l.bf16 %v773
    %v802 = vunpack.c.h.bf16 %v773
    %v803 = vunpack.c.l.bf16 %v774
    %v804 = vunpack.c.h.bf16 %v774
    %v805 = vunpack.c.l.bf16 %v775
    %v806 = vunpack.c.h.bf16 %v775
    %v807 = vunpack.c.l.bf16 %v776
    %v808 = vunpack.c.h.bf16 %v776
    %809 = vmatpush.msra.mxu0 %v807
    %810 = vmatpush.msra.mxu0 %v805
    %811 = vmatpush.msra.mxu0 %v803
    %812 = vmatpush.msra.mxu0 %v801
    %813 = vmatpush.msra.mxu0 %v799
    %814 = vmatpush.msra.mxu0 %v797
    %815 = vmatpush.msra.mxu0 %v795
    %816 = vmatpush.msra.mxu0 %v793
    %817 = vmatpush.msra.mxu0 %v791
    %818 = vmatpush.msra.mxu0 %v789
    %819 = vmatpush.msra.mxu0 %v787
    %820 = vmatpush.msra.mxu0 %v785
    %821 = vmatpush.msra.mxu0 %v783
    %822 = vmatpush.msra.mxu0 %v781
    %823 = vmatpush.msra.mxu0 %v779
    %824 = vmatpush.msra.mxu0 %v777
    %825 = vmatmul.f32.gmra.mxu0 %v760
    %v826 = vpop.f32.mrf.mxu0
    %v827 = vadd.f32 0.0, %v826
    %828 = vdwg.mxu0
    %829 = vmatpush.msra.mxu0 %v808
    %830 = vmatpush.msra.mxu0 %v806
    %831 = vmatpush.msra.mxu0 %v804
    %832 = vmatpush.msra.mxu0 %v802
    %833 = vmatpush.msra.mxu0 %v800
    %834 = vmatpush.msra.mxu0 %v798
    %835 = vmatpush.msra.mxu0 %v796
    %836 = vmatpush.msra.mxu0 %v794
    %837 = vmatpush.msra.mxu0 %v792
    %838 = vmatpush.msra.mxu0 %v790
    %839 = vmatpush.msra.mxu0 %v788
    %840 = vmatpush.msra.mxu0 %v786
    %841 = vmatpush.msra.mxu0 %v784
    %842 = vmatpush.msra.mxu0 %v782
    %843 = vmatpush.msra.mxu0 %v780
    %844 = vmatpush.msra.mxu0 %v778
    %845 = vmatmul.f32.gmra.mxu0 %v760
    %v846 = vpop.f32.mrf.mxu0
    %v847 = vadd.f32 0.0, %v846
    %848 = vdwg.mxu0
    %v849 = vld [vmem:[%s9] sm:$0x3]
    %v850 = vld [vmem:[%s10] sm:$0x3]
    %v851 = vsel %vm431, %v827, 0.0
    %v852 = vrot.slane %v851, 4
    %v853 = vadd.f32 %v851, %v852
    %v854 = vrot.slane %v853, 2
    %v855 = vadd.f32 %v853, %v854
    %v856 = vrot.slane %v855, 1
    %v857 = vadd.f32 %v855, %v856
    %v858 = vsel %vm431, %v847, 0.0
    %v859 = vrot.slane %v858, 4
    %v860 = vadd.f32 %v858, %v859
    %v861 = vrot.slane %v860, 2
    %v862 = vadd.f32 %v860, %v861
    %v863 = vrot.slane %v862, 1
    %v864 = vadd.f32 %v862, %v863
    %v865 = vmul.f32 %v857, 0.5
    %v866 = vmul.f32 %v864, 0.5
    %v867 = vsub.f32 %v827, %v865
    %v868 = vsub.f32 %v847, %v866
    %v869 = vmul.f32 %v867, %v867
    %v870 = vmul.f32 %v868, %v868
    %v871 = vsel %vm431, %v869, 0.0
    %v872 = vrot.slane %v871, 4
    %v873 = vadd.f32 %v871, %v872
    %v874 = vrot.slane %v873, 2
    %v875 = vadd.f32 %v873, %v874
    %v876 = vrot.slane %v875, 1
    %v877 = vadd.f32 %v875, %v876
    %v878 = vsel %vm431, %v870, 0.0
    %v879 = vrot.slane %v878, 4
    %v880 = vadd.f32 %v878, %v879
    %v881 = vrot.slane %v880, 2
    %v882 = vadd.f32 %v880, %v881
    %v883 = vrot.slane %v882, 1
    %v884 = vadd.f32 %v882, %v883
    %v885 = vmul.f32 %v877, 0.5
    %v886 = vmul.f32 %v884, 0.5
    %v887 = vadd.f32 %v885, 1e-05
    %v888 = vadd.f32 %v886, 1e-05
    %v889 = vrsqrt.pop %v887
    %v890 = vmul.f32 %v889, %v887
    %v891 = vmul.f32 %v890, %v889
    %v892 = vmul.f32 0.5, %v891
    %v893 = vsub.f32 1.5, %v892
    %v894 = vmul.f32 %v889, %v893
    %vm895 = vweird.f32 %v887
    %vm896 = vweird.f32 %v889
    %vm897 = vmor %vm895, %vm896
    %v898 = vsel %vm897, %v889, %v894
    %v899 = vrsqrt.pop %v888
    %v900 = vmul.f32 %v899, %v888
    %v901 = vmul.f32 %v900, %v899
    %v902 = vmul.f32 0.5, %v901
    %v903 = vsub.f32 1.5, %v902
    %v904 = vmul.f32 %v899, %v903
    %vm905 = vweird.f32 %v888
    %vm906 = vweird.f32 %v899
    %vm907 = vmor %vm905, %vm906
    %v908 = vsel %vm907, %v899, %v904
    %v909 = vmul.f32 %v867, %v898
    %v910 = vmul.f32 %v868, %v908
    %v912 = vperm.slane %v849, 0
    %v913 = vperm.slane %v849, 1
    %v916 = vmul.f32 %v909, %v912
    %v917 = vmul.f32 %v910, %v913
    %v919 = vperm.slane %v850, 0
    %v920 = vperm.slane %v850, 1
    %v923 = vadd.f32 %v916, %v919
    %v924 = vadd.f32 %v917, %v920
    %v925 = vadd.f32 %v758, %v923
    %v926 = vadd.f32 %v759, %v924
    %v927 = vmax.f32 %v925, 0.0
    %v928 = vmax.f32 %v926, 0.0
    %v929 = vld [vmem:[%s11] sm:$0xff]
    %v930 = vld [vmem:[%s11 + $0x8] sm:$0xff]
    %v931 = vld [vmem:[%s11 + $0x10] sm:$0xff]
    %v932 = vld [vmem:[%s11 + $0x18] sm:$0xff]
    %v933 = vld [vmem:[%s11 + $0x20] sm:$0xff]
    %v934 = vld [vmem:[%s11 + $0x28] sm:$0xff]
    %v935 = vld [vmem:[%s11 + $0x30] sm:$0xff]
    %v936 = vld [vmem:[%s11 + $0x38] sm:$0xff]
    %v937 = vld [vmem:[%s11 + $0x40] sm:$0xff]
    %v938 = vld [vmem:[%s11 + $0x48] sm:$0xff]
    %v939 = vld [vmem:[%s11 + $0x50] sm:$0xff]
    %v940 = vld [vmem:[%s11 + $0x58] sm:$0xff]
    %v941 = vld [vmem:[%s11 + $0x60] sm:$0xff]
    %v942 = vld [vmem:[%s11 + $0x68] sm:$0xff]
    %v943 = vld [vmem:[%s11 + $0x70] sm:$0xff]
    %v944 = vld [vmem:[%s11 + $0x78] sm:$0xff]
    %v945 = vld [vmem:[%s11 + $0x80] sm:$0xff]
    %v946 = vld [vmem:[%s11 + $0x88] sm:$0xff]
    %v947 = vld [vmem:[%s11 + $0x90] sm:$0xff]
    %v948 = vld [vmem:[%s11 + $0x98] sm:$0xff]
    %v949 = vld [vmem:[%s11 + $0xa0] sm:$0xff]
    %v950 = vld [vmem:[%s11 + $0xa8] sm:$0xff]
    %v951 = vld [vmem:[%s11 + $0xb0] sm:$0xff]
    %v952 = vld [vmem:[%s11 + $0xb8] sm:$0xff]
    %v953 = vld [vmem:[%s11 + $0xc0] sm:$0xff]
    %v954 = vld [vmem:[%s11 + $0xc8] sm:$0xff]
    %v955 = vld [vmem:[%s11 + $0xd0] sm:$0xff]
    %v956 = vld [vmem:[%s11 + $0xd8] sm:$0xff]
    %v957 = vld [vmem:[%s11 + $0xe0] sm:$0xff]
    %v958 = vld [vmem:[%s11 + $0xe8] sm:$0xff]
    %v959 = vld [vmem:[%s11 + $0xf0] sm:$0xff]
    %v960 = vld [vmem:[%s11 + $0xf8] sm:$0xff]
    %v961 = vld [vmem:[%s11 + $0x100] sm:$0xff]
    %v962 = vld [vmem:[%s11 + $0x108] sm:$0xff]
    %v963 = vld [vmem:[%s11 + $0x110] sm:$0xff]
    %v964 = vld [vmem:[%s11 + $0x118] sm:$0xff]
    %v965 = vld [vmem:[%s11 + $0x120] sm:$0xff]
    %v966 = vld [vmem:[%s11 + $0x128] sm:$0xff]
    %v967 = vld [vmem:[%s11 + $0x130] sm:$0xff]
    %v968 = vld [vmem:[%s11 + $0x138] sm:$0xff]
    %v969 = vld [vmem:[%s11 + $0x140] sm:$0xff]
    %v970 = vld [vmem:[%s11 + $0x148] sm:$0xff]
    %v971 = vld [vmem:[%s11 + $0x150] sm:$0xff]
    %v972 = vld [vmem:[%s11 + $0x158] sm:$0xff]
    %v973 = vld [vmem:[%s11 + $0x160] sm:$0xff]
    %v974 = vld [vmem:[%s11 + $0x168] sm:$0xff]
    %v975 = vld [vmem:[%s11 + $0x170] sm:$0xff]
    %v976 = vld [vmem:[%s11 + $0x178] sm:$0xff]
    %v977 = vld [vmem:[%s11 + $0x180] sm:$0xff]
    %v978 = vld [vmem:[%s11 + $0x188] sm:$0xff]
    %v979 = vld [vmem:[%s11 + $0x190] sm:$0xff]
    %v980 = vld [vmem:[%s11 + $0x198] sm:$0xff]
    %v981 = vld [vmem:[%s11 + $0x1a0] sm:$0xff]
    %v982 = vld [vmem:[%s11 + $0x1a8] sm:$0xff]
    %v983 = vld [vmem:[%s11 + $0x1b0] sm:$0xff]
    %v984 = vld [vmem:[%s11 + $0x1b8] sm:$0xff]
    %v985 = vld [vmem:[%s11 + $0x1c0] sm:$0xff]
    %v986 = vld [vmem:[%s11 + $0x1c8] sm:$0xff]
    %v987 = vld [vmem:[%s11 + $0x1d0] sm:$0xff]
    %v988 = vld [vmem:[%s11 + $0x1d8] sm:$0xff]
    %v989 = vld [vmem:[%s11 + $0x1e0] sm:$0xff]
    %v990 = vld [vmem:[%s11 + $0x1e8] sm:$0xff]
    %v991 = vld [vmem:[%s11 + $0x1f0] sm:$0xff]
    %v992 = vld [vmem:[%s11 + $0x1f8] sm:$0xff]
    %v993 = vunpack.c.l.bf16 %v929
    %v994 = vunpack.c.h.bf16 %v929
    %v995 = vunpack.c.l.bf16 %v930
    %v996 = vunpack.c.h.bf16 %v930
    %v997 = vunpack.c.l.bf16 %v931
    %v998 = vunpack.c.h.bf16 %v931
    %v999 = vunpack.c.l.bf16 %v932
    %v1000 = vunpack.c.h.bf16 %v932
    %v1001 = vunpack.c.l.bf16 %v933
    %v1002 = vunpack.c.h.bf16 %v933
    %v1003 = vunpack.c.l.bf16 %v934
    %v1004 = vunpack.c.h.bf16 %v934
    %v1005 = vunpack.c.l.bf16 %v935
    %v1006 = vunpack.c.h.bf16 %v935
    %v1007 = vunpack.c.l.bf16 %v936
    %v1008 = vunpack.c.h.bf16 %v936
    %v1009 = vunpack.c.l.bf16 %v937
    %v1010 = vunpack.c.h.bf16 %v937
    %v1011 = vunpack.c.l.bf16 %v938
    %v1012 = vunpack.c.h.bf16 %v938
    %v1013 = vunpack.c.l.bf16 %v939
    %v1014 = vunpack.c.h.bf16 %v939
    %v1015 = vunpack.c.l.bf16 %v940
    %v1016 = vunpack.c.h.bf16 %v940
    %v1017 = vunpack.c.l.bf16 %v941
    %v1018 = vunpack.c.h.bf16 %v941
    %v1019 = vunpack.c.l.bf16 %v942
    %v1020 = vunpack.c.h.bf16 %v942
    %v1021 = vunpack.c.l.bf16 %v943
    %v1022 = vunpack.c.h.bf16 %v943
    %v1023 = vunpack.c.l.bf16 %v944
    %v1024 = vunpack.c.h.bf16 %v944
    %v1025 = vunpack.c.l.bf16 %v945
    %v1026 = vunpack.c.h.bf16 %v945
    %v1027 = vunpack.c.l.bf16 %v946
    %v1028 = vunpack.c.h.bf16 %v946
    %v1029 = vunpack.c.l.bf16 %v947
    %v1030 = vunpack.c.h.bf16 %v947
    %v1031 = vunpack.c.l.bf16 %v948
    %v1032 = vunpack.c.h.bf16 %v948
    %v1033 = vunpack.c.l.bf16 %v949
    %v1034 = vunpack.c.h.bf16 %v949
    %v1035 = vunpack.c.l.bf16 %v950
    %v1036 = vunpack.c.h.bf16 %v950
    %v1037 = vunpack.c.l.bf16 %v951
    %v1038 = vunpack.c.h.bf16 %v951
    %v1039 = vunpack.c.l.bf16 %v952
    %v1040 = vunpack.c.h.bf16 %v952
    %v1041 = vunpack.c.l.bf16 %v953
    %v1042 = vunpack.c.h.bf16 %v953
    %v1043 = vunpack.c.l.bf16 %v954
    %v1044 = vunpack.c.h.bf16 %v954
    %v1045 = vunpack.c.l.bf16 %v955
    %v1046 = vunpack.c.h.bf16 %v955
    %v1047 = vunpack.c.l.bf16 %v956
    %v1048 = vunpack.c.h.bf16 %v956
    %v1049 = vunpack.c.l.bf16 %v957
    %v1050 = vunpack.c.h.bf16 %v957
    %v1051 = vunpack.c.l.bf16 %v958
    %v1052 = vunpack.c.h.bf16 %v958
    %v1053 = vunpack.c.l.bf16 %v959
    %v1054 = vunpack.c.h.bf16 %v959
    %v1055 = vunpack.c.l.bf16 %v960
    %v1056 = vunpack.c.h.bf16 %v960
    %v1057 = vunpack.c.l.bf16 %v961
    %v1058 = vunpack.c.h.bf16 %v961
    %v1059 = vunpack.c.l.bf16 %v962
    %v1060 = vunpack.c.h.bf16 %v962
    %v1061 = vunpack.c.l.bf16 %v963
    %v1062 = vunpack.c.h.bf16 %v963
    %v1063 = vunpack.c.l.bf16 %v964
    %v1064 = vunpack.c.h.bf16 %v964
    %v1065 = vunpack.c.l.bf16 %v965
    %v1066 = vunpack.c.h.bf16 %v965
    %v1067 = vunpack.c.l.bf16 %v966
    %v1068 = vunpack.c.h.bf16 %v966
    %v1069 = vunpack.c.l.bf16 %v967
    %v1070 = vunpack.c.h.bf16 %v967
    %v1071 = vunpack.c.l.bf16 %v968
    %v1072 = vunpack.c.h.bf16 %v968
    %v1073 = vunpack.c.l.bf16 %v969
    %v1074 = vunpack.c.h.bf16 %v969
    %v1075 = vunpack.c.l.bf16 %v970
    %v1076 = vunpack.c.h.bf16 %v970
    %v1077 = vunpack.c.l.bf16 %v971
    %v1078 = vunpack.c.h.bf16 %v971
    %v1079 = vunpack.c.l.bf16 %v972
    %v1080 = vunpack.c.h.bf16 %v972
    %v1081 = vunpack.c.l.bf16 %v973
    %v1082 = vunpack.c.h.bf16 %v973
    %v1083 = vunpack.c.l.bf16 %v974
    %v1084 = vunpack.c.h.bf16 %v974
    %v1085 = vunpack.c.l.bf16 %v975
    %v1086 = vunpack.c.h.bf16 %v975
    %v1087 = vunpack.c.l.bf16 %v976
    %v1088 = vunpack.c.h.bf16 %v976
    %v1089 = vunpack.c.l.bf16 %v977
    %v1090 = vunpack.c.h.bf16 %v977
    %v1091 = vunpack.c.l.bf16 %v978
    %v1092 = vunpack.c.h.bf16 %v978
    %v1093 = vunpack.c.l.bf16 %v979
    %v1094 = vunpack.c.h.bf16 %v979
    %v1095 = vunpack.c.l.bf16 %v980
    %v1096 = vunpack.c.h.bf16 %v980
    %v1097 = vunpack.c.l.bf16 %v981
    %v1098 = vunpack.c.h.bf16 %v981
    %v1099 = vunpack.c.l.bf16 %v982
    %v1100 = vunpack.c.h.bf16 %v982
    %v1101 = vunpack.c.l.bf16 %v983
    %v1102 = vunpack.c.h.bf16 %v983
    %v1103 = vunpack.c.l.bf16 %v984
    %v1104 = vunpack.c.h.bf16 %v984
    %v1105 = vunpack.c.l.bf16 %v985
    %v1106 = vunpack.c.h.bf16 %v985
    %v1107 = vunpack.c.l.bf16 %v986
    %v1108 = vunpack.c.h.bf16 %v986
    %v1109 = vunpack.c.l.bf16 %v987
    %v1110 = vunpack.c.h.bf16 %v987
    %v1111 = vunpack.c.l.bf16 %v988
    %v1112 = vunpack.c.h.bf16 %v988
    %v1113 = vunpack.c.l.bf16 %v989
    %v1114 = vunpack.c.h.bf16 %v989
    %v1115 = vunpack.c.l.bf16 %v990
    %v1116 = vunpack.c.h.bf16 %v990
    %v1117 = vunpack.c.l.bf16 %v991
    %v1118 = vunpack.c.h.bf16 %v991
    %v1119 = vunpack.c.l.bf16 %v992
    %v1120 = vunpack.c.h.bf16 %v992
    %1121 = vmatpush.msra.mxu0 %v1053
    %1122 = vmatpush.msra.mxu0 %v1049
    %1123 = vmatpush.msra.mxu0 %v1045
    %1124 = vmatpush.msra.mxu0 %v1041
    %1125 = vmatpush.msra.mxu0 %v1037
    %1126 = vmatpush.msra.mxu0 %v1033
    %1127 = vmatpush.msra.mxu0 %v1029
    %1128 = vmatpush.msra.mxu0 %v1025
    %1129 = vmatpush.msra.mxu0 %v1021
    %1130 = vmatpush.msra.mxu0 %v1017
    %1131 = vmatpush.msra.mxu0 %v1013
    %1132 = vmatpush.msra.mxu0 %v1009
    %1133 = vmatpush.msra.mxu0 %v1005
    %1134 = vmatpush.msra.mxu0 %v1001
    %1135 = vmatpush.msra.mxu0 %v997
    %1136 = vmatpush.msra.mxu0 %v993
    %1137 = vmatmul.f32.gmra.mxu0 %v927
    %v1138 = vpop.f32.mrf.mxu0
    %v1139 = vadd.f32 0.0, %v1138
    %1140 = vdwg.mxu0
    %1141 = vmatpush.msra.mxu0 %v1117
    %1142 = vmatpush.msra.mxu0 %v1113
    %1143 = vmatpush.msra.mxu0 %v1109
    %1144 = vmatpush.msra.mxu0 %v1105
    %1145 = vmatpush.msra.mxu0 %v1101
    %1146 = vmatpush.msra.mxu0 %v1097
    %1147 = vmatpush.msra.mxu0 %v1093
    %1148 = vmatpush.msra.mxu0 %v1089
    %1149 = vmatpush.msra.mxu0 %v1085
    %1150 = vmatpush.msra.mxu0 %v1081
    %1151 = vmatpush.msra.mxu0 %v1077
    %1152 = vmatpush.msra.mxu0 %v1073
    %1153 = vmatpush.msra.mxu0 %v1069
    %1154 = vmatpush.msra.mxu0 %v1065
    %1155 = vmatpush.msra.mxu0 %v1061
    %1156 = vmatpush.msra.mxu0 %v1057
    %1157 = vmatmul.f32.gmra.mxu0 %v928
    %v1158 = vpop.f32.mrf.mxu0
    %v1159 = vadd.f32 %v1139, %v1158
    %1160 = vdwg.mxu0
    %1161 = vmatpush.msra.mxu0 %v1054
    %1162 = vmatpush.msra.mxu0 %v1050
    %1163 = vmatpush.msra.mxu0 %v1046
    %1164 = vmatpush.msra.mxu0 %v1042
    %1165 = vmatpush.msra.mxu0 %v1038
    %1166 = vmatpush.msra.mxu0 %v1034
    %1167 = vmatpush.msra.mxu0 %v1030
    %1168 = vmatpush.msra.mxu0 %v1026
    %1169 = vmatpush.msra.mxu0 %v1022
    %1170 = vmatpush.msra.mxu0 %v1018
    %1171 = vmatpush.msra.mxu0 %v1014
    %1172 = vmatpush.msra.mxu0 %v1010
    %1173 = vmatpush.msra.mxu0 %v1006
    %1174 = vmatpush.msra.mxu0 %v1002
    %1175 = vmatpush.msra.mxu0 %v998
    %1176 = vmatpush.msra.mxu0 %v994
    %1177 = vmatmul.f32.gmra.mxu0 %v927
    %v1178 = vpop.f32.mrf.mxu0
    %v1179 = vadd.f32 0.0, %v1178
    %1180 = vdwg.mxu0
    %1181 = vmatpush.msra.mxu0 %v1118
    %1182 = vmatpush.msra.mxu0 %v1114
    %1183 = vmatpush.msra.mxu0 %v1110
    %1184 = vmatpush.msra.mxu0 %v1106
    %1185 = vmatpush.msra.mxu0 %v1102
    %1186 = vmatpush.msra.mxu0 %v1098
    %1187 = vmatpush.msra.mxu0 %v1094
    %1188 = vmatpush.msra.mxu0 %v1090
    %1189 = vmatpush.msra.mxu0 %v1086
    %1190 = vmatpush.msra.mxu0 %v1082
    %1191 = vmatpush.msra.mxu0 %v1078
    %1192 = vmatpush.msra.mxu0 %v1074
    %1193 = vmatpush.msra.mxu0 %v1070
    %1194 = vmatpush.msra.mxu0 %v1066
    %1195 = vmatpush.msra.mxu0 %v1062
    %1196 = vmatpush.msra.mxu0 %v1058
    %1197 = vmatmul.f32.gmra.mxu0 %v928
    %v1198 = vpop.f32.mrf.mxu0
    %v1199 = vadd.f32 %v1179, %v1198
    %1200 = vdwg.mxu0
    %1201 = vmatpush.msra.mxu0 %v1055
    %1202 = vmatpush.msra.mxu0 %v1051
    %1203 = vmatpush.msra.mxu0 %v1047
    %1204 = vmatpush.msra.mxu0 %v1043
    %1205 = vmatpush.msra.mxu0 %v1039
    %1206 = vmatpush.msra.mxu0 %v1035
    %1207 = vmatpush.msra.mxu0 %v1031
    %1208 = vmatpush.msra.mxu0 %v1027
    %1209 = vmatpush.msra.mxu0 %v1023
    %1210 = vmatpush.msra.mxu0 %v1019
    %1211 = vmatpush.msra.mxu0 %v1015
    %1212 = vmatpush.msra.mxu0 %v1011
    %1213 = vmatpush.msra.mxu0 %v1007
    %1214 = vmatpush.msra.mxu0 %v1003
    %1215 = vmatpush.msra.mxu0 %v999
    %1216 = vmatpush.msra.mxu0 %v995
    %1217 = vmatmul.f32.gmra.mxu0 %v927
    %v1218 = vpop.f32.mrf.mxu0
    %v1219 = vadd.f32 0.0, %v1218
    %1220 = vdwg.mxu0
    %1221 = vmatpush.msra.mxu0 %v1119
    %1222 = vmatpush.msra.mxu0 %v1115
    %1223 = vmatpush.msra.mxu0 %v1111
    %1224 = vmatpush.msra.mxu0 %v1107
    %1225 = vmatpush.msra.mxu0 %v1103
    %1226 = vmatpush.msra.mxu0 %v1099
    %1227 = vmatpush.msra.mxu0 %v1095
    %1228 = vmatpush.msra.mxu0 %v1091
    %1229 = vmatpush.msra.mxu0 %v1087
    %1230 = vmatpush.msra.mxu0 %v1083
    %1231 = vmatpush.msra.mxu0 %v1079
    %1232 = vmatpush.msra.mxu0 %v1075
    %1233 = vmatpush.msra.mxu0 %v1071
    %1234 = vmatpush.msra.mxu0 %v1067
    %1235 = vmatpush.msra.mxu0 %v1063
    %1236 = vmatpush.msra.mxu0 %v1059
    %1237 = vmatmul.f32.gmra.mxu0 %v928
    %v1238 = vpop.f32.mrf.mxu0
    %v1239 = vadd.f32 %v1219, %v1238
    %1240 = vdwg.mxu0
    %1241 = vmatpush.msra.mxu0 %v1056
    %1242 = vmatpush.msra.mxu0 %v1052
    %1243 = vmatpush.msra.mxu0 %v1048
    %1244 = vmatpush.msra.mxu0 %v1044
    %1245 = vmatpush.msra.mxu0 %v1040
    %1246 = vmatpush.msra.mxu0 %v1036
    %1247 = vmatpush.msra.mxu0 %v1032
    %1248 = vmatpush.msra.mxu0 %v1028
    %1249 = vmatpush.msra.mxu0 %v1024
    %1250 = vmatpush.msra.mxu0 %v1020
    %1251 = vmatpush.msra.mxu0 %v1016
    %1252 = vmatpush.msra.mxu0 %v1012
    %1253 = vmatpush.msra.mxu0 %v1008
    %1254 = vmatpush.msra.mxu0 %v1004
    %1255 = vmatpush.msra.mxu0 %v1000
    %1256 = vmatpush.msra.mxu0 %v996
    %1257 = vmatmul.f32.gmra.mxu0 %v927
    %v1258 = vpop.f32.mrf.mxu0
    %v1259 = vadd.f32 0.0, %v1258
    %1260 = vdwg.mxu0
    %1261 = vmatpush.msra.mxu0 %v1120
    %1262 = vmatpush.msra.mxu0 %v1116
    %1263 = vmatpush.msra.mxu0 %v1112
    %1264 = vmatpush.msra.mxu0 %v1108
    %1265 = vmatpush.msra.mxu0 %v1104
    %1266 = vmatpush.msra.mxu0 %v1100
    %1267 = vmatpush.msra.mxu0 %v1096
    %1268 = vmatpush.msra.mxu0 %v1092
    %1269 = vmatpush.msra.mxu0 %v1088
    %1270 = vmatpush.msra.mxu0 %v1084
    %1271 = vmatpush.msra.mxu0 %v1080
    %1272 = vmatpush.msra.mxu0 %v1076
    %1273 = vmatpush.msra.mxu0 %v1072
    %1274 = vmatpush.msra.mxu0 %v1068
    %1275 = vmatpush.msra.mxu0 %v1064
    %1276 = vmatpush.msra.mxu0 %v1060
    %1277 = vmatmul.f32.gmra.mxu0 %v928
    %v1278 = vpop.f32.mrf.mxu0
    %v1279 = vadd.f32 %v1259, %v1278
    %1280 = vdwg.mxu0
    %v1281 = vld [vmem:[%s12] sm:$0xf]
    %v1282 = vld [vmem:[%s13] sm:$0xf]
    %v1283 = vsel %vm431, %v1159, 0.0
    %v1284 = vrot.slane %v1283, 4
    %v1285 = vadd.f32 %v1283, %v1284
    %v1286 = vrot.slane %v1285, 2
    %v1287 = vadd.f32 %v1285, %v1286
    %v1288 = vrot.slane %v1287, 1
    %v1289 = vadd.f32 %v1287, %v1288
    %v1290 = vsel %vm431, %v1199, 0.0
    %v1291 = vrot.slane %v1290, 4
    %v1292 = vadd.f32 %v1290, %v1291
    %v1293 = vrot.slane %v1292, 2
    %v1294 = vadd.f32 %v1292, %v1293
    %v1295 = vrot.slane %v1294, 1
    %v1296 = vadd.f32 %v1294, %v1295
    %v1297 = vsel %vm431, %v1239, 0.0
    %v1298 = vrot.slane %v1297, 4
    %v1299 = vadd.f32 %v1297, %v1298
    %v1300 = vrot.slane %v1299, 2
    %v1301 = vadd.f32 %v1299, %v1300
    %v1302 = vrot.slane %v1301, 1
    %v1303 = vadd.f32 %v1301, %v1302
    %v1304 = vsel %vm431, %v1279, 0.0
    %v1305 = vrot.slane %v1304, 4
    %v1306 = vadd.f32 %v1304, %v1305
    %v1307 = vrot.slane %v1306, 2
    %v1308 = vadd.f32 %v1306, %v1307
    %v1309 = vrot.slane %v1308, 1
    %v1310 = vadd.f32 %v1308, %v1309
    %v1311 = vmul.f32 %v1289, 0.5
    %v1312 = vmul.f32 %v1296, 0.5
    %v1313 = vmul.f32 %v1303, 0.5
    %v1314 = vmul.f32 %v1310, 0.5
    %v1315 = vsub.f32 %v1159, %v1311
    %v1316 = vsub.f32 %v1199, %v1312
    %v1317 = vsub.f32 %v1239, %v1313
    %v1318 = vsub.f32 %v1279, %v1314
    %v1319 = vmul.f32 %v1315, %v1315
    %v1320 = vmul.f32 %v1316, %v1316
    %v1321 = vmul.f32 %v1317, %v1317
    %v1322 = vmul.f32 %v1318, %v1318
    %v1323 = vsel %vm431, %v1319, 0.0
    %v1324 = vrot.slane %v1323, 4
    %v1325 = vadd.f32 %v1323, %v1324
    %v1326 = vrot.slane %v1325, 2
    %v1327 = vadd.f32 %v1325, %v1326
    %v1328 = vrot.slane %v1327, 1
    %v1329 = vadd.f32 %v1327, %v1328
    %v1330 = vsel %vm431, %v1320, 0.0
    %v1331 = vrot.slane %v1330, 4
    %v1332 = vadd.f32 %v1330, %v1331
    %v1333 = vrot.slane %v1332, 2
    %v1334 = vadd.f32 %v1332, %v1333
    %v1335 = vrot.slane %v1334, 1
    %v1336 = vadd.f32 %v1334, %v1335
    %v1337 = vsel %vm431, %v1321, 0.0
    %v1338 = vrot.slane %v1337, 4
    %v1339 = vadd.f32 %v1337, %v1338
    %v1340 = vrot.slane %v1339, 2
    %v1341 = vadd.f32 %v1339, %v1340
    %v1342 = vrot.slane %v1341, 1
    %v1343 = vadd.f32 %v1341, %v1342
    %v1344 = vsel %vm431, %v1322, 0.0
    %v1345 = vrot.slane %v1344, 4
    %v1346 = vadd.f32 %v1344, %v1345
    %v1347 = vrot.slane %v1346, 2
    %v1348 = vadd.f32 %v1346, %v1347
    %v1349 = vrot.slane %v1348, 1
    %v1350 = vadd.f32 %v1348, %v1349
    %v1351 = vmul.f32 %v1329, 0.5
    %v1352 = vmul.f32 %v1336, 0.5
    %v1353 = vmul.f32 %v1343, 0.5
    %v1354 = vmul.f32 %v1350, 0.5
    %v1355 = vadd.f32 %v1351, 1e-05
    %v1356 = vadd.f32 %v1352, 1e-05
    %v1357 = vadd.f32 %v1353, 1e-05
    %v1358 = vadd.f32 %v1354, 1e-05
    %v1359 = vrsqrt.pop %v1355
    %v1360 = vmul.f32 %v1359, %v1355
    %v1361 = vmul.f32 %v1360, %v1359
    %v1362 = vmul.f32 0.5, %v1361
    %v1363 = vsub.f32 1.5, %v1362
    %v1364 = vmul.f32 %v1359, %v1363
    %vm1365 = vweird.f32 %v1355
    %vm1366 = vweird.f32 %v1359
    %vm1367 = vmor %vm1365, %vm1366
    %v1368 = vsel %vm1367, %v1359, %v1364
    %v1369 = vrsqrt.pop %v1356
    %v1370 = vmul.f32 %v1369, %v1356
    %v1371 = vmul.f32 %v1370, %v1369
    %v1372 = vmul.f32 0.5, %v1371
    %v1373 = vsub.f32 1.5, %v1372
    %v1374 = vmul.f32 %v1369, %v1373
    %vm1375 = vweird.f32 %v1356
    %vm1376 = vweird.f32 %v1369
    %vm1377 = vmor %vm1375, %vm1376
    %v1378 = vsel %vm1377, %v1369, %v1374
    %v1379 = vrsqrt.pop %v1357
    %v1380 = vmul.f32 %v1379, %v1357
    %v1381 = vmul.f32 %v1380, %v1379
    %v1382 = vmul.f32 0.5, %v1381
    %v1383 = vsub.f32 1.5, %v1382
    %v1384 = vmul.f32 %v1379, %v1383
    %vm1385 = vweird.f32 %v1357
    %vm1386 = vweird.f32 %v1379
    %vm1387 = vmor %vm1385, %vm1386
    %v1388 = vsel %vm1387, %v1379, %v1384
    %v1389 = vrsqrt.pop %v1358
    %v1390 = vmul.f32 %v1389, %v1358
    %v1391 = vmul.f32 %v1390, %v1389
    %v1392 = vmul.f32 0.5, %v1391
    %v1393 = vsub.f32 1.5, %v1392
    %v1394 = vmul.f32 %v1389, %v1393
    %vm1395 = vweird.f32 %v1358
    %vm1396 = vweird.f32 %v1389
    %vm1397 = vmor %vm1395, %vm1396
    %v1398 = vsel %vm1397, %v1389, %v1394
    %v1399 = vmul.f32 %v1315, %v1368
    %v1400 = vmul.f32 %v1316, %v1378
    %v1401 = vmul.f32 %v1317, %v1388
    %v1402 = vmul.f32 %v1318, %v1398
    %v1404 = vperm.slane %v1281, 0
    %v1405 = vperm.slane %v1281, 1
    %v1406 = vperm.slane %v1281, 2
    %v1407 = vperm.slane %v1281, 3
    %v1412 = vmul.f32 %v1399, %v1404
    %v1413 = vmul.f32 %v1400, %v1405
    %v1414 = vmul.f32 %v1401, %v1406
    %v1415 = vmul.f32 %v1402, %v1407
    %v1417 = vperm.slane %v1282, 0
    %v1418 = vperm.slane %v1282, 1
    %v1419 = vperm.slane %v1282, 2
    %v1420 = vperm.slane %v1282, 3
    %v1425 = vadd.f32 %v1412, %v1417
    %v1426 = vadd.f32 %v1413, %v1418
    %v1427 = vadd.f32 %v1414, %v1419
    %v1428 = vadd.f32 %v1415, %v1420
    %v1429 = vmax.f32 %v1425, 0.0
    %v1430 = vmax.f32 %v1426, 0.0
    %v1431 = vmax.f32 %v1427, 0.0
    %v1432 = vmax.f32 %v1428, 0.0
    %v1433 = vld [vmem:[%s14] sm:$0xff]
    %v1434 = vld [vmem:[%s14 + $0x8] sm:$0xff]
    %v1435 = vld [vmem:[%s14 + $0x10] sm:$0xff]
    %v1436 = vld [vmem:[%s14 + $0x18] sm:$0xff]
    %v1437 = vld [vmem:[%s14 + $0x20] sm:$0xff]
    %v1438 = vld [vmem:[%s14 + $0x28] sm:$0xff]
    %v1439 = vld [vmem:[%s14 + $0x30] sm:$0xff]
    %v1440 = vld [vmem:[%s14 + $0x38] sm:$0xff]
    %v1441 = vld [vmem:[%s14 + $0x40] sm:$0xff]
    %v1442 = vld [vmem:[%s14 + $0x48] sm:$0xff]
    %v1443 = vld [vmem:[%s14 + $0x50] sm:$0xff]
    %v1444 = vld [vmem:[%s14 + $0x58] sm:$0xff]
    %v1445 = vld [vmem:[%s14 + $0x60] sm:$0xff]
    %v1446 = vld [vmem:[%s14 + $0x68] sm:$0xff]
    %v1447 = vld [vmem:[%s14 + $0x70] sm:$0xff]
    %v1448 = vld [vmem:[%s14 + $0x78] sm:$0xff]
    %v1449 = vld [vmem:[%s14 + $0x80] sm:$0xff]
    %v1450 = vld [vmem:[%s14 + $0x88] sm:$0xff]
    %v1451 = vld [vmem:[%s14 + $0x90] sm:$0xff]
    %v1452 = vld [vmem:[%s14 + $0x98] sm:$0xff]
    %v1453 = vld [vmem:[%s14 + $0xa0] sm:$0xff]
    %v1454 = vld [vmem:[%s14 + $0xa8] sm:$0xff]
    %v1455 = vld [vmem:[%s14 + $0xb0] sm:$0xff]
    %v1456 = vld [vmem:[%s14 + $0xb8] sm:$0xff]
    %v1457 = vld [vmem:[%s14 + $0xc0] sm:$0xff]
    %v1458 = vld [vmem:[%s14 + $0xc8] sm:$0xff]
    %v1459 = vld [vmem:[%s14 + $0xd0] sm:$0xff]
    %v1460 = vld [vmem:[%s14 + $0xd8] sm:$0xff]
    %v1461 = vld [vmem:[%s14 + $0xe0] sm:$0xff]
    %v1462 = vld [vmem:[%s14 + $0xe8] sm:$0xff]
    %v1463 = vld [vmem:[%s14 + $0xf0] sm:$0xff]
    %v1464 = vld [vmem:[%s14 + $0xf8] sm:$0xff]
    %v1465 = vld [vmem:[%s14 + $0x100] sm:$0xff]
    %v1466 = vld [vmem:[%s14 + $0x108] sm:$0xff]
    %v1467 = vld [vmem:[%s14 + $0x110] sm:$0xff]
    %v1468 = vld [vmem:[%s14 + $0x118] sm:$0xff]
    %v1469 = vld [vmem:[%s14 + $0x120] sm:$0xff]
    %v1470 = vld [vmem:[%s14 + $0x128] sm:$0xff]
    %v1471 = vld [vmem:[%s14 + $0x130] sm:$0xff]
    %v1472 = vld [vmem:[%s14 + $0x138] sm:$0xff]
    %v1473 = vld [vmem:[%s14 + $0x140] sm:$0xff]
    %v1474 = vld [vmem:[%s14 + $0x148] sm:$0xff]
    %v1475 = vld [vmem:[%s14 + $0x150] sm:$0xff]
    %v1476 = vld [vmem:[%s14 + $0x158] sm:$0xff]
    %v1477 = vld [vmem:[%s14 + $0x160] sm:$0xff]
    %v1478 = vld [vmem:[%s14 + $0x168] sm:$0xff]
    %v1479 = vld [vmem:[%s14 + $0x170] sm:$0xff]
    %v1480 = vld [vmem:[%s14 + $0x178] sm:$0xff]
    %v1481 = vld [vmem:[%s14 + $0x180] sm:$0xff]
    %v1482 = vld [vmem:[%s14 + $0x188] sm:$0xff]
    %v1483 = vld [vmem:[%s14 + $0x190] sm:$0xff]
    %v1484 = vld [vmem:[%s14 + $0x198] sm:$0xff]
    %v1485 = vld [vmem:[%s14 + $0x1a0] sm:$0xff]
    %v1486 = vld [vmem:[%s14 + $0x1a8] sm:$0xff]
    %v1487 = vld [vmem:[%s14 + $0x1b0] sm:$0xff]
    %v1488 = vld [vmem:[%s14 + $0x1b8] sm:$0xff]
    %v1489 = vld [vmem:[%s14 + $0x1c0] sm:$0xff]
    %v1490 = vld [vmem:[%s14 + $0x1c8] sm:$0xff]
    %v1491 = vld [vmem:[%s14 + $0x1d0] sm:$0xff]
    %v1492 = vld [vmem:[%s14 + $0x1d8] sm:$0xff]
    %v1493 = vld [vmem:[%s14 + $0x1e0] sm:$0xff]
    %v1494 = vld [vmem:[%s14 + $0x1e8] sm:$0xff]
    %v1495 = vld [vmem:[%s14 + $0x1f0] sm:$0xff]
    %v1496 = vld [vmem:[%s14 + $0x1f8] sm:$0xff]
    %v1497 = vld [vmem:[%s14 + $0x200] sm:$0xff]
    %v1498 = vld [vmem:[%s14 + $0x208] sm:$0xff]
    %v1499 = vld [vmem:[%s14 + $0x210] sm:$0xff]
    %v1500 = vld [vmem:[%s14 + $0x218] sm:$0xff]
    %v1501 = vld [vmem:[%s14 + $0x220] sm:$0xff]
    %v1502 = vld [vmem:[%s14 + $0x228] sm:$0xff]
    %v1503 = vld [vmem:[%s14 + $0x230] sm:$0xff]
    %v1504 = vld [vmem:[%s14 + $0x238] sm:$0xff]
    %v1505 = vld [vmem:[%s14 + $0x240] sm:$0xff]
    %v1506 = vld [vmem:[%s14 + $0x248] sm:$0xff]
    %v1507 = vld [vmem:[%s14 + $0x250] sm:$0xff]
    %v1508 = vld [vmem:[%s14 + $0x258] sm:$0xff]
    %v1509 = vld [vmem:[%s14 + $0x260] sm:$0xff]
    %v1510 = vld [vmem:[%s14 + $0x268] sm:$0xff]
    %v1511 = vld [vmem:[%s14 + $0x270] sm:$0xff]
    %v1512 = vld [vmem:[%s14 + $0x278] sm:$0xff]
    %v1513 = vld [vmem:[%s14 + $0x280] sm:$0xff]
    %v1514 = vld [vmem:[%s14 + $0x288] sm:$0xff]
    %v1515 = vld [vmem:[%s14 + $0x290] sm:$0xff]
    %v1516 = vld [vmem:[%s14 + $0x298] sm:$0xff]
    %v1517 = vld [vmem:[%s14 + $0x2a0] sm:$0xff]
    %v1518 = vld [vmem:[%s14 + $0x2a8] sm:$0xff]
    %v1519 = vld [vmem:[%s14 + $0x2b0] sm:$0xff]
    %v1520 = vld [vmem:[%s14 + $0x2b8] sm:$0xff]
    %v1521 = vld [vmem:[%s14 + $0x2c0] sm:$0xff]
    %v1522 = vld [vmem:[%s14 + $0x2c8] sm:$0xff]
    %v1523 = vld [vmem:[%s14 + $0x2d0] sm:$0xff]
    %v1524 = vld [vmem:[%s14 + $0x2d8] sm:$0xff]
    %v1525 = vld [vmem:[%s14 + $0x2e0] sm:$0xff]
    %v1526 = vld [vmem:[%s14 + $0x2e8] sm:$0xff]
    %v1527 = vld [vmem:[%s14 + $0x2f0] sm:$0xff]
    %v1528 = vld [vmem:[%s14 + $0x2f8] sm:$0xff]
    %v1529 = vld [vmem:[%s14 + $0x300] sm:$0xff]
    %v1530 = vld [vmem:[%s14 + $0x308] sm:$0xff]
    %v1531 = vld [vmem:[%s14 + $0x310] sm:$0xff]
    %v1532 = vld [vmem:[%s14 + $0x318] sm:$0xff]
    %v1533 = vld [vmem:[%s14 + $0x320] sm:$0xff]
    %v1534 = vld [vmem:[%s14 + $0x328] sm:$0xff]
    %v1535 = vld [vmem:[%s14 + $0x330] sm:$0xff]
    %v1536 = vld [vmem:[%s14 + $0x338] sm:$0xff]
    %v1537 = vld [vmem:[%s14 + $0x340] sm:$0xff]
    %v1538 = vld [vmem:[%s14 + $0x348] sm:$0xff]
    %v1539 = vld [vmem:[%s14 + $0x350] sm:$0xff]
    %v1540 = vld [vmem:[%s14 + $0x358] sm:$0xff]
    %v1541 = vld [vmem:[%s14 + $0x360] sm:$0xff]
    %v1542 = vld [vmem:[%s14 + $0x368] sm:$0xff]
    %v1543 = vld [vmem:[%s14 + $0x370] sm:$0xff]
    %v1544 = vld [vmem:[%s14 + $0x378] sm:$0xff]
    %v1545 = vld [vmem:[%s14 + $0x380] sm:$0xff]
    %v1546 = vld [vmem:[%s14 + $0x388] sm:$0xff]
    %v1547 = vld [vmem:[%s14 + $0x390] sm:$0xff]
    %v1548 = vld [vmem:[%s14 + $0x398] sm:$0xff]
    %v1549 = vld [vmem:[%s14 + $0x3a0] sm:$0xff]
    %v1550 = vld [vmem:[%s14 + $0x3a8] sm:$0xff]
    %v1551 = vld [vmem:[%s14 + $0x3b0] sm:$0xff]
    %v1552 = vld [vmem:[%s14 + $0x3b8] sm:$0xff]
    %v1553 = vld [vmem:[%s14 + $0x3c0] sm:$0xff]
    %v1554 = vld [vmem:[%s14 + $0x3c8] sm:$0xff]
    %v1555 = vld [vmem:[%s14 + $0x3d0] sm:$0xff]
    %v1556 = vld [vmem:[%s14 + $0x3d8] sm:$0xff]
    %v1557 = vld [vmem:[%s14 + $0x3e0] sm:$0xff]
    %v1558 = vld [vmem:[%s14 + $0x3e8] sm:$0xff]
    %v1559 = vld [vmem:[%s14 + $0x3f0] sm:$0xff]
    %v1560 = vld [vmem:[%s14 + $0x3f8] sm:$0xff]
    %v1561 = vunpack.c.l.bf16 %v1433
    %v1562 = vunpack.c.h.bf16 %v1433
    %v1563 = vunpack.c.l.bf16 %v1434
    %v1564 = vunpack.c.h.bf16 %v1434
    %v1565 = vunpack.c.l.bf16 %v1435
    %v1566 = vunpack.c.h.bf16 %v1435
    %v1567 = vunpack.c.l.bf16 %v1436
    %v1568 = vunpack.c.h.bf16 %v1436
    %v1569 = vunpack.c.l.bf16 %v1437
    %v1570 = vunpack.c.h.bf16 %v1437
    %v1571 = vunpack.c.l.bf16 %v1438
    %v1572 = vunpack.c.h.bf16 %v1438
    %v1573 = vunpack.c.l.bf16 %v1439
    %v1574 = vunpack.c.h.bf16 %v1439
    %v1575 = vunpack.c.l.bf16 %v1440
    %v1576 = vunpack.c.h.bf16 %v1440
    %v1577 = vunpack.c.l.bf16 %v1441
    %v1578 = vunpack.c.h.bf16 %v1441
    %v1579 = vunpack.c.l.bf16 %v1442
    %v1580 = vunpack.c.h.bf16 %v1442
    %v1581 = vunpack.c.l.bf16 %v1443
    %v1582 = vunpack.c.h.bf16 %v1443
    %v1583 = vunpack.c.l.bf16 %v1444
    %v1584 = vunpack.c.h.bf16 %v1444
    %v1585 = vunpack.c.l.bf16 %v1445
    %v1586 = vunpack.c.h.bf16 %v1445
    %v1587 = vunpack.c.l.bf16 %v1446
    %v1588 = vunpack.c.h.bf16 %v1446
    %v1589 = vunpack.c.l.bf16 %v1447
    %v1590 = vunpack.c.h.bf16 %v1447
    %v1591 = vunpack.c.l.bf16 %v1448
    %v1592 = vunpack.c.h.bf16 %v1448
    %v1593 = vunpack.c.l.bf16 %v1449
    %v1594 = vunpack.c.h.bf16 %v1449
    %v1595 = vunpack.c.l.bf16 %v1450
    %v1596 = vunpack.c.h.bf16 %v1450
    %v1597 = vunpack.c.l.bf16 %v1451
    %v1598 = vunpack.c.h.bf16 %v1451
    %v1599 = vunpack.c.l.bf16 %v1452
    %v1600 = vunpack.c.h.bf16 %v1452
    %v1601 = vunpack.c.l.bf16 %v1453
    %v1602 = vunpack.c.h.bf16 %v1453
    %v1603 = vunpack.c.l.bf16 %v1454
    %v1604 = vunpack.c.h.bf16 %v1454
    %v1605 = vunpack.c.l.bf16 %v1455
    %v1606 = vunpack.c.h.bf16 %v1455
    %v1607 = vunpack.c.l.bf16 %v1456
    %v1608 = vunpack.c.h.bf16 %v1456
    %v1609 = vunpack.c.l.bf16 %v1457
    %v1610 = vunpack.c.h.bf16 %v1457
    %v1611 = vunpack.c.l.bf16 %v1458
    %v1612 = vunpack.c.h.bf16 %v1458
    %v1613 = vunpack.c.l.bf16 %v1459
    %v1614 = vunpack.c.h.bf16 %v1459
    %v1615 = vunpack.c.l.bf16 %v1460
    %v1616 = vunpack.c.h.bf16 %v1460
    %v1617 = vunpack.c.l.bf16 %v1461
    %v1618 = vunpack.c.h.bf16 %v1461
    %v1619 = vunpack.c.l.bf16 %v1462
    %v1620 = vunpack.c.h.bf16 %v1462
    %v1621 = vunpack.c.l.bf16 %v1463
    %v1622 = vunpack.c.h.bf16 %v1463
    %v1623 = vunpack.c.l.bf16 %v1464
    %v1624 = vunpack.c.h.bf16 %v1464
    %v1625 = vunpack.c.l.bf16 %v1465
    %v1626 = vunpack.c.h.bf16 %v1465
    %v1627 = vunpack.c.l.bf16 %v1466
    %v1628 = vunpack.c.h.bf16 %v1466
    %v1629 = vunpack.c.l.bf16 %v1467
    %v1630 = vunpack.c.h.bf16 %v1467
    %v1631 = vunpack.c.l.bf16 %v1468
    %v1632 = vunpack.c.h.bf16 %v1468
    %v1633 = vunpack.c.l.bf16 %v1469
    %v1634 = vunpack.c.h.bf16 %v1469
    %v1635 = vunpack.c.l.bf16 %v1470
    %v1636 = vunpack.c.h.bf16 %v1470
    %v1637 = vunpack.c.l.bf16 %v1471
    %v1638 = vunpack.c.h.bf16 %v1471
    %v1639 = vunpack.c.l.bf16 %v1472
    %v1640 = vunpack.c.h.bf16 %v1472
    %v1641 = vunpack.c.l.bf16 %v1473
    %v1642 = vunpack.c.h.bf16 %v1473
    %v1643 = vunpack.c.l.bf16 %v1474
    %v1644 = vunpack.c.h.bf16 %v1474
    %v1645 = vunpack.c.l.bf16 %v1475
    %v1646 = vunpack.c.h.bf16 %v1475
    %v1647 = vunpack.c.l.bf16 %v1476
    %v1648 = vunpack.c.h.bf16 %v1476
    %v1649 = vunpack.c.l.bf16 %v1477
    %v1650 = vunpack.c.h.bf16 %v1477
    %v1651 = vunpack.c.l.bf16 %v1478
    %v1652 = vunpack.c.h.bf16 %v1478
    %v1653 = vunpack.c.l.bf16 %v1479
    %v1654 = vunpack.c.h.bf16 %v1479
    %v1655 = vunpack.c.l.bf16 %v1480
    %v1656 = vunpack.c.h.bf16 %v1480
    %v1657 = vunpack.c.l.bf16 %v1481
    %v1658 = vunpack.c.h.bf16 %v1481
    %v1659 = vunpack.c.l.bf16 %v1482
    %v1660 = vunpack.c.h.bf16 %v1482
    %v1661 = vunpack.c.l.bf16 %v1483
    %v1662 = vunpack.c.h.bf16 %v1483
    %v1663 = vunpack.c.l.bf16 %v1484
    %v1664 = vunpack.c.h.bf16 %v1484
    %v1665 = vunpack.c.l.bf16 %v1485
    %v1666 = vunpack.c.h.bf16 %v1485
    %v1667 = vunpack.c.l.bf16 %v1486
    %v1668 = vunpack.c.h.bf16 %v1486
    %v1669 = vunpack.c.l.bf16 %v1487
    %v1670 = vunpack.c.h.bf16 %v1487
    %v1671 = vunpack.c.l.bf16 %v1488
    %v1672 = vunpack.c.h.bf16 %v1488
    %v1673 = vunpack.c.l.bf16 %v1489
    %v1674 = vunpack.c.h.bf16 %v1489
    %v1675 = vunpack.c.l.bf16 %v1490
    %v1676 = vunpack.c.h.bf16 %v1490
    %v1677 = vunpack.c.l.bf16 %v1491
    %v1678 = vunpack.c.h.bf16 %v1491
    %v1679 = vunpack.c.l.bf16 %v1492
    %v1680 = vunpack.c.h.bf16 %v1492
    %v1681 = vunpack.c.l.bf16 %v1493
    %v1682 = vunpack.c.h.bf16 %v1493
    %v1683 = vunpack.c.l.bf16 %v1494
    %v1684 = vunpack.c.h.bf16 %v1494
    %v1685 = vunpack.c.l.bf16 %v1495
    %v1686 = vunpack.c.h.bf16 %v1495
    %v1687 = vunpack.c.l.bf16 %v1496
    %v1688 = vunpack.c.h.bf16 %v1496
    %v1689 = vunpack.c.l.bf16 %v1497
    %v1690 = vunpack.c.h.bf16 %v1497
    %v1691 = vunpack.c.l.bf16 %v1498
    %v1692 = vunpack.c.h.bf16 %v1498
    %v1693 = vunpack.c.l.bf16 %v1499
    %v1694 = vunpack.c.h.bf16 %v1499
    %v1695 = vunpack.c.l.bf16 %v1500
    %v1696 = vunpack.c.h.bf16 %v1500
    %v1697 = vunpack.c.l.bf16 %v1501
    %v1698 = vunpack.c.h.bf16 %v1501
    %v1699 = vunpack.c.l.bf16 %v1502
    %v1700 = vunpack.c.h.bf16 %v1502
    %v1701 = vunpack.c.l.bf16 %v1503
    %v1702 = vunpack.c.h.bf16 %v1503
    %v1703 = vunpack.c.l.bf16 %v1504
    %v1704 = vunpack.c.h.bf16 %v1504
    %v1705 = vunpack.c.l.bf16 %v1505
    %v1706 = vunpack.c.h.bf16 %v1505
    %v1707 = vunpack.c.l.bf16 %v1506
    %v1708 = vunpack.c.h.bf16 %v1506
    %v1709 = vunpack.c.l.bf16 %v1507
    %v1710 = vunpack.c.h.bf16 %v1507
    %v1711 = vunpack.c.l.bf16 %v1508
    %v1712 = vunpack.c.h.bf16 %v1508
    %v1713 = vunpack.c.l.bf16 %v1509
    %v1714 = vunpack.c.h.bf16 %v1509
    %v1715 = vunpack.c.l.bf16 %v1510
    %v1716 = vunpack.c.h.bf16 %v1510
    %v1717 = vunpack.c.l.bf16 %v1511
    %v1718 = vunpack.c.h.bf16 %v1511
    %v1719 = vunpack.c.l.bf16 %v1512
    %v1720 = vunpack.c.h.bf16 %v1512
    %v1721 = vunpack.c.l.bf16 %v1513
    %v1722 = vunpack.c.h.bf16 %v1513
    %v1723 = vunpack.c.l.bf16 %v1514
    %v1724 = vunpack.c.h.bf16 %v1514
    %v1725 = vunpack.c.l.bf16 %v1515
    %v1726 = vunpack.c.h.bf16 %v1515
    %v1727 = vunpack.c.l.bf16 %v1516
    %v1728 = vunpack.c.h.bf16 %v1516
    %v1729 = vunpack.c.l.bf16 %v1517
    %v1730 = vunpack.c.h.bf16 %v1517
    %v1731 = vunpack.c.l.bf16 %v1518
    %v1732 = vunpack.c.h.bf16 %v1518
    %v1733 = vunpack.c.l.bf16 %v1519
    %v1734 = vunpack.c.h.bf16 %v1519
    %v1735 = vunpack.c.l.bf16 %v1520
    %v1736 = vunpack.c.h.bf16 %v1520
    %v1737 = vunpack.c.l.bf16 %v1521
    %v1738 = vunpack.c.h.bf16 %v1521
    %v1739 = vunpack.c.l.bf16 %v1522
    %v1740 = vunpack.c.h.bf16 %v1522
    %v1741 = vunpack.c.l.bf16 %v1523
    %v1742 = vunpack.c.h.bf16 %v1523
    %v1743 = vunpack.c.l.bf16 %v1524
    %v1744 = vunpack.c.h.bf16 %v1524
    %v1745 = vunpack.c.l.bf16 %v1525
    %v1746 = vunpack.c.h.bf16 %v1525
    %v1747 = vunpack.c.l.bf16 %v1526
    %v1748 = vunpack.c.h.bf16 %v1526
    %v1749 = vunpack.c.l.bf16 %v1527
    %v1750 = vunpack.c.h.bf16 %v1527
    %v1751 = vunpack.c.l.bf16 %v1528
    %v1752 = vunpack.c.h.bf16 %v1528
    %v1753 = vunpack.c.l.bf16 %v1529
    %v1754 = vunpack.c.h.bf16 %v1529
    %v1755 = vunpack.c.l.bf16 %v1530
    %v1756 = vunpack.c.h.bf16 %v1530
    %v1757 = vunpack.c.l.bf16 %v1531
    %v1758 = vunpack.c.h.bf16 %v1531
    %v1759 = vunpack.c.l.bf16 %v1532
    %v1760 = vunpack.c.h.bf16 %v1532
    %v1761 = vunpack.c.l.bf16 %v1533
    %v1762 = vunpack.c.h.bf16 %v1533
    %v1763 = vunpack.c.l.bf16 %v1534
    %v1764 = vunpack.c.h.bf16 %v1534
    %v1765 = vunpack.c.l.bf16 %v1535
    %v1766 = vunpack.c.h.bf16 %v1535
    %v1767 = vunpack.c.l.bf16 %v1536
    %v1768 = vunpack.c.h.bf16 %v1536
    %v1769 = vunpack.c.l.bf16 %v1537
    %v1770 = vunpack.c.h.bf16 %v1537
    %v1771 = vunpack.c.l.bf16 %v1538
    %v1772 = vunpack.c.h.bf16 %v1538
    %v1773 = vunpack.c.l.bf16 %v1539
    %v1774 = vunpack.c.h.bf16 %v1539
    %v1775 = vunpack.c.l.bf16 %v1540
    %v1776 = vunpack.c.h.bf16 %v1540
    %v1777 = vunpack.c.l.bf16 %v1541
    %v1778 = vunpack.c.h.bf16 %v1541
    %v1779 = vunpack.c.l.bf16 %v1542
    %v1780 = vunpack.c.h.bf16 %v1542
    %v1781 = vunpack.c.l.bf16 %v1543
    %v1782 = vunpack.c.h.bf16 %v1543
    %v1783 = vunpack.c.l.bf16 %v1544
    %v1784 = vunpack.c.h.bf16 %v1544
    %v1785 = vunpack.c.l.bf16 %v1545
    %v1786 = vunpack.c.h.bf16 %v1545
    %v1787 = vunpack.c.l.bf16 %v1546
    %v1788 = vunpack.c.h.bf16 %v1546
    %v1789 = vunpack.c.l.bf16 %v1547
    %v1790 = vunpack.c.h.bf16 %v1547
    %v1791 = vunpack.c.l.bf16 %v1548
    %v1792 = vunpack.c.h.bf16 %v1548
    %v1793 = vunpack.c.l.bf16 %v1549
    %v1794 = vunpack.c.h.bf16 %v1549
    %v1795 = vunpack.c.l.bf16 %v1550
    %v1796 = vunpack.c.h.bf16 %v1550
    %v1797 = vunpack.c.l.bf16 %v1551
    %v1798 = vunpack.c.h.bf16 %v1551
    %v1799 = vunpack.c.l.bf16 %v1552
    %v1800 = vunpack.c.h.bf16 %v1552
    %v1801 = vunpack.c.l.bf16 %v1553
    %v1802 = vunpack.c.h.bf16 %v1553
    %v1803 = vunpack.c.l.bf16 %v1554
    %v1804 = vunpack.c.h.bf16 %v1554
    %v1805 = vunpack.c.l.bf16 %v1555
    %v1806 = vunpack.c.h.bf16 %v1555
    %v1807 = vunpack.c.l.bf16 %v1556
    %v1808 = vunpack.c.h.bf16 %v1556
    %v1809 = vunpack.c.l.bf16 %v1557
    %v1810 = vunpack.c.h.bf16 %v1557
    %v1811 = vunpack.c.l.bf16 %v1558
    %v1812 = vunpack.c.h.bf16 %v1558
    %v1813 = vunpack.c.l.bf16 %v1559
    %v1814 = vunpack.c.h.bf16 %v1559
    %v1815 = vunpack.c.l.bf16 %v1560
    %v1816 = vunpack.c.h.bf16 %v1560
    %1817 = vmatpush.msra.mxu0 %v1621
    %1818 = vmatpush.msra.mxu0 %v1617
    %1819 = vmatpush.msra.mxu0 %v1613
    %1820 = vmatpush.msra.mxu0 %v1609
    %1821 = vmatpush.msra.mxu0 %v1605
    %1822 = vmatpush.msra.mxu0 %v1601
    %1823 = vmatpush.msra.mxu0 %v1597
    %1824 = vmatpush.msra.mxu0 %v1593
    %1825 = vmatpush.msra.mxu0 %v1589
    %1826 = vmatpush.msra.mxu0 %v1585
    %1827 = vmatpush.msra.mxu0 %v1581
    %1828 = vmatpush.msra.mxu0 %v1577
    %1829 = vmatpush.msra.mxu0 %v1573
    %1830 = vmatpush.msra.mxu0 %v1569
    %1831 = vmatpush.msra.mxu0 %v1565
    %1832 = vmatpush.msra.mxu0 %v1561
    %1833 = vmatmul.f32.gmra.mxu0 %v1429
    %v1834 = vpop.f32.mrf.mxu0
    %v1835 = vadd.f32 0.0, %v1834
    %1836 = vdwg.mxu0
    %1837 = vmatpush.msra.mxu0 %v1685
    %1838 = vmatpush.msra.mxu0 %v1681
    %1839 = vmatpush.msra.mxu0 %v1677
    %1840 = vmatpush.msra.mxu0 %v1673
    %1841 = vmatpush.msra.mxu0 %v1669
    %1842 = vmatpush.msra.mxu0 %v1665
    %1843 = vmatpush.msra.mxu0 %v1661
    %1844 = vmatpush.msra.mxu0 %v1657
    %1845 = vmatpush.msra.mxu0 %v1653
    %1846 = vmatpush.msra.mxu0 %v1649
    %1847 = vmatpush.msra.mxu0 %v1645
    %1848 = vmatpush.msra.mxu0 %v1641
    %1849 = vmatpush.msra.mxu0 %v1637
    %1850 = vmatpush.msra.mxu0 %v1633
    %1851 = vmatpush.msra.mxu0 %v1629
    %1852 = vmatpush.msra.mxu0 %v1625
    %1853 = vmatmul.f32.gmra.mxu0 %v1430
    %v1854 = vpop.f32.mrf.mxu0
    %v1855 = vadd.f32 %v1835, %v1854
    %1856 = vdwg.mxu0
    %1857 = vmatpush.msra.mxu0 %v1749
    %1858 = vmatpush.msra.mxu0 %v1745
    %1859 = vmatpush.msra.mxu0 %v1741
    %1860 = vmatpush.msra.mxu0 %v1737
    %1861 = vmatpush.msra.mxu0 %v1733
    %1862 = vmatpush.msra.mxu0 %v1729
    %1863 = vmatpush.msra.mxu0 %v1725
    %1864 = vmatpush.msra.mxu0 %v1721
    %1865 = vmatpush.msra.mxu0 %v1717
    %1866 = vmatpush.msra.mxu0 %v1713
    %1867 = vmatpush.msra.mxu0 %v1709
    %1868 = vmatpush.msra.mxu0 %v1705
    %1869 = vmatpush.msra.mxu0 %v1701
    %1870 = vmatpush.msra.mxu0 %v1697
    %1871 = vmatpush.msra.mxu0 %v1693
    %1872 = vmatpush.msra.mxu0 %v1689
    %1873 = vmatmul.f32.gmra.mxu0 %v1431
    %v1874 = vpop.f32.mrf.mxu0
    %v1875 = vadd.f32 %v1855, %v1874
    %1876 = vdwg.mxu0
    %1877 = vmatpush.msra.mxu0 %v1813
    %1878 = vmatpush.msra.mxu0 %v1809
    %1879 = vmatpush.msra.mxu0 %v1805
    %1880 = vmatpush.msra.mxu0 %v1801
    %1881 = vmatpush.msra.mxu0 %v1797
    %1882 = vmatpush.msra.mxu0 %v1793
    %1883 = vmatpush.msra.mxu0 %v1789
    %1884 = vmatpush.msra.mxu0 %v1785
    %1885 = vmatpush.msra.mxu0 %v1781
    %1886 = vmatpush.msra.mxu0 %v1777
    %1887 = vmatpush.msra.mxu0 %v1773
    %1888 = vmatpush.msra.mxu0 %v1769
    %1889 = vmatpush.msra.mxu0 %v1765
    %1890 = vmatpush.msra.mxu0 %v1761
    %1891 = vmatpush.msra.mxu0 %v1757
    %1892 = vmatpush.msra.mxu0 %v1753
    %1893 = vmatmul.f32.gmra.mxu0 %v1432
    %v1894 = vpop.f32.mrf.mxu0
    %v1895 = vadd.f32 %v1875, %v1894
    %1896 = vdwg.mxu0
    %1897 = vmatpush.msra.mxu0 %v1622
    %1898 = vmatpush.msra.mxu0 %v1618
    %1899 = vmatpush.msra.mxu0 %v1614
    %1900 = vmatpush.msra.mxu0 %v1610
    %1901 = vmatpush.msra.mxu0 %v1606
    %1902 = vmatpush.msra.mxu0 %v1602
    %1903 = vmatpush.msra.mxu0 %v1598
    %1904 = vmatpush.msra.mxu0 %v1594
    %1905 = vmatpush.msra.mxu0 %v1590
    %1906 = vmatpush.msra.mxu0 %v1586
    %1907 = vmatpush.msra.mxu0 %v1582
    %1908 = vmatpush.msra.mxu0 %v1578
    %1909 = vmatpush.msra.mxu0 %v1574
    %1910 = vmatpush.msra.mxu0 %v1570
    %1911 = vmatpush.msra.mxu0 %v1566
    %1912 = vmatpush.msra.mxu0 %v1562
    %1913 = vmatmul.f32.gmra.mxu0 %v1429
    %v1914 = vpop.f32.mrf.mxu0
    %v1915 = vadd.f32 0.0, %v1914
    %1916 = vdwg.mxu0
    %1917 = vmatpush.msra.mxu0 %v1686
    %1918 = vmatpush.msra.mxu0 %v1682
    %1919 = vmatpush.msra.mxu0 %v1678
    %1920 = vmatpush.msra.mxu0 %v1674
    %1921 = vmatpush.msra.mxu0 %v1670
    %1922 = vmatpush.msra.mxu0 %v1666
    %1923 = vmatpush.msra.mxu0 %v1662
    %1924 = vmatpush.msra.mxu0 %v1658
    %1925 = vmatpush.msra.mxu0 %v1654
    %1926 = vmatpush.msra.mxu0 %v1650
    %1927 = vmatpush.msra.mxu0 %v1646
    %1928 = vmatpush.msra.mxu0 %v1642
    %1929 = vmatpush.msra.mxu0 %v1638
    %1930 = vmatpush.msra.mxu0 %v1634
    %1931 = vmatpush.msra.mxu0 %v1630
    %1932 = vmatpush.msra.mxu0 %v1626
    %1933 = vmatmul.f32.gmra.mxu0 %v1430
    %v1934 = vpop.f32.mrf.mxu0
    %v1935 = vadd.f32 %v1915, %v1934
    %1936 = vdwg.mxu0
    %1937 = vmatpush.msra.mxu0 %v1750
    %1938 = vmatpush.msra.mxu0 %v1746
    %1939 = vmatpush.msra.mxu0 %v1742
    %1940 = vmatpush.msra.mxu0 %v1738
    %1941 = vmatpush.msra.mxu0 %v1734
    %1942 = vmatpush.msra.mxu0 %v1730
    %1943 = vmatpush.msra.mxu0 %v1726
    %1944 = vmatpush.msra.mxu0 %v1722
    %1945 = vmatpush.msra.mxu0 %v1718
    %1946 = vmatpush.msra.mxu0 %v1714
    %1947 = vmatpush.msra.mxu0 %v1710
    %1948 = vmatpush.msra.mxu0 %v1706
    %1949 = vmatpush.msra.mxu0 %v1702
    %1950 = vmatpush.msra.mxu0 %v1698
    %1951 = vmatpush.msra.mxu0 %v1694
    %1952 = vmatpush.msra.mxu0 %v1690
    %1953 = vmatmul.f32.gmra.mxu0 %v1431
    %v1954 = vpop.f32.mrf.mxu0
    %v1955 = vadd.f32 %v1935, %v1954
    %1956 = vdwg.mxu0
    %1957 = vmatpush.msra.mxu0 %v1814
    %1958 = vmatpush.msra.mxu0 %v1810
    %1959 = vmatpush.msra.mxu0 %v1806
    %1960 = vmatpush.msra.mxu0 %v1802
    %1961 = vmatpush.msra.mxu0 %v1798
    %1962 = vmatpush.msra.mxu0 %v1794
    %1963 = vmatpush.msra.mxu0 %v1790
    %1964 = vmatpush.msra.mxu0 %v1786
    %1965 = vmatpush.msra.mxu0 %v1782
    %1966 = vmatpush.msra.mxu0 %v1778
    %1967 = vmatpush.msra.mxu0 %v1774
    %1968 = vmatpush.msra.mxu0 %v1770
    %1969 = vmatpush.msra.mxu0 %v1766
    %1970 = vmatpush.msra.mxu0 %v1762
    %1971 = vmatpush.msra.mxu0 %v1758
    %1972 = vmatpush.msra.mxu0 %v1754
    %1973 = vmatmul.f32.gmra.mxu0 %v1432
    %v1974 = vpop.f32.mrf.mxu0
    %v1975 = vadd.f32 %v1955, %v1974
    %1976 = vdwg.mxu0
    %1977 = vmatpush.msra.mxu0 %v1623
    %1978 = vmatpush.msra.mxu0 %v1619
    %1979 = vmatpush.msra.mxu0 %v1615
    %1980 = vmatpush.msra.mxu0 %v1611
    %1981 = vmatpush.msra.mxu0 %v1607
    %1982 = vmatpush.msra.mxu0 %v1603
    %1983 = vmatpush.msra.mxu0 %v1599
    %1984 = vmatpush.msra.mxu0 %v1595
    %1985 = vmatpush.msra.mxu0 %v1591
    %1986 = vmatpush.msra.mxu0 %v1587
    %1987 = vmatpush.msra.mxu0 %v1583
    %1988 = vmatpush.msra.mxu0 %v1579
    %1989 = vmatpush.msra.mxu0 %v1575
    %1990 = vmatpush.msra.mxu0 %v1571
    %1991 = vmatpush.msra.mxu0 %v1567
    %1992 = vmatpush.msra.mxu0 %v1563
    %1993 = vmatmul.f32.gmra.mxu0 %v1429
    %v1994 = vpop.f32.mrf.mxu0
    %v1995 = vadd.f32 0.0, %v1994
    %1996 = vdwg.mxu0
    %1997 = vmatpush.msra.mxu0 %v1687
    %1998 = vmatpush.msra.mxu0 %v1683
    %1999 = vmatpush.msra.mxu0 %v1679
    %2000 = vmatpush.msra.mxu0 %v1675
    %2001 = vmatpush.msra.mxu0 %v1671
    %2002 = vmatpush.msra.mxu0 %v1667
    %2003 = vmatpush.msra.mxu0 %v1663
    %2004 = vmatpush.msra.mxu0 %v1659
    %2005 = vmatpush.msra.mxu0 %v1655
    %2006 = vmatpush.msra.mxu0 %v1651
    %2007 = vmatpush.msra.mxu0 %v1647
    %2008 = vmatpush.msra.mxu0 %v1643
    %2009 = vmatpush.msra.mxu0 %v1639
    %2010 = vmatpush.msra.mxu0 %v1635
    %2011 = vmatpush.msra.mxu0 %v1631
    %2012 = vmatpush.msra.mxu0 %v1627
    %2013 = vmatmul.f32.gmra.mxu0 %v1430
    %v2014 = vpop.f32.mrf.mxu0
    %v2015 = vadd.f32 %v1995, %v2014
    %2016 = vdwg.mxu0
    %2017 = vmatpush.msra.mxu0 %v1751
    %2018 = vmatpush.msra.mxu0 %v1747
    %2019 = vmatpush.msra.mxu0 %v1743
    %2020 = vmatpush.msra.mxu0 %v1739
    %2021 = vmatpush.msra.mxu0 %v1735
    %2022 = vmatpush.msra.mxu0 %v1731
    %2023 = vmatpush.msra.mxu0 %v1727
    %2024 = vmatpush.msra.mxu0 %v1723
    %2025 = vmatpush.msra.mxu0 %v1719
    %2026 = vmatpush.msra.mxu0 %v1715
    %2027 = vmatpush.msra.mxu0 %v1711
    %2028 = vmatpush.msra.mxu0 %v1707
    %2029 = vmatpush.msra.mxu0 %v1703
    %2030 = vmatpush.msra.mxu0 %v1699
    %2031 = vmatpush.msra.mxu0 %v1695
    %2032 = vmatpush.msra.mxu0 %v1691
    %2033 = vmatmul.f32.gmra.mxu0 %v1431
    %v2034 = vpop.f32.mrf.mxu0
    %v2035 = vadd.f32 %v2015, %v2034
    %2036 = vdwg.mxu0
    %2037 = vmatpush.msra.mxu0 %v1815
    %2038 = vmatpush.msra.mxu0 %v1811
    %2039 = vmatpush.msra.mxu0 %v1807
    %2040 = vmatpush.msra.mxu0 %v1803
    %2041 = vmatpush.msra.mxu0 %v1799
    %2042 = vmatpush.msra.mxu0 %v1795
    %2043 = vmatpush.msra.mxu0 %v1791
    %2044 = vmatpush.msra.mxu0 %v1787
    %2045 = vmatpush.msra.mxu0 %v1783
    %2046 = vmatpush.msra.mxu0 %v1779
    %2047 = vmatpush.msra.mxu0 %v1775
    %2048 = vmatpush.msra.mxu0 %v1771
    %2049 = vmatpush.msra.mxu0 %v1767
    %2050 = vmatpush.msra.mxu0 %v1763
    %2051 = vmatpush.msra.mxu0 %v1759
    %2052 = vmatpush.msra.mxu0 %v1755
    %2053 = vmatmul.f32.gmra.mxu0 %v1432
    %v2054 = vpop.f32.mrf.mxu0
    %v2055 = vadd.f32 %v2035, %v2054
    %2056 = vdwg.mxu0
    %2057 = vmatpush.msra.mxu0 %v1624
    %2058 = vmatpush.msra.mxu0 %v1620
    %2059 = vmatpush.msra.mxu0 %v1616
    %2060 = vmatpush.msra.mxu0 %v1612
    %2061 = vmatpush.msra.mxu0 %v1608
    %2062 = vmatpush.msra.mxu0 %v1604
    %2063 = vmatpush.msra.mxu0 %v1600
    %2064 = vmatpush.msra.mxu0 %v1596
    %2065 = vmatpush.msra.mxu0 %v1592
    %2066 = vmatpush.msra.mxu0 %v1588
    %2067 = vmatpush.msra.mxu0 %v1584
    %2068 = vmatpush.msra.mxu0 %v1580
    %2069 = vmatpush.msra.mxu0 %v1576
    %2070 = vmatpush.msra.mxu0 %v1572
    %2071 = vmatpush.msra.mxu0 %v1568
    %2072 = vmatpush.msra.mxu0 %v1564
    %2073 = vmatmul.f32.gmra.mxu0 %v1429
    %v2074 = vpop.f32.mrf.mxu0
    %v2075 = vadd.f32 0.0, %v2074
    %2076 = vdwg.mxu0
    %2077 = vmatpush.msra.mxu0 %v1688
    %2078 = vmatpush.msra.mxu0 %v1684
    %2079 = vmatpush.msra.mxu0 %v1680
    %2080 = vmatpush.msra.mxu0 %v1676
    %2081 = vmatpush.msra.mxu0 %v1672
    %2082 = vmatpush.msra.mxu0 %v1668
    %2083 = vmatpush.msra.mxu0 %v1664
    %2084 = vmatpush.msra.mxu0 %v1660
    %2085 = vmatpush.msra.mxu0 %v1656
    %2086 = vmatpush.msra.mxu0 %v1652
    %2087 = vmatpush.msra.mxu0 %v1648
    %2088 = vmatpush.msra.mxu0 %v1644
    %2089 = vmatpush.msra.mxu0 %v1640
    %2090 = vmatpush.msra.mxu0 %v1636
    %2091 = vmatpush.msra.mxu0 %v1632
    %2092 = vmatpush.msra.mxu0 %v1628
    %2093 = vmatmul.f32.gmra.mxu0 %v1430
    %v2094 = vpop.f32.mrf.mxu0
    %v2095 = vadd.f32 %v2075, %v2094
    %2096 = vdwg.mxu0
    %2097 = vmatpush.msra.mxu0 %v1752
    %2098 = vmatpush.msra.mxu0 %v1748
    %2099 = vmatpush.msra.mxu0 %v1744
    %2100 = vmatpush.msra.mxu0 %v1740
    %2101 = vmatpush.msra.mxu0 %v1736
    %2102 = vmatpush.msra.mxu0 %v1732
    %2103 = vmatpush.msra.mxu0 %v1728
    %2104 = vmatpush.msra.mxu0 %v1724
    %2105 = vmatpush.msra.mxu0 %v1720
    %2106 = vmatpush.msra.mxu0 %v1716
    %2107 = vmatpush.msra.mxu0 %v1712
    %2108 = vmatpush.msra.mxu0 %v1708
    %2109 = vmatpush.msra.mxu0 %v1704
    %2110 = vmatpush.msra.mxu0 %v1700
    %2111 = vmatpush.msra.mxu0 %v1696
    %2112 = vmatpush.msra.mxu0 %v1692
    %2113 = vmatmul.f32.gmra.mxu0 %v1431
    %v2114 = vpop.f32.mrf.mxu0
    %v2115 = vadd.f32 %v2095, %v2114
    %2116 = vdwg.mxu0
    %2117 = vmatpush.msra.mxu0 %v1816
    %2118 = vmatpush.msra.mxu0 %v1812
    %2119 = vmatpush.msra.mxu0 %v1808
    %2120 = vmatpush.msra.mxu0 %v1804
    %2121 = vmatpush.msra.mxu0 %v1800
    %2122 = vmatpush.msra.mxu0 %v1796
    %2123 = vmatpush.msra.mxu0 %v1792
    %2124 = vmatpush.msra.mxu0 %v1788
    %2125 = vmatpush.msra.mxu0 %v1784
    %2126 = vmatpush.msra.mxu0 %v1780
    %2127 = vmatpush.msra.mxu0 %v1776
    %2128 = vmatpush.msra.mxu0 %v1772
    %2129 = vmatpush.msra.mxu0 %v1768
    %2130 = vmatpush.msra.mxu0 %v1764
    %2131 = vmatpush.msra.mxu0 %v1760
    %2132 = vmatpush.msra.mxu0 %v1756
    %2133 = vmatmul.f32.gmra.mxu0 %v1432
    %v2134 = vpop.f32.mrf.mxu0
    %v2135 = vadd.f32 %v2115, %v2134
    %2136 = vdwg.mxu0
    %v2137 = vld [vmem:[%s15] sm:$0xf]
    %v2138 = vld [vmem:[%s16] sm:$0xf]
    %v2139 = vsel %vm431, %v1895, 0.0
    %v2140 = vrot.slane %v2139, 4
    %v2141 = vadd.f32 %v2139, %v2140
    %v2142 = vrot.slane %v2141, 2
    %v2143 = vadd.f32 %v2141, %v2142
    %v2144 = vrot.slane %v2143, 1
    %v2145 = vadd.f32 %v2143, %v2144
    %v2146 = vsel %vm431, %v1975, 0.0
    %v2147 = vrot.slane %v2146, 4
    %v2148 = vadd.f32 %v2146, %v2147
    %v2149 = vrot.slane %v2148, 2
    %v2150 = vadd.f32 %v2148, %v2149
    %v2151 = vrot.slane %v2150, 1
    %v2152 = vadd.f32 %v2150, %v2151
    %v2153 = vsel %vm431, %v2055, 0.0
    %v2154 = vrot.slane %v2153, 4
    %v2155 = vadd.f32 %v2153, %v2154
    %v2156 = vrot.slane %v2155, 2
    %v2157 = vadd.f32 %v2155, %v2156
    %v2158 = vrot.slane %v2157, 1
    %v2159 = vadd.f32 %v2157, %v2158
    %v2160 = vsel %vm431, %v2135, 0.0
    %v2161 = vrot.slane %v2160, 4
    %v2162 = vadd.f32 %v2160, %v2161
    %v2163 = vrot.slane %v2162, 2
    %v2164 = vadd.f32 %v2162, %v2163
    %v2165 = vrot.slane %v2164, 1
    %v2166 = vadd.f32 %v2164, %v2165
    %v2167 = vmul.f32 %v2145, 0.5
    %v2168 = vmul.f32 %v2152, 0.5
    %v2169 = vmul.f32 %v2159, 0.5
    %v2170 = vmul.f32 %v2166, 0.5
    %v2171 = vsub.f32 %v1895, %v2167
    %v2172 = vsub.f32 %v1975, %v2168
    %v2173 = vsub.f32 %v2055, %v2169
    %v2174 = vsub.f32 %v2135, %v2170
    %v2175 = vmul.f32 %v2171, %v2171
    %v2176 = vmul.f32 %v2172, %v2172
    %v2177 = vmul.f32 %v2173, %v2173
    %v2178 = vmul.f32 %v2174, %v2174
    %v2179 = vsel %vm431, %v2175, 0.0
    %v2180 = vrot.slane %v2179, 4
    %v2181 = vadd.f32 %v2179, %v2180
    %v2182 = vrot.slane %v2181, 2
    %v2183 = vadd.f32 %v2181, %v2182
    %v2184 = vrot.slane %v2183, 1
    %v2185 = vadd.f32 %v2183, %v2184
    %v2186 = vsel %vm431, %v2176, 0.0
    %v2187 = vrot.slane %v2186, 4
    %v2188 = vadd.f32 %v2186, %v2187
    %v2189 = vrot.slane %v2188, 2
    %v2190 = vadd.f32 %v2188, %v2189
    %v2191 = vrot.slane %v2190, 1
    %v2192 = vadd.f32 %v2190, %v2191
    %v2193 = vsel %vm431, %v2177, 0.0
    %v2194 = vrot.slane %v2193, 4
    %v2195 = vadd.f32 %v2193, %v2194
    %v2196 = vrot.slane %v2195, 2
    %v2197 = vadd.f32 %v2195, %v2196
    %v2198 = vrot.slane %v2197, 1
    %v2199 = vadd.f32 %v2197, %v2198
    %v2200 = vsel %vm431, %v2178, 0.0
    %v2201 = vrot.slane %v2200, 4
    %v2202 = vadd.f32 %v2200, %v2201
    %v2203 = vrot.slane %v2202, 2
    %v2204 = vadd.f32 %v2202, %v2203
    %v2205 = vrot.slane %v2204, 1
    %v2206 = vadd.f32 %v2204, %v2205
    %v2207 = vmul.f32 %v2185, 0.5
    %v2208 = vmul.f32 %v2192, 0.5
    %v2209 = vmul.f32 %v2199, 0.5
    %v2210 = vmul.f32 %v2206, 0.5
    %v2211 = vadd.f32 %v2207, 1e-05
    %v2212 = vadd.f32 %v2208, 1e-05
    %v2213 = vadd.f32 %v2209, 1e-05
    %v2214 = vadd.f32 %v2210, 1e-05
    %v2215 = vrsqrt.pop %v2211
    %v2216 = vmul.f32 %v2215, %v2211
    %v2217 = vmul.f32 %v2216, %v2215
    %v2218 = vmul.f32 0.5, %v2217
    %v2219 = vsub.f32 1.5, %v2218
    %v2220 = vmul.f32 %v2215, %v2219
    %vm2221 = vweird.f32 %v2211
    %vm2222 = vweird.f32 %v2215
    %vm2223 = vmor %vm2221, %vm2222
    %v2224 = vsel %vm2223, %v2215, %v2220
    %v2225 = vrsqrt.pop %v2212
    %v2226 = vmul.f32 %v2225, %v2212
    %v2227 = vmul.f32 %v2226, %v2225
    %v2228 = vmul.f32 0.5, %v2227
    %v2229 = vsub.f32 1.5, %v2228
    %v2230 = vmul.f32 %v2225, %v2229
    %vm2231 = vweird.f32 %v2212
    %vm2232 = vweird.f32 %v2225
    %vm2233 = vmor %vm2231, %vm2232
    %v2234 = vsel %vm2233, %v2225, %v2230
    %v2235 = vrsqrt.pop %v2213
    %v2236 = vmul.f32 %v2235, %v2213
    %v2237 = vmul.f32 %v2236, %v2235
    %v2238 = vmul.f32 0.5, %v2237
    %v2239 = vsub.f32 1.5, %v2238
    %v2240 = vmul.f32 %v2235, %v2239
    %vm2241 = vweird.f32 %v2213
    %vm2242 = vweird.f32 %v2235
    %vm2243 = vmor %vm2241, %vm2242
    %v2244 = vsel %vm2243, %v2235, %v2240
    %v2245 = vrsqrt.pop %v2214
    %v2246 = vmul.f32 %v2245, %v2214
    %v2247 = vmul.f32 %v2246, %v2245
    %v2248 = vmul.f32 0.5, %v2247
    %v2249 = vsub.f32 1.5, %v2248
    %v2250 = vmul.f32 %v2245, %v2249
    %vm2251 = vweird.f32 %v2214
    %vm2252 = vweird.f32 %v2245
    %vm2253 = vmor %vm2251, %vm2252
    %v2254 = vsel %vm2253, %v2245, %v2250
    %v2255 = vmul.f32 %v2171, %v2224
    %v2256 = vmul.f32 %v2172, %v2234
    %v2257 = vmul.f32 %v2173, %v2244
    %v2258 = vmul.f32 %v2174, %v2254
    %v2260 = vperm.slane %v2137, 0
    %v2261 = vperm.slane %v2137, 1
    %v2262 = vperm.slane %v2137, 2
    %v2263 = vperm.slane %v2137, 3
    %v2268 = vmul.f32 %v2255, %v2260
    %v2269 = vmul.f32 %v2256, %v2261
    %v2270 = vmul.f32 %v2257, %v2262
    %v2271 = vmul.f32 %v2258, %v2263
    %v2273 = vperm.slane %v2138, 0
    %v2274 = vperm.slane %v2138, 1
    %v2275 = vperm.slane %v2138, 2
    %v2276 = vperm.slane %v2138, 3
    %v2281 = vadd.f32 %v2268, %v2273
    %v2282 = vadd.f32 %v2269, %v2274
    %v2283 = vadd.f32 %v2270, %v2275
    %v2284 = vadd.f32 %v2271, %v2276
    %v2285 = vld [vmem:[%s17] sm:$0xff]
    %v2286 = vld [vmem:[%s17 + $0x8] sm:$0xff]
    %v2287 = vld [vmem:[%s17 + $0x10] sm:$0xff]
    %v2288 = vld [vmem:[%s17 + $0x18] sm:$0xff]
    %v2289 = vld [vmem:[%s17 + $0x20] sm:$0xff]
    %v2290 = vld [vmem:[%s17 + $0x28] sm:$0xff]
    %v2291 = vld [vmem:[%s17 + $0x30] sm:$0xff]
    %v2292 = vld [vmem:[%s17 + $0x38] sm:$0xff]
    %v2293 = vld [vmem:[%s17 + $0x40] sm:$0xff]
    %v2294 = vld [vmem:[%s17 + $0x48] sm:$0xff]
    %v2295 = vld [vmem:[%s17 + $0x50] sm:$0xff]
    %v2296 = vld [vmem:[%s17 + $0x58] sm:$0xff]
    %v2297 = vld [vmem:[%s17 + $0x60] sm:$0xff]
    %v2298 = vld [vmem:[%s17 + $0x68] sm:$0xff]
    %v2299 = vld [vmem:[%s17 + $0x70] sm:$0xff]
    %v2300 = vld [vmem:[%s17 + $0x78] sm:$0xff]
    %v2301 = vld [vmem:[%s17 + $0x80] sm:$0xff]
    %v2302 = vld [vmem:[%s17 + $0x88] sm:$0xff]
    %v2303 = vld [vmem:[%s17 + $0x90] sm:$0xff]
    %v2304 = vld [vmem:[%s17 + $0x98] sm:$0xff]
    %v2305 = vld [vmem:[%s17 + $0xa0] sm:$0xff]
    %v2306 = vld [vmem:[%s17 + $0xa8] sm:$0xff]
    %v2307 = vld [vmem:[%s17 + $0xb0] sm:$0xff]
    %v2308 = vld [vmem:[%s17 + $0xb8] sm:$0xff]
    %v2309 = vld [vmem:[%s17 + $0xc0] sm:$0xff]
    %v2310 = vld [vmem:[%s17 + $0xc8] sm:$0xff]
    %v2311 = vld [vmem:[%s17 + $0xd0] sm:$0xff]
    %v2312 = vld [vmem:[%s17 + $0xd8] sm:$0xff]
    %v2313 = vld [vmem:[%s17 + $0xe0] sm:$0xff]
    %v2314 = vld [vmem:[%s17 + $0xe8] sm:$0xff]
    %v2315 = vld [vmem:[%s17 + $0xf0] sm:$0xff]
    %v2316 = vld [vmem:[%s17 + $0xf8] sm:$0xff]
    %v2317 = vld [vmem:[%s17 + $0x100] sm:$0xff]
    %v2318 = vld [vmem:[%s17 + $0x108] sm:$0xff]
    %v2319 = vld [vmem:[%s17 + $0x110] sm:$0xff]
    %v2320 = vld [vmem:[%s17 + $0x118] sm:$0xff]
    %v2321 = vld [vmem:[%s17 + $0x120] sm:$0xff]
    %v2322 = vld [vmem:[%s17 + $0x128] sm:$0xff]
    %v2323 = vld [vmem:[%s17 + $0x130] sm:$0xff]
    %v2324 = vld [vmem:[%s17 + $0x138] sm:$0xff]
    %v2325 = vld [vmem:[%s17 + $0x140] sm:$0xff]
    %v2326 = vld [vmem:[%s17 + $0x148] sm:$0xff]
    %v2327 = vld [vmem:[%s17 + $0x150] sm:$0xff]
    %v2328 = vld [vmem:[%s17 + $0x158] sm:$0xff]
    %v2329 = vld [vmem:[%s17 + $0x160] sm:$0xff]
    %v2330 = vld [vmem:[%s17 + $0x168] sm:$0xff]
    %v2331 = vld [vmem:[%s17 + $0x170] sm:$0xff]
    %v2332 = vld [vmem:[%s17 + $0x178] sm:$0xff]
    %v2333 = vld [vmem:[%s17 + $0x180] sm:$0xff]
    %v2334 = vld [vmem:[%s17 + $0x188] sm:$0xff]
    %v2335 = vld [vmem:[%s17 + $0x190] sm:$0xff]
    %v2336 = vld [vmem:[%s17 + $0x198] sm:$0xff]
    %v2337 = vld [vmem:[%s17 + $0x1a0] sm:$0xff]
    %v2338 = vld [vmem:[%s17 + $0x1a8] sm:$0xff]
    %v2339 = vld [vmem:[%s17 + $0x1b0] sm:$0xff]
    %v2340 = vld [vmem:[%s17 + $0x1b8] sm:$0xff]
    %v2341 = vld [vmem:[%s17 + $0x1c0] sm:$0xff]
    %v2342 = vld [vmem:[%s17 + $0x1c8] sm:$0xff]
    %v2343 = vld [vmem:[%s17 + $0x1d0] sm:$0xff]
    %v2344 = vld [vmem:[%s17 + $0x1d8] sm:$0xff]
    %v2345 = vld [vmem:[%s17 + $0x1e0] sm:$0xff]
    %v2346 = vld [vmem:[%s17 + $0x1e8] sm:$0xff]
    %v2347 = vld [vmem:[%s17 + $0x1f0] sm:$0xff]
    %v2348 = vld [vmem:[%s17 + $0x1f8] sm:$0xff]
    %v2349 = vunpack.c.l.bf16 %v2285
    %v2350 = vunpack.c.h.bf16 %v2285
    %v2351 = vunpack.c.l.bf16 %v2286
    %v2352 = vunpack.c.h.bf16 %v2286
    %v2353 = vunpack.c.l.bf16 %v2287
    %v2354 = vunpack.c.h.bf16 %v2287
    %v2355 = vunpack.c.l.bf16 %v2288
    %v2356 = vunpack.c.h.bf16 %v2288
    %v2357 = vunpack.c.l.bf16 %v2289
    %v2358 = vunpack.c.h.bf16 %v2289
    %v2359 = vunpack.c.l.bf16 %v2290
    %v2360 = vunpack.c.h.bf16 %v2290
    %v2361 = vunpack.c.l.bf16 %v2291
    %v2362 = vunpack.c.h.bf16 %v2291
    %v2363 = vunpack.c.l.bf16 %v2292
    %v2364 = vunpack.c.h.bf16 %v2292
    %v2365 = vunpack.c.l.bf16 %v2293
    %v2366 = vunpack.c.h.bf16 %v2293
    %v2367 = vunpack.c.l.bf16 %v2294
    %v2368 = vunpack.c.h.bf16 %v2294
    %v2369 = vunpack.c.l.bf16 %v2295
    %v2370 = vunpack.c.h.bf16 %v2295
    %v2371 = vunpack.c.l.bf16 %v2296
    %v2372 = vunpack.c.h.bf16 %v2296
    %v2373 = vunpack.c.l.bf16 %v2297
    %v2374 = vunpack.c.h.bf16 %v2297
    %v2375 = vunpack.c.l.bf16 %v2298
    %v2376 = vunpack.c.h.bf16 %v2298
    %v2377 = vunpack.c.l.bf16 %v2299
    %v2378 = vunpack.c.h.bf16 %v2299
    %v2379 = vunpack.c.l.bf16 %v2300
    %v2380 = vunpack.c.h.bf16 %v2300
    %v2381 = vunpack.c.l.bf16 %v2301
    %v2382 = vunpack.c.h.bf16 %v2301
    %v2383 = vunpack.c.l.bf16 %v2302
    %v2384 = vunpack.c.h.bf16 %v2302
    %v2385 = vunpack.c.l.bf16 %v2303
    %v2386 = vunpack.c.h.bf16 %v2303
    %v2387 = vunpack.c.l.bf16 %v2304
    %v2388 = vunpack.c.h.bf16 %v2304
    %v2389 = vunpack.c.l.bf16 %v2305
    %v2390 = vunpack.c.h.bf16 %v2305
    %v2391 = vunpack.c.l.bf16 %v2306
    %v2392 = vunpack.c.h.bf16 %v2306
    %v2393 = vunpack.c.l.bf16 %v2307
    %v2394 = vunpack.c.h.bf16 %v2307
    %v2395 = vunpack.c.l.bf16 %v2308
    %v2396 = vunpack.c.h.bf16 %v2308
    %v2397 = vunpack.c.l.bf16 %v2309
    %v2398 = vunpack.c.h.bf16 %v2309
    %v2399 = vunpack.c.l.bf16 %v2310
    %v2400 = vunpack.c.h.bf16 %v2310
    %v2401 = vunpack.c.l.bf16 %v2311
    %v2402 = vunpack.c.h.bf16 %v2311
    %v2403 = vunpack.c.l.bf16 %v2312
    %v2404 = vunpack.c.h.bf16 %v2312
    %v2405 = vunpack.c.l.bf16 %v2313
    %v2406 = vunpack.c.h.bf16 %v2313
    %v2407 = vunpack.c.l.bf16 %v2314
    %v2408 = vunpack.c.h.bf16 %v2314
    %v2409 = vunpack.c.l.bf16 %v2315
    %v2410 = vunpack.c.h.bf16 %v2315
    %v2411 = vunpack.c.l.bf16 %v2316
    %v2412 = vunpack.c.h.bf16 %v2316
    %v2413 = vunpack.c.l.bf16 %v2317
    %v2414 = vunpack.c.h.bf16 %v2317
    %v2415 = vunpack.c.l.bf16 %v2318
    %v2416 = vunpack.c.h.bf16 %v2318
    %v2417 = vunpack.c.l.bf16 %v2319
    %v2418 = vunpack.c.h.bf16 %v2319
    %v2419 = vunpack.c.l.bf16 %v2320
    %v2420 = vunpack.c.h.bf16 %v2320
    %v2421 = vunpack.c.l.bf16 %v2321
    %v2422 = vunpack.c.h.bf16 %v2321
    %v2423 = vunpack.c.l.bf16 %v2322
    %v2424 = vunpack.c.h.bf16 %v2322
    %v2425 = vunpack.c.l.bf16 %v2323
    %v2426 = vunpack.c.h.bf16 %v2323
    %v2427 = vunpack.c.l.bf16 %v2324
    %v2428 = vunpack.c.h.bf16 %v2324
    %v2429 = vunpack.c.l.bf16 %v2325
    %v2430 = vunpack.c.h.bf16 %v2325
    %v2431 = vunpack.c.l.bf16 %v2326
    %v2432 = vunpack.c.h.bf16 %v2326
    %v2433 = vunpack.c.l.bf16 %v2327
    %v2434 = vunpack.c.h.bf16 %v2327
    %v2435 = vunpack.c.l.bf16 %v2328
    %v2436 = vunpack.c.h.bf16 %v2328
    %v2437 = vunpack.c.l.bf16 %v2329
    %v2438 = vunpack.c.h.bf16 %v2329
    %v2439 = vunpack.c.l.bf16 %v2330
    %v2440 = vunpack.c.h.bf16 %v2330
    %v2441 = vunpack.c.l.bf16 %v2331
    %v2442 = vunpack.c.h.bf16 %v2331
    %v2443 = vunpack.c.l.bf16 %v2332
    %v2444 = vunpack.c.h.bf16 %v2332
    %v2445 = vunpack.c.l.bf16 %v2333
    %v2446 = vunpack.c.h.bf16 %v2333
    %v2447 = vunpack.c.l.bf16 %v2334
    %v2448 = vunpack.c.h.bf16 %v2334
    %v2449 = vunpack.c.l.bf16 %v2335
    %v2450 = vunpack.c.h.bf16 %v2335
    %v2451 = vunpack.c.l.bf16 %v2336
    %v2452 = vunpack.c.h.bf16 %v2336
    %v2453 = vunpack.c.l.bf16 %v2337
    %v2454 = vunpack.c.h.bf16 %v2337
    %v2455 = vunpack.c.l.bf16 %v2338
    %v2456 = vunpack.c.h.bf16 %v2338
    %v2457 = vunpack.c.l.bf16 %v2339
    %v2458 = vunpack.c.h.bf16 %v2339
    %v2459 = vunpack.c.l.bf16 %v2340
    %v2460 = vunpack.c.h.bf16 %v2340
    %v2461 = vunpack.c.l.bf16 %v2341
    %v2462 = vunpack.c.h.bf16 %v2341
    %v2463 = vunpack.c.l.bf16 %v2342
    %v2464 = vunpack.c.h.bf16 %v2342
    %v2465 = vunpack.c.l.bf16 %v2343
    %v2466 = vunpack.c.h.bf16 %v2343
    %v2467 = vunpack.c.l.bf16 %v2344
    %v2468 = vunpack.c.h.bf16 %v2344
    %v2469 = vunpack.c.l.bf16 %v2345
    %v2470 = vunpack.c.h.bf16 %v2345
    %v2471 = vunpack.c.l.bf16 %v2346
    %v2472 = vunpack.c.h.bf16 %v2346
    %v2473 = vunpack.c.l.bf16 %v2347
    %v2474 = vunpack.c.h.bf16 %v2347
    %v2475 = vunpack.c.l.bf16 %v2348
    %v2476 = vunpack.c.h.bf16 %v2348
    %2477 = vmatpush.msra.mxu0 %v2409
    %2478 = vmatpush.msra.mxu0 %v2405
    %2479 = vmatpush.msra.mxu0 %v2401
    %2480 = vmatpush.msra.mxu0 %v2397
    %2481 = vmatpush.msra.mxu0 %v2393
    %2482 = vmatpush.msra.mxu0 %v2389
    %2483 = vmatpush.msra.mxu0 %v2385
    %2484 = vmatpush.msra.mxu0 %v2381
    %2485 = vmatpush.msra.mxu0 %v2377
    %2486 = vmatpush.msra.mxu0 %v2373
    %2487 = vmatpush.msra.mxu0 %v2369
    %2488 = vmatpush.msra.mxu0 %v2365
    %2489 = vmatpush.msra.mxu0 %v2361
    %2490 = vmatpush.msra.mxu0 %v2357
    %2491 = vmatpush.msra.mxu0 %v2353
    %2492 = vmatpush.msra.mxu0 %v2349
    %2493 = vmatmul.f32.gmra.mxu0 %v927
    %v2494 = vpop.f32.mrf.mxu0
    %v2495 = vadd.f32 0.0, %v2494
    %2496 = vdwg.mxu0
    %2497 = vmatpush.msra.mxu0 %v2473
    %2498 = vmatpush.msra.mxu0 %v2469
    %2499 = vmatpush.msra.mxu0 %v2465
    %2500 = vmatpush.msra.mxu0 %v2461
    %2501 = vmatpush.msra.mxu0 %v2457
    %2502 = vmatpush.msra.mxu0 %v2453
    %2503 = vmatpush.msra.mxu0 %v2449
    %2504 = vmatpush.msra.mxu0 %v2445
    %2505 = vmatpush.msra.mxu0 %v2441
    %2506 = vmatpush.msra.mxu0 %v2437
    %2507 = vmatpush.msra.mxu0 %v2433
    %2508 = vmatpush.msra.mxu0 %v2429
    %2509 = vmatpush.msra.mxu0 %v2425
    %2510 = vmatpush.msra.mxu0 %v2421
    %2511 = vmatpush.msra.mxu0 %v2417
    %2512 = vmatpush.msra.mxu0 %v2413
    %2513 = vmatmul.f32.gmra.mxu0 %v928
    %v2514 = vpop.f32.mrf.mxu0
    %v2515 = vadd.f32 %v2495, %v2514
    %2516 = vdwg.mxu0
    %2517 = vmatpush.msra.mxu0 %v2410
    %2518 = vmatpush.msra.mxu0 %v2406
    %2519 = vmatpush.msra.mxu0 %v2402
    %2520 = vmatpush.msra.mxu0 %v2398
    %2521 = vmatpush.msra.mxu0 %v2394
    %2522 = vmatpush.msra.mxu0 %v2390
    %2523 = vmatpush.msra.mxu0 %v2386
    %2524 = vmatpush.msra.mxu0 %v2382
    %2525 = vmatpush.msra.mxu0 %v2378
    %2526 = vmatpush.msra.mxu0 %v2374
    %2527 = vmatpush.msra.mxu0 %v2370
    %2528 = vmatpush.msra.mxu0 %v2366
    %2529 = vmatpush.msra.mxu0 %v2362
    %2530 = vmatpush.msra.mxu0 %v2358
    %2531 = vmatpush.msra.mxu0 %v2354
    %2532 = vmatpush.msra.mxu0 %v2350
    %2533 = vmatmul.f32.gmra.mxu0 %v927
    %v2534 = vpop.f32.mrf.mxu0
    %v2535 = vadd.f32 0.0, %v2534
    %2536 = vdwg.mxu0
    %2537 = vmatpush.msra.mxu0 %v2474
    %2538 = vmatpush.msra.mxu0 %v2470
    %2539 = vmatpush.msra.mxu0 %v2466
    %2540 = vmatpush.msra.mxu0 %v2462
    %2541 = vmatpush.msra.mxu0 %v2458
    %2542 = vmatpush.msra.mxu0 %v2454
    %2543 = vmatpush.msra.mxu0 %v2450
    %2544 = vmatpush.msra.mxu0 %v2446
    %2545 = vmatpush.msra.mxu0 %v2442
    %2546 = vmatpush.msra.mxu0 %v2438
    %2547 = vmatpush.msra.mxu0 %v2434
    %2548 = vmatpush.msra.mxu0 %v2430
    %2549 = vmatpush.msra.mxu0 %v2426
    %2550 = vmatpush.msra.mxu0 %v2422
    %2551 = vmatpush.msra.mxu0 %v2418
    %2552 = vmatpush.msra.mxu0 %v2414
    %2553 = vmatmul.f32.gmra.mxu0 %v928
    %v2554 = vpop.f32.mrf.mxu0
    %v2555 = vadd.f32 %v2535, %v2554
    %2556 = vdwg.mxu0
    %2557 = vmatpush.msra.mxu0 %v2411
    %2558 = vmatpush.msra.mxu0 %v2407
    %2559 = vmatpush.msra.mxu0 %v2403
    %2560 = vmatpush.msra.mxu0 %v2399
    %2561 = vmatpush.msra.mxu0 %v2395
    %2562 = vmatpush.msra.mxu0 %v2391
    %2563 = vmatpush.msra.mxu0 %v2387
    %2564 = vmatpush.msra.mxu0 %v2383
    %2565 = vmatpush.msra.mxu0 %v2379
    %2566 = vmatpush.msra.mxu0 %v2375
    %2567 = vmatpush.msra.mxu0 %v2371
    %2568 = vmatpush.msra.mxu0 %v2367
    %2569 = vmatpush.msra.mxu0 %v2363
    %2570 = vmatpush.msra.mxu0 %v2359
    %2571 = vmatpush.msra.mxu0 %v2355
    %2572 = vmatpush.msra.mxu0 %v2351
    %2573 = vmatmul.f32.gmra.mxu0 %v927
    %v2574 = vpop.f32.mrf.mxu0
    %v2575 = vadd.f32 0.0, %v2574
    %2576 = vdwg.mxu0
    %2577 = vmatpush.msra.mxu0 %v2475
    %2578 = vmatpush.msra.mxu0 %v2471
    %2579 = vmatpush.msra.mxu0 %v2467
    %2580 = vmatpush.msra.mxu0 %v2463
    %2581 = vmatpush.msra.mxu0 %v2459
    %2582 = vmatpush.msra.mxu0 %v2455
    %2583 = vmatpush.msra.mxu0 %v2451
    %2584 = vmatpush.msra.mxu0 %v2447
    %2585 = vmatpush.msra.mxu0 %v2443
    %2586 = vmatpush.msra.mxu0 %v2439
    %2587 = vmatpush.msra.mxu0 %v2435
    %2588 = vmatpush.msra.mxu0 %v2431
    %2589 = vmatpush.msra.mxu0 %v2427
    %2590 = vmatpush.msra.mxu0 %v2423
    %2591 = vmatpush.msra.mxu0 %v2419
    %2592 = vmatpush.msra.mxu0 %v2415
    %2593 = vmatmul.f32.gmra.mxu0 %v928
    %v2594 = vpop.f32.mrf.mxu0
    %v2595 = vadd.f32 %v2575, %v2594
    %2596 = vdwg.mxu0
    %2597 = vmatpush.msra.mxu0 %v2412
    %2598 = vmatpush.msra.mxu0 %v2408
    %2599 = vmatpush.msra.mxu0 %v2404
    %2600 = vmatpush.msra.mxu0 %v2400
    %2601 = vmatpush.msra.mxu0 %v2396
    %2602 = vmatpush.msra.mxu0 %v2392
    %2603 = vmatpush.msra.mxu0 %v2388
    %2604 = vmatpush.msra.mxu0 %v2384
    %2605 = vmatpush.msra.mxu0 %v2380
    %2606 = vmatpush.msra.mxu0 %v2376
    %2607 = vmatpush.msra.mxu0 %v2372
    %2608 = vmatpush.msra.mxu0 %v2368
    %2609 = vmatpush.msra.mxu0 %v2364
    %2610 = vmatpush.msra.mxu0 %v2360
    %2611 = vmatpush.msra.mxu0 %v2356
    %2612 = vmatpush.msra.mxu0 %v2352
    %2613 = vmatmul.f32.gmra.mxu0 %v927
    %v2614 = vpop.f32.mrf.mxu0
    %v2615 = vadd.f32 0.0, %v2614
    %2616 = vdwg.mxu0
    %2617 = vmatpush.msra.mxu0 %v2476
    %2618 = vmatpush.msra.mxu0 %v2472
    %2619 = vmatpush.msra.mxu0 %v2468
    %2620 = vmatpush.msra.mxu0 %v2464
    %2621 = vmatpush.msra.mxu0 %v2460
    %2622 = vmatpush.msra.mxu0 %v2456
    %2623 = vmatpush.msra.mxu0 %v2452
    %2624 = vmatpush.msra.mxu0 %v2448
    %2625 = vmatpush.msra.mxu0 %v2444
    %2626 = vmatpush.msra.mxu0 %v2440
    %2627 = vmatpush.msra.mxu0 %v2436
    %2628 = vmatpush.msra.mxu0 %v2432
    %2629 = vmatpush.msra.mxu0 %v2428
    %2630 = vmatpush.msra.mxu0 %v2424
    %2631 = vmatpush.msra.mxu0 %v2420
    %2632 = vmatpush.msra.mxu0 %v2416
    %2633 = vmatmul.f32.gmra.mxu0 %v928
    %v2634 = vpop.f32.mrf.mxu0
    %v2635 = vadd.f32 %v2615, %v2634
    %2636 = vdwg.mxu0
    %v2637 = vld [vmem:[%s18] sm:$0xf]
    %v2638 = vld [vmem:[%s19] sm:$0xf]
    %v2639 = vsel %vm431, %v2515, 0.0
    %v2640 = vrot.slane %v2639, 4
    %v2641 = vadd.f32 %v2639, %v2640
    %v2642 = vrot.slane %v2641, 2
    %v2643 = vadd.f32 %v2641, %v2642
    %v2644 = vrot.slane %v2643, 1
    %v2645 = vadd.f32 %v2643, %v2644
    %v2646 = vsel %vm431, %v2555, 0.0
    %v2647 = vrot.slane %v2646, 4
    %v2648 = vadd.f32 %v2646, %v2647
    %v2649 = vrot.slane %v2648, 2
    %v2650 = vadd.f32 %v2648, %v2649
    %v2651 = vrot.slane %v2650, 1
    %v2652 = vadd.f32 %v2650, %v2651
    %v2653 = vsel %vm431, %v2595, 0.0
    %v2654 = vrot.slane %v2653, 4
    %v2655 = vadd.f32 %v2653, %v2654
    %v2656 = vrot.slane %v2655, 2
    %v2657 = vadd.f32 %v2655, %v2656
    %v2658 = vrot.slane %v2657, 1
    %v2659 = vadd.f32 %v2657, %v2658
    %v2660 = vsel %vm431, %v2635, 0.0
    %v2661 = vrot.slane %v2660, 4
    %v2662 = vadd.f32 %v2660, %v2661
    %v2663 = vrot.slane %v2662, 2
    %v2664 = vadd.f32 %v2662, %v2663
    %v2665 = vrot.slane %v2664, 1
    %v2666 = vadd.f32 %v2664, %v2665
    %v2667 = vmul.f32 %v2645, 0.5
    %v2668 = vmul.f32 %v2652, 0.5
    %v2669 = vmul.f32 %v2659, 0.5
    %v2670 = vmul.f32 %v2666, 0.5
    %v2671 = vsub.f32 %v2515, %v2667
    %v2672 = vsub.f32 %v2555, %v2668
    %v2673 = vsub.f32 %v2595, %v2669
    %v2674 = vsub.f32 %v2635, %v2670
    %v2675 = vmul.f32 %v2671, %v2671
    %v2676 = vmul.f32 %v2672, %v2672
    %v2677 = vmul.f32 %v2673, %v2673
    %v2678 = vmul.f32 %v2674, %v2674
    %v2679 = vsel %vm431, %v2675, 0.0
    %v2680 = vrot.slane %v2679, 4
    %v2681 = vadd.f32 %v2679, %v2680
    %v2682 = vrot.slane %v2681, 2
    %v2683 = vadd.f32 %v2681, %v2682
    %v2684 = vrot.slane %v2683, 1
    %v2685 = vadd.f32 %v2683, %v2684
    %v2686 = vsel %vm431, %v2676, 0.0
    %v2687 = vrot.slane %v2686, 4
    %v2688 = vadd.f32 %v2686, %v2687
    %v2689 = vrot.slane %v2688, 2
    %v2690 = vadd.f32 %v2688, %v2689
    %v2691 = vrot.slane %v2690, 1
    %v2692 = vadd.f32 %v2690, %v2691
    %v2693 = vsel %vm431, %v2677, 0.0
    %v2694 = vrot.slane %v2693, 4
    %v2695 = vadd.f32 %v2693, %v2694
    %v2696 = vrot.slane %v2695, 2
    %v2697 = vadd.f32 %v2695, %v2696
    %v2698 = vrot.slane %v2697, 1
    %v2699 = vadd.f32 %v2697, %v2698
    %v2700 = vsel %vm431, %v2678, 0.0
    %v2701 = vrot.slane %v2700, 4
    %v2702 = vadd.f32 %v2700, %v2701
    %v2703 = vrot.slane %v2702, 2
    %v2704 = vadd.f32 %v2702, %v2703
    %v2705 = vrot.slane %v2704, 1
    %v2706 = vadd.f32 %v2704, %v2705
    %v2707 = vmul.f32 %v2685, 0.5
    %v2708 = vmul.f32 %v2692, 0.5
    %v2709 = vmul.f32 %v2699, 0.5
    %v2710 = vmul.f32 %v2706, 0.5
    %v2711 = vadd.f32 %v2707, 1e-05
    %v2712 = vadd.f32 %v2708, 1e-05
    %v2713 = vadd.f32 %v2709, 1e-05
    %v2714 = vadd.f32 %v2710, 1e-05
    %v2715 = vrsqrt.pop %v2711
    %v2716 = vmul.f32 %v2715, %v2711
    %v2717 = vmul.f32 %v2716, %v2715
    %v2718 = vmul.f32 0.5, %v2717
    %v2719 = vsub.f32 1.5, %v2718
    %v2720 = vmul.f32 %v2715, %v2719
    %vm2721 = vweird.f32 %v2711
    %vm2722 = vweird.f32 %v2715
    %vm2723 = vmor %vm2721, %vm2722
    %v2724 = vsel %vm2723, %v2715, %v2720
    %v2725 = vrsqrt.pop %v2712
    %v2726 = vmul.f32 %v2725, %v2712
    %v2727 = vmul.f32 %v2726, %v2725
    %v2728 = vmul.f32 0.5, %v2727
    %v2729 = vsub.f32 1.5, %v2728
    %v2730 = vmul.f32 %v2725, %v2729
    %vm2731 = vweird.f32 %v2712
    %vm2732 = vweird.f32 %v2725
    %vm2733 = vmor %vm2731, %vm2732
    %v2734 = vsel %vm2733, %v2725, %v2730
    %v2735 = vrsqrt.pop %v2713
    %v2736 = vmul.f32 %v2735, %v2713
    %v2737 = vmul.f32 %v2736, %v2735
    %v2738 = vmul.f32 0.5, %v2737
    %v2739 = vsub.f32 1.5, %v2738
    %v2740 = vmul.f32 %v2735, %v2739
    %vm2741 = vweird.f32 %v2713
    %vm2742 = vweird.f32 %v2735
    %vm2743 = vmor %vm2741, %vm2742
    %v2744 = vsel %vm2743, %v2735, %v2740
    %v2745 = vrsqrt.pop %v2714
    %v2746 = vmul.f32 %v2745, %v2714
    %v2747 = vmul.f32 %v2746, %v2745
    %v2748 = vmul.f32 0.5, %v2747
    %v2749 = vsub.f32 1.5, %v2748
    %v2750 = vmul.f32 %v2745, %v2749
    %vm2751 = vweird.f32 %v2714
    %vm2752 = vweird.f32 %v2745
    %vm2753 = vmor %vm2751, %vm2752
    %v2754 = vsel %vm2753, %v2745, %v2750
    %v2755 = vmul.f32 %v2671, %v2724
    %v2756 = vmul.f32 %v2672, %v2734
    %v2757 = vmul.f32 %v2673, %v2744
    %v2758 = vmul.f32 %v2674, %v2754
    %v2760 = vperm.slane %v2637, 0
    %v2761 = vperm.slane %v2637, 1
    %v2762 = vperm.slane %v2637, 2
    %v2763 = vperm.slane %v2637, 3
    %v2768 = vmul.f32 %v2755, %v2760
    %v2769 = vmul.f32 %v2756, %v2761
    %v2770 = vmul.f32 %v2757, %v2762
    %v2771 = vmul.f32 %v2758, %v2763
    %v2773 = vperm.slane %v2638, 0
    %v2774 = vperm.slane %v2638, 1
    %v2775 = vperm.slane %v2638, 2
    %v2776 = vperm.slane %v2638, 3
    %v2781 = vadd.f32 %v2768, %v2773
    %v2782 = vadd.f32 %v2769, %v2774
    %v2783 = vadd.f32 %v2770, %v2775
    %v2784 = vadd.f32 %v2771, %v2776
    %v2785 = vadd.f32 %v2281, %v2781
    %v2786 = vadd.f32 %v2282, %v2782
    %v2787 = vadd.f32 %v2283, %v2783
    %v2788 = vadd.f32 %v2284, %v2784
    %v2789 = vmax.f32 %v2785, 0.0
    %v2790 = vmax.f32 %v2786, 0.0
    %v2791 = vmax.f32 %v2787, 0.0
    %v2792 = vmax.f32 %v2788, 0.0
    %v2793 = vsel %vm431, %v2789, 0.0
    %v2794 = vsel %vm431, %v2790, 0.0
    %v2795 = vadd.f32 %v2793, %v2794
    %v2796 = vsel %vm431, %v2791, 0.0
    %v2797 = vadd.f32 %v2795, %v2796
    %v2798 = vsel %vm431, %v2792, 0.0
    %v2799 = vadd.f32 %v2797, %v2798
    %2800 = vadd.xlane.f32.xlu0 %v2799
    %v2801 = vpop.xlane.xlu0 %2800
    %v2802 = vrot.slane %v2801, 4
    %v2803 = vadd.f32 %v2801, %v2802
    %v2804 = vrot.slane %v2803, 2
    %v2805 = vadd.f32 %v2803, %v2804
    %v2806 = vrot.slane %v2805, 1
    %v2807 = vadd.f32 %v2805, %v2806
    %s2808 = vtos %v2807
    %v2809 = vstv %s2808
    %vm2810 = vcmask 0
    %2811 = vst.msk [vmem:[#allocation2] sm:$0x1] %vm2810, %v2809
    // Predicated region
    $region82: #{resnet_forward.11} parent=1 // pred_check
      _
    $region83: #{resnet_forward.11} parent=1 // pred_check_branch
      %2813 = sbr.rel (0) target = $region85
    $region84: #{resnet_forward.11} parent=1 // pred_region
      %2815 = vsyncadd [#allocation3], 0
      %s2817 = sshll.u32 [#allocation2], 4
      %s2818 = int_to_ptr.vmem [resolvable:$true] %s2817
      %s2819 = sshll.u32 %s20, 4
      %s2820 = int_to_ptr.hbm [resolvable:$true] %s2819
      %2822 = dma.vmem_to_hbm [thread:$0]  %s2818, 16, %s2820, [#allocation3]
    $region85: #{resnet_forward.11} parent=1 // pred_fallthru
      _
    // Predicated region
    $region86: #{resnet_forward.11} parent=1 // pred_check
      _
    $region87: #{resnet_forward.11} parent=1 // pred_check_branch
      %2824 = sbr.rel (0) target = $region89
    $region88: #{resnet_forward.11} parent=1 // pred_region
      %2826 = dma.done [#allocation3], 16
    $region89: #{resnet_forward.11} parent=1 // pred_fallthru
      _
    %2827 = vsyncpa [#allocation3], 1

</llo_original>
